<compile_context>
chip_gen: v7x
topology: tpu7x:2x2x1
jax: 0.10.0
libtpu: 0.0.40
codegen_flags: <defaults>
</compile_context>

<pallas_src>
import jax
import jax.numpy as jnp
from jax import lax
from jax.experimental import pallas as pl
from jax.experimental.pallas import tpu as pltpu


# Interior of the padded scratch starts at sublane offset 8 (multiple of 8) so
# the interior store is aligned; halo columns x=-1 / x=W live at sublanes 7 and
# 8+W and are covered by the zero fill.
_W_OFF = 8


def _silu(x):
    return x * jax.nn.sigmoid(x)


def _conv3x3_im2col(pad_ref, h_in, B, H, W, w_ref, b_ref):
    """One 3x3 'same' conv + bias + SiLU via a zero-padded VMEM scratch.

    pad_ref : (B, H+2, W+2*_W_OFF, Cin) f32 scratch (overwritten here)
    h_in    : (B, H, W, Cin) f32 value (unpadded input)
    w_ref   : (9*Cin, Cout) bf16 im2col weights, row index = (3*dy+dx)*Cin + c
    b_ref   : (1, Cout) f32
    returns : (B*H*W, Cout) f32 with SiLU applied
    """
    Cin = h_in.shape[-1]
    # zero-fill, then write the interior at an 8-aligned sublane offset
    pad_ref[...] = jnp.zeros(pad_ref.shape, jnp.float32)
    pad_ref[:, 1:H + 1, _W_OFF:_W_OFF + W, :] = h_in

    # im2col: 9 shifted taps -> one (B*H*W, 9*Cin) patch matrix -> one GEMM
    cols = []
    for dy in range(3):
        for dx in range(3):
            tap = pad_ref[:, dy:dy + H, _W_OFF - 1 + dx:_W_OFF - 1 + dx + W, :]
            cols.append(tap.reshape(B * H * W, Cin))
    patches = jnp.concatenate(cols, axis=-1).astype(jnp.bfloat16)

    acc = jnp.dot(patches, w_ref[...],
                  preferred_element_type=jnp.float32) + b_ref[...]
    return _silu(acc)                                      # (B*H*W, Cout) f32


# ----------------------------------------------------------------------------
# Kernel 1: fused conv1 + SiLU + conv2 + SiLU (whole CNN trunk, one launch).
#   x_ref : (B, H, W, Cin) f32 (unpadded NHWC)
#   w*_ref: (9*Cin, Cout) bf16 im2col weights,  b*_ref: (1, Cout) f32
#   o_ref : (B*H*W, Cout) bf16   (2D so the wrapper flatten is a free reshape)
# ----------------------------------------------------------------------------
def encoder_conv_kernel(x_ref, w1_ref, b1_ref, w2_ref, b2_ref, o_ref,
                        pad1_ref, pad2_ref):
    B, H, W, _ = x_ref.shape
    h1 = _conv3x3_im2col(pad1_ref, x_ref[...].astype(jnp.float32),
                         B, H, W, w1_ref, b1_ref)           # (BHW, C1) f32
    C1 = h1.shape[-1]
    h2 = _conv3x3_im2col(pad2_ref, h1.reshape(B, H, W, C1),
                         B, H, W, w2_ref, b2_ref)           # (BHW, C1) f32
    o_ref[...] = h2.astype(o_ref.dtype)


def conv_encoder(x_nhwc, w1, b1, w2, b2):
    B, H, W, Cin = x_nhwc.shape
    C1 = w1.shape[-1]
    vmem = pl.BlockSpec(memory_space=pltpu.MemorySpace.VMEM)
    return pl.pallas_call(
        encoder_conv_kernel,
        out_shape=jax.ShapeDtypeStruct((B * H * W, C1), jnp.bfloat16),
        in_specs=[vmem] * 5,
        out_specs=vmem,
        scratch_shapes=[
            pltpu.VMEM((B, H + 2, W + 2 * _W_OFF, Cin), jnp.float32),
            pltpu.VMEM((B, H + 2, W + 2 * _W_OFF, C1), jnp.float32),
        ],
        compiler_params=pltpu.CompilerParams(
            vmem_limit_bytes=32 * 1024 * 1024),
    )(x_nhwc, w1, b1, w2, b2)


# ----------------------------------------------------------------------------
# Kernel 2: encoder FC + SiLU, fc_policy + SiLU, policy_head, softmax(dim=1).
#   x_ref  : (B, F) bf16 flattened features (F = H*W*C1, lane-dense)
#   w*_ref : bf16 weights (in, out),  b*_ref : (1, out) f32
#   o_ref  : (B, A) f32 softmax probabilities (Categorical.probs)
# ----------------------------------------------------------------------------
def mlp_softmax_kernel(x_ref, w1_ref, b1_ref, w2_ref, b2_ref, w3_ref, b3_ref,
                       o_ref):
    f32, bf16 = jnp.float32, jnp.bfloat16

    # encoder fc + SiLU (bf16 operands on the MXU, f32 accumulation/activation)
    h = jnp.dot(x_ref[...], w1_ref[...],
                preferred_element_type=f32) + b1_ref[...]
    h = _silu(h)

    # fc_policy + SiLU
    h = jnp.dot(h.astype(bf16), w2_ref[...],
                preferred_element_type=f32) + b2_ref[...]
    h = _silu(h)

    # policy_head
    logits = jnp.dot(h.astype(bf16), w3_ref[...],
                     preferred_element_type=f32) + b3_ref[...]

    # softmax over dim=1 (actions), f32 throughout (v5e has no bf16 VPU/EUP)
    logits = logits - jnp.max(logits, axis=1, keepdims=True)
    e = jnp.exp(logits)
    s = jnp.sum(e, axis=1, keepdims=True)
    inv = pl.reciprocal(s, approx=True)        # EUP slot
    inv = inv * (2.0 - s * inv)                # one Newton step -> ~exact
    o_ref[...] = (e * inv).astype(o_ref.dtype)


def mlp_softmax(feat, w1, b1, w2, b2, w3, b3):
    B = feat.shape[0]
    A = w3.shape[-1]
    vmem = pl.BlockSpec(memory_space=pltpu.MemorySpace.VMEM)
    return pl.pallas_call(
        mlp_softmax_kernel,
        out_shape=jax.ShapeDtypeStruct((B, A), jnp.float32),
        in_specs=[vmem] * 7,
        out_specs=vmem,
        compiler_params=pltpu.CompilerParams(
            vmem_limit_bytes=32 * 1024 * 1024),
    )(feat, w1, b1, w2, b2, w3, b3)


# ----------------------------------------------------------------------------
# Parameter construction (deterministic, PyTorch-style uniform(-1/sqrt(fan_in)))
# Matmul weights stored bf16 (halves the dominant HBM bytes), biases f32.
# ----------------------------------------------------------------------------
def init_params(key, width, height, num_frames, num_actions,
                num_fc_hidden_units, num_channels):
    def uni(k, shape, fan_in, dtype):
        bound = 1.0 / float(fan_in) ** 0.5
        w = jax.random.uniform(k, shape, jnp.float32, -bound, bound)
        return w.astype(dtype)

    ks = jax.random.split(key, 10)
    flat = num_channels * width * height
    bf16, f32 = jnp.bfloat16, jnp.float32
    return {
        # conv weights in im2col layout: row = (3*dy + dx) * Cin + cin
        "conv1_w": uni(ks[0], (9 * num_frames, num_channels),
                       9 * num_frames, bf16),
        "conv1_b": uni(ks[1], (1, num_channels), 9 * num_frames, f32),
        "conv2_w": uni(ks[2], (9 * num_channels, num_channels),
                       9 * num_channels, bf16),
        "conv2_b": uni(ks[3], (1, num_channels), 9 * num_channels, f32),
        # linear weights stored (in, out); flatten order is HWC (see forward)
        "fc_w": uni(ks[4], (flat, num_fc_hidden_units), flat, bf16),
        "fc_b": uni(ks[5], (1, num_fc_hidden_units), flat, f32),
        "fc_policy_w": uni(ks[6], (num_fc_hidden_units, num_fc_hidden_units),
                           num_fc_hidden_units, bf16),
        "fc_policy_b": uni(ks[7], (1, num_fc_hidden_units),
                           num_fc_hidden_units, f32),
        "policy_head_w": uni(ks[8], (num_fc_hidden_units, num_actions),
                             num_fc_hidden_units, bf16),
        "policy_head_b": uni(ks[9], (1, num_actions), num_fc_hidden_units, f32),
    }


# ----------------------------------------------------------------------------
# Full PolicyNet forward.  Returns the Categorical probabilities (B, A).
# ----------------------------------------------------------------------------
@jax.jit
def policy_net_forward(x_nchw, params):
    # NCHW (PyTorch) -> NHWC (kernel layout); boundary glue only.
    x = jnp.transpose(x_nchw, (0, 2, 3, 1)).astype(jnp.float32)
    B = x.shape[0]

    conv_feat = conv_encoder(x, params["conv1_w"], params["conv1_b"],
                             params["conv2_w"], params["conv2_b"])
    # free row-major reshape: (B*H*W, C1) -> (B, H*W*C1)   [HWC flatten order]
    feat = conv_feat.reshape(B, -1)

    probs = mlp_softmax(feat,
                        params["fc_w"], params["fc_b"],
                        params["fc_policy_w"], params["fc_policy_b"],
                        params["policy_head_w"], params["policy_head_b"])
    return probs


# ----------------------------------------------------------------------------
# Pure-JAX reference mirroring the kernel's bf16 rounding points.
# ----------------------------------------------------------------------------
def policy_net_reference(x_nchw, params):
    f32, bf16 = jnp.float32, jnp.bfloat16
    x = jnp.transpose(x_nchw, (0, 2, 3, 1)).astype(f32)
    B = x.shape[0]

    def conv(h, w_im2col, b):
        cin, cout = h.shape[-1], w_im2col.shape[-1]
        w_hwio = w_im2col.astype(f32).reshape(3, 3, cin, cout)
        y = lax.conv_general_dilated(
            h.astype(bf16).astype(f32), w_hwio, window_strides=(1, 1),
            padding="SAME", dimension_numbers=("NHWC", "HWIO", "NHWC"))
        y = y + b.reshape(1, 1, 1, cout)
        return y * jax.nn.sigmoid(y)

    h = conv(x, params["conv1_w"], params["conv1_b"])
    h = conv(h, params["conv2_w"], params["conv2_b"])
    feat = h.astype(bf16).astype(f32).reshape(B, -1)

    def lin(v, w, b):
        return jnp.dot(v.astype(bf16).astype(f32), w.astype(f32)) + b

    h = lin(feat, params["fc_w"], params["fc_b"])
    h = h * jax.nn.sigmoid(h)
    h = lin(h, params["fc_policy_w"], params["fc_policy_b"])
    h = h * jax.nn.sigmoid(h)
    logits = lin(h, params["policy_head_w"], params["policy_head_b"])
    return jax.nn.softmax(logits, axis=1)


if __name__ == "__main__":
    # Small shapes consistent with the module's constructor.
    B, num_frames, H, W = 2, 4, 16, 16
    num_actions = 6
    num_fc_hidden_units = 32
    num_channels = 16

    key = jax.random.PRNGKey(0)
    k_x, k_p = jax.random.split(key)
    x = jax.random.normal(k_x, (B, num_frames, H, W), jnp.float32)  # NCHW
    params = init_params(k_p, W, H, num_frames, num_actions,
                         num_fc_hidden_units, num_channels)

    probs = jax.block_until_ready(policy_net_forward(x, params))
    probs_ref = jax.block_until_ready(policy_net_reference(x, params))

    # valid categorical distribution per row + agreement with pure-JAX ref
    assert probs.shape == (B, num_actions)
    assert bool(jnp.all(probs >= 0.0))
    assert bool(jnp.allclose(jnp.sum(probs, axis=1), 1.0, atol=1e-4))
    assert float(jnp.max(jnp.abs(probs - probs_ref))) < 2e-2

    print("KERNEL_OK")
</pallas_src>

<mosaic_0001>
module attributes {stable_mosaic.version = 11 : i64} {
  func.func @encoder_conv_kernel(%arg0: memref<2x16x16x4xf32, #tpu.memory_space<vmem>>, %arg1: memref<36x16xbf16, #tpu.memory_space<vmem>>, %arg2: memref<1x16xf32, #tpu.memory_space<vmem>>, %arg3: memref<144x16xbf16, #tpu.memory_space<vmem>>, %arg4: memref<1x16xf32, #tpu.memory_space<vmem>>, %arg5: memref<512x16xbf16, #tpu.memory_space<vmem>>, %arg6: memref<2x18x32x4xf32, #tpu.memory_space<vmem>>, %arg7: memref<2x18x32x16xf32, #tpu.memory_space<vmem>>) attributes {dimension_semantics = [], scalar_prefetch = 0 : i64, scratch_operands = 2 : i64, tpu.core_type = #tpu.core_type<tc>} {
    %c0 = arith.constant 0 : index
    %c0_0 = arith.constant 0 : index
    %c0_1 = arith.constant 0 : index
    %c0_2 = arith.constant 0 : index
    %0 = vector.load %arg0[%c0, %c0_0, %c0_1, %c0_2] : memref<2x16x16x4xf32, #tpu.memory_space<vmem>>, vector<2x16x16x4xf32>
    %cst = arith.constant 0.000000e+00 : f32
    %1 = vector.broadcast %cst : f32 to vector<2x18x32x4xf32>
    %c0_3 = arith.constant 0 : index
    %c0_4 = arith.constant 0 : index
    %c0_5 = arith.constant 0 : index
    %c0_6 = arith.constant 0 : index
    %2 = vector.load %arg6[%c0_3, %c0_4, %c0_5, %c0_6] : memref<2x18x32x4xf32, #tpu.memory_space<vmem>>, vector<2x18x32x4xf32>
    tpu.vector_store %arg6[%c0_3, %c0_4, %c0_5, %c0_6], %1 {strides = array<i32>} : memref<2x18x32x4xf32, #tpu.memory_space<vmem>>, vector<2x18x32x4xf32>,
    %c0_7 = arith.constant 0 : index
    %c1 = arith.constant 1 : index
    %c8 = arith.constant 8 : index
    %c0_8 = arith.constant 0 : index
    %3 = vector.load %arg6[%c0_7, %c1, %c8, %c0_8] : memref<2x18x32x4xf32, #tpu.memory_space<vmem>>, vector<2x16x16x4xf32>
    tpu.vector_store %arg6[%c0_7, %c1, %c8, %c0_8], %0 {strides = array<i32>} : memref<2x18x32x4xf32, #tpu.memory_space<vmem>>, vector<2x16x16x4xf32>,
    %c0_9 = arith.constant 0 : index
    %c0_10 = arith.constant 0 : index
    %c7 = arith.constant 7 : index
    %c0_11 = arith.constant 0 : index
    %4 = vector.load %arg6[%c0_9, %c0_10, %c7, %c0_11] : memref<2x18x32x4xf32, #tpu.memory_space<vmem>>, vector<2x16x16x4xf32>
    %5 = vector.shape_cast %4 : vector<2x16x16x4xf32> to vector<512x4xf32>
    %c0_12 = arith.constant 0 : index
    %c0_13 = arith.constant 0 : index
    %c8_14 = arith.constant 8 : index
    %c0_15 = arith.constant 0 : index
    %6 = vector.load %arg6[%c0_12, %c0_13, %c8_14, %c0_15] : memref<2x18x32x4xf32, #tpu.memory_space<vmem>>, vector<2x16x16x4xf32>
    %7 = vector.shape_cast %6 : vector<2x16x16x4xf32> to vector<512x4xf32>
    %c0_16 = arith.constant 0 : index
    %c0_17 = arith.constant 0 : index
    %c9 = arith.constant 9 : index
    %c0_18 = arith.constant 0 : index
    %8 = vector.load %arg6[%c0_16, %c0_17, %c9, %c0_18] : memref<2x18x32x4xf32, #tpu.memory_space<vmem>>, vector<2x16x16x4xf32>
    %9 = vector.shape_cast %8 : vector<2x16x16x4xf32> to vector<512x4xf32>
    %c0_19 = arith.constant 0 : index
    %c1_20 = arith.constant 1 : index
    %c7_21 = arith.constant 7 : index
    %c0_22 = arith.constant 0 : index
    %10 = vector.load %arg6[%c0_19, %c1_20, %c7_21, %c0_22] : memref<2x18x32x4xf32, #tpu.memory_space<vmem>>, vector<2x16x16x4xf32>
    %11 = vector.shape_cast %10 : vector<2x16x16x4xf32> to vector<512x4xf32>
    %c0_23 = arith.constant 0 : index
    %c1_24 = arith.constant 1 : index
    %c8_25 = arith.constant 8 : index
    %c0_26 = arith.constant 0 : index
    %12 = vector.load %arg6[%c0_23, %c1_24, %c8_25, %c0_26] : memref<2x18x32x4xf32, #tpu.memory_space<vmem>>, vector<2x16x16x4xf32>
    %13 = vector.shape_cast %12 : vector<2x16x16x4xf32> to vector<512x4xf32>
    %c0_27 = arith.constant 0 : index
    %c1_28 = arith.constant 1 : index
    %c9_29 = arith.constant 9 : index
    %c0_30 = arith.constant 0 : index
    %14 = vector.load %arg6[%c0_27, %c1_28, %c9_29, %c0_30] : memref<2x18x32x4xf32, #tpu.memory_space<vmem>>, vector<2x16x16x4xf32>
    %15 = vector.shape_cast %14 : vector<2x16x16x4xf32> to vector<512x4xf32>
    %c0_31 = arith.constant 0 : index
    %c2 = arith.constant 2 : index
    %c7_32 = arith.constant 7 : index
    %c0_33 = arith.constant 0 : index
    %16 = vector.load %arg6[%c0_31, %c2, %c7_32, %c0_33] : memref<2x18x32x4xf32, #tpu.memory_space<vmem>>, vector<2x16x16x4xf32>
    %17 = vector.shape_cast %16 : vector<2x16x16x4xf32> to vector<512x4xf32>
    %c0_34 = arith.constant 0 : index
    %c2_35 = arith.constant 2 : index
    %c8_36 = arith.constant 8 : index
    %c0_37 = arith.constant 0 : index
    %18 = vector.load %arg6[%c0_34, %c2_35, %c8_36, %c0_37] : memref<2x18x32x4xf32, #tpu.memory_space<vmem>>, vector<2x16x16x4xf32>
    %19 = vector.shape_cast %18 : vector<2x16x16x4xf32> to vector<512x4xf32>
    %c0_38 = arith.constant 0 : index
    %c2_39 = arith.constant 2 : index
    %c9_40 = arith.constant 9 : index
    %c0_41 = arith.constant 0 : index
    %20 = vector.load %arg6[%c0_38, %c2_39, %c9_40, %c0_41] : memref<2x18x32x4xf32, #tpu.memory_space<vmem>>, vector<2x16x16x4xf32>
    %21 = vector.shape_cast %20 : vector<2x16x16x4xf32> to vector<512x4xf32>
    %22 = tpu.concatenate %5, %7, %9, %11, %13, %15, %17, %19, %21 in 1 : vector<512x4xf32>, vector<512x4xf32>, vector<512x4xf32>, vector<512x4xf32>, vector<512x4xf32>, vector<512x4xf32>, vector<512x4xf32>, vector<512x4xf32>, vector<512x4xf32> -> vector<512x36xf32>
    %23 = arith.truncf %22 : vector<512x36xf32> to vector<512x36xbf16>
    %c0_42 = arith.constant 0 : index
    %c0_43 = arith.constant 0 : index
    %24 = vector.load %arg1[%c0_42, %c0_43] : memref<36x16xbf16, #tpu.memory_space<vmem>>, vector<36x16xbf16>
    %cst_44 = arith.constant dense<0.000000e+00> : vector<512x16xf32>
    %25 = tpu.matmul %23, %24, %cst_44 {dimension_numbers = #tpu.dot_dimension_numbers<[1], [0], [0], [1], [0, 0, 1, 1], [], []>} : vector<512x36xbf16>, vector<36x16xbf16>, vector<512x16xf32> -> vector<512x16xf32>
    %c0_45 = arith.constant 0 : index
    %c0_46 = arith.constant 0 : index
    %26 = vector.load %arg2[%c0_45, %c0_46] : memref<1x16xf32, #tpu.memory_space<vmem>>, vector<1x16xf32>
    %27 = vector.broadcast %26 : vector<1x16xf32> to vector<512x16xf32>
    %28 = arith.addf %25, %27 : vector<512x16xf32>
    %29 = arith.negf %28 : vector<512x16xf32>
    %30 = math.exp %29 : vector<512x16xf32>
    %cst_47 = arith.constant 1.000000e+00 : f32
    %31 = vector.broadcast %cst_47 : f32 to vector<512x16xf32>
    %32 = arith.addf %31, %30 : vector<512x16xf32>
    %33 = arith.divf %31, %32 : vector<512x16xf32>
    %34 = arith.mulf %28, %33 : vector<512x16xf32>
    %35 = vector.shape_cast %34 : vector<512x16xf32> to vector<2x16x16x16xf32>
    %cst_48 = arith.constant 0.000000e+00 : f32
    %36 = vector.broadcast %cst_48 : f32 to vector<2x18x32x16xf32>
    %c0_49 = arith.constant 0 : index
    %c0_50 = arith.constant 0 : index
    %c0_51 = arith.constant 0 : index
    %c0_52 = arith.constant 0 : index
    %37 = vector.load %arg7[%c0_49, %c0_50, %c0_51, %c0_52] : memref<2x18x32x16xf32, #tpu.memory_space<vmem>>, vector<2x18x32x16xf32>
    tpu.vector_store %arg7[%c0_49, %c0_50, %c0_51, %c0_52], %36 {strides = array<i32>} : memref<2x18x32x16xf32, #tpu.memory_space<vmem>>, vector<2x18x32x16xf32>,
    %c0_53 = arith.constant 0 : index
    %c1_54 = arith.constant 1 : index
    %c8_55 = arith.constant 8 : index
    %c0_56 = arith.constant 0 : index
    %38 = vector.load %arg7[%c0_53, %c1_54, %c8_55, %c0_56] : memref<2x18x32x16xf32, #tpu.memory_space<vmem>>, vector<2x16x16x16xf32>
    tpu.vector_store %arg7[%c0_53, %c1_54, %c8_55, %c0_56], %35 {strides = array<i32>} : memref<2x18x32x16xf32, #tpu.memory_space<vmem>>, vector<2x16x16x16xf32>,
    %c0_57 = arith.constant 0 : index
    %c0_58 = arith.constant 0 : index
    %c7_59 = arith.constant 7 : index
    %c0_60 = arith.constant 0 : index
    %39 = vector.load %arg7[%c0_57, %c0_58, %c7_59, %c0_60] : memref<2x18x32x16xf32, #tpu.memory_space<vmem>>, vector<2x16x16x16xf32>
    %40 = vector.shape_cast %39 : vector<2x16x16x16xf32> to vector<512x16xf32>
    %c0_61 = arith.constant 0 : index
    %c0_62 = arith.constant 0 : index
    %c8_63 = arith.constant 8 : index
    %c0_64 = arith.constant 0 : index
    %41 = vector.load %arg7[%c0_61, %c0_62, %c8_63, %c0_64] : memref<2x18x32x16xf32, #tpu.memory_space<vmem>>, vector<2x16x16x16xf32>
    %42 = vector.shape_cast %41 : vector<2x16x16x16xf32> to vector<512x16xf32>
    %c0_65 = arith.constant 0 : index
    %c0_66 = arith.constant 0 : index
    %c9_67 = arith.constant 9 : index
    %c0_68 = arith.constant 0 : index
    %43 = vector.load %arg7[%c0_65, %c0_66, %c9_67, %c0_68] : memref<2x18x32x16xf32, #tpu.memory_space<vmem>>, vector<2x16x16x16xf32>
    %44 = vector.shape_cast %43 : vector<2x16x16x16xf32> to vector<512x16xf32>
    %c0_69 = arith.constant 0 : index
    %c1_70 = arith.constant 1 : index
    %c7_71 = arith.constant 7 : index
    %c0_72 = arith.constant 0 : index
    %45 = vector.load %arg7[%c0_69, %c1_70, %c7_71, %c0_72] : memref<2x18x32x16xf32, #tpu.memory_space<vmem>>, vector<2x16x16x16xf32>
    %46 = vector.shape_cast %45 : vector<2x16x16x16xf32> to vector<512x16xf32>
    %c0_73 = arith.constant 0 : index
    %c1_74 = arith.constant 1 : index
    %c8_75 = arith.constant 8 : index
    %c0_76 = arith.constant 0 : index
    %47 = vector.load %arg7[%c0_73, %c1_74, %c8_75, %c0_76] : memref<2x18x32x16xf32, #tpu.memory_space<vmem>>, vector<2x16x16x16xf32>
    %48 = vector.shape_cast %47 : vector<2x16x16x16xf32> to vector<512x16xf32>
    %c0_77 = arith.constant 0 : index
    %c1_78 = arith.constant 1 : index
    %c9_79 = arith.constant 9 : index
    %c0_80 = arith.constant 0 : index
    %49 = vector.load %arg7[%c0_77, %c1_78, %c9_79, %c0_80] : memref<2x18x32x16xf32, #tpu.memory_space<vmem>>, vector<2x16x16x16xf32>
    %50 = vector.shape_cast %49 : vector<2x16x16x16xf32> to vector<512x16xf32>
    %c0_81 = arith.constant 0 : index
    %c2_82 = arith.constant 2 : index
    %c7_83 = arith.constant 7 : index
    %c0_84 = arith.constant 0 : index
    %51 = vector.load %arg7[%c0_81, %c2_82, %c7_83, %c0_84] : memref<2x18x32x16xf32, #tpu.memory_space<vmem>>, vector<2x16x16x16xf32>
    %52 = vector.shape_cast %51 : vector<2x16x16x16xf32> to vector<512x16xf32>
    %c0_85 = arith.constant 0 : index
    %c2_86 = arith.constant 2 : index
    %c8_87 = arith.constant 8 : index
    %c0_88 = arith.constant 0 : index
    %53 = vector.load %arg7[%c0_85, %c2_86, %c8_87, %c0_88] : memref<2x18x32x16xf32, #tpu.memory_space<vmem>>, vector<2x16x16x16xf32>
    %54 = vector.shape_cast %53 : vector<2x16x16x16xf32> to vector<512x16xf32>
    %c0_89 = arith.constant 0 : index
    %c2_90 = arith.constant 2 : index
    %c9_91 = arith.constant 9 : index
    %c0_92 = arith.constant 0 : index
    %55 = vector.load %arg7[%c0_89, %c2_90, %c9_91, %c0_92] : memref<2x18x32x16xf32, #tpu.memory_space<vmem>>, vector<2x16x16x16xf32>
    %56 = vector.shape_cast %55 : vector<2x16x16x16xf32> to vector<512x16xf32>
    %57 = tpu.concatenate %40, %42, %44, %46, %48, %50, %52, %54, %56 in 1 : vector<512x16xf32>, vector<512x16xf32>, vector<512x16xf32>, vector<512x16xf32>, vector<512x16xf32>, vector<512x16xf32>, vector<512x16xf32>, vector<512x16xf32>, vector<512x16xf32> -> vector<512x144xf32>
    %58 = arith.truncf %57 : vector<512x144xf32> to vector<512x144xbf16>
    %c0_93 = arith.constant 0 : index
    %c0_94 = arith.constant 0 : index
    %59 = vector.load %arg3[%c0_93, %c0_94] : memref<144x16xbf16, #tpu.memory_space<vmem>>, vector<144x16xbf16>
    %cst_95 = arith.constant dense<0.000000e+00> : vector<512x16xf32>
    %60 = tpu.matmul %58, %59, %cst_95 {dimension_numbers = #tpu.dot_dimension_numbers<[1], [0], [0], [1], [0, 0, 1, 1], [], []>} : vector<512x144xbf16>, vector<144x16xbf16>, vector<512x16xf32> -> vector<512x16xf32>
    %c0_96 = arith.constant 0 : index
    %c0_97 = arith.constant 0 : index
    %61 = vector.load %arg4[%c0_96, %c0_97] : memref<1x16xf32, #tpu.memory_space<vmem>>, vector<1x16xf32>
    %62 = vector.broadcast %61 : vector<1x16xf32> to vector<512x16xf32>
    %63 = arith.addf %60, %62 : vector<512x16xf32>
    %64 = arith.negf %63 : vector<512x16xf32>
    %65 = math.exp %64 : vector<512x16xf32>
    %cst_98 = arith.constant 1.000000e+00 : f32
    %66 = vector.broadcast %cst_98 : f32 to vector<512x16xf32>
    %67 = arith.addf %66, %65 : vector<512x16xf32>
    %68 = arith.divf %66, %67 : vector<512x16xf32>
    %69 = arith.mulf %63, %68 : vector<512x16xf32>
    %70 = arith.truncf %69 : vector<512x16xf32> to vector<512x16xbf16>
    %c0_99 = arith.constant 0 : index
    %c0_100 = arith.constant 0 : index
    %71 = vector.load %arg5[%c0_99, %c0_100] : memref<512x16xbf16, #tpu.memory_space<vmem>>, vector<512x16xbf16>
    tpu.vector_store %arg5[%c0_99, %c0_100], %70 {strides = array<i32>} : memref<512x16xbf16, #tpu.memory_space<vmem>>, vector<512x16xbf16>,
    return
  }
}

module attributes {stable_mosaic.version = 11 : i64} {
  func.func @mlp_softmax_kernel(%arg0: memref<2x4096xbf16, #tpu.memory_space<vmem>>, %arg1: memref<4096x32xbf16, #tpu.memory_space<vmem>>, %arg2: memref<1x32xf32, #tpu.memory_space<vmem>>, %arg3: memref<32x32xbf16, #tpu.memory_space<vmem>>, %arg4: memref<1x32xf32, #tpu.memory_space<vmem>>, %arg5: memref<32x6xbf16, #tpu.memory_space<vmem>>, %arg6: memref<1x6xf32, #tpu.memory_space<vmem>>, %arg7: memref<2x6xf32, #tpu.memory_space<vmem>>) attributes {dimension_semantics = [], scalar_prefetch = 0 : i64, scratch_operands = 0 : i64, tpu.core_type = #tpu.core_type<tc>} {
    %c0 = arith.constant 0 : index
    %c0_0 = arith.constant 0 : index
    %0 = vector.load %arg0[%c0, %c0_0] : memref<2x4096xbf16, #tpu.memory_space<vmem>>, vector<2x4096xbf16>
    %c0_1 = arith.constant 0 : index
    %c0_2 = arith.constant 0 : index
    %1 = vector.load %arg1[%c0_1, %c0_2] : memref<4096x32xbf16, #tpu.memory_space<vmem>>, vector<4096x32xbf16>
    %cst = arith.constant dense<0.000000e+00> : vector<2x32xf32>
    %2 = tpu.matmul %0, %1, %cst {dimension_numbers = #tpu.dot_dimension_numbers<[1], [0], [0], [1], [0, 0, 1, 1], [], []>} : vector<2x4096xbf16>, vector<4096x32xbf16>, vector<2x32xf32> -> vector<2x32xf32>
    %c0_3 = arith.constant 0 : index
    %c0_4 = arith.constant 0 : index
    %3 = vector.load %arg2[%c0_3, %c0_4] : memref<1x32xf32, #tpu.memory_space<vmem>>, vector<1x32xf32>
    %4 = vector.broadcast %3 : vector<1x32xf32> to vector<2x32xf32>
    %5 = arith.addf %2, %4 : vector<2x32xf32>
    %6 = arith.negf %5 : vector<2x32xf32>
    %7 = math.exp %6 : vector<2x32xf32>
    %cst_5 = arith.constant 1.000000e+00 : f32
    %8 = vector.broadcast %cst_5 : f32 to vector<2x32xf32>
    %9 = arith.addf %8, %7 : vector<2x32xf32>
    %10 = arith.divf %8, %9 : vector<2x32xf32>
    %11 = arith.mulf %5, %10 : vector<2x32xf32>
    %12 = arith.truncf %11 : vector<2x32xf32> to vector<2x32xbf16>
    %c0_6 = arith.constant 0 : index
    %c0_7 = arith.constant 0 : index
    %13 = vector.load %arg3[%c0_6, %c0_7] : memref<32x32xbf16, #tpu.memory_space<vmem>>, vector<32x32xbf16>
    %cst_8 = arith.constant dense<0.000000e+00> : vector<2x32xf32>
    %14 = tpu.matmul %12, %13, %cst_8 {dimension_numbers = #tpu.dot_dimension_numbers<[1], [0], [0], [1], [0, 0, 1, 1], [], []>} : vector<2x32xbf16>, vector<32x32xbf16>, vector<2x32xf32> -> vector<2x32xf32>
    %c0_9 = arith.constant 0 : index
    %c0_10 = arith.constant 0 : index
    %15 = vector.load %arg4[%c0_9, %c0_10] : memref<1x32xf32, #tpu.memory_space<vmem>>, vector<1x32xf32>
    %16 = vector.broadcast %15 : vector<1x32xf32> to vector<2x32xf32>
    %17 = arith.addf %14, %16 : vector<2x32xf32>
    %18 = arith.negf %17 : vector<2x32xf32>
    %19 = math.exp %18 : vector<2x32xf32>
    %cst_11 = arith.constant 1.000000e+00 : f32
    %20 = vector.broadcast %cst_11 : f32 to vector<2x32xf32>
    %21 = arith.addf %20, %19 : vector<2x32xf32>
    %22 = arith.divf %20, %21 : vector<2x32xf32>
    %23 = arith.mulf %17, %22 : vector<2x32xf32>
    %24 = arith.truncf %23 : vector<2x32xf32> to vector<2x32xbf16>
    %c0_12 = arith.constant 0 : index
    %c0_13 = arith.constant 0 : index
    %25 = vector.load %arg5[%c0_12, %c0_13] : memref<32x6xbf16, #tpu.memory_space<vmem>>, vector<32x6xbf16>
    %cst_14 = arith.constant dense<0.000000e+00> : vector<2x6xf32>
    %26 = tpu.matmul %24, %25, %cst_14 {dimension_numbers = #tpu.dot_dimension_numbers<[1], [0], [0], [1], [0, 0, 1, 1], [], []>} : vector<2x32xbf16>, vector<32x6xbf16>, vector<2x6xf32> -> vector<2x6xf32>
    %c0_15 = arith.constant 0 : index
    %c0_16 = arith.constant 0 : index
    %27 = vector.load %arg6[%c0_15, %c0_16] : memref<1x6xf32, #tpu.memory_space<vmem>>, vector<1x6xf32>
    %28 = vector.broadcast %27 : vector<1x6xf32> to vector<2x6xf32>
    %29 = arith.addf %26, %28 : vector<2x6xf32>
    %cst_17 = arith.constant dense<0xFF800000> : vector<2xf32>
    %30 = vector.multi_reduction <maximumf>, %29, %cst_17 [1] : vector<2x6xf32> to vector<2xf32>
    %31 = vector.shape_cast %30 : vector<2xf32> to vector<2x1xf32>
    %32 = vector.broadcast %31 : vector<2x1xf32> to vector<2x6xf32>
    %33 = arith.subf %29, %32 : vector<2x6xf32>
    %34 = math.exp %33 : vector<2x6xf32>
    %cst_18 = arith.constant dense<0.000000e+00> : vector<2xf32>
    %35 = vector.multi_reduction <add>, %34, %cst_18 [1] : vector<2x6xf32> to vector<2xf32>
    %36 = vector.shape_cast %35 : vector<2xf32> to vector<2x1xf32>
    %37 = tpu.reciprocal %36 {approx = true} : vector<2x1xf32> -> vector<2x1xf32>
    %38 = arith.mulf %36, %37 : vector<2x1xf32>
    %cst_19 = arith.constant 2.000000e+00 : f32
    %39 = vector.broadcast %cst_19 : f32 to vector<2x1xf32>
    %40 = arith.subf %39, %38 : vector<2x1xf32>
    %41 = arith.mulf %37, %40 : vector<2x1xf32>
    %42 = vector.broadcast %41 : vector<2x1xf32> to vector<2x6xf32>
    %43 = arith.mulf %34, %42 : vector<2x6xf32>
    %c0_20 = arith.constant 0 : index
    %c0_21 = arith.constant 0 : index
    %44 = vector.load %arg7[%c0_20, %c0_21] : memref<2x6xf32, #tpu.memory_space<vmem>>, vector<2x6xf32>
    tpu.vector_store %arg7[%c0_20, %c0_21], %43 {strides = array<i32>} : memref<2x6xf32, #tpu.memory_space<vmem>>, vector<2x6xf32>,
    return
  }
}

</mosaic_0001>

<llo_original>
// kernel: policy_net_forward.3
$region0: #{policy_net_forward.3}
  #allocation0 [shape = 'u32[]', space=smem, size = 0x4, offset = 0x4, fixed_abs, tag = 'smem constant byte address 0x4 - core index']
  #allocation1 [shape = 'u32[144,128]{1,0:T(1,128)}', space=vmem, size = 0x12000, scoped, tag = 'internal scratch']
  %s0 = inlined_call_operand.vmem [shape: bf16[2,4096], index: 0, kind: input, shape index: {}]
  %s1 = inlined_call_operand.vmem [shape: bf16[4096,32], index: 1, kind: input, shape index: {}]
  %s2 = inlined_call_operand.vmem [shape: f32[1,32], index: 2, kind: input, shape index: {}]
  %s3 = inlined_call_operand.vmem [shape: bf16[32,32], index: 3, kind: input, shape index: {}]
  %s4 = inlined_call_operand.vmem [shape: f32[1,32], index: 4, kind: input, shape index: {}]
  %s5 = inlined_call_operand.vmem [shape: bf16[32,6], index: 5, kind: input, shape index: {}]
  %s6 = inlined_call_operand.vmem [shape: f32[1,6], index: 6, kind: input, shape index: {}]
  %s7 = inlined_call_operand.hbm [shape: f32[2,6], index: 7, kind: output, shape index: {}]
  %s8 = sld [smem:[#allocation0]]
  $region38: #{policy_net_forward.3} parent=0
    _
  %s10 = ssub.s32 1, %s8
  %s11 = scalar_select 0, %s10, %s8
  $region1: #{policy_net_forward.3} parent=0
    #allocation2 [shape = 'u8[1024]{0}', space=vmem, size = 0x400, scoped, tag = 'output window, operand 0, single buffered']
    #allocation3 [shape = 's32[1]{0}', space=sflag, size = 0x4, scoped, tag = 'scoped memory for policy_net_forward.3']
    %12 = vsyncpa [#allocation3], 0
    // Predicated region
    $region2: #{policy_net_forward.3} parent=1 // pred_check
      _
    $region3: #{policy_net_forward.3} parent=1 // pred_check_branch
      %14 = sbr.rel (0) target = $region5
    $region4: #{policy_net_forward.3} parent=1 // pred_region
      _
    $region5: #{policy_net_forward.3} parent=1 // pred_fallthru
      _
    // Predicated region
    $region6: #{policy_net_forward.3} parent=1 // pred_check
      _
    $region7: #{policy_net_forward.3} parent=1 // pred_check_branch
      %16 = sbr.rel (0) target = $region9
    $region8: #{policy_net_forward.3} parent=1 // pred_region
      _
    $region9: #{policy_net_forward.3} parent=1 // pred_fallthru
      _
    // Predicated region
    $region10: #{policy_net_forward.3} parent=1 // pred_check
      _
    $region11: #{policy_net_forward.3} parent=1 // pred_check_branch
      %18 = sbr.rel (0) target = $region13
    $region12: #{policy_net_forward.3} parent=1 // pred_region
      _
    $region13: #{policy_net_forward.3} parent=1 // pred_fallthru
      _
    // Predicated region
    $region14: #{policy_net_forward.3} parent=1 // pred_check
      _
    $region15: #{policy_net_forward.3} parent=1 // pred_check_branch
      %20 = sbr.rel (0) target = $region17
    $region16: #{policy_net_forward.3} parent=1 // pred_region
      _
    $region17: #{policy_net_forward.3} parent=1 // pred_fallthru
      _
    // Predicated region
    $region18: #{policy_net_forward.3} parent=1 // pred_check
      _
    $region19: #{policy_net_forward.3} parent=1 // pred_check_branch
      %22 = sbr.rel (0) target = $region21
    $region20: #{policy_net_forward.3} parent=1 // pred_region
      _
    $region21: #{policy_net_forward.3} parent=1 // pred_fallthru
      _
    // Predicated region
    $region22: #{policy_net_forward.3} parent=1 // pred_check
      _
    $region23: #{policy_net_forward.3} parent=1 // pred_check_branch
      %24 = sbr.rel (0) target = $region25
    $region24: #{policy_net_forward.3} parent=1 // pred_region
      _
    $region25: #{policy_net_forward.3} parent=1 // pred_fallthru
      _
    // Predicated region
    $region26: #{policy_net_forward.3} parent=1 // pred_check
      _
    $region27: #{policy_net_forward.3} parent=1 // pred_check_branch
      %26 = sbr.rel (0) target = $region29
    $region28: #{policy_net_forward.3} parent=1 // pred_region
      _
    $region29: #{policy_net_forward.3} parent=1 // pred_fallthru
      _
    %v28 = vld [vmem:[%s0] sm:$0xff]
    %v29 = vld [vmem:[%s0 + $0x8] sm:$0xff]
    %v30 = vld [vmem:[%s0 + $0x10] sm:$0xff]
    %v31 = vld [vmem:[%s0 + $0x18] sm:$0xff]
    %v32 = vld [vmem:[%s1] sm:$0xf]
    %v33 = vld [vmem:[%s1 + $0x4] sm:$0xf]
    %v34 = vld [vmem:[%s1 + $0x8] sm:$0xf]
    %v35 = vld [vmem:[%s1 + $0xc] sm:$0xf]
    %v36 = vld [vmem:[%s1 + $0x10] sm:$0xf]
    %v37 = vld [vmem:[%s1 + $0x14] sm:$0xf]
    %v38 = vld [vmem:[%s1 + $0x18] sm:$0xf]
    %v39 = vld [vmem:[%s1 + $0x1c] sm:$0xf]
    %v40 = vld [vmem:[%s1 + $0x20] sm:$0xf]
    %v41 = vld [vmem:[%s1 + $0x24] sm:$0xf]
    %v42 = vld [vmem:[%s1 + $0x28] sm:$0xf]
    %v43 = vld [vmem:[%s1 + $0x2c] sm:$0xf]
    %v44 = vld [vmem:[%s1 + $0x30] sm:$0xf]
    %v45 = vld [vmem:[%s1 + $0x34] sm:$0xf]
    %v46 = vld [vmem:[%s1 + $0x38] sm:$0xf]
    %v47 = vld [vmem:[%s1 + $0x3c] sm:$0xf]
    %v48 = vld [vmem:[%s1 + $0x40] sm:$0xf]
    %v49 = vld [vmem:[%s1 + $0x44] sm:$0xf]
    %v50 = vld [vmem:[%s1 + $0x48] sm:$0xf]
    %v51 = vld [vmem:[%s1 + $0x4c] sm:$0xf]
    %v52 = vld [vmem:[%s1 + $0x50] sm:$0xf]
    %v53 = vld [vmem:[%s1 + $0x54] sm:$0xf]
    %v54 = vld [vmem:[%s1 + $0x58] sm:$0xf]
    %v55 = vld [vmem:[%s1 + $0x5c] sm:$0xf]
    %v56 = vld [vmem:[%s1 + $0x60] sm:$0xf]
    %v57 = vld [vmem:[%s1 + $0x64] sm:$0xf]
    %v58 = vld [vmem:[%s1 + $0x68] sm:$0xf]
    %v59 = vld [vmem:[%s1 + $0x6c] sm:$0xf]
    %v60 = vld [vmem:[%s1 + $0x70] sm:$0xf]
    %v61 = vld [vmem:[%s1 + $0x74] sm:$0xf]
    %v62 = vld [vmem:[%s1 + $0x78] sm:$0xf]
    %v63 = vld [vmem:[%s1 + $0x7c] sm:$0xf]
    %v64 = vld [vmem:[%s1 + $0x80] sm:$0xf]
    %v65 = vld [vmem:[%s1 + $0x84] sm:$0xf]
    %v66 = vld [vmem:[%s1 + $0x88] sm:$0xf]
    %v67 = vld [vmem:[%s1 + $0x8c] sm:$0xf]
    %v68 = vld [vmem:[%s1 + $0x90] sm:$0xf]
    %v69 = vld [vmem:[%s1 + $0x94] sm:$0xf]
    %v70 = vld [vmem:[%s1 + $0x98] sm:$0xf]
    %v71 = vld [vmem:[%s1 + $0x9c] sm:$0xf]
    %v72 = vld [vmem:[%s1 + $0xa0] sm:$0xf]
    %v73 = vld [vmem:[%s1 + $0xa4] sm:$0xf]
    %v74 = vld [vmem:[%s1 + $0xa8] sm:$0xf]
    %v75 = vld [vmem:[%s1 + $0xac] sm:$0xf]
    %v76 = vld [vmem:[%s1 + $0xb0] sm:$0xf]
    %v77 = vld [vmem:[%s1 + $0xb4] sm:$0xf]
    %v78 = vld [vmem:[%s1 + $0xb8] sm:$0xf]
    %v79 = vld [vmem:[%s1 + $0xbc] sm:$0xf]
    %v80 = vld [vmem:[%s1 + $0xc0] sm:$0xf]
    %v81 = vld [vmem:[%s1 + $0xc4] sm:$0xf]
    %v82 = vld [vmem:[%s1 + $0xc8] sm:$0xf]
    %v83 = vld [vmem:[%s1 + $0xcc] sm:$0xf]
    %v84 = vld [vmem:[%s1 + $0xd0] sm:$0xf]
    %v85 = vld [vmem:[%s1 + $0xd4] sm:$0xf]
    %v86 = vld [vmem:[%s1 + $0xd8] sm:$0xf]
    %v87 = vld [vmem:[%s1 + $0xdc] sm:$0xf]
    %v88 = vld [vmem:[%s1 + $0xe0] sm:$0xf]
    %v89 = vld [vmem:[%s1 + $0xe4] sm:$0xf]
    %v90 = vld [vmem:[%s1 + $0xe8] sm:$0xf]
    %v91 = vld [vmem:[%s1 + $0xec] sm:$0xf]
    %v92 = vld [vmem:[%s1 + $0xf0] sm:$0xf]
    %v93 = vld [vmem:[%s1 + $0xf4] sm:$0xf]
    %v94 = vld [vmem:[%s1 + $0xf8] sm:$0xf]
    %v95 = vld [vmem:[%s1 + $0xfc] sm:$0xf]
    %v96 = vld [vmem:[%s1 + $0x100] sm:$0xf]
    %v97 = vld [vmem:[%s1 + $0x104] sm:$0xf]
    %v98 = vld [vmem:[%s1 + $0x108] sm:$0xf]
    %v99 = vld [vmem:[%s1 + $0x10c] sm:$0xf]
    %v100 = vld [vmem:[%s1 + $0x110] sm:$0xf]
    %v101 = vld [vmem:[%s1 + $0x114] sm:$0xf]
    %v102 = vld [vmem:[%s1 + $0x118] sm:$0xf]
    %v103 = vld [vmem:[%s1 + $0x11c] sm:$0xf]
    %v104 = vld [vmem:[%s1 + $0x120] sm:$0xf]
    %v105 = vld [vmem:[%s1 + $0x124] sm:$0xf]
    %v106 = vld [vmem:[%s1 + $0x128] sm:$0xf]
    %v107 = vld [vmem:[%s1 + $0x12c] sm:$0xf]
    %v108 = vld [vmem:[%s1 + $0x130] sm:$0xf]
    %v109 = vld [vmem:[%s1 + $0x134] sm:$0xf]
    %v110 = vld [vmem:[%s1 + $0x138] sm:$0xf]
    %v111 = vld [vmem:[%s1 + $0x13c] sm:$0xf]
    %v112 = vld [vmem:[%s1 + $0x140] sm:$0xf]
    %v113 = vld [vmem:[%s1 + $0x144] sm:$0xf]
    %v114 = vld [vmem:[%s1 + $0x148] sm:$0xf]
    %v115 = vld [vmem:[%s1 + $0x14c] sm:$0xf]
    %v116 = vld [vmem:[%s1 + $0x150] sm:$0xf]
    %v117 = vld [vmem:[%s1 + $0x154] sm:$0xf]
    %v118 = vld [vmem:[%s1 + $0x158] sm:$0xf]
    %v119 = vld [vmem:[%s1 + $0x15c] sm:$0xf]
    %v120 = vld [vmem:[%s1 + $0x160] sm:$0xf]
    %v121 = vld [vmem:[%s1 + $0x164] sm:$0xf]
    %v122 = vld [vmem:[%s1 + $0x168] sm:$0xf]
    %v123 = vld [vmem:[%s1 + $0x16c] sm:$0xf]
    %v124 = vld [vmem:[%s1 + $0x170] sm:$0xf]
    %v125 = vld [vmem:[%s1 + $0x174] sm:$0xf]
    %v126 = vld [vmem:[%s1 + $0x178] sm:$0xf]
    %v127 = vld [vmem:[%s1 + $0x17c] sm:$0xf]
    %v128 = vld [vmem:[%s1 + $0x180] sm:$0xf]
    %v129 = vld [vmem:[%s1 + $0x184] sm:$0xf]
    %v130 = vld [vmem:[%s1 + $0x188] sm:$0xf]
    %v131 = vld [vmem:[%s1 + $0x18c] sm:$0xf]
    %v132 = vld [vmem:[%s1 + $0x190] sm:$0xf]
    %v133 = vld [vmem:[%s1 + $0x194] sm:$0xf]
    %v134 = vld [vmem:[%s1 + $0x198] sm:$0xf]
    %v135 = vld [vmem:[%s1 + $0x19c] sm:$0xf]
    %v136 = vld [vmem:[%s1 + $0x1a0] sm:$0xf]
    %v137 = vld [vmem:[%s1 + $0x1a4] sm:$0xf]
    %v138 = vld [vmem:[%s1 + $0x1a8] sm:$0xf]
    %v139 = vld [vmem:[%s1 + $0x1ac] sm:$0xf]
    %v140 = vld [vmem:[%s1 + $0x1b0] sm:$0xf]
    %v141 = vld [vmem:[%s1 + $0x1b4] sm:$0xf]
    %v142 = vld [vmem:[%s1 + $0x1b8] sm:$0xf]
    %v143 = vld [vmem:[%s1 + $0x1bc] sm:$0xf]
    %v144 = vld [vmem:[%s1 + $0x1c0] sm:$0xf]
    %v145 = vld [vmem:[%s1 + $0x1c4] sm:$0xf]
    %v146 = vld [vmem:[%s1 + $0x1c8] sm:$0xf]
    %v147 = vld [vmem:[%s1 + $0x1cc] sm:$0xf]
    %v148 = vld [vmem:[%s1 + $0x1d0] sm:$0xf]
    %v149 = vld [vmem:[%s1 + $0x1d4] sm:$0xf]
    %v150 = vld [vmem:[%s1 + $0x1d8] sm:$0xf]
    %v151 = vld [vmem:[%s1 + $0x1dc] sm:$0xf]
    %v152 = vld [vmem:[%s1 + $0x1e0] sm:$0xf]
    %v153 = vld [vmem:[%s1 + $0x1e4] sm:$0xf]
    %v154 = vld [vmem:[%s1 + $0x1e8] sm:$0xf]
    %v155 = vld [vmem:[%s1 + $0x1ec] sm:$0xf]
    %v156 = vld [vmem:[%s1 + $0x1f0] sm:$0xf]
    %v157 = vld [vmem:[%s1 + $0x1f4] sm:$0xf]
    %v158 = vld [vmem:[%s1 + $0x1f8] sm:$0xf]
    %v159 = vld [vmem:[%s1 + $0x1fc] sm:$0xf]
    %v160 = vld [vmem:[%s1 + $0x200] sm:$0xf]
    %v161 = vld [vmem:[%s1 + $0x204] sm:$0xf]
    %v162 = vld [vmem:[%s1 + $0x208] sm:$0xf]
    %v163 = vld [vmem:[%s1 + $0x20c] sm:$0xf]
    %v164 = vld [vmem:[%s1 + $0x210] sm:$0xf]
    %v165 = vld [vmem:[%s1 + $0x214] sm:$0xf]
    %v166 = vld [vmem:[%s1 + $0x218] sm:$0xf]
    %v167 = vld [vmem:[%s1 + $0x21c] sm:$0xf]
    %v168 = vld [vmem:[%s1 + $0x220] sm:$0xf]
    %v169 = vld [vmem:[%s1 + $0x224] sm:$0xf]
    %v170 = vld [vmem:[%s1 + $0x228] sm:$0xf]
    %v171 = vld [vmem:[%s1 + $0x22c] sm:$0xf]
    %v172 = vld [vmem:[%s1 + $0x230] sm:$0xf]
    %v173 = vld [vmem:[%s1 + $0x234] sm:$0xf]
    %v174 = vld [vmem:[%s1 + $0x238] sm:$0xf]
    %v175 = vld [vmem:[%s1 + $0x23c] sm:$0xf]
    %v176 = vld [vmem:[%s1 + $0x240] sm:$0xf]
    %v177 = vld [vmem:[%s1 + $0x244] sm:$0xf]
    %v178 = vld [vmem:[%s1 + $0x248] sm:$0xf]
    %v179 = vld [vmem:[%s1 + $0x24c] sm:$0xf]
    %v180 = vld [vmem:[%s1 + $0x250] sm:$0xf]
    %v181 = vld [vmem:[%s1 + $0x254] sm:$0xf]
    %v182 = vld [vmem:[%s1 + $0x258] sm:$0xf]
    %v183 = vld [vmem:[%s1 + $0x25c] sm:$0xf]
    %v184 = vld [vmem:[%s1 + $0x260] sm:$0xf]
    %v185 = vld [vmem:[%s1 + $0x264] sm:$0xf]
    %v186 = vld [vmem:[%s1 + $0x268] sm:$0xf]
    %v187 = vld [vmem:[%s1 + $0x26c] sm:$0xf]
    %v188 = vld [vmem:[%s1 + $0x270] sm:$0xf]
    %v189 = vld [vmem:[%s1 + $0x274] sm:$0xf]
    %v190 = vld [vmem:[%s1 + $0x278] sm:$0xf]
    %v191 = vld [vmem:[%s1 + $0x27c] sm:$0xf]
    %v192 = vld [vmem:[%s1 + $0x280] sm:$0xf]
    %v193 = vld [vmem:[%s1 + $0x284] sm:$0xf]
    %v194 = vld [vmem:[%s1 + $0x288] sm:$0xf]
    %v195 = vld [vmem:[%s1 + $0x28c] sm:$0xf]
    %v196 = vld [vmem:[%s1 + $0x290] sm:$0xf]
    %v197 = vld [vmem:[%s1 + $0x294] sm:$0xf]
    %v198 = vld [vmem:[%s1 + $0x298] sm:$0xf]
    %v199 = vld [vmem:[%s1 + $0x29c] sm:$0xf]
    %v200 = vld [vmem:[%s1 + $0x2a0] sm:$0xf]
    %v201 = vld [vmem:[%s1 + $0x2a4] sm:$0xf]
    %v202 = vld [vmem:[%s1 + $0x2a8] sm:$0xf]
    %v203 = vld [vmem:[%s1 + $0x2ac] sm:$0xf]
    %v204 = vld [vmem:[%s1 + $0x2b0] sm:$0xf]
    %v205 = vld [vmem:[%s1 + $0x2b4] sm:$0xf]
    %v206 = vld [vmem:[%s1 + $0x2b8] sm:$0xf]
    %v207 = vld [vmem:[%s1 + $0x2bc] sm:$0xf]
    %v208 = vld [vmem:[%s1 + $0x2c0] sm:$0xf]
    %v209 = vld [vmem:[%s1 + $0x2c4] sm:$0xf]
    %v210 = vld [vmem:[%s1 + $0x2c8] sm:$0xf]
    %v211 = vld [vmem:[%s1 + $0x2cc] sm:$0xf]
    %v212 = vld [vmem:[%s1 + $0x2d0] sm:$0xf]
    %v213 = vld [vmem:[%s1 + $0x2d4] sm:$0xf]
    %v214 = vld [vmem:[%s1 + $0x2d8] sm:$0xf]
    %v215 = vld [vmem:[%s1 + $0x2dc] sm:$0xf]
    %v216 = vld [vmem:[%s1 + $0x2e0] sm:$0xf]
    %v217 = vld [vmem:[%s1 + $0x2e4] sm:$0xf]
    %v218 = vld [vmem:[%s1 + $0x2e8] sm:$0xf]
    %v219 = vld [vmem:[%s1 + $0x2ec] sm:$0xf]
    %v220 = vld [vmem:[%s1 + $0x2f0] sm:$0xf]
    %v221 = vld [vmem:[%s1 + $0x2f4] sm:$0xf]
    %v222 = vld [vmem:[%s1 + $0x2f8] sm:$0xf]
    %v223 = vld [vmem:[%s1 + $0x2fc] sm:$0xf]
    %v224 = vld [vmem:[%s1 + $0x300] sm:$0xf]
    %v225 = vld [vmem:[%s1 + $0x304] sm:$0xf]
    %v226 = vld [vmem:[%s1 + $0x308] sm:$0xf]
    %v227 = vld [vmem:[%s1 + $0x30c] sm:$0xf]
    %v228 = vld [vmem:[%s1 + $0x310] sm:$0xf]
    %v229 = vld [vmem:[%s1 + $0x314] sm:$0xf]
    %v230 = vld [vmem:[%s1 + $0x318] sm:$0xf]
    %v231 = vld [vmem:[%s1 + $0x31c] sm:$0xf]
    %v232 = vld [vmem:[%s1 + $0x320] sm:$0xf]
    %v233 = vld [vmem:[%s1 + $0x324] sm:$0xf]
    %v234 = vld [vmem:[%s1 + $0x328] sm:$0xf]
    %v235 = vld [vmem:[%s1 + $0x32c] sm:$0xf]
    %v236 = vld [vmem:[%s1 + $0x330] sm:$0xf]
    %v237 = vld [vmem:[%s1 + $0x334] sm:$0xf]
    %v238 = vld [vmem:[%s1 + $0x338] sm:$0xf]
    %v239 = vld [vmem:[%s1 + $0x33c] sm:$0xf]
    %v240 = vld [vmem:[%s1 + $0x340] sm:$0xf]
    %v241 = vld [vmem:[%s1 + $0x344] sm:$0xf]
    %v242 = vld [vmem:[%s1 + $0x348] sm:$0xf]
    %v243 = vld [vmem:[%s1 + $0x34c] sm:$0xf]
    %v244 = vld [vmem:[%s1 + $0x350] sm:$0xf]
    %v245 = vld [vmem:[%s1 + $0x354] sm:$0xf]
    %v246 = vld [vmem:[%s1 + $0x358] sm:$0xf]
    %v247 = vld [vmem:[%s1 + $0x35c] sm:$0xf]
    %v248 = vld [vmem:[%s1 + $0x360] sm:$0xf]
    %v249 = vld [vmem:[%s1 + $0x364] sm:$0xf]
    %v250 = vld [vmem:[%s1 + $0x368] sm:$0xf]
    %v251 = vld [vmem:[%s1 + $0x36c] sm:$0xf]
    %v252 = vld [vmem:[%s1 + $0x370] sm:$0xf]
    %v253 = vld [vmem:[%s1 + $0x374] sm:$0xf]
    %v254 = vld [vmem:[%s1 + $0x378] sm:$0xf]
    %v255 = vld [vmem:[%s1 + $0x37c] sm:$0xf]
    %v256 = vld [vmem:[%s1 + $0x380] sm:$0xf]
    %v257 = vld [vmem:[%s1 + $0x384] sm:$0xf]
    %v258 = vld [vmem:[%s1 + $0x388] sm:$0xf]
    %v259 = vld [vmem:[%s1 + $0x38c] sm:$0xf]
    %v260 = vld [vmem:[%s1 + $0x390] sm:$0xf]
    %v261 = vld [vmem:[%s1 + $0x394] sm:$0xf]
    %v262 = vld [vmem:[%s1 + $0x398] sm:$0xf]
    %v263 = vld [vmem:[%s1 + $0x39c] sm:$0xf]
    %v264 = vld [vmem:[%s1 + $0x3a0] sm:$0xf]
    %v265 = vld [vmem:[%s1 + $0x3a4] sm:$0xf]
    %v266 = vld [vmem:[%s1 + $0x3a8] sm:$0xf]
    %v267 = vld [vmem:[%s1 + $0x3ac] sm:$0xf]
    %v268 = vld [vmem:[%s1 + $0x3b0] sm:$0xf]
    %v269 = vld [vmem:[%s1 + $0x3b4] sm:$0xf]
    %v270 = vld [vmem:[%s1 + $0x3b8] sm:$0xf]
    %v271 = vld [vmem:[%s1 + $0x3bc] sm:$0xf]
    %v272 = vld [vmem:[%s1 + $0x3c0] sm:$0xf]
    %v273 = vld [vmem:[%s1 + $0x3c4] sm:$0xf]
    %v274 = vld [vmem:[%s1 + $0x3c8] sm:$0xf]
    %v275 = vld [vmem:[%s1 + $0x3cc] sm:$0xf]
    %v276 = vld [vmem:[%s1 + $0x3d0] sm:$0xf]
    %v277 = vld [vmem:[%s1 + $0x3d4] sm:$0xf]
    %v278 = vld [vmem:[%s1 + $0x3d8] sm:$0xf]
    %v279 = vld [vmem:[%s1 + $0x3dc] sm:$0xf]
    %v280 = vld [vmem:[%s1 + $0x3e0] sm:$0xf]
    %v281 = vld [vmem:[%s1 + $0x3e4] sm:$0xf]
    %v282 = vld [vmem:[%s1 + $0x3e8] sm:$0xf]
    %v283 = vld [vmem:[%s1 + $0x3ec] sm:$0xf]
    %v284 = vld [vmem:[%s1 + $0x3f0] sm:$0xf]
    %v285 = vld [vmem:[%s1 + $0x3f4] sm:$0xf]
    %v286 = vld [vmem:[%s1 + $0x3f8] sm:$0xf]
    %v287 = vld [vmem:[%s1 + $0x3fc] sm:$0xf]
    %v288 = vld [vmem:[%s1 + $0x400] sm:$0xf]
    %v289 = vld [vmem:[%s1 + $0x404] sm:$0xf]
    %v290 = vld [vmem:[%s1 + $0x408] sm:$0xf]
    %v291 = vld [vmem:[%s1 + $0x40c] sm:$0xf]
    %v292 = vld [vmem:[%s1 + $0x410] sm:$0xf]
    %v293 = vld [vmem:[%s1 + $0x414] sm:$0xf]
    %v294 = vld [vmem:[%s1 + $0x418] sm:$0xf]
    %v295 = vld [vmem:[%s1 + $0x41c] sm:$0xf]
    %v296 = vld [vmem:[%s1 + $0x420] sm:$0xf]
    %v297 = vld [vmem:[%s1 + $0x424] sm:$0xf]
    %v298 = vld [vmem:[%s1 + $0x428] sm:$0xf]
    %v299 = vld [vmem:[%s1 + $0x42c] sm:$0xf]
    %v300 = vld [vmem:[%s1 + $0x430] sm:$0xf]
    %v301 = vld [vmem:[%s1 + $0x434] sm:$0xf]
    %v302 = vld [vmem:[%s1 + $0x438] sm:$0xf]
    %v303 = vld [vmem:[%s1 + $0x43c] sm:$0xf]
    %v304 = vld [vmem:[%s1 + $0x440] sm:$0xf]
    %v305 = vld [vmem:[%s1 + $0x444] sm:$0xf]
    %v306 = vld [vmem:[%s1 + $0x448] sm:$0xf]
    %v307 = vld [vmem:[%s1 + $0x44c] sm:$0xf]
    %v308 = vld [vmem:[%s1 + $0x450] sm:$0xf]
    %v309 = vld [vmem:[%s1 + $0x454] sm:$0xf]
    %v310 = vld [vmem:[%s1 + $0x458] sm:$0xf]
    %v311 = vld [vmem:[%s1 + $0x45c] sm:$0xf]
    %v312 = vld [vmem:[%s1 + $0x460] sm:$0xf]
    %v313 = vld [vmem:[%s1 + $0x464] sm:$0xf]
    %v314 = vld [vmem:[%s1 + $0x468] sm:$0xf]
    %v315 = vld [vmem:[%s1 + $0x46c] sm:$0xf]
    %v316 = vld [vmem:[%s1 + $0x470] sm:$0xf]
    %v317 = vld [vmem:[%s1 + $0x474] sm:$0xf]
    %v318 = vld [vmem:[%s1 + $0x478] sm:$0xf]
    %v319 = vld [vmem:[%s1 + $0x47c] sm:$0xf]
    %v320 = vld [vmem:[%s1 + $0x480] sm:$0xf]
    %v321 = vld [vmem:[%s1 + $0x484] sm:$0xf]
    %v322 = vld [vmem:[%s1 + $0x488] sm:$0xf]
    %v323 = vld [vmem:[%s1 + $0x48c] sm:$0xf]
    %v324 = vld [vmem:[%s1 + $0x490] sm:$0xf]
    %v325 = vld [vmem:[%s1 + $0x494] sm:$0xf]
    %v326 = vld [vmem:[%s1 + $0x498] sm:$0xf]
    %v327 = vld [vmem:[%s1 + $0x49c] sm:$0xf]
    %v328 = vld [vmem:[%s1 + $0x4a0] sm:$0xf]
    %v329 = vld [vmem:[%s1 + $0x4a4] sm:$0xf]
    %v330 = vld [vmem:[%s1 + $0x4a8] sm:$0xf]
    %v331 = vld [vmem:[%s1 + $0x4ac] sm:$0xf]
    %v332 = vld [vmem:[%s1 + $0x4b0] sm:$0xf]
    %v333 = vld [vmem:[%s1 + $0x4b4] sm:$0xf]
    %v334 = vld [vmem:[%s1 + $0x4b8] sm:$0xf]
    %v335 = vld [vmem:[%s1 + $0x4bc] sm:$0xf]
    %v336 = vld [vmem:[%s1 + $0x4c0] sm:$0xf]
    %v337 = vld [vmem:[%s1 + $0x4c4] sm:$0xf]
    %v338 = vld [vmem:[%s1 + $0x4c8] sm:$0xf]
    %v339 = vld [vmem:[%s1 + $0x4cc] sm:$0xf]
    %v340 = vld [vmem:[%s1 + $0x4d0] sm:$0xf]
    %v341 = vld [vmem:[%s1 + $0x4d4] sm:$0xf]
    %v342 = vld [vmem:[%s1 + $0x4d8] sm:$0xf]
    %v343 = vld [vmem:[%s1 + $0x4dc] sm:$0xf]
    %v344 = vld [vmem:[%s1 + $0x4e0] sm:$0xf]
    %v345 = vld [vmem:[%s1 + $0x4e4] sm:$0xf]
    %v346 = vld [vmem:[%s1 + $0x4e8] sm:$0xf]
    %v347 = vld [vmem:[%s1 + $0x4ec] sm:$0xf]
    %v348 = vld [vmem:[%s1 + $0x4f0] sm:$0xf]
    %v349 = vld [vmem:[%s1 + $0x4f4] sm:$0xf]
    %v350 = vld [vmem:[%s1 + $0x4f8] sm:$0xf]
    %v351 = vld [vmem:[%s1 + $0x4fc] sm:$0xf]
    %v352 = vld [vmem:[%s1 + $0x500] sm:$0xf]
    %v353 = vld [vmem:[%s1 + $0x504] sm:$0xf]
    %v354 = vld [vmem:[%s1 + $0x508] sm:$0xf]
    %v355 = vld [vmem:[%s1 + $0x50c] sm:$0xf]
    %v356 = vld [vmem:[%s1 + $0x510] sm:$0xf]
    %v357 = vld [vmem:[%s1 + $0x514] sm:$0xf]
    %v358 = vld [vmem:[%s1 + $0x518] sm:$0xf]
    %v359 = vld [vmem:[%s1 + $0x51c] sm:$0xf]
    %v360 = vld [vmem:[%s1 + $0x520] sm:$0xf]
    %v361 = vld [vmem:[%s1 + $0x524] sm:$0xf]
    %v362 = vld [vmem:[%s1 + $0x528] sm:$0xf]
    %v363 = vld [vmem:[%s1 + $0x52c] sm:$0xf]
    %v364 = vld [vmem:[%s1 + $0x530] sm:$0xf]
    %v365 = vld [vmem:[%s1 + $0x534] sm:$0xf]
    %v366 = vld [vmem:[%s1 + $0x538] sm:$0xf]
    %v367 = vld [vmem:[%s1 + $0x53c] sm:$0xf]
    %v368 = vld [vmem:[%s1 + $0x540] sm:$0xf]
    %v369 = vld [vmem:[%s1 + $0x544] sm:$0xf]
    %v370 = vld [vmem:[%s1 + $0x548] sm:$0xf]
    %v371 = vld [vmem:[%s1 + $0x54c] sm:$0xf]
    %v372 = vld [vmem:[%s1 + $0x550] sm:$0xf]
    %v373 = vld [vmem:[%s1 + $0x554] sm:$0xf]
    %v374 = vld [vmem:[%s1 + $0x558] sm:$0xf]
    %v375 = vld [vmem:[%s1 + $0x55c] sm:$0xf]
    %v376 = vld [vmem:[%s1 + $0x560] sm:$0xf]
    %v377 = vld [vmem:[%s1 + $0x564] sm:$0xf]
    %v378 = vld [vmem:[%s1 + $0x568] sm:$0xf]
    %v379 = vld [vmem:[%s1 + $0x56c] sm:$0xf]
    %v380 = vld [vmem:[%s1 + $0x570] sm:$0xf]
    %v381 = vld [vmem:[%s1 + $0x574] sm:$0xf]
    %v382 = vld [vmem:[%s1 + $0x578] sm:$0xf]
    %v383 = vld [vmem:[%s1 + $0x57c] sm:$0xf]
    %v384 = vld [vmem:[%s1 + $0x580] sm:$0xf]
    %v385 = vld [vmem:[%s1 + $0x584] sm:$0xf]
    %v386 = vld [vmem:[%s1 + $0x588] sm:$0xf]
    %v387 = vld [vmem:[%s1 + $0x58c] sm:$0xf]
    %v388 = vld [vmem:[%s1 + $0x590] sm:$0xf]
    %v389 = vld [vmem:[%s1 + $0x594] sm:$0xf]
    %v390 = vld [vmem:[%s1 + $0x598] sm:$0xf]
    %v391 = vld [vmem:[%s1 + $0x59c] sm:$0xf]
    %v392 = vld [vmem:[%s1 + $0x5a0] sm:$0xf]
    %v393 = vld [vmem:[%s1 + $0x5a4] sm:$0xf]
    %v394 = vld [vmem:[%s1 + $0x5a8] sm:$0xf]
    %v395 = vld [vmem:[%s1 + $0x5ac] sm:$0xf]
    %v396 = vld [vmem:[%s1 + $0x5b0] sm:$0xf]
    %v397 = vld [vmem:[%s1 + $0x5b4] sm:$0xf]
    %v398 = vld [vmem:[%s1 + $0x5b8] sm:$0xf]
    %v399 = vld [vmem:[%s1 + $0x5bc] sm:$0xf]
    %v400 = vld [vmem:[%s1 + $0x5c0] sm:$0xf]
    %v401 = vld [vmem:[%s1 + $0x5c4] sm:$0xf]
    %v402 = vld [vmem:[%s1 + $0x5c8] sm:$0xf]
    %v403 = vld [vmem:[%s1 + $0x5cc] sm:$0xf]
    %v404 = vld [vmem:[%s1 + $0x5d0] sm:$0xf]
    %v405 = vld [vmem:[%s1 + $0x5d4] sm:$0xf]
    %v406 = vld [vmem:[%s1 + $0x5d8] sm:$0xf]
    %v407 = vld [vmem:[%s1 + $0x5dc] sm:$0xf]
    %v408 = vld [vmem:[%s1 + $0x5e0] sm:$0xf]
    %v409 = vld [vmem:[%s1 + $0x5e4] sm:$0xf]
    %v410 = vld [vmem:[%s1 + $0x5e8] sm:$0xf]
    %v411 = vld [vmem:[%s1 + $0x5ec] sm:$0xf]
    %v412 = vld [vmem:[%s1 + $0x5f0] sm:$0xf]
    %v413 = vld [vmem:[%s1 + $0x5f4] sm:$0xf]
    %v414 = vld [vmem:[%s1 + $0x5f8] sm:$0xf]
    %v415 = vld [vmem:[%s1 + $0x5fc] sm:$0xf]
    %v416 = vld [vmem:[%s1 + $0x600] sm:$0xf]
    %v417 = vld [vmem:[%s1 + $0x604] sm:$0xf]
    %v418 = vld [vmem:[%s1 + $0x608] sm:$0xf]
    %v419 = vld [vmem:[%s1 + $0x60c] sm:$0xf]
    %v420 = vld [vmem:[%s1 + $0x610] sm:$0xf]
    %v421 = vld [vmem:[%s1 + $0x614] sm:$0xf]
    %v422 = vld [vmem:[%s1 + $0x618] sm:$0xf]
    %v423 = vld [vmem:[%s1 + $0x61c] sm:$0xf]
    %v424 = vld [vmem:[%s1 + $0x620] sm:$0xf]
    %v425 = vld [vmem:[%s1 + $0x624] sm:$0xf]
    %v426 = vld [vmem:[%s1 + $0x628] sm:$0xf]
    %v427 = vld [vmem:[%s1 + $0x62c] sm:$0xf]
    %v428 = vld [vmem:[%s1 + $0x630] sm:$0xf]
    %v429 = vld [vmem:[%s1 + $0x634] sm:$0xf]
    %v430 = vld [vmem:[%s1 + $0x638] sm:$0xf]
    %v431 = vld [vmem:[%s1 + $0x63c] sm:$0xf]
    %v432 = vld [vmem:[%s1 + $0x640] sm:$0xf]
    %v433 = vld [vmem:[%s1 + $0x644] sm:$0xf]
    %v434 = vld [vmem:[%s1 + $0x648] sm:$0xf]
    %v435 = vld [vmem:[%s1 + $0x64c] sm:$0xf]
    %v436 = vld [vmem:[%s1 + $0x650] sm:$0xf]
    %v437 = vld [vmem:[%s1 + $0x654] sm:$0xf]
    %v438 = vld [vmem:[%s1 + $0x658] sm:$0xf]
    %v439 = vld [vmem:[%s1 + $0x65c] sm:$0xf]
    %v440 = vld [vmem:[%s1 + $0x660] sm:$0xf]
    %v441 = vld [vmem:[%s1 + $0x664] sm:$0xf]
    %v442 = vld [vmem:[%s1 + $0x668] sm:$0xf]
    %v443 = vld [vmem:[%s1 + $0x66c] sm:$0xf]
    %v444 = vld [vmem:[%s1 + $0x670] sm:$0xf]
    %v445 = vld [vmem:[%s1 + $0x674] sm:$0xf]
    %v446 = vld [vmem:[%s1 + $0x678] sm:$0xf]
    %v447 = vld [vmem:[%s1 + $0x67c] sm:$0xf]
    %v448 = vld [vmem:[%s1 + $0x680] sm:$0xf]
    %v449 = vld [vmem:[%s1 + $0x684] sm:$0xf]
    %v450 = vld [vmem:[%s1 + $0x688] sm:$0xf]
    %v451 = vld [vmem:[%s1 + $0x68c] sm:$0xf]
    %v452 = vld [vmem:[%s1 + $0x690] sm:$0xf]
    %v453 = vld [vmem:[%s1 + $0x694] sm:$0xf]
    %v454 = vld [vmem:[%s1 + $0x698] sm:$0xf]
    %v455 = vld [vmem:[%s1 + $0x69c] sm:$0xf]
    %v456 = vld [vmem:[%s1 + $0x6a0] sm:$0xf]
    %v457 = vld [vmem:[%s1 + $0x6a4] sm:$0xf]
    %v458 = vld [vmem:[%s1 + $0x6a8] sm:$0xf]
    %v459 = vld [vmem:[%s1 + $0x6ac] sm:$0xf]
    %v460 = vld [vmem:[%s1 + $0x6b0] sm:$0xf]
    %v461 = vld [vmem:[%s1 + $0x6b4] sm:$0xf]
    %v462 = vld [vmem:[%s1 + $0x6b8] sm:$0xf]
    %v463 = vld [vmem:[%s1 + $0x6bc] sm:$0xf]
    %v464 = vld [vmem:[%s1 + $0x6c0] sm:$0xf]
    %v465 = vld [vmem:[%s1 + $0x6c4] sm:$0xf]
    %v466 = vld [vmem:[%s1 + $0x6c8] sm:$0xf]
    %v467 = vld [vmem:[%s1 + $0x6cc] sm:$0xf]
    %v468 = vld [vmem:[%s1 + $0x6d0] sm:$0xf]
    %v469 = vld [vmem:[%s1 + $0x6d4] sm:$0xf]
    %v470 = vld [vmem:[%s1 + $0x6d8] sm:$0xf]
    %v471 = vld [vmem:[%s1 + $0x6dc] sm:$0xf]
    %v472 = vld [vmem:[%s1 + $0x6e0] sm:$0xf]
    %v473 = vld [vmem:[%s1 + $0x6e4] sm:$0xf]
    %v474 = vld [vmem:[%s1 + $0x6e8] sm:$0xf]
    %v475 = vld [vmem:[%s1 + $0x6ec] sm:$0xf]
    %v476 = vld [vmem:[%s1 + $0x6f0] sm:$0xf]
    %v477 = vld [vmem:[%s1 + $0x6f4] sm:$0xf]
    %v478 = vld [vmem:[%s1 + $0x6f8] sm:$0xf]
    %v479 = vld [vmem:[%s1 + $0x6fc] sm:$0xf]
    %v480 = vld [vmem:[%s1 + $0x700] sm:$0xf]
    %v481 = vld [vmem:[%s1 + $0x704] sm:$0xf]
    %v482 = vld [vmem:[%s1 + $0x708] sm:$0xf]
    %v483 = vld [vmem:[%s1 + $0x70c] sm:$0xf]
    %v484 = vld [vmem:[%s1 + $0x710] sm:$0xf]
    %v485 = vld [vmem:[%s1 + $0x714] sm:$0xf]
    %v486 = vld [vmem:[%s1 + $0x718] sm:$0xf]
    %v487 = vld [vmem:[%s1 + $0x71c] sm:$0xf]
    %v488 = vld [vmem:[%s1 + $0x720] sm:$0xf]
    %v489 = vld [vmem:[%s1 + $0x724] sm:$0xf]
    %v490 = vld [vmem:[%s1 + $0x728] sm:$0xf]
    %v491 = vld [vmem:[%s1 + $0x72c] sm:$0xf]
    %v492 = vld [vmem:[%s1 + $0x730] sm:$0xf]
    %v493 = vld [vmem:[%s1 + $0x734] sm:$0xf]
    %v494 = vld [vmem:[%s1 + $0x738] sm:$0xf]
    %v495 = vld [vmem:[%s1 + $0x73c] sm:$0xf]
    %v496 = vld [vmem:[%s1 + $0x740] sm:$0xf]
    %v497 = vld [vmem:[%s1 + $0x744] sm:$0xf]
    %v498 = vld [vmem:[%s1 + $0x748] sm:$0xf]
    %v499 = vld [vmem:[%s1 + $0x74c] sm:$0xf]
    %v500 = vld [vmem:[%s1 + $0x750] sm:$0xf]
    %v501 = vld [vmem:[%s1 + $0x754] sm:$0xf]
    %v502 = vld [vmem:[%s1 + $0x758] sm:$0xf]
    %v503 = vld [vmem:[%s1 + $0x75c] sm:$0xf]
    %v504 = vld [vmem:[%s1 + $0x760] sm:$0xf]
    %v505 = vld [vmem:[%s1 + $0x764] sm:$0xf]
    %v506 = vld [vmem:[%s1 + $0x768] sm:$0xf]
    %v507 = vld [vmem:[%s1 + $0x76c] sm:$0xf]
    %v508 = vld [vmem:[%s1 + $0x770] sm:$0xf]
    %v509 = vld [vmem:[%s1 + $0x774] sm:$0xf]
    %v510 = vld [vmem:[%s1 + $0x778] sm:$0xf]
    %v511 = vld [vmem:[%s1 + $0x77c] sm:$0xf]
    %v512 = vld [vmem:[%s1 + $0x780] sm:$0xf]
    %v513 = vld [vmem:[%s1 + $0x784] sm:$0xf]
    %v514 = vld [vmem:[%s1 + $0x788] sm:$0xf]
    %v515 = vld [vmem:[%s1 + $0x78c] sm:$0xf]
    %v516 = vld [vmem:[%s1 + $0x790] sm:$0xf]
    %v517 = vld [vmem:[%s1 + $0x794] sm:$0xf]
    %v518 = vld [vmem:[%s1 + $0x798] sm:$0xf]
    %v519 = vld [vmem:[%s1 + $0x79c] sm:$0xf]
    %v520 = vld [vmem:[%s1 + $0x7a0] sm:$0xf]
    %v521 = vld [vmem:[%s1 + $0x7a4] sm:$0xf]
    %v522 = vld [vmem:[%s1 + $0x7a8] sm:$0xf]
    %v523 = vld [vmem:[%s1 + $0x7ac] sm:$0xf]
    %v524 = vld [vmem:[%s1 + $0x7b0] sm:$0xf]
    %v525 = vld [vmem:[%s1 + $0x7b4] sm:$0xf]
    %v526 = vld [vmem:[%s1 + $0x7b8] sm:$0xf]
    %v527 = vld [vmem:[%s1 + $0x7bc] sm:$0xf]
    %v528 = vld [vmem:[%s1 + $0x7c0] sm:$0xf]
    %v529 = vld [vmem:[%s1 + $0x7c4] sm:$0xf]
    %v530 = vld [vmem:[%s1 + $0x7c8] sm:$0xf]
    %v531 = vld [vmem:[%s1 + $0x7cc] sm:$0xf]
    %v532 = vld [vmem:[%s1 + $0x7d0] sm:$0xf]
    %v533 = vld [vmem:[%s1 + $0x7d4] sm:$0xf]
    %v534 = vld [vmem:[%s1 + $0x7d8] sm:$0xf]
    %v535 = vld [vmem:[%s1 + $0x7dc] sm:$0xf]
    %v536 = vld [vmem:[%s1 + $0x7e0] sm:$0xf]
    %v537 = vld [vmem:[%s1 + $0x7e4] sm:$0xf]
    %v538 = vld [vmem:[%s1 + $0x7e8] sm:$0xf]
    %v539 = vld [vmem:[%s1 + $0x7ec] sm:$0xf]
    %v540 = vld [vmem:[%s1 + $0x7f0] sm:$0xf]
    %v541 = vld [vmem:[%s1 + $0x7f4] sm:$0xf]
    %v542 = vld [vmem:[%s1 + $0x7f8] sm:$0xf]
    %v543 = vld [vmem:[%s1 + $0x7fc] sm:$0xf]
    %v544 = vld [vmem:[%s2] sm:$0x1]
    %v546 = vlaneseq
    %v547 = vshrl.u32 %v546, 7
    %v548 = vsub.s32 0, %v547
    %v549 = vrot.slane %v544, %v548
    %v555 = vcombine.high %v28, %v28
    %v557 = vunpack.c.l.s4 1966171168
    %v558 = vunpack.c.0.s8 %v557
    %v559 = vlaneseq
    %v560 = vshrl.u32 %v559, 7
    %v561 = vsub.s32 %v558, %v560
    %v562 = vrot.slane %v28, %v561
    %v564 = vunpack.c.l.s4 1966171168
    %v565 = vunpack.c.0.s8 %v564
    %v566 = vlaneseq
    %v567 = vshrl.u32 %v566, 7
    %v568 = vsub.s32 %v565, %v567
    %v569 = vrot.slane %v555, %v568
    %v570 = vcombine.high %v562, %v562
    %v571 = vcombine.high %v569, %v569
    %v573 = vunpack.c.l.s4 1966171168
    %v574 = vunpack.c.0.s8 %v573
    %v575 = vlaneseq
    %v576 = vshrl.u32 %v575, 7
    %v577 = vsub.s32 %v574, %v576
    %v578 = vrot.slane %v562, %v577
    %v580 = vunpack.c.l.s4 1966171168
    %v581 = vunpack.c.0.s8 %v580
    %v582 = vlaneseq
    %v583 = vshrl.u32 %v582, 7
    %v584 = vsub.s32 %v581, %v583
    %v585 = vrot.slane %v569, %v584
    %v587 = vunpack.c.l.s4 1966171168
    %v588 = vunpack.c.0.s8 %v587
    %v589 = vlaneseq
    %v590 = vshrl.u32 %v589, 7
    %v591 = vsub.s32 %v588, %v590
    %v592 = vrot.slane %v570, %v591
    %v594 = vunpack.c.l.s4 1966171168
    %v595 = vunpack.c.0.s8 %v594
    %v596 = vlaneseq
    %v597 = vshrl.u32 %v596, 7
    %v598 = vsub.s32 %v595, %v597
    %v599 = vrot.slane %v571, %v598
    %v600 = vcombine.high %v578, %v578
    %v601 = vcombine.high %v585, %v585
    %v602 = vcombine.high %v592, %v592
    %v603 = vcombine.high %v599, %v599
    %v604 = vcombine.high %v29, %v29
    %v606 = vunpack.c.l.s4 1966171168
    %v607 = vunpack.c.0.s8 %v606
    %v608 = vlaneseq
    %v609 = vshrl.u32 %v608, 7
    %v610 = vsub.s32 %v607, %v609
    %v611 = vrot.slane %v29, %v610
    %v613 = vunpack.c.l.s4 1966171168
    %v614 = vunpack.c.0.s8 %v613
    %v615 = vlaneseq
    %v616 = vshrl.u32 %v615, 7
    %v617 = vsub.s32 %v614, %v616
    %v618 = vrot.slane %v604, %v617
    %v619 = vcombine.high %v611, %v611
    %v620 = vcombine.high %v618, %v618
    %v622 = vunpack.c.l.s4 1966171168
    %v623 = vunpack.c.0.s8 %v622
    %v624 = vlaneseq
    %v625 = vshrl.u32 %v624, 7
    %v626 = vsub.s32 %v623, %v625
    %v627 = vrot.slane %v611, %v626
    %v629 = vunpack.c.l.s4 1966171168
    %v630 = vunpack.c.0.s8 %v629
    %v631 = vlaneseq
    %v632 = vshrl.u32 %v631, 7
    %v633 = vsub.s32 %v630, %v632
    %v634 = vrot.slane %v618, %v633
    %v636 = vunpack.c.l.s4 1966171168
    %v637 = vunpack.c.0.s8 %v636
    %v638 = vlaneseq
    %v639 = vshrl.u32 %v638, 7
    %v640 = vsub.s32 %v637, %v639
    %v641 = vrot.slane %v619, %v640
    %v643 = vunpack.c.l.s4 1966171168
    %v644 = vunpack.c.0.s8 %v643
    %v645 = vlaneseq
    %v646 = vshrl.u32 %v645, 7
    %v647 = vsub.s32 %v644, %v646
    %v648 = vrot.slane %v620, %v647
    %v649 = vcombine.high %v627, %v627
    %v650 = vcombine.high %v634, %v634
    %v651 = vcombine.high %v641, %v641
    %v652 = vcombine.high %v648, %v648
    %v653 = vcombine.high %v30, %v30
    %v655 = vunpack.c.l.s4 1966171168
    %v656 = vunpack.c.0.s8 %v655
    %v657 = vlaneseq
    %v658 = vshrl.u32 %v657, 7
    %v659 = vsub.s32 %v656, %v658
    %v660 = vrot.slane %v30, %v659
    %v662 = vunpack.c.l.s4 1966171168
    %v663 = vunpack.c.0.s8 %v662
    %v664 = vlaneseq
    %v665 = vshrl.u32 %v664, 7
    %v666 = vsub.s32 %v663, %v665
    %v667 = vrot.slane %v653, %v666
    %v668 = vcombine.high %v660, %v660
    %v669 = vcombine.high %v667, %v667
    %v671 = vunpack.c.l.s4 1966171168
    %v672 = vunpack.c.0.s8 %v671
    %v673 = vlaneseq
    %v674 = vshrl.u32 %v673, 7
    %v675 = vsub.s32 %v672, %v674
    %v676 = vrot.slane %v660, %v675
    %v678 = vunpack.c.l.s4 1966171168
    %v679 = vunpack.c.0.s8 %v678
    %v680 = vlaneseq
    %v681 = vshrl.u32 %v680, 7
    %v682 = vsub.s32 %v679, %v681
    %v683 = vrot.slane %v667, %v682
    %v685 = vunpack.c.l.s4 1966171168
    %v686 = vunpack.c.0.s8 %v685
    %v687 = vlaneseq
    %v688 = vshrl.u32 %v687, 7
    %v689 = vsub.s32 %v686, %v688
    %v690 = vrot.slane %v668, %v689
    %v692 = vunpack.c.l.s4 1966171168
    %v693 = vunpack.c.0.s8 %v692
    %v694 = vlaneseq
    %v695 = vshrl.u32 %v694, 7
    %v696 = vsub.s32 %v693, %v695
    %v697 = vrot.slane %v669, %v696
    %v698 = vcombine.high %v676, %v676
    %v699 = vcombine.high %v683, %v683
    %v700 = vcombine.high %v690, %v690
    %v701 = vcombine.high %v697, %v697
    %v702 = vcombine.high %v31, %v31
    %v704 = vunpack.c.l.s4 1966171168
    %v705 = vunpack.c.0.s8 %v704
    %v706 = vlaneseq
    %v707 = vshrl.u32 %v706, 7
    %v708 = vsub.s32 %v705, %v707
    %v709 = vrot.slane %v31, %v708
    %v711 = vunpack.c.l.s4 1966171168
    %v712 = vunpack.c.0.s8 %v711
    %v713 = vlaneseq
    %v714 = vshrl.u32 %v713, 7
    %v715 = vsub.s32 %v712, %v714
    %v716 = vrot.slane %v702, %v715
    %v717 = vcombine.high %v709, %v709
    %v718 = vcombine.high %v716, %v716
    %v720 = vunpack.c.l.s4 1966171168
    %v721 = vunpack.c.0.s8 %v720
    %v722 = vlaneseq
    %v723 = vshrl.u32 %v722, 7
    %v724 = vsub.s32 %v721, %v723
    %v725 = vrot.slane %v709, %v724
    %v727 = vunpack.c.l.s4 1966171168
    %v728 = vunpack.c.0.s8 %v727
    %v729 = vlaneseq
    %v730 = vshrl.u32 %v729, 7
    %v731 = vsub.s32 %v728, %v730
    %v732 = vrot.slane %v716, %v731
    %v734 = vunpack.c.l.s4 1966171168
    %v735 = vunpack.c.0.s8 %v734
    %v736 = vlaneseq
    %v737 = vshrl.u32 %v736, 7
    %v738 = vsub.s32 %v735, %v737
    %v739 = vrot.slane %v717, %v738
    %v741 = vunpack.c.l.s4 1966171168
    %v742 = vunpack.c.0.s8 %v741
    %v743 = vlaneseq
    %v744 = vshrl.u32 %v743, 7
    %v745 = vsub.s32 %v742, %v744
    %v746 = vrot.slane %v718, %v745
    %v747 = vcombine.high %v725, %v725
    %v748 = vcombine.high %v732, %v732
    %v749 = vcombine.high %v739, %v739
    %v750 = vcombine.high %v746, %v746
    %v1295 = vunpack.c.l.b16 %v32
    %v1296 = vunpack.c.l.b16 %v33
    %v1297 = vunpack.c.l.b16 %v34
    %v1298 = vunpack.c.l.b16 %v35
    %v1299 = vunpack.c.l.b16 %v36
    %v1300 = vunpack.c.l.b16 %v37
    %v1301 = vunpack.c.l.b16 %v38
    %v1302 = vunpack.c.l.b16 %v39
    %v1303 = vunpack.c.l.b16 %v40
    %v1304 = vunpack.c.l.b16 %v41
    %v1305 = vunpack.c.l.b16 %v42
    %v1306 = vunpack.c.l.b16 %v43
    %v1307 = vunpack.c.l.b16 %v44
    %v1308 = vunpack.c.l.b16 %v45
    %v1309 = vunpack.c.l.b16 %v46
    %v1310 = vunpack.c.l.b16 %v47
    %v1311 = vunpack.c.l.b16 %v48
    %v1312 = vunpack.c.l.b16 %v49
    %v1313 = vunpack.c.l.b16 %v50
    %v1314 = vunpack.c.l.b16 %v51
    %v1315 = vunpack.c.l.b16 %v52
    %v1316 = vunpack.c.l.b16 %v53
    %v1317 = vunpack.c.l.b16 %v54
    %v1318 = vunpack.c.l.b16 %v55
    %v1319 = vunpack.c.l.b16 %v56
    %v1320 = vunpack.c.l.b16 %v57
    %v1321 = vunpack.c.l.b16 %v58
    %v1322 = vunpack.c.l.b16 %v59
    %v1323 = vunpack.c.l.b16 %v60
    %v1324 = vunpack.c.l.b16 %v61
    %v1325 = vunpack.c.l.b16 %v62
    %v1326 = vunpack.c.l.b16 %v63
    %v1327 = vunpack.c.l.b16 %v64
    %v1328 = vunpack.c.l.b16 %v65
    %v1329 = vunpack.c.l.b16 %v66
    %v1330 = vunpack.c.l.b16 %v67
    %v1331 = vunpack.c.l.b16 %v68
    %v1332 = vunpack.c.l.b16 %v69
    %v1333 = vunpack.c.l.b16 %v70
    %v1334 = vunpack.c.l.b16 %v71
    %v1335 = vunpack.c.l.b16 %v72
    %v1336 = vunpack.c.l.b16 %v73
    %v1337 = vunpack.c.l.b16 %v74
    %v1338 = vunpack.c.l.b16 %v75
    %v1339 = vunpack.c.l.b16 %v76
    %v1340 = vunpack.c.l.b16 %v77
    %v1341 = vunpack.c.l.b16 %v78
    %v1342 = vunpack.c.l.b16 %v79
    %v1343 = vunpack.c.l.b16 %v80
    %v1344 = vunpack.c.l.b16 %v81
    %v1345 = vunpack.c.l.b16 %v82
    %v1346 = vunpack.c.l.b16 %v83
    %v1347 = vunpack.c.l.b16 %v84
    %v1348 = vunpack.c.l.b16 %v85
    %v1349 = vunpack.c.l.b16 %v86
    %v1350 = vunpack.c.l.b16 %v87
    %v1351 = vunpack.c.l.b16 %v88
    %v1352 = vunpack.c.l.b16 %v89
    %v1353 = vunpack.c.l.b16 %v90
    %v1354 = vunpack.c.l.b16 %v91
    %v1355 = vunpack.c.l.b16 %v92
    %v1356 = vunpack.c.l.b16 %v93
    %v1357 = vunpack.c.l.b16 %v94
    %v1358 = vunpack.c.l.b16 %v95
    %v1359 = vunpack.c.l.b16 %v96
    %v1360 = vunpack.c.l.b16 %v97
    %v1361 = vunpack.c.l.b16 %v98
    %v1362 = vunpack.c.l.b16 %v99
    %v1363 = vunpack.c.l.b16 %v100
    %v1364 = vunpack.c.l.b16 %v101
    %v1365 = vunpack.c.l.b16 %v102
    %v1366 = vunpack.c.l.b16 %v103
    %v1367 = vunpack.c.l.b16 %v104
    %v1368 = vunpack.c.l.b16 %v105
    %v1369 = vunpack.c.l.b16 %v106
    %v1370 = vunpack.c.l.b16 %v107
    %v1371 = vunpack.c.l.b16 %v108
    %v1372 = vunpack.c.l.b16 %v109
    %v1373 = vunpack.c.l.b16 %v110
    %v1374 = vunpack.c.l.b16 %v111
    %v1375 = vunpack.c.l.b16 %v112
    %v1376 = vunpack.c.l.b16 %v113
    %v1377 = vunpack.c.l.b16 %v114
    %v1378 = vunpack.c.l.b16 %v115
    %v1379 = vunpack.c.l.b16 %v116
    %v1380 = vunpack.c.l.b16 %v117
    %v1381 = vunpack.c.l.b16 %v118
    %v1382 = vunpack.c.l.b16 %v119
    %v1383 = vunpack.c.l.b16 %v120
    %v1384 = vunpack.c.l.b16 %v121
    %v1385 = vunpack.c.l.b16 %v122
    %v1386 = vunpack.c.l.b16 %v123
    %v1387 = vunpack.c.l.b16 %v124
    %v1388 = vunpack.c.l.b16 %v125
    %v1389 = vunpack.c.l.b16 %v126
    %v1390 = vunpack.c.l.b16 %v127
    %v1391 = vunpack.c.l.b16 %v128
    %v1392 = vunpack.c.l.b16 %v129
    %v1393 = vunpack.c.l.b16 %v130
    %v1394 = vunpack.c.l.b16 %v131
    %v1395 = vunpack.c.l.b16 %v132
    %v1396 = vunpack.c.l.b16 %v133
    %v1397 = vunpack.c.l.b16 %v134
    %v1398 = vunpack.c.l.b16 %v135
    %v1399 = vunpack.c.l.b16 %v136
    %v1400 = vunpack.c.l.b16 %v137
    %v1401 = vunpack.c.l.b16 %v138
    %v1402 = vunpack.c.l.b16 %v139
    %v1403 = vunpack.c.l.b16 %v140
    %v1404 = vunpack.c.l.b16 %v141
    %v1405 = vunpack.c.l.b16 %v142
    %v1406 = vunpack.c.l.b16 %v143
    %v1407 = vunpack.c.l.b16 %v144
    %v1408 = vunpack.c.l.b16 %v145
    %v1409 = vunpack.c.l.b16 %v146
    %v1410 = vunpack.c.l.b16 %v147
    %v1411 = vunpack.c.l.b16 %v148
    %v1412 = vunpack.c.l.b16 %v149
    %v1413 = vunpack.c.l.b16 %v150
    %v1414 = vunpack.c.l.b16 %v151
    %v1415 = vunpack.c.l.b16 %v152
    %v1416 = vunpack.c.l.b16 %v153
    %v1417 = vunpack.c.l.b16 %v154
    %v1418 = vunpack.c.l.b16 %v155
    %v1419 = vunpack.c.l.b16 %v156
    %v1420 = vunpack.c.l.b16 %v157
    %v1421 = vunpack.c.l.b16 %v158
    %v1422 = vunpack.c.l.b16 %v159
    %v1423 = vunpack.c.l.b16 %v160
    %v1424 = vunpack.c.l.b16 %v161
    %v1425 = vunpack.c.l.b16 %v162
    %v1426 = vunpack.c.l.b16 %v163
    %v1427 = vunpack.c.l.b16 %v164
    %v1428 = vunpack.c.l.b16 %v165
    %v1429 = vunpack.c.l.b16 %v166
    %v1430 = vunpack.c.l.b16 %v167
    %v1431 = vunpack.c.l.b16 %v168
    %v1432 = vunpack.c.l.b16 %v169
    %v1433 = vunpack.c.l.b16 %v170
    %v1434 = vunpack.c.l.b16 %v171
    %v1435 = vunpack.c.l.b16 %v172
    %v1436 = vunpack.c.l.b16 %v173
    %v1437 = vunpack.c.l.b16 %v174
    %v1438 = vunpack.c.l.b16 %v175
    %v1439 = vunpack.c.l.b16 %v176
    %v1440 = vunpack.c.l.b16 %v177
    %v1441 = vunpack.c.l.b16 %v178
    %v1442 = vunpack.c.l.b16 %v179
    %v1443 = vunpack.c.l.b16 %v180
    %v1444 = vunpack.c.l.b16 %v181
    %v1445 = vunpack.c.l.b16 %v182
    %v1446 = vunpack.c.l.b16 %v183
    %v1447 = vunpack.c.l.b16 %v184
    %v1448 = vunpack.c.l.b16 %v185
    %v1449 = vunpack.c.l.b16 %v186
    %v1450 = vunpack.c.l.b16 %v187
    %v1451 = vunpack.c.l.b16 %v188
    %v1452 = vunpack.c.l.b16 %v189
    %v1453 = vunpack.c.l.b16 %v190
    %v1454 = vunpack.c.l.b16 %v191
    %v1455 = vunpack.c.l.b16 %v192
    %v1456 = vunpack.c.l.b16 %v193
    %v1457 = vunpack.c.l.b16 %v194
    %v1458 = vunpack.c.l.b16 %v195
    %v1459 = vunpack.c.l.b16 %v196
    %v1460 = vunpack.c.l.b16 %v197
    %v1461 = vunpack.c.l.b16 %v198
    %v1462 = vunpack.c.l.b16 %v199
    %v1463 = vunpack.c.l.b16 %v200
    %v1464 = vunpack.c.l.b16 %v201
    %v1465 = vunpack.c.l.b16 %v202
    %v1466 = vunpack.c.l.b16 %v203
    %v1467 = vunpack.c.l.b16 %v204
    %v1468 = vunpack.c.l.b16 %v205
    %v1469 = vunpack.c.l.b16 %v206
    %v1470 = vunpack.c.l.b16 %v207
    %v1471 = vunpack.c.l.b16 %v208
    %v1472 = vunpack.c.l.b16 %v209
    %v1473 = vunpack.c.l.b16 %v210
    %v1474 = vunpack.c.l.b16 %v211
    %v1475 = vunpack.c.l.b16 %v212
    %v1476 = vunpack.c.l.b16 %v213
    %v1477 = vunpack.c.l.b16 %v214
    %v1478 = vunpack.c.l.b16 %v215
    %v1479 = vunpack.c.l.b16 %v216
    %v1480 = vunpack.c.l.b16 %v217
    %v1481 = vunpack.c.l.b16 %v218
    %v1482 = vunpack.c.l.b16 %v219
    %v1483 = vunpack.c.l.b16 %v220
    %v1484 = vunpack.c.l.b16 %v221
    %v1485 = vunpack.c.l.b16 %v222
    %v1486 = vunpack.c.l.b16 %v223
    %v1487 = vunpack.c.l.b16 %v224
    %v1488 = vunpack.c.l.b16 %v225
    %v1489 = vunpack.c.l.b16 %v226
    %v1490 = vunpack.c.l.b16 %v227
    %v1491 = vunpack.c.l.b16 %v228
    %v1492 = vunpack.c.l.b16 %v229
    %v1493 = vunpack.c.l.b16 %v230
    %v1494 = vunpack.c.l.b16 %v231
    %v1495 = vunpack.c.l.b16 %v232
    %v1496 = vunpack.c.l.b16 %v233
    %v1497 = vunpack.c.l.b16 %v234
    %v1498 = vunpack.c.l.b16 %v235
    %v1499 = vunpack.c.l.b16 %v236
    %v1500 = vunpack.c.l.b16 %v237
    %v1501 = vunpack.c.l.b16 %v238
    %v1502 = vunpack.c.l.b16 %v239
    %v1503 = vunpack.c.l.b16 %v240
    %v1504 = vunpack.c.l.b16 %v241
    %v1505 = vunpack.c.l.b16 %v242
    %v1506 = vunpack.c.l.b16 %v243
    %v1507 = vunpack.c.l.b16 %v244
    %v1508 = vunpack.c.l.b16 %v245
    %v1509 = vunpack.c.l.b16 %v246
    %v1510 = vunpack.c.l.b16 %v247
    %v1511 = vunpack.c.l.b16 %v248
    %v1512 = vunpack.c.l.b16 %v249
    %v1513 = vunpack.c.l.b16 %v250
    %v1514 = vunpack.c.l.b16 %v251
    %v1515 = vunpack.c.l.b16 %v252
    %v1516 = vunpack.c.l.b16 %v253
    %v1517 = vunpack.c.l.b16 %v254
    %v1518 = vunpack.c.l.b16 %v255
    %v1519 = vunpack.c.l.b16 %v256
    %v1520 = vunpack.c.l.b16 %v257
    %v1521 = vunpack.c.l.b16 %v258
    %v1522 = vunpack.c.l.b16 %v259
    %v1523 = vunpack.c.l.b16 %v260
    %v1524 = vunpack.c.l.b16 %v261
    %v1525 = vunpack.c.l.b16 %v262
    %v1526 = vunpack.c.l.b16 %v263
    %v1527 = vunpack.c.l.b16 %v264
    %v1528 = vunpack.c.l.b16 %v265
    %v1529 = vunpack.c.l.b16 %v266
    %v1530 = vunpack.c.l.b16 %v267
    %v1531 = vunpack.c.l.b16 %v268
    %v1532 = vunpack.c.l.b16 %v269
    %v1533 = vunpack.c.l.b16 %v270
    %v1534 = vunpack.c.l.b16 %v271
    %v1535 = vunpack.c.l.b16 %v272
    %v1536 = vunpack.c.l.b16 %v273
    %v1537 = vunpack.c.l.b16 %v274
    %v1538 = vunpack.c.l.b16 %v275
    %v1539 = vunpack.c.l.b16 %v276
    %v1540 = vunpack.c.l.b16 %v277
    %v1541 = vunpack.c.l.b16 %v278
    %v1542 = vunpack.c.l.b16 %v279
    %v1543 = vunpack.c.l.b16 %v280
    %v1544 = vunpack.c.l.b16 %v281
    %v1545 = vunpack.c.l.b16 %v282
    %v1546 = vunpack.c.l.b16 %v283
    %v1547 = vunpack.c.l.b16 %v284
    %v1548 = vunpack.c.l.b16 %v285
    %v1549 = vunpack.c.l.b16 %v286
    %v1550 = vunpack.c.l.b16 %v287
    %v1551 = vunpack.c.l.b16 %v288
    %v1552 = vunpack.c.l.b16 %v289
    %v1553 = vunpack.c.l.b16 %v290
    %v1554 = vunpack.c.l.b16 %v291
    %v1555 = vunpack.c.l.b16 %v292
    %v1556 = vunpack.c.l.b16 %v293
    %v1557 = vunpack.c.l.b16 %v294
    %v1558 = vunpack.c.l.b16 %v295
    %v1559 = vunpack.c.l.b16 %v296
    %v1560 = vunpack.c.l.b16 %v297
    %v1561 = vunpack.c.l.b16 %v298
    %v1562 = vunpack.c.l.b16 %v299
    %v1563 = vunpack.c.l.b16 %v300
    %v1564 = vunpack.c.l.b16 %v301
    %v1565 = vunpack.c.l.b16 %v302
    %v1566 = vunpack.c.l.b16 %v303
    %v1567 = vunpack.c.l.b16 %v304
    %v1568 = vunpack.c.l.b16 %v305
    %v1569 = vunpack.c.l.b16 %v306
    %v1570 = vunpack.c.l.b16 %v307
    %v1571 = vunpack.c.l.b16 %v308
    %v1572 = vunpack.c.l.b16 %v309
    %v1573 = vunpack.c.l.b16 %v310
    %v1574 = vunpack.c.l.b16 %v311
    %v1575 = vunpack.c.l.b16 %v312
    %v1576 = vunpack.c.l.b16 %v313
    %v1577 = vunpack.c.l.b16 %v314
    %v1578 = vunpack.c.l.b16 %v315
    %v1579 = vunpack.c.l.b16 %v316
    %v1580 = vunpack.c.l.b16 %v317
    %v1581 = vunpack.c.l.b16 %v318
    %v1582 = vunpack.c.l.b16 %v319
    %v1583 = vunpack.c.l.b16 %v320
    %v1584 = vunpack.c.l.b16 %v321
    %v1585 = vunpack.c.l.b16 %v322
    %v1586 = vunpack.c.l.b16 %v323
    %v1587 = vunpack.c.l.b16 %v324
    %v1588 = vunpack.c.l.b16 %v325
    %v1589 = vunpack.c.l.b16 %v326
    %v1590 = vunpack.c.l.b16 %v327
    %v1591 = vunpack.c.l.b16 %v328
    %v1592 = vunpack.c.l.b16 %v329
    %v1593 = vunpack.c.l.b16 %v330
    %v1594 = vunpack.c.l.b16 %v331
    %v1595 = vunpack.c.l.b16 %v332
    %v1596 = vunpack.c.l.b16 %v333
    %v1597 = vunpack.c.l.b16 %v334
    %v1598 = vunpack.c.l.b16 %v335
    %v1599 = vunpack.c.l.b16 %v336
    %v1600 = vunpack.c.l.b16 %v337
    %v1601 = vunpack.c.l.b16 %v338
    %v1602 = vunpack.c.l.b16 %v339
    %v1603 = vunpack.c.l.b16 %v340
    %v1604 = vunpack.c.l.b16 %v341
    %v1605 = vunpack.c.l.b16 %v342
    %v1606 = vunpack.c.l.b16 %v343
    %v1607 = vunpack.c.l.b16 %v344
    %v1608 = vunpack.c.l.b16 %v345
    %v1609 = vunpack.c.l.b16 %v346
    %v1610 = vunpack.c.l.b16 %v347
    %v1611 = vunpack.c.l.b16 %v348
    %v1612 = vunpack.c.l.b16 %v349
    %v1613 = vunpack.c.l.b16 %v350
    %v1614 = vunpack.c.l.b16 %v351
    %v1615 = vunpack.c.l.b16 %v352
    %v1616 = vunpack.c.l.b16 %v353
    %v1617 = vunpack.c.l.b16 %v354
    %v1618 = vunpack.c.l.b16 %v355
    %v1619 = vunpack.c.l.b16 %v356
    %v1620 = vunpack.c.l.b16 %v357
    %v1621 = vunpack.c.l.b16 %v358
    %v1622 = vunpack.c.l.b16 %v359
    %v1623 = vunpack.c.l.b16 %v360
    %v1624 = vunpack.c.l.b16 %v361
    %v1625 = vunpack.c.l.b16 %v362
    %v1626 = vunpack.c.l.b16 %v363
    %v1627 = vunpack.c.l.b16 %v364
    %v1628 = vunpack.c.l.b16 %v365
    %v1629 = vunpack.c.l.b16 %v366
    %v1630 = vunpack.c.l.b16 %v367
    %v1631 = vunpack.c.l.b16 %v368
    %v1632 = vunpack.c.l.b16 %v369
    %v1633 = vunpack.c.l.b16 %v370
    %v1634 = vunpack.c.l.b16 %v371
    %v1635 = vunpack.c.l.b16 %v372
    %v1636 = vunpack.c.l.b16 %v373
    %v1637 = vunpack.c.l.b16 %v374
    %v1638 = vunpack.c.l.b16 %v375
    %v1639 = vunpack.c.l.b16 %v376
    %v1640 = vunpack.c.l.b16 %v377
    %v1641 = vunpack.c.l.b16 %v378
    %v1642 = vunpack.c.l.b16 %v379
    %v1643 = vunpack.c.l.b16 %v380
    %v1644 = vunpack.c.l.b16 %v381
    %v1645 = vunpack.c.l.b16 %v382
    %v1646 = vunpack.c.l.b16 %v383
    %v1647 = vunpack.c.l.b16 %v384
    %v1648 = vunpack.c.l.b16 %v385
    %v1649 = vunpack.c.l.b16 %v386
    %v1650 = vunpack.c.l.b16 %v387
    %v1651 = vunpack.c.l.b16 %v388
    %v1652 = vunpack.c.l.b16 %v389
    %v1653 = vunpack.c.l.b16 %v390
    %v1654 = vunpack.c.l.b16 %v391
    %v1655 = vunpack.c.l.b16 %v392
    %v1656 = vunpack.c.l.b16 %v393
    %v1657 = vunpack.c.l.b16 %v394
    %v1658 = vunpack.c.l.b16 %v395
    %v1659 = vunpack.c.l.b16 %v396
    %v1660 = vunpack.c.l.b16 %v397
    %v1661 = vunpack.c.l.b16 %v398
    %v1662 = vunpack.c.l.b16 %v399
    %v1663 = vunpack.c.l.b16 %v400
    %v1664 = vunpack.c.l.b16 %v401
    %v1665 = vunpack.c.l.b16 %v402
    %v1666 = vunpack.c.l.b16 %v403
    %v1667 = vunpack.c.l.b16 %v404
    %v1668 = vunpack.c.l.b16 %v405
    %v1669 = vunpack.c.l.b16 %v406
    %v1670 = vunpack.c.l.b16 %v407
    %v1671 = vunpack.c.l.b16 %v408
    %v1672 = vunpack.c.l.b16 %v409
    %v1673 = vunpack.c.l.b16 %v410
    %v1674 = vunpack.c.l.b16 %v411
    %v1675 = vunpack.c.l.b16 %v412
    %v1676 = vunpack.c.l.b16 %v413
    %v1677 = vunpack.c.l.b16 %v414
    %v1678 = vunpack.c.l.b16 %v415
    %v1679 = vunpack.c.l.b16 %v416
    %v1680 = vunpack.c.l.b16 %v417
    %v1681 = vunpack.c.l.b16 %v418
    %v1682 = vunpack.c.l.b16 %v419
    %v1683 = vunpack.c.l.b16 %v420
    %v1684 = vunpack.c.l.b16 %v421
    %v1685 = vunpack.c.l.b16 %v422
    %v1686 = vunpack.c.l.b16 %v423
    %v1687 = vunpack.c.l.b16 %v424
    %v1688 = vunpack.c.l.b16 %v425
    %v1689 = vunpack.c.l.b16 %v426
    %v1690 = vunpack.c.l.b16 %v427
    %v1691 = vunpack.c.l.b16 %v428
    %v1692 = vunpack.c.l.b16 %v429
    %v1693 = vunpack.c.l.b16 %v430
    %v1694 = vunpack.c.l.b16 %v431
    %v1695 = vunpack.c.l.b16 %v432
    %v1696 = vunpack.c.l.b16 %v433
    %v1697 = vunpack.c.l.b16 %v434
    %v1698 = vunpack.c.l.b16 %v435
    %v1699 = vunpack.c.l.b16 %v436
    %v1700 = vunpack.c.l.b16 %v437
    %v1701 = vunpack.c.l.b16 %v438
    %v1702 = vunpack.c.l.b16 %v439
    %v1703 = vunpack.c.l.b16 %v440
    %v1704 = vunpack.c.l.b16 %v441
    %v1705 = vunpack.c.l.b16 %v442
    %v1706 = vunpack.c.l.b16 %v443
    %v1707 = vunpack.c.l.b16 %v444
    %v1708 = vunpack.c.l.b16 %v445
    %v1709 = vunpack.c.l.b16 %v446
    %v1710 = vunpack.c.l.b16 %v447
    %v1711 = vunpack.c.l.b16 %v448
    %v1712 = vunpack.c.l.b16 %v449
    %v1713 = vunpack.c.l.b16 %v450
    %v1714 = vunpack.c.l.b16 %v451
    %v1715 = vunpack.c.l.b16 %v452
    %v1716 = vunpack.c.l.b16 %v453
    %v1717 = vunpack.c.l.b16 %v454
    %v1718 = vunpack.c.l.b16 %v455
    %v1719 = vunpack.c.l.b16 %v456
    %v1720 = vunpack.c.l.b16 %v457
    %v1721 = vunpack.c.l.b16 %v458
    %v1722 = vunpack.c.l.b16 %v459
    %v1723 = vunpack.c.l.b16 %v460
    %v1724 = vunpack.c.l.b16 %v461
    %v1725 = vunpack.c.l.b16 %v462
    %v1726 = vunpack.c.l.b16 %v463
    %v1727 = vunpack.c.l.b16 %v464
    %v1728 = vunpack.c.l.b16 %v465
    %v1729 = vunpack.c.l.b16 %v466
    %v1730 = vunpack.c.l.b16 %v467
    %v1731 = vunpack.c.l.b16 %v468
    %v1732 = vunpack.c.l.b16 %v469
    %v1733 = vunpack.c.l.b16 %v470
    %v1734 = vunpack.c.l.b16 %v471
    %v1735 = vunpack.c.l.b16 %v472
    %v1736 = vunpack.c.l.b16 %v473
    %v1737 = vunpack.c.l.b16 %v474
    %v1738 = vunpack.c.l.b16 %v475
    %v1739 = vunpack.c.l.b16 %v476
    %v1740 = vunpack.c.l.b16 %v477
    %v1741 = vunpack.c.l.b16 %v478
    %v1742 = vunpack.c.l.b16 %v479
    %v1743 = vunpack.c.l.b16 %v480
    %v1744 = vunpack.c.l.b16 %v481
    %v1745 = vunpack.c.l.b16 %v482
    %v1746 = vunpack.c.l.b16 %v483
    %v1747 = vunpack.c.l.b16 %v484
    %v1748 = vunpack.c.l.b16 %v485
    %v1749 = vunpack.c.l.b16 %v486
    %v1750 = vunpack.c.l.b16 %v487
    %v1751 = vunpack.c.l.b16 %v488
    %v1752 = vunpack.c.l.b16 %v489
    %v1753 = vunpack.c.l.b16 %v490
    %v1754 = vunpack.c.l.b16 %v491
    %v1755 = vunpack.c.l.b16 %v492
    %v1756 = vunpack.c.l.b16 %v493
    %v1757 = vunpack.c.l.b16 %v494
    %v1758 = vunpack.c.l.b16 %v495
    %v1759 = vunpack.c.l.b16 %v496
    %v1760 = vunpack.c.l.b16 %v497
    %v1761 = vunpack.c.l.b16 %v498
    %v1762 = vunpack.c.l.b16 %v499
    %v1763 = vunpack.c.l.b16 %v500
    %v1764 = vunpack.c.l.b16 %v501
    %v1765 = vunpack.c.l.b16 %v502
    %v1766 = vunpack.c.l.b16 %v503
    %v1767 = vunpack.c.l.b16 %v504
    %v1768 = vunpack.c.l.b16 %v505
    %v1769 = vunpack.c.l.b16 %v506
    %v1770 = vunpack.c.l.b16 %v507
    %v1771 = vunpack.c.l.b16 %v508
    %v1772 = vunpack.c.l.b16 %v509
    %v1773 = vunpack.c.l.b16 %v510
    %v1774 = vunpack.c.l.b16 %v511
    %v1775 = vunpack.c.l.b16 %v512
    %v1776 = vunpack.c.l.b16 %v513
    %v1777 = vunpack.c.l.b16 %v514
    %v1778 = vunpack.c.l.b16 %v515
    %v1779 = vunpack.c.l.b16 %v516
    %v1780 = vunpack.c.l.b16 %v517
    %v1781 = vunpack.c.l.b16 %v518
    %v1782 = vunpack.c.l.b16 %v519
    %v1783 = vunpack.c.l.b16 %v520
    %v1784 = vunpack.c.l.b16 %v521
    %v1785 = vunpack.c.l.b16 %v522
    %v1786 = vunpack.c.l.b16 %v523
    %v1787 = vunpack.c.l.b16 %v524
    %v1788 = vunpack.c.l.b16 %v525
    %v1789 = vunpack.c.l.b16 %v526
    %v1790 = vunpack.c.l.b16 %v527
    %v1791 = vunpack.c.l.b16 %v528
    %v1792 = vunpack.c.l.b16 %v529
    %v1793 = vunpack.c.l.b16 %v530
    %v1794 = vunpack.c.l.b16 %v531
    %v1795 = vunpack.c.l.b16 %v532
    %v1796 = vunpack.c.l.b16 %v533
    %v1797 = vunpack.c.l.b16 %v534
    %v1798 = vunpack.c.l.b16 %v535
    %v1799 = vunpack.c.l.b16 %v536
    %v1800 = vunpack.c.l.b16 %v537
    %v1801 = vunpack.c.l.b16 %v538
    %v1802 = vunpack.c.l.b16 %v539
    %v1803 = vunpack.c.l.b16 %v540
    %v1804 = vunpack.c.l.b16 %v541
    %v1805 = vunpack.c.l.b16 %v542
    %v1806 = vunpack.c.l.b16 %v543
    %v1807 = vpack.c.b16 %v1296, %v1295
    %v1808 = vpack.c.b16 %v1298, %v1297
    %v1809 = vpack.c.b16 %v1300, %v1299
    %v1810 = vpack.c.b16 %v1302, %v1301
    %v1811 = vpack.c.b16 %v1304, %v1303
    %v1812 = vpack.c.b16 %v1306, %v1305
    %v1813 = vpack.c.b16 %v1308, %v1307
    %v1814 = vpack.c.b16 %v1310, %v1309
    %v1815 = vpack.c.b16 %v1312, %v1311
    %v1816 = vpack.c.b16 %v1314, %v1313
    %v1817 = vpack.c.b16 %v1316, %v1315
    %v1818 = vpack.c.b16 %v1318, %v1317
    %v1819 = vpack.c.b16 %v1320, %v1319
    %v1820 = vpack.c.b16 %v1322, %v1321
    %v1821 = vpack.c.b16 %v1324, %v1323
    %v1822 = vpack.c.b16 %v1326, %v1325
    %v1823 = vpack.c.b16 %v1328, %v1327
    %v1824 = vpack.c.b16 %v1330, %v1329
    %v1825 = vpack.c.b16 %v1332, %v1331
    %v1826 = vpack.c.b16 %v1334, %v1333
    %v1827 = vpack.c.b16 %v1336, %v1335
    %v1828 = vpack.c.b16 %v1338, %v1337
    %v1829 = vpack.c.b16 %v1340, %v1339
    %v1830 = vpack.c.b16 %v1342, %v1341
    %v1831 = vpack.c.b16 %v1344, %v1343
    %v1832 = vpack.c.b16 %v1346, %v1345
    %v1833 = vpack.c.b16 %v1348, %v1347
    %v1834 = vpack.c.b16 %v1350, %v1349
    %v1835 = vpack.c.b16 %v1352, %v1351
    %v1836 = vpack.c.b16 %v1354, %v1353
    %v1837 = vpack.c.b16 %v1356, %v1355
    %v1838 = vpack.c.b16 %v1358, %v1357
    %v1839 = vpack.c.b16 %v1360, %v1359
    %v1840 = vpack.c.b16 %v1362, %v1361
    %v1841 = vpack.c.b16 %v1364, %v1363
    %v1842 = vpack.c.b16 %v1366, %v1365
    %v1843 = vpack.c.b16 %v1368, %v1367
    %v1844 = vpack.c.b16 %v1370, %v1369
    %v1845 = vpack.c.b16 %v1372, %v1371
    %v1846 = vpack.c.b16 %v1374, %v1373
    %v1847 = vpack.c.b16 %v1376, %v1375
    %v1848 = vpack.c.b16 %v1378, %v1377
    %v1849 = vpack.c.b16 %v1380, %v1379
    %v1850 = vpack.c.b16 %v1382, %v1381
    %v1851 = vpack.c.b16 %v1384, %v1383
    %v1852 = vpack.c.b16 %v1386, %v1385
    %v1853 = vpack.c.b16 %v1388, %v1387
    %v1854 = vpack.c.b16 %v1390, %v1389
    %v1855 = vpack.c.b16 %v1392, %v1391
    %v1856 = vpack.c.b16 %v1394, %v1393
    %v1857 = vpack.c.b16 %v1396, %v1395
    %v1858 = vpack.c.b16 %v1398, %v1397
    %v1859 = vpack.c.b16 %v1400, %v1399
    %v1860 = vpack.c.b16 %v1402, %v1401
    %v1861 = vpack.c.b16 %v1404, %v1403
    %v1862 = vpack.c.b16 %v1406, %v1405
    %v1863 = vpack.c.b16 %v1408, %v1407
    %v1864 = vpack.c.b16 %v1410, %v1409
    %v1865 = vpack.c.b16 %v1412, %v1411
    %v1866 = vpack.c.b16 %v1414, %v1413
    %v1867 = vpack.c.b16 %v1416, %v1415
    %v1868 = vpack.c.b16 %v1418, %v1417
    %v1869 = vpack.c.b16 %v1420, %v1419
    %v1870 = vpack.c.b16 %v1422, %v1421
    %v1871 = vpack.c.b16 %v1424, %v1423
    %v1872 = vpack.c.b16 %v1426, %v1425
    %v1873 = vpack.c.b16 %v1428, %v1427
    %v1874 = vpack.c.b16 %v1430, %v1429
    %v1875 = vpack.c.b16 %v1432, %v1431
    %v1876 = vpack.c.b16 %v1434, %v1433
    %v1877 = vpack.c.b16 %v1436, %v1435
    %v1878 = vpack.c.b16 %v1438, %v1437
    %v1879 = vpack.c.b16 %v1440, %v1439
    %v1880 = vpack.c.b16 %v1442, %v1441
    %v1881 = vpack.c.b16 %v1444, %v1443
    %v1882 = vpack.c.b16 %v1446, %v1445
    %v1883 = vpack.c.b16 %v1448, %v1447
    %v1884 = vpack.c.b16 %v1450, %v1449
    %v1885 = vpack.c.b16 %v1452, %v1451
    %v1886 = vpack.c.b16 %v1454, %v1453
    %v1887 = vpack.c.b16 %v1456, %v1455
    %v1888 = vpack.c.b16 %v1458, %v1457
    %v1889 = vpack.c.b16 %v1460, %v1459
    %v1890 = vpack.c.b16 %v1462, %v1461
    %v1891 = vpack.c.b16 %v1464, %v1463
    %v1892 = vpack.c.b16 %v1466, %v1465
    %v1893 = vpack.c.b16 %v1468, %v1467
    %v1894 = vpack.c.b16 %v1470, %v1469
    %v1895 = vpack.c.b16 %v1472, %v1471
    %v1896 = vpack.c.b16 %v1474, %v1473
    %v1897 = vpack.c.b16 %v1476, %v1475
    %v1898 = vpack.c.b16 %v1478, %v1477
    %v1899 = vpack.c.b16 %v1480, %v1479
    %v1900 = vpack.c.b16 %v1482, %v1481
    %v1901 = vpack.c.b16 %v1484, %v1483
    %v1902 = vpack.c.b16 %v1486, %v1485
    %v1903 = vpack.c.b16 %v1488, %v1487
    %v1904 = vpack.c.b16 %v1490, %v1489
    %v1905 = vpack.c.b16 %v1492, %v1491
    %v1906 = vpack.c.b16 %v1494, %v1493
    %v1907 = vpack.c.b16 %v1496, %v1495
    %v1908 = vpack.c.b16 %v1498, %v1497
    %v1909 = vpack.c.b16 %v1500, %v1499
    %v1910 = vpack.c.b16 %v1502, %v1501
    %v1911 = vpack.c.b16 %v1504, %v1503
    %v1912 = vpack.c.b16 %v1506, %v1505
    %v1913 = vpack.c.b16 %v1508, %v1507
    %v1914 = vpack.c.b16 %v1510, %v1509
    %v1915 = vpack.c.b16 %v1512, %v1511
    %v1916 = vpack.c.b16 %v1514, %v1513
    %v1917 = vpack.c.b16 %v1516, %v1515
    %v1918 = vpack.c.b16 %v1518, %v1517
    %v1919 = vpack.c.b16 %v1520, %v1519
    %v1920 = vpack.c.b16 %v1522, %v1521
    %v1921 = vpack.c.b16 %v1524, %v1523
    %v1922 = vpack.c.b16 %v1526, %v1525
    %v1923 = vpack.c.b16 %v1528, %v1527
    %v1924 = vpack.c.b16 %v1530, %v1529
    %v1925 = vpack.c.b16 %v1532, %v1531
    %v1926 = vpack.c.b16 %v1534, %v1533
    %v1927 = vpack.c.b16 %v1536, %v1535
    %v1928 = vpack.c.b16 %v1538, %v1537
    %v1929 = vpack.c.b16 %v1540, %v1539
    %v1930 = vpack.c.b16 %v1542, %v1541
    %v1931 = vpack.c.b16 %v1544, %v1543
    %v1932 = vpack.c.b16 %v1546, %v1545
    %v1933 = vpack.c.b16 %v1548, %v1547
    %v1934 = vpack.c.b16 %v1550, %v1549
    %v1935 = vpack.c.b16 %v1552, %v1551
    %v1936 = vpack.c.b16 %v1554, %v1553
    %v1937 = vpack.c.b16 %v1556, %v1555
    %v1938 = vpack.c.b16 %v1558, %v1557
    %v1939 = vpack.c.b16 %v1560, %v1559
    %v1940 = vpack.c.b16 %v1562, %v1561
    %v1941 = vpack.c.b16 %v1564, %v1563
    %v1942 = vpack.c.b16 %v1566, %v1565
    %v1943 = vpack.c.b16 %v1568, %v1567
    %v1944 = vpack.c.b16 %v1570, %v1569
    %v1945 = vpack.c.b16 %v1572, %v1571
    %v1946 = vpack.c.b16 %v1574, %v1573
    %v1947 = vpack.c.b16 %v1576, %v1575
    %v1948 = vpack.c.b16 %v1578, %v1577
    %v1949 = vpack.c.b16 %v1580, %v1579
    %v1950 = vpack.c.b16 %v1582, %v1581
    %v1951 = vpack.c.b16 %v1584, %v1583
    %v1952 = vpack.c.b16 %v1586, %v1585
    %v1953 = vpack.c.b16 %v1588, %v1587
    %v1954 = vpack.c.b16 %v1590, %v1589
    %v1955 = vpack.c.b16 %v1592, %v1591
    %v1956 = vpack.c.b16 %v1594, %v1593
    %v1957 = vpack.c.b16 %v1596, %v1595
    %v1958 = vpack.c.b16 %v1598, %v1597
    %v1959 = vpack.c.b16 %v1600, %v1599
    %v1960 = vpack.c.b16 %v1602, %v1601
    %v1961 = vpack.c.b16 %v1604, %v1603
    %v1962 = vpack.c.b16 %v1606, %v1605
    %v1963 = vpack.c.b16 %v1608, %v1607
    %v1964 = vpack.c.b16 %v1610, %v1609
    %v1965 = vpack.c.b16 %v1612, %v1611
    %v1966 = vpack.c.b16 %v1614, %v1613
    %v1967 = vpack.c.b16 %v1616, %v1615
    %v1968 = vpack.c.b16 %v1618, %v1617
    %v1969 = vpack.c.b16 %v1620, %v1619
    %v1970 = vpack.c.b16 %v1622, %v1621
    %v1971 = vpack.c.b16 %v1624, %v1623
    %v1972 = vpack.c.b16 %v1626, %v1625
    %v1973 = vpack.c.b16 %v1628, %v1627
    %v1974 = vpack.c.b16 %v1630, %v1629
    %v1975 = vpack.c.b16 %v1632, %v1631
    %v1976 = vpack.c.b16 %v1634, %v1633
    %v1977 = vpack.c.b16 %v1636, %v1635
    %v1978 = vpack.c.b16 %v1638, %v1637
    %v1979 = vpack.c.b16 %v1640, %v1639
    %v1980 = vpack.c.b16 %v1642, %v1641
    %v1981 = vpack.c.b16 %v1644, %v1643
    %v1982 = vpack.c.b16 %v1646, %v1645
    %v1983 = vpack.c.b16 %v1648, %v1647
    %v1984 = vpack.c.b16 %v1650, %v1649
    %v1985 = vpack.c.b16 %v1652, %v1651
    %v1986 = vpack.c.b16 %v1654, %v1653
    %v1987 = vpack.c.b16 %v1656, %v1655
    %v1988 = vpack.c.b16 %v1658, %v1657
    %v1989 = vpack.c.b16 %v1660, %v1659
    %v1990 = vpack.c.b16 %v1662, %v1661
    %v1991 = vpack.c.b16 %v1664, %v1663
    %v1992 = vpack.c.b16 %v1666, %v1665
    %v1993 = vpack.c.b16 %v1668, %v1667
    %v1994 = vpack.c.b16 %v1670, %v1669
    %v1995 = vpack.c.b16 %v1672, %v1671
    %v1996 = vpack.c.b16 %v1674, %v1673
    %v1997 = vpack.c.b16 %v1676, %v1675
    %v1998 = vpack.c.b16 %v1678, %v1677
    %v1999 = vpack.c.b16 %v1680, %v1679
    %v2000 = vpack.c.b16 %v1682, %v1681
    %v2001 = vpack.c.b16 %v1684, %v1683
    %v2002 = vpack.c.b16 %v1686, %v1685
    %v2003 = vpack.c.b16 %v1688, %v1687
    %v2004 = vpack.c.b16 %v1690, %v1689
    %v2005 = vpack.c.b16 %v1692, %v1691
    %v2006 = vpack.c.b16 %v1694, %v1693
    %v2007 = vpack.c.b16 %v1696, %v1695
    %v2008 = vpack.c.b16 %v1698, %v1697
    %v2009 = vpack.c.b16 %v1700, %v1699
    %v2010 = vpack.c.b16 %v1702, %v1701
    %v2011 = vpack.c.b16 %v1704, %v1703
    %v2012 = vpack.c.b16 %v1706, %v1705
    %v2013 = vpack.c.b16 %v1708, %v1707
    %v2014 = vpack.c.b16 %v1710, %v1709
    %v2015 = vpack.c.b16 %v1712, %v1711
    %v2016 = vpack.c.b16 %v1714, %v1713
    %v2017 = vpack.c.b16 %v1716, %v1715
    %v2018 = vpack.c.b16 %v1718, %v1717
    %v2019 = vpack.c.b16 %v1720, %v1719
    %v2020 = vpack.c.b16 %v1722, %v1721
    %v2021 = vpack.c.b16 %v1724, %v1723
    %v2022 = vpack.c.b16 %v1726, %v1725
    %v2023 = vpack.c.b16 %v1728, %v1727
    %v2024 = vpack.c.b16 %v1730, %v1729
    %v2025 = vpack.c.b16 %v1732, %v1731
    %v2026 = vpack.c.b16 %v1734, %v1733
    %v2027 = vpack.c.b16 %v1736, %v1735
    %v2028 = vpack.c.b16 %v1738, %v1737
    %v2029 = vpack.c.b16 %v1740, %v1739
    %v2030 = vpack.c.b16 %v1742, %v1741
    %v2031 = vpack.c.b16 %v1744, %v1743
    %v2032 = vpack.c.b16 %v1746, %v1745
    %v2033 = vpack.c.b16 %v1748, %v1747
    %v2034 = vpack.c.b16 %v1750, %v1749
    %v2035 = vpack.c.b16 %v1752, %v1751
    %v2036 = vpack.c.b16 %v1754, %v1753
    %v2037 = vpack.c.b16 %v1756, %v1755
    %v2038 = vpack.c.b16 %v1758, %v1757
    %v2039 = vpack.c.b16 %v1760, %v1759
    %v2040 = vpack.c.b16 %v1762, %v1761
    %v2041 = vpack.c.b16 %v1764, %v1763
    %v2042 = vpack.c.b16 %v1766, %v1765
    %v2043 = vpack.c.b16 %v1768, %v1767
    %v2044 = vpack.c.b16 %v1770, %v1769
    %v2045 = vpack.c.b16 %v1772, %v1771
    %v2046 = vpack.c.b16 %v1774, %v1773
    %v2047 = vpack.c.b16 %v1776, %v1775
    %v2048 = vpack.c.b16 %v1778, %v1777
    %v2049 = vpack.c.b16 %v1780, %v1779
    %v2050 = vpack.c.b16 %v1782, %v1781
    %v2051 = vpack.c.b16 %v1784, %v1783
    %v2052 = vpack.c.b16 %v1786, %v1785
    %v2053 = vpack.c.b16 %v1788, %v1787
    %v2054 = vpack.c.b16 %v1790, %v1789
    %v2055 = vpack.c.b16 %v1792, %v1791
    %v2056 = vpack.c.b16 %v1794, %v1793
    %v2057 = vpack.c.b16 %v1796, %v1795
    %v2058 = vpack.c.b16 %v1798, %v1797
    %v2059 = vpack.c.b16 %v1800, %v1799
    %v2060 = vpack.c.b16 %v1802, %v1801
    %v2061 = vpack.c.b16 %v1804, %v1803
    %v2062 = vpack.c.b16 %v1806, %v1805
    %2319 = vmatprep.subr.bf16.mxu0 0
    %2320 = vmatpush1.bf16.msra.mxu0 %v1807
    %2321 = vmatprep.subr.bf16.mxu0 0
    %2322 = vmatpush1.bf16.msra.mxu0 %v1808
    %2323 = vmatprep.subr.bf16.mxu0 0
    %2324 = vmatpush1.bf16.msra.mxu0 %v1809
    %2325 = vmatprep.subr.bf16.mxu0 0
    %2326 = vmatpush1.bf16.msra.mxu0 %v1810
    %2327 = vmatprep.subr.bf16.mxu0 0
    %2328 = vmatpush1.bf16.msra.mxu0 %v1811
    %2329 = vmatprep.subr.bf16.mxu0 0
    %2330 = vmatpush1.bf16.msra.mxu0 %v1812
    %2331 = vmatprep.subr.bf16.mxu0 0
    %2332 = vmatpush1.bf16.msra.mxu0 %v1813
    %2333 = vmatprep.subr.bf16.mxu0 0
    %2334 = vmatpush1.bf16.msra.mxu0 %v1814
    %2335 = vmatprep.subr.bf16.mxu0 0
    %2336 = vmatpush1.bf16.msra.mxu0 %v1815
    %2337 = vmatprep.subr.bf16.mxu0 0
    %2338 = vmatpush1.bf16.msra.mxu0 %v1816
    %2339 = vmatprep.subr.bf16.mxu0 0
    %2340 = vmatpush1.bf16.msra.mxu0 %v1817
    %2341 = vmatprep.subr.bf16.mxu0 0
    %2342 = vmatpush1.bf16.msra.mxu0 %v1818
    %2343 = vmatprep.subr.bf16.mxu0 0
    %2344 = vmatpush1.bf16.msra.mxu0 %v1819
    %2345 = vmatprep.subr.bf16.mxu0 0
    %2346 = vmatpush1.bf16.msra.mxu0 %v1820
    %2347 = vmatprep.subr.bf16.mxu0 0
    %2348 = vmatpush1.bf16.msra.mxu0 %v1821
    %2349 = vmatprep.subr.bf16.mxu0 0
    %2350 = vmatpush1.bf16.msra.mxu0 %v1822
    %2351 = vmatprep.mubr.bf16.mxu0 %v592
    %2352 = vmatmul.mubr.bf16.gmra.mrb[0].mxu0 %v578
    %v2353 = vpop.f32.mrb[0].mxu0
    %v2354 = vadd.f32 %v549, %v2353
    %v2355 = vpop.f32.mrb[0].mxu0
    %v2356 = vpop.f32.mrb[0].mxu0
    %v2357 = vpop.f32.mrb[0].mxu0
    %2358 = vdwg.mxu0
    %2359 = vmatprep.subr.bf16.mxu0 0
    %2360 = vmatpush1.bf16.msra.mxu0 %v1823
    %2361 = vmatprep.subr.bf16.mxu0 0
    %2362 = vmatpush1.bf16.msra.mxu0 %v1824
    %2363 = vmatprep.subr.bf16.mxu0 0
    %2364 = vmatpush1.bf16.msra.mxu0 %v1825
    %2365 = vmatprep.subr.bf16.mxu0 0
    %2366 = vmatpush1.bf16.msra.mxu0 %v1826
    %2367 = vmatprep.subr.bf16.mxu0 0
    %2368 = vmatpush1.bf16.msra.mxu0 %v1827
    %2369 = vmatprep.subr.bf16.mxu0 0
    %2370 = vmatpush1.bf16.msra.mxu0 %v1828
    %2371 = vmatprep.subr.bf16.mxu0 0
    %2372 = vmatpush1.bf16.msra.mxu0 %v1829
    %2373 = vmatprep.subr.bf16.mxu0 0
    %2374 = vmatpush1.bf16.msra.mxu0 %v1830
    %2375 = vmatprep.subr.bf16.mxu0 0
    %2376 = vmatpush1.bf16.msra.mxu0 %v1831
    %2377 = vmatprep.subr.bf16.mxu0 0
    %2378 = vmatpush1.bf16.msra.mxu0 %v1832
    %2379 = vmatprep.subr.bf16.mxu0 0
    %2380 = vmatpush1.bf16.msra.mxu0 %v1833
    %2381 = vmatprep.subr.bf16.mxu0 0
    %2382 = vmatpush1.bf16.msra.mxu0 %v1834
    %2383 = vmatprep.subr.bf16.mxu0 0
    %2384 = vmatpush1.bf16.msra.mxu0 %v1835
    %2385 = vmatprep.subr.bf16.mxu0 0
    %2386 = vmatpush1.bf16.msra.mxu0 %v1836
    %2387 = vmatprep.subr.bf16.mxu0 0
    %2388 = vmatpush1.bf16.msra.mxu0 %v1837
    %2389 = vmatprep.subr.bf16.mxu0 0
    %2390 = vmatpush1.bf16.msra.mxu0 %v1838
    %2391 = vmatprep.mubr.bf16.mxu0 %v602
    %2392 = vmatmul.mubr.bf16.gmra.mrb[0].mxu0 %v600
    %v2393 = vpop.f32.mrb[0].mxu0
    %v2394 = vadd.f32 %v2354, %v2393
    %v2395 = vpop.f32.mrb[0].mxu0
    %v2396 = vpop.f32.mrb[0].mxu0
    %v2397 = vpop.f32.mrb[0].mxu0
    %2398 = vdwg.mxu0
    %2399 = vmatprep.subr.bf16.mxu0 0
    %2400 = vmatpush1.bf16.msra.mxu0 %v1839
    %2401 = vmatprep.subr.bf16.mxu0 0
    %2402 = vmatpush1.bf16.msra.mxu0 %v1840
    %2403 = vmatprep.subr.bf16.mxu0 0
    %2404 = vmatpush1.bf16.msra.mxu0 %v1841
    %2405 = vmatprep.subr.bf16.mxu0 0
    %2406 = vmatpush1.bf16.msra.mxu0 %v1842
    %2407 = vmatprep.subr.bf16.mxu0 0
    %2408 = vmatpush1.bf16.msra.mxu0 %v1843
    %2409 = vmatprep.subr.bf16.mxu0 0
    %2410 = vmatpush1.bf16.msra.mxu0 %v1844
    %2411 = vmatprep.subr.bf16.mxu0 0
    %2412 = vmatpush1.bf16.msra.mxu0 %v1845
    %2413 = vmatprep.subr.bf16.mxu0 0
    %2414 = vmatpush1.bf16.msra.mxu0 %v1846
    %2415 = vmatprep.subr.bf16.mxu0 0
    %2416 = vmatpush1.bf16.msra.mxu0 %v1847
    %2417 = vmatprep.subr.bf16.mxu0 0
    %2418 = vmatpush1.bf16.msra.mxu0 %v1848
    %2419 = vmatprep.subr.bf16.mxu0 0
    %2420 = vmatpush1.bf16.msra.mxu0 %v1849
    %2421 = vmatprep.subr.bf16.mxu0 0
    %2422 = vmatpush1.bf16.msra.mxu0 %v1850
    %2423 = vmatprep.subr.bf16.mxu0 0
    %2424 = vmatpush1.bf16.msra.mxu0 %v1851
    %2425 = vmatprep.subr.bf16.mxu0 0
    %2426 = vmatpush1.bf16.msra.mxu0 %v1852
    %2427 = vmatprep.subr.bf16.mxu0 0
    %2428 = vmatpush1.bf16.msra.mxu0 %v1853
    %2429 = vmatprep.subr.bf16.mxu0 0
    %2430 = vmatpush1.bf16.msra.mxu0 %v1854
    %2431 = vmatprep.mubr.bf16.mxu0 %v599
    %2432 = vmatmul.mubr.bf16.gmra.mrb[0].mxu0 %v585
    %v2433 = vpop.f32.mrb[0].mxu0
    %v2434 = vadd.f32 %v2394, %v2433
    %v2435 = vpop.f32.mrb[0].mxu0
    %v2436 = vpop.f32.mrb[0].mxu0
    %v2437 = vpop.f32.mrb[0].mxu0
    %2438 = vdwg.mxu0
    %2439 = vmatprep.subr.bf16.mxu0 0
    %2440 = vmatpush1.bf16.msra.mxu0 %v1855
    %2441 = vmatprep.subr.bf16.mxu0 0
    %2442 = vmatpush1.bf16.msra.mxu0 %v1856
    %2443 = vmatprep.subr.bf16.mxu0 0
    %2444 = vmatpush1.bf16.msra.mxu0 %v1857
    %2445 = vmatprep.subr.bf16.mxu0 0
    %2446 = vmatpush1.bf16.msra.mxu0 %v1858
    %2447 = vmatprep.subr.bf16.mxu0 0
    %2448 = vmatpush1.bf16.msra.mxu0 %v1859
    %2449 = vmatprep.subr.bf16.mxu0 0
    %2450 = vmatpush1.bf16.msra.mxu0 %v1860
    %2451 = vmatprep.subr.bf16.mxu0 0
    %2452 = vmatpush1.bf16.msra.mxu0 %v1861
    %2453 = vmatprep.subr.bf16.mxu0 0
    %2454 = vmatpush1.bf16.msra.mxu0 %v1862
    %2455 = vmatprep.subr.bf16.mxu0 0
    %2456 = vmatpush1.bf16.msra.mxu0 %v1863
    %2457 = vmatprep.subr.bf16.mxu0 0
    %2458 = vmatpush1.bf16.msra.mxu0 %v1864
    %2459 = vmatprep.subr.bf16.mxu0 0
    %2460 = vmatpush1.bf16.msra.mxu0 %v1865
    %2461 = vmatprep.subr.bf16.mxu0 0
    %2462 = vmatpush1.bf16.msra.mxu0 %v1866
    %2463 = vmatprep.subr.bf16.mxu0 0
    %2464 = vmatpush1.bf16.msra.mxu0 %v1867
    %2465 = vmatprep.subr.bf16.mxu0 0
    %2466 = vmatpush1.bf16.msra.mxu0 %v1868
    %2467 = vmatprep.subr.bf16.mxu0 0
    %2468 = vmatpush1.bf16.msra.mxu0 %v1869
    %2469 = vmatprep.subr.bf16.mxu0 0
    %2470 = vmatpush1.bf16.msra.mxu0 %v1870
    %2471 = vmatprep.mubr.bf16.mxu0 %v603
    %2472 = vmatmul.mubr.bf16.gmra.mrb[0].mxu0 %v601
    %v2473 = vpop.f32.mrb[0].mxu0
    %v2474 = vadd.f32 %v2434, %v2473
    %v2475 = vpop.f32.mrb[0].mxu0
    %v2476 = vpop.f32.mrb[0].mxu0
    %v2477 = vpop.f32.mrb[0].mxu0
    %2478 = vdwg.mxu0
    %2479 = vmatprep.subr.bf16.mxu0 0
    %2480 = vmatpush1.bf16.msra.mxu0 %v1871
    %2481 = vmatprep.subr.bf16.mxu0 0
    %2482 = vmatpush1.bf16.msra.mxu0 %v1872
    %2483 = vmatprep.subr.bf16.mxu0 0
    %2484 = vmatpush1.bf16.msra.mxu0 %v1873
    %2485 = vmatprep.subr.bf16.mxu0 0
    %2486 = vmatpush1.bf16.msra.mxu0 %v1874
    %2487 = vmatprep.subr.bf16.mxu0 0
    %2488 = vmatpush1.bf16.msra.mxu0 %v1875
    %2489 = vmatprep.subr.bf16.mxu0 0
    %2490 = vmatpush1.bf16.msra.mxu0 %v1876
    %2491 = vmatprep.subr.bf16.mxu0 0
    %2492 = vmatpush1.bf16.msra.mxu0 %v1877
    %2493 = vmatprep.subr.bf16.mxu0 0
    %2494 = vmatpush1.bf16.msra.mxu0 %v1878
    %2495 = vmatprep.subr.bf16.mxu0 0
    %2496 = vmatpush1.bf16.msra.mxu0 %v1879
    %2497 = vmatprep.subr.bf16.mxu0 0
    %2498 = vmatpush1.bf16.msra.mxu0 %v1880
    %2499 = vmatprep.subr.bf16.mxu0 0
    %2500 = vmatpush1.bf16.msra.mxu0 %v1881
    %2501 = vmatprep.subr.bf16.mxu0 0
    %2502 = vmatpush1.bf16.msra.mxu0 %v1882
    %2503 = vmatprep.subr.bf16.mxu0 0
    %2504 = vmatpush1.bf16.msra.mxu0 %v1883
    %2505 = vmatprep.subr.bf16.mxu0 0
    %2506 = vmatpush1.bf16.msra.mxu0 %v1884
    %2507 = vmatprep.subr.bf16.mxu0 0
    %2508 = vmatpush1.bf16.msra.mxu0 %v1885
    %2509 = vmatprep.subr.bf16.mxu0 0
    %2510 = vmatpush1.bf16.msra.mxu0 %v1886
    %2511 = vmatprep.mubr.bf16.mxu0 %v641
    %2512 = vmatmul.mubr.bf16.gmra.mrb[0].mxu0 %v627
    %v2513 = vpop.f32.mrb[0].mxu0
    %v2514 = vadd.f32 %v2474, %v2513
    %v2515 = vpop.f32.mrb[0].mxu0
    %v2516 = vpop.f32.mrb[0].mxu0
    %v2517 = vpop.f32.mrb[0].mxu0
    %2518 = vdwg.mxu0
    %2519 = vmatprep.subr.bf16.mxu0 0
    %2520 = vmatpush1.bf16.msra.mxu0 %v1887
    %2521 = vmatprep.subr.bf16.mxu0 0
    %2522 = vmatpush1.bf16.msra.mxu0 %v1888
    %2523 = vmatprep.subr.bf16.mxu0 0
    %2524 = vmatpush1.bf16.msra.mxu0 %v1889
    %2525 = vmatprep.subr.bf16.mxu0 0
    %2526 = vmatpush1.bf16.msra.mxu0 %v1890
    %2527 = vmatprep.subr.bf16.mxu0 0
    %2528 = vmatpush1.bf16.msra.mxu0 %v1891
    %2529 = vmatprep.subr.bf16.mxu0 0
    %2530 = vmatpush1.bf16.msra.mxu0 %v1892
    %2531 = vmatprep.subr.bf16.mxu0 0
    %2532 = vmatpush1.bf16.msra.mxu0 %v1893
    %2533 = vmatprep.subr.bf16.mxu0 0
    %2534 = vmatpush1.bf16.msra.mxu0 %v1894
    %2535 = vmatprep.subr.bf16.mxu0 0
    %2536 = vmatpush1.bf16.msra.mxu0 %v1895
    %2537 = vmatprep.subr.bf16.mxu0 0
    %2538 = vmatpush1.bf16.msra.mxu0 %v1896
    %2539 = vmatprep.subr.bf16.mxu0 0
    %2540 = vmatpush1.bf16.msra.mxu0 %v1897
    %2541 = vmatprep.subr.bf16.mxu0 0
    %2542 = vmatpush1.bf16.msra.mxu0 %v1898
    %2543 = vmatprep.subr.bf16.mxu0 0
    %2544 = vmatpush1.bf16.msra.mxu0 %v1899
    %2545 = vmatprep.subr.bf16.mxu0 0
    %2546 = vmatpush1.bf16.msra.mxu0 %v1900
    %2547 = vmatprep.subr.bf16.mxu0 0
    %2548 = vmatpush1.bf16.msra.mxu0 %v1901
    %2549 = vmatprep.subr.bf16.mxu0 0
    %2550 = vmatpush1.bf16.msra.mxu0 %v1902
    %2551 = vmatprep.mubr.bf16.mxu0 %v651
    %2552 = vmatmul.mubr.bf16.gmra.mrb[0].mxu0 %v649
    %v2553 = vpop.f32.mrb[0].mxu0
    %v2554 = vadd.f32 %v2514, %v2553
    %v2555 = vpop.f32.mrb[0].mxu0
    %v2556 = vpop.f32.mrb[0].mxu0
    %v2557 = vpop.f32.mrb[0].mxu0
    %2558 = vdwg.mxu0
    %2559 = vmatprep.subr.bf16.mxu0 0
    %2560 = vmatpush1.bf16.msra.mxu0 %v1903
    %2561 = vmatprep.subr.bf16.mxu0 0
    %2562 = vmatpush1.bf16.msra.mxu0 %v1904
    %2563 = vmatprep.subr.bf16.mxu0 0
    %2564 = vmatpush1.bf16.msra.mxu0 %v1905
    %2565 = vmatprep.subr.bf16.mxu0 0
    %2566 = vmatpush1.bf16.msra.mxu0 %v1906
    %2567 = vmatprep.subr.bf16.mxu0 0
    %2568 = vmatpush1.bf16.msra.mxu0 %v1907
    %2569 = vmatprep.subr.bf16.mxu0 0
    %2570 = vmatpush1.bf16.msra.mxu0 %v1908
    %2571 = vmatprep.subr.bf16.mxu0 0
    %2572 = vmatpush1.bf16.msra.mxu0 %v1909
    %2573 = vmatprep.subr.bf16.mxu0 0
    %2574 = vmatpush1.bf16.msra.mxu0 %v1910
    %2575 = vmatprep.subr.bf16.mxu0 0
    %2576 = vmatpush1.bf16.msra.mxu0 %v1911
    %2577 = vmatprep.subr.bf16.mxu0 0
    %2578 = vmatpush1.bf16.msra.mxu0 %v1912
    %2579 = vmatprep.subr.bf16.mxu0 0
    %2580 = vmatpush1.bf16.msra.mxu0 %v1913
    %2581 = vmatprep.subr.bf16.mxu0 0
    %2582 = vmatpush1.bf16.msra.mxu0 %v1914
    %2583 = vmatprep.subr.bf16.mxu0 0
    %2584 = vmatpush1.bf16.msra.mxu0 %v1915
    %2585 = vmatprep.subr.bf16.mxu0 0
    %2586 = vmatpush1.bf16.msra.mxu0 %v1916
    %2587 = vmatprep.subr.bf16.mxu0 0
    %2588 = vmatpush1.bf16.msra.mxu0 %v1917
    %2589 = vmatprep.subr.bf16.mxu0 0
    %2590 = vmatpush1.bf16.msra.mxu0 %v1918
    %2591 = vmatprep.mubr.bf16.mxu0 %v648
    %2592 = vmatmul.mubr.bf16.gmra.mrb[0].mxu0 %v634
    %v2593 = vpop.f32.mrb[0].mxu0
    %v2594 = vadd.f32 %v2554, %v2593
    %v2595 = vpop.f32.mrb[0].mxu0
    %v2596 = vpop.f32.mrb[0].mxu0
    %v2597 = vpop.f32.mrb[0].mxu0
    %2598 = vdwg.mxu0
    %2599 = vmatprep.subr.bf16.mxu0 0
    %2600 = vmatpush1.bf16.msra.mxu0 %v1919
    %2601 = vmatprep.subr.bf16.mxu0 0
    %2602 = vmatpush1.bf16.msra.mxu0 %v1920
    %2603 = vmatprep.subr.bf16.mxu0 0
    %2604 = vmatpush1.bf16.msra.mxu0 %v1921
    %2605 = vmatprep.subr.bf16.mxu0 0
    %2606 = vmatpush1.bf16.msra.mxu0 %v1922
    %2607 = vmatprep.subr.bf16.mxu0 0
    %2608 = vmatpush1.bf16.msra.mxu0 %v1923
    %2609 = vmatprep.subr.bf16.mxu0 0
    %2610 = vmatpush1.bf16.msra.mxu0 %v1924
    %2611 = vmatprep.subr.bf16.mxu0 0
    %2612 = vmatpush1.bf16.msra.mxu0 %v1925
    %2613 = vmatprep.subr.bf16.mxu0 0
    %2614 = vmatpush1.bf16.msra.mxu0 %v1926
    %2615 = vmatprep.subr.bf16.mxu0 0
    %2616 = vmatpush1.bf16.msra.mxu0 %v1927
    %2617 = vmatprep.subr.bf16.mxu0 0
    %2618 = vmatpush1.bf16.msra.mxu0 %v1928
    %2619 = vmatprep.subr.bf16.mxu0 0
    %2620 = vmatpush1.bf16.msra.mxu0 %v1929
    %2621 = vmatprep.subr.bf16.mxu0 0
    %2622 = vmatpush1.bf16.msra.mxu0 %v1930
    %2623 = vmatprep.subr.bf16.mxu0 0
    %2624 = vmatpush1.bf16.msra.mxu0 %v1931
    %2625 = vmatprep.subr.bf16.mxu0 0
    %2626 = vmatpush1.bf16.msra.mxu0 %v1932
    %2627 = vmatprep.subr.bf16.mxu0 0
    %2628 = vmatpush1.bf16.msra.mxu0 %v1933
    %2629 = vmatprep.subr.bf16.mxu0 0
    %2630 = vmatpush1.bf16.msra.mxu0 %v1934
    %2631 = vmatprep.mubr.bf16.mxu0 %v652
    %2632 = vmatmul.mubr.bf16.gmra.mrb[0].mxu0 %v650
    %v2633 = vpop.f32.mrb[0].mxu0
    %v2634 = vadd.f32 %v2594, %v2633
    %v2635 = vpop.f32.mrb[0].mxu0
    %v2636 = vpop.f32.mrb[0].mxu0
    %v2637 = vpop.f32.mrb[0].mxu0
    %2638 = vdwg.mxu0
    %2639 = vmatprep.subr.bf16.mxu0 0
    %2640 = vmatpush1.bf16.msra.mxu0 %v1935
    %2641 = vmatprep.subr.bf16.mxu0 0
    %2642 = vmatpush1.bf16.msra.mxu0 %v1936
    %2643 = vmatprep.subr.bf16.mxu0 0
    %2644 = vmatpush1.bf16.msra.mxu0 %v1937
    %2645 = vmatprep.subr.bf16.mxu0 0
    %2646 = vmatpush1.bf16.msra.mxu0 %v1938
    %2647 = vmatprep.subr.bf16.mxu0 0
    %2648 = vmatpush1.bf16.msra.mxu0 %v1939
    %2649 = vmatprep.subr.bf16.mxu0 0
    %2650 = vmatpush1.bf16.msra.mxu0 %v1940
    %2651 = vmatprep.subr.bf16.mxu0 0
    %2652 = vmatpush1.bf16.msra.mxu0 %v1941
    %2653 = vmatprep.subr.bf16.mxu0 0
    %2654 = vmatpush1.bf16.msra.mxu0 %v1942
    %2655 = vmatprep.subr.bf16.mxu0 0
    %2656 = vmatpush1.bf16.msra.mxu0 %v1943
    %2657 = vmatprep.subr.bf16.mxu0 0
    %2658 = vmatpush1.bf16.msra.mxu0 %v1944
    %2659 = vmatprep.subr.bf16.mxu0 0
    %2660 = vmatpush1.bf16.msra.mxu0 %v1945
    %2661 = vmatprep.subr.bf16.mxu0 0
    %2662 = vmatpush1.bf16.msra.mxu0 %v1946
    %2663 = vmatprep.subr.bf16.mxu0 0
    %2664 = vmatpush1.bf16.msra.mxu0 %v1947
    %2665 = vmatprep.subr.bf16.mxu0 0
    %2666 = vmatpush1.bf16.msra.mxu0 %v1948
    %2667 = vmatprep.subr.bf16.mxu0 0
    %2668 = vmatpush1.bf16.msra.mxu0 %v1949
    %2669 = vmatprep.subr.bf16.mxu0 0
    %2670 = vmatpush1.bf16.msra.mxu0 %v1950
    %2671 = vmatprep.mubr.bf16.mxu0 %v690
    %2672 = vmatmul.mubr.bf16.gmra.mrb[0].mxu0 %v676
    %v2673 = vpop.f32.mrb[0].mxu0
    %v2674 = vadd.f32 %v2634, %v2673
    %v2675 = vpop.f32.mrb[0].mxu0
    %v2676 = vpop.f32.mrb[0].mxu0
    %v2677 = vpop.f32.mrb[0].mxu0
    %2678 = vdwg.mxu0
    %2679 = vmatprep.subr.bf16.mxu0 0
    %2680 = vmatpush1.bf16.msra.mxu0 %v1951
    %2681 = vmatprep.subr.bf16.mxu0 0
    %2682 = vmatpush1.bf16.msra.mxu0 %v1952
    %2683 = vmatprep.subr.bf16.mxu0 0
    %2684 = vmatpush1.bf16.msra.mxu0 %v1953
    %2685 = vmatprep.subr.bf16.mxu0 0
    %2686 = vmatpush1.bf16.msra.mxu0 %v1954
    %2687 = vmatprep.subr.bf16.mxu0 0
    %2688 = vmatpush1.bf16.msra.mxu0 %v1955
    %2689 = vmatprep.subr.bf16.mxu0 0
    %2690 = vmatpush1.bf16.msra.mxu0 %v1956
    %2691 = vmatprep.subr.bf16.mxu0 0
    %2692 = vmatpush1.bf16.msra.mxu0 %v1957
    %2693 = vmatprep.subr.bf16.mxu0 0
    %2694 = vmatpush1.bf16.msra.mxu0 %v1958
    %2695 = vmatprep.subr.bf16.mxu0 0
    %2696 = vmatpush1.bf16.msra.mxu0 %v1959
    %2697 = vmatprep.subr.bf16.mxu0 0
    %2698 = vmatpush1.bf16.msra.mxu0 %v1960
    %2699 = vmatprep.subr.bf16.mxu0 0
    %2700 = vmatpush1.bf16.msra.mxu0 %v1961
    %2701 = vmatprep.subr.bf16.mxu0 0
    %2702 = vmatpush1.bf16.msra.mxu0 %v1962
    %2703 = vmatprep.subr.bf16.mxu0 0
    %2704 = vmatpush1.bf16.msra.mxu0 %v1963
    %2705 = vmatprep.subr.bf16.mxu0 0
    %2706 = vmatpush1.bf16.msra.mxu0 %v1964
    %2707 = vmatprep.subr.bf16.mxu0 0
    %2708 = vmatpush1.bf16.msra.mxu0 %v1965
    %2709 = vmatprep.subr.bf16.mxu0 0
    %2710 = vmatpush1.bf16.msra.mxu0 %v1966
    %2711 = vmatprep.mubr.bf16.mxu0 %v700
    %2712 = vmatmul.mubr.bf16.gmra.mrb[0].mxu0 %v698
    %v2713 = vpop.f32.mrb[0].mxu0
    %v2714 = vadd.f32 %v2674, %v2713
    %v2715 = vpop.f32.mrb[0].mxu0
    %v2716 = vpop.f32.mrb[0].mxu0
    %v2717 = vpop.f32.mrb[0].mxu0
    %2718 = vdwg.mxu0
    %2719 = vmatprep.subr.bf16.mxu0 0
    %2720 = vmatpush1.bf16.msra.mxu0 %v1967
    %2721 = vmatprep.subr.bf16.mxu0 0
    %2722 = vmatpush1.bf16.msra.mxu0 %v1968
    %2723 = vmatprep.subr.bf16.mxu0 0
    %2724 = vmatpush1.bf16.msra.mxu0 %v1969
    %2725 = vmatprep.subr.bf16.mxu0 0
    %2726 = vmatpush1.bf16.msra.mxu0 %v1970
    %2727 = vmatprep.subr.bf16.mxu0 0
    %2728 = vmatpush1.bf16.msra.mxu0 %v1971
    %2729 = vmatprep.subr.bf16.mxu0 0
    %2730 = vmatpush1.bf16.msra.mxu0 %v1972
    %2731 = vmatprep.subr.bf16.mxu0 0
    %2732 = vmatpush1.bf16.msra.mxu0 %v1973
    %2733 = vmatprep.subr.bf16.mxu0 0
    %2734 = vmatpush1.bf16.msra.mxu0 %v1974
    %2735 = vmatprep.subr.bf16.mxu0 0
    %2736 = vmatpush1.bf16.msra.mxu0 %v1975
    %2737 = vmatprep.subr.bf16.mxu0 0
    %2738 = vmatpush1.bf16.msra.mxu0 %v1976
    %2739 = vmatprep.subr.bf16.mxu0 0
    %2740 = vmatpush1.bf16.msra.mxu0 %v1977
    %2741 = vmatprep.subr.bf16.mxu0 0
    %2742 = vmatpush1.bf16.msra.mxu0 %v1978
    %2743 = vmatprep.subr.bf16.mxu0 0
    %2744 = vmatpush1.bf16.msra.mxu0 %v1979
    %2745 = vmatprep.subr.bf16.mxu0 0
    %2746 = vmatpush1.bf16.msra.mxu0 %v1980
    %2747 = vmatprep.subr.bf16.mxu0 0
    %2748 = vmatpush1.bf16.msra.mxu0 %v1981
    %2749 = vmatprep.subr.bf16.mxu0 0
    %2750 = vmatpush1.bf16.msra.mxu0 %v1982
    %2751 = vmatprep.mubr.bf16.mxu0 %v697
    %2752 = vmatmul.mubr.bf16.gmra.mrb[0].mxu0 %v683
    %v2753 = vpop.f32.mrb[0].mxu0
    %v2754 = vadd.f32 %v2714, %v2753
    %v2755 = vpop.f32.mrb[0].mxu0
    %v2756 = vpop.f32.mrb[0].mxu0
    %v2757 = vpop.f32.mrb[0].mxu0
    %2758 = vdwg.mxu0
    %2759 = vmatprep.subr.bf16.mxu0 0
    %2760 = vmatpush1.bf16.msra.mxu0 %v1983
    %2761 = vmatprep.subr.bf16.mxu0 0
    %2762 = vmatpush1.bf16.msra.mxu0 %v1984
    %2763 = vmatprep.subr.bf16.mxu0 0
    %2764 = vmatpush1.bf16.msra.mxu0 %v1985
    %2765 = vmatprep.subr.bf16.mxu0 0
    %2766 = vmatpush1.bf16.msra.mxu0 %v1986
    %2767 = vmatprep.subr.bf16.mxu0 0
    %2768 = vmatpush1.bf16.msra.mxu0 %v1987
    %2769 = vmatprep.subr.bf16.mxu0 0
    %2770 = vmatpush1.bf16.msra.mxu0 %v1988
    %2771 = vmatprep.subr.bf16.mxu0 0
    %2772 = vmatpush1.bf16.msra.mxu0 %v1989
    %2773 = vmatprep.subr.bf16.mxu0 0
    %2774 = vmatpush1.bf16.msra.mxu0 %v1990
    %2775 = vmatprep.subr.bf16.mxu0 0
    %2776 = vmatpush1.bf16.msra.mxu0 %v1991
    %2777 = vmatprep.subr.bf16.mxu0 0
    %2778 = vmatpush1.bf16.msra.mxu0 %v1992
    %2779 = vmatprep.subr.bf16.mxu0 0
    %2780 = vmatpush1.bf16.msra.mxu0 %v1993
    %2781 = vmatprep.subr.bf16.mxu0 0
    %2782 = vmatpush1.bf16.msra.mxu0 %v1994
    %2783 = vmatprep.subr.bf16.mxu0 0
    %2784 = vmatpush1.bf16.msra.mxu0 %v1995
    %2785 = vmatprep.subr.bf16.mxu0 0
    %2786 = vmatpush1.bf16.msra.mxu0 %v1996
    %2787 = vmatprep.subr.bf16.mxu0 0
    %2788 = vmatpush1.bf16.msra.mxu0 %v1997
    %2789 = vmatprep.subr.bf16.mxu0 0
    %2790 = vmatpush1.bf16.msra.mxu0 %v1998
    %2791 = vmatprep.mubr.bf16.mxu0 %v701
    %2792 = vmatmul.mubr.bf16.gmra.mrb[0].mxu0 %v699
    %v2793 = vpop.f32.mrb[0].mxu0
    %v2794 = vadd.f32 %v2754, %v2793
    %v2795 = vpop.f32.mrb[0].mxu0
    %v2796 = vpop.f32.mrb[0].mxu0
    %v2797 = vpop.f32.mrb[0].mxu0
    %2798 = vdwg.mxu0
    %2799 = vmatprep.subr.bf16.mxu0 0
    %2800 = vmatpush1.bf16.msra.mxu0 %v1999
    %2801 = vmatprep.subr.bf16.mxu0 0
    %2802 = vmatpush1.bf16.msra.mxu0 %v2000
    %2803 = vmatprep.subr.bf16.mxu0 0
    %2804 = vmatpush1.bf16.msra.mxu0 %v2001
    %2805 = vmatprep.subr.bf16.mxu0 0
    %2806 = vmatpush1.bf16.msra.mxu0 %v2002
    %2807 = vmatprep.subr.bf16.mxu0 0
    %2808 = vmatpush1.bf16.msra.mxu0 %v2003
    %2809 = vmatprep.subr.bf16.mxu0 0
    %2810 = vmatpush1.bf16.msra.mxu0 %v2004
    %2811 = vmatprep.subr.bf16.mxu0 0
    %2812 = vmatpush1.bf16.msra.mxu0 %v2005
    %2813 = vmatprep.subr.bf16.mxu0 0
    %2814 = vmatpush1.bf16.msra.mxu0 %v2006
    %2815 = vmatprep.subr.bf16.mxu0 0
    %2816 = vmatpush1.bf16.msra.mxu0 %v2007
    %2817 = vmatprep.subr.bf16.mxu0 0
    %2818 = vmatpush1.bf16.msra.mxu0 %v2008
    %2819 = vmatprep.subr.bf16.mxu0 0
    %2820 = vmatpush1.bf16.msra.mxu0 %v2009
    %2821 = vmatprep.subr.bf16.mxu0 0
    %2822 = vmatpush1.bf16.msra.mxu0 %v2010
    %2823 = vmatprep.subr.bf16.mxu0 0
    %2824 = vmatpush1.bf16.msra.mxu0 %v2011
    %2825 = vmatprep.subr.bf16.mxu0 0
    %2826 = vmatpush1.bf16.msra.mxu0 %v2012
    %2827 = vmatprep.subr.bf16.mxu0 0
    %2828 = vmatpush1.bf16.msra.mxu0 %v2013
    %2829 = vmatprep.subr.bf16.mxu0 0
    %2830 = vmatpush1.bf16.msra.mxu0 %v2014
    %2831 = vmatprep.mubr.bf16.mxu0 %v739
    %2832 = vmatmul.mubr.bf16.gmra.mrb[0].mxu0 %v725
    %v2833 = vpop.f32.mrb[0].mxu0
    %v2834 = vadd.f32 %v2794, %v2833
    %v2835 = vpop.f32.mrb[0].mxu0
    %v2836 = vpop.f32.mrb[0].mxu0
    %v2837 = vpop.f32.mrb[0].mxu0
    %2838 = vdwg.mxu0
    %2839 = vmatprep.subr.bf16.mxu0 0
    %2840 = vmatpush1.bf16.msra.mxu0 %v2015
    %2841 = vmatprep.subr.bf16.mxu0 0
    %2842 = vmatpush1.bf16.msra.mxu0 %v2016
    %2843 = vmatprep.subr.bf16.mxu0 0
    %2844 = vmatpush1.bf16.msra.mxu0 %v2017
    %2845 = vmatprep.subr.bf16.mxu0 0
    %2846 = vmatpush1.bf16.msra.mxu0 %v2018
    %2847 = vmatprep.subr.bf16.mxu0 0
    %2848 = vmatpush1.bf16.msra.mxu0 %v2019
    %2849 = vmatprep.subr.bf16.mxu0 0
    %2850 = vmatpush1.bf16.msra.mxu0 %v2020
    %2851 = vmatprep.subr.bf16.mxu0 0
    %2852 = vmatpush1.bf16.msra.mxu0 %v2021
    %2853 = vmatprep.subr.bf16.mxu0 0
    %2854 = vmatpush1.bf16.msra.mxu0 %v2022
    %2855 = vmatprep.subr.bf16.mxu0 0
    %2856 = vmatpush1.bf16.msra.mxu0 %v2023
    %2857 = vmatprep.subr.bf16.mxu0 0
    %2858 = vmatpush1.bf16.msra.mxu0 %v2024
    %2859 = vmatprep.subr.bf16.mxu0 0
    %2860 = vmatpush1.bf16.msra.mxu0 %v2025
    %2861 = vmatprep.subr.bf16.mxu0 0
    %2862 = vmatpush1.bf16.msra.mxu0 %v2026
    %2863 = vmatprep.subr.bf16.mxu0 0
    %2864 = vmatpush1.bf16.msra.mxu0 %v2027
    %2865 = vmatprep.subr.bf16.mxu0 0
    %2866 = vmatpush1.bf16.msra.mxu0 %v2028
    %2867 = vmatprep.subr.bf16.mxu0 0
    %2868 = vmatpush1.bf16.msra.mxu0 %v2029
    %2869 = vmatprep.subr.bf16.mxu0 0
    %2870 = vmatpush1.bf16.msra.mxu0 %v2030
    %2871 = vmatprep.mubr.bf16.mxu0 %v749
    %2872 = vmatmul.mubr.bf16.gmra.mrb[0].mxu0 %v747
    %v2873 = vpop.f32.mrb[0].mxu0
    %v2874 = vadd.f32 %v2834, %v2873
    %v2875 = vpop.f32.mrb[0].mxu0
    %v2876 = vpop.f32.mrb[0].mxu0
    %v2877 = vpop.f32.mrb[0].mxu0
    %2878 = vdwg.mxu0
    %2879 = vmatprep.subr.bf16.mxu0 0
    %2880 = vmatpush1.bf16.msra.mxu0 %v2031
    %2881 = vmatprep.subr.bf16.mxu0 0
    %2882 = vmatpush1.bf16.msra.mxu0 %v2032
    %2883 = vmatprep.subr.bf16.mxu0 0
    %2884 = vmatpush1.bf16.msra.mxu0 %v2033
    %2885 = vmatprep.subr.bf16.mxu0 0
    %2886 = vmatpush1.bf16.msra.mxu0 %v2034
    %2887 = vmatprep.subr.bf16.mxu0 0
    %2888 = vmatpush1.bf16.msra.mxu0 %v2035
    %2889 = vmatprep.subr.bf16.mxu0 0
    %2890 = vmatpush1.bf16.msra.mxu0 %v2036
    %2891 = vmatprep.subr.bf16.mxu0 0
    %2892 = vmatpush1.bf16.msra.mxu0 %v2037
    %2893 = vmatprep.subr.bf16.mxu0 0
    %2894 = vmatpush1.bf16.msra.mxu0 %v2038
    %2895 = vmatprep.subr.bf16.mxu0 0
    %2896 = vmatpush1.bf16.msra.mxu0 %v2039
    %2897 = vmatprep.subr.bf16.mxu0 0
    %2898 = vmatpush1.bf16.msra.mxu0 %v2040
    %2899 = vmatprep.subr.bf16.mxu0 0
    %2900 = vmatpush1.bf16.msra.mxu0 %v2041
    %2901 = vmatprep.subr.bf16.mxu0 0
    %2902 = vmatpush1.bf16.msra.mxu0 %v2042
    %2903 = vmatprep.subr.bf16.mxu0 0
    %2904 = vmatpush1.bf16.msra.mxu0 %v2043
    %2905 = vmatprep.subr.bf16.mxu0 0
    %2906 = vmatpush1.bf16.msra.mxu0 %v2044
    %2907 = vmatprep.subr.bf16.mxu0 0
    %2908 = vmatpush1.bf16.msra.mxu0 %v2045
    %2909 = vmatprep.subr.bf16.mxu0 0
    %2910 = vmatpush1.bf16.msra.mxu0 %v2046
    %2911 = vmatprep.mubr.bf16.mxu0 %v746
    %2912 = vmatmul.mubr.bf16.gmra.mrb[0].mxu0 %v732
    %v2913 = vpop.f32.mrb[0].mxu0
    %v2914 = vadd.f32 %v2874, %v2913
    %v2915 = vpop.f32.mrb[0].mxu0
    %v2916 = vpop.f32.mrb[0].mxu0
    %v2917 = vpop.f32.mrb[0].mxu0
    %2918 = vdwg.mxu0
    %2919 = vmatprep.subr.bf16.mxu0 0
    %2920 = vmatpush1.bf16.msra.mxu0 %v2047
    %2921 = vmatprep.subr.bf16.mxu0 0
    %2922 = vmatpush1.bf16.msra.mxu0 %v2048
    %2923 = vmatprep.subr.bf16.mxu0 0
    %2924 = vmatpush1.bf16.msra.mxu0 %v2049
    %2925 = vmatprep.subr.bf16.mxu0 0
    %2926 = vmatpush1.bf16.msra.mxu0 %v2050
    %2927 = vmatprep.subr.bf16.mxu0 0
    %2928 = vmatpush1.bf16.msra.mxu0 %v2051
    %2929 = vmatprep.subr.bf16.mxu0 0
    %2930 = vmatpush1.bf16.msra.mxu0 %v2052
    %2931 = vmatprep.subr.bf16.mxu0 0
    %2932 = vmatpush1.bf16.msra.mxu0 %v2053
    %2933 = vmatprep.subr.bf16.mxu0 0
    %2934 = vmatpush1.bf16.msra.mxu0 %v2054
    %2935 = vmatprep.subr.bf16.mxu0 0
    %2936 = vmatpush1.bf16.msra.mxu0 %v2055
    %2937 = vmatprep.subr.bf16.mxu0 0
    %2938 = vmatpush1.bf16.msra.mxu0 %v2056
    %2939 = vmatprep.subr.bf16.mxu0 0
    %2940 = vmatpush1.bf16.msra.mxu0 %v2057
    %2941 = vmatprep.subr.bf16.mxu0 0
    %2942 = vmatpush1.bf16.msra.mxu0 %v2058
    %2943 = vmatprep.subr.bf16.mxu0 0
    %2944 = vmatpush1.bf16.msra.mxu0 %v2059
    %2945 = vmatprep.subr.bf16.mxu0 0
    %2946 = vmatpush1.bf16.msra.mxu0 %v2060
    %2947 = vmatprep.subr.bf16.mxu0 0
    %2948 = vmatpush1.bf16.msra.mxu0 %v2061
    %2949 = vmatprep.subr.bf16.mxu0 0
    %2950 = vmatpush1.bf16.msra.mxu0 %v2062
    %2951 = vmatprep.mubr.bf16.mxu0 %v750
    %2952 = vmatmul.mubr.bf16.gmra.mrb[0].mxu0 %v748
    %v2953 = vpop.f32.mrb[0].mxu0
    %v2954 = vadd.f32 %v2914, %v2953
    %v2955 = vpop.f32.mrb[0].mxu0
    %v2956 = vpop.f32.mrb[0].mxu0
    %v2957 = vpop.f32.mrb[0].mxu0
    %2958 = vdwg.mxu0
    %v2959 = vxor.u32 %v2954, 2147483648
    %v2960 = vmul.f32 %v2959, 1.442695
    %v2961 = vpow.pop %v2960
    %v2962 = vadd.f32 %v2961, 1.0
    %v2963 = vrcp.pop %v2962
    %v2964 = vmul.f32 1.0, %v2963
    %v2965 = vmul.f32 %v2954, %v2964
    %v2966 = vpack.c.bf16 %v2965, %v2965
    %v2967 = vld [vmem:[%s3] sm:$0xf]
    %v2968 = vld [vmem:[%s3 + $0x4] sm:$0xf]
    %v2969 = vld [vmem:[%s3 + $0x8] sm:$0xf]
    %v2970 = vld [vmem:[%s3 + $0xc] sm:$0xf]
    %v2971 = vld [vmem:[%s4] sm:$0x1]
    %v2973 = vlaneseq
    %v2974 = vshrl.u32 %v2973, 7
    %v2975 = vsub.s32 0, %v2974
    %v2976 = vrot.slane %v2971, %v2975
    %v2982 = vunpack.c.l.b16 %v2967
    %v2983 = vunpack.c.l.b16 %v2968
    %v2984 = vunpack.c.l.b16 %v2969
    %v2985 = vunpack.c.l.b16 %v2970
    %v2986 = vpack.c.b16 %v2983, %v2982
    %v2987 = vpack.c.b16 %v2985, %v2984
    %vm2990 = vcmask 261120
    %v2992 = vsel %vm2990, %v2966, 0
    %2994 = vmatprep.subr.bf16.mxu0 0
    %2995 = vmatpush1.bf16.msra.mxu0 %v2986
    %2996 = vmatprep.subr.bf16.mxu0 0
    %2997 = vmatpush1.bf16.msra.mxu0 %v2987
    %2998 = vmatprep.subr.bf16.mxu0 0
    %2999 = vmatpush1.bf16.msra.mxu0 0
    %3000 = vmatprep.subr.bf16.mxu0 0
    %3001 = vmatpush1.bf16.msra.mxu0 0
    %3002 = vmatprep.subr.bf16.mxu0 0
    %3003 = vmatpush1.bf16.msra.mxu0 0
    %3004 = vmatprep.subr.bf16.mxu0 0
    %3005 = vmatpush1.bf16.msra.mxu0 0
    %3006 = vmatprep.subr.bf16.mxu0 0
    %3007 = vmatpush1.bf16.msra.mxu0 0
    %3008 = vmatprep.subr.bf16.mxu0 0
    %3009 = vmatpush1.bf16.msra.mxu0 0
    %3010 = vmatprep.subr.bf16.mxu0 0
    %3011 = vmatpush1.bf16.msra.mxu0 0
    %3012 = vmatprep.subr.bf16.mxu0 0
    %3013 = vmatpush1.bf16.msra.mxu0 0
    %3014 = vmatprep.subr.bf16.mxu0 0
    %3015 = vmatpush1.bf16.msra.mxu0 0
    %3016 = vmatprep.subr.bf16.mxu0 0
    %3017 = vmatpush1.bf16.msra.mxu0 0
    %3018 = vmatprep.subr.bf16.mxu0 0
    %3019 = vmatpush1.bf16.msra.mxu0 0
    %3020 = vmatprep.subr.bf16.mxu0 0
    %3021 = vmatpush1.bf16.msra.mxu0 0
    %3022 = vmatprep.subr.bf16.mxu0 0
    %3023 = vmatpush1.bf16.msra.mxu0 0
    %3024 = vmatprep.subr.bf16.mxu0 0
    %3025 = vmatpush1.bf16.msra.mxu0 0
    %3026 = vmatprep.mubr.bf16.mxu0 0
    %3027 = vmatmul.mubr.bf16.gmra.mrb[0].mxu0 %v2992
    %v3028 = vpop.f32.mrb[0].mxu0
    %v3029 = vadd.f32 %v2976, %v3028
    %v3030 = vpop.f32.mrb[0].mxu0
    %v3031 = vpop.f32.mrb[0].mxu0
    %v3032 = vpop.f32.mrb[0].mxu0
    %3033 = vdwg.mxu0
    %v3034 = vxor.u32 %v3029, 2147483648
    %v3035 = vmul.f32 %v3034, 1.442695
    %v3036 = vpow.pop %v3035
    %v3037 = vadd.f32 %v3036, 1.0
    %v3038 = vrcp.pop %v3037
    %v3039 = vmul.f32 1.0, %v3038
    %v3040 = vmul.f32 %v3029, %v3039
    %v3041 = vpack.c.bf16 %v3040, %v3040
    %v3042 = vld [vmem:[%s5] sm:$0xf]
    %v3043 = vld [vmem:[%s5 + $0x4] sm:$0xf]
    %v3044 = vld [vmem:[%s5 + $0x8] sm:$0xf]
    %v3045 = vld [vmem:[%s5 + $0xc] sm:$0xf]
    %v3046 = vld [vmem:[%s6] sm:$0x1]
    %v3048 = vlaneseq
    %v3049 = vshrl.u32 %v3048, 7
    %v3050 = vsub.s32 0, %v3049
    %v3051 = vrot.slane %v3046, %v3050
    %v3057 = vunpack.c.l.b16 %v3042
    %v3058 = vunpack.c.l.b16 %v3043
    %v3059 = vunpack.c.l.b16 %v3044
    %v3060 = vunpack.c.l.b16 %v3045
    %v3061 = vpack.c.b16 %v3058, %v3057
    %v3062 = vpack.c.b16 %v3060, %v3059
    %v3066 = vsel %vm2990, %v3041, 0
    %3068 = vmatprep.subr.bf16.mxu0 0
    %3069 = vmatpush1.bf16.msra.mxu0 %v3061
    %3070 = vmatprep.subr.bf16.mxu0 0
    %3071 = vmatpush1.bf16.msra.mxu0 %v3062
    %3072 = vmatprep.subr.bf16.mxu0 0
    %3073 = vmatpush1.bf16.msra.mxu0 0
    %3074 = vmatprep.subr.bf16.mxu0 0
    %3075 = vmatpush1.bf16.msra.mxu0 0
    %3076 = vmatprep.subr.bf16.mxu0 0
    %3077 = vmatpush1.bf16.msra.mxu0 0
    %3078 = vmatprep.subr.bf16.mxu0 0
    %3079 = vmatpush1.bf16.msra.mxu0 0
    %3080 = vmatprep.subr.bf16.mxu0 0
    %3081 = vmatpush1.bf16.msra.mxu0 0
    %3082 = vmatprep.subr.bf16.mxu0 0
    %3083 = vmatpush1.bf16.msra.mxu0 0
    %3084 = vmatprep.subr.bf16.mxu0 0
    %3085 = vmatpush1.bf16.msra.mxu0 0
    %3086 = vmatprep.subr.bf16.mxu0 0
    %3087 = vmatpush1.bf16.msra.mxu0 0
    %3088 = vmatprep.subr.bf16.mxu0 0
    %3089 = vmatpush1.bf16.msra.mxu0 0
    %3090 = vmatprep.subr.bf16.mxu0 0
    %3091 = vmatpush1.bf16.msra.mxu0 0
    %3092 = vmatprep.subr.bf16.mxu0 0
    %3093 = vmatpush1.bf16.msra.mxu0 0
    %3094 = vmatprep.subr.bf16.mxu0 0
    %3095 = vmatpush1.bf16.msra.mxu0 0
    %3096 = vmatprep.subr.bf16.mxu0 0
    %3097 = vmatpush1.bf16.msra.mxu0 0
    %3098 = vmatprep.subr.bf16.mxu0 0
    %3099 = vmatpush1.bf16.msra.mxu0 0
    %3100 = vmatprep.mubr.bf16.mxu0 0
    %3101 = vmatmul.mubr.bf16.gmra.mrb[0].mxu0 %v3066
    %v3102 = vpop.f32.mrb[0].mxu0
    %v3103 = vadd.f32 %v3051, %v3102
    %v3104 = vpop.f32.mrb[0].mxu0
    %v3105 = vpop.f32.mrb[0].mxu0
    %v3106 = vpop.f32.mrb[0].mxu0
    %3107 = vdwg.mxu0
    %vm3108 = vcmask 41984
    %v3109 = vsel %vm3108, %v3103, -inf
    %3110 = vmax.xlane.f32.xlu0 %v3109
    %v3111 = vpop.xlane.xlu0 %3110
    %v3112 = vsub.f32 %v3103, %v3111
    %v3113 = vmul.f32 %v3112, 1.442695
    %v3114 = vpow.pop %v3113
    %v3115 = vsel %vm3108, %v3114, 0.0
    %3116 = vadd.xlane.f32.xlu0 %v3115
    %v3117 = vpop.xlane.xlu0 %3116
    %v3118 = vrcp.pop %v3117
    %v3119 = vmul.f32 %v3117, %v3118
    %v3120 = vsub.f32 2.0, %v3119
    %v3121 = vmul.f32 %v3118, %v3120
    %v3122 = vmul.f32 %v3114, %v3121
    %3123 = vst.msk [vmem:[#allocation2] sm:$0x3] %vm3108, %v3122
    // Predicated region
    $region30: #{policy_net_forward.3} parent=1 // pred_check
      _
    $region31: #{policy_net_forward.3} parent=1 // pred_check_branch
      %3125 = sbr.rel (0) target = $region33
    $region32: #{policy_net_forward.3} parent=1 // pred_region
      %s3127 = ssub.s32 32, 32
      %3128 = vsyncadd [#allocation3], %s3127
      %s3130 = sshll.u32 [#allocation2], 4
      %s3131 = int_to_ptr.vmem [resolvable:$true] %s3130
      %3133 = dma.vmem_to_hbm [thread:$0]  %s3131, 32, %s7, [#allocation3]
    $region33: #{policy_net_forward.3} parent=1 // pred_fallthru
      _
    // Predicated region
    $region34: #{policy_net_forward.3} parent=1 // pred_check
      _
    $region35: #{policy_net_forward.3} parent=1 // pred_check_branch
      %3135 = sbr.rel (0) target = $region37
    $region36: #{policy_net_forward.3} parent=1 // pred_region
      %3136 = dma.done [#allocation3], 32
    $region37: #{policy_net_forward.3} parent=1 // pred_fallthru
      _
    %3137 = vsyncpa [#allocation3], 1

// kernel: policy_net_forward.2
$region0: #{policy_net_forward.2}
  #allocation0 [shape = 'u32[]', space=smem, size = 0x4, offset = 0x4, fixed_abs, tag = 'smem constant byte address 0x4 - core index']
  #allocation1 [shape = 'u32[144,128]{1,0:T(1,128)}', space=vmem, size = 0x12000, scoped, tag = 'internal scratch']
  #allocation2 [shape = 'f32[2,18,32,4]{3,2,1,0:T(8,128)}', space=vmem, size = 0x90000, scoped, tag = 'scratch operand']
  #allocation3 [shape = 'f32[2,18,32,16]{3,2,1,0:T(8,128)}', space=vmem, size = 0x90000, scoped, tag = 'scratch operand']
  %s0 = inlined_call_operand.vmem [shape: f32[2,16,16,4], index: 0, kind: input, shape index: {}]
  %s1 = inlined_call_operand.vmem [shape: bf16[36,16], index: 1, kind: input, shape index: {}]
  %s2 = inlined_call_operand.vmem [shape: f32[1,16], index: 2, kind: input, shape index: {}]
  %s3 = inlined_call_operand.vmem [shape: bf16[144,16], index: 3, kind: input, shape index: {}]
  %s4 = inlined_call_operand.vmem [shape: f32[1,16], index: 4, kind: input, shape index: {}]
  %s5 = inlined_call_operand.vmem [shape: bf16[512,16], index: 5, kind: output, shape index: {}]
  %s6 = sld [smem:[#allocation0]]
  $region30: #{policy_net_forward.2} parent=0
    _
  %s8 = ssub.s32 1, %s6
  %s9 = scalar_select 0, %s8, %s6
  // Predicated region
  $region2: #{policy_net_forward.2} parent=0 // pred_check
    _
  $region3: #{policy_net_forward.2} parent=0 // pred_check_branch
    %11 = sbr.rel (0) target = $region5
  $region4: #{policy_net_forward.2} parent=0 // pred_region
    _
  $region5: #{policy_net_forward.2} parent=0 // pred_fallthru
    _
  // Predicated region
  $region6: #{policy_net_forward.2} parent=0 // pred_check
    _
  $region7: #{policy_net_forward.2} parent=0 // pred_check_branch
    %13 = sbr.rel (0) target = $region9
  $region8: #{policy_net_forward.2} parent=0 // pred_region
    _
  $region9: #{policy_net_forward.2} parent=0 // pred_fallthru
    _
  // Predicated region
  $region10: #{policy_net_forward.2} parent=0 // pred_check
    _
  $region11: #{policy_net_forward.2} parent=0 // pred_check_branch
    %15 = sbr.rel (0) target = $region13
  $region12: #{policy_net_forward.2} parent=0 // pred_region
    _
  $region13: #{policy_net_forward.2} parent=0 // pred_fallthru
    _
  // Predicated region
  $region14: #{policy_net_forward.2} parent=0 // pred_check
    _
  $region15: #{policy_net_forward.2} parent=0 // pred_check_branch
    %17 = sbr.rel (0) target = $region17
  $region16: #{policy_net_forward.2} parent=0 // pred_region
    _
  $region17: #{policy_net_forward.2} parent=0 // pred_fallthru
    _
  // Predicated region
  $region18: #{policy_net_forward.2} parent=0 // pred_check
    _
  $region19: #{policy_net_forward.2} parent=0 // pred_check_branch
    %19 = sbr.rel (0) target = $region21
  $region20: #{policy_net_forward.2} parent=0 // pred_region
    _
  $region21: #{policy_net_forward.2} parent=0 // pred_fallthru
    _
  %v21 = vld [vmem:[%s0] sm:$0xff]
  %v22 = vld [vmem:[%s0 + $0x8] sm:$0xff]
  %v23 = vld [vmem:[%s0 + $0x10] sm:$0xff]
  %v24 = vld [vmem:[%s0 + $0x18] sm:$0xff]
  %v25 = vld [vmem:[%s0 + $0x20] sm:$0xff]
  %v26 = vld [vmem:[%s0 + $0x28] sm:$0xff]
  %v27 = vld [vmem:[%s0 + $0x30] sm:$0xff]
  %v28 = vld [vmem:[%s0 + $0x38] sm:$0xff]
  %v29 = vld [vmem:[%s0 + $0x40] sm:$0xff]
  %v30 = vld [vmem:[%s0 + $0x48] sm:$0xff]
  %v31 = vld [vmem:[%s0 + $0x50] sm:$0xff]
  %v32 = vld [vmem:[%s0 + $0x58] sm:$0xff]
  %v33 = vld [vmem:[%s0 + $0x60] sm:$0xff]
  %v34 = vld [vmem:[%s0 + $0x68] sm:$0xff]
  %v35 = vld [vmem:[%s0 + $0x70] sm:$0xff]
  %v36 = vld [vmem:[%s0 + $0x78] sm:$0xff]
  %v37 = vld [vmem:[%s0 + $0x80] sm:$0xff]
  %v38 = vld [vmem:[%s0 + $0x88] sm:$0xff]
  %v39 = vld [vmem:[%s0 + $0x90] sm:$0xff]
  %v40 = vld [vmem:[%s0 + $0x98] sm:$0xff]
  %v41 = vld [vmem:[%s0 + $0xa0] sm:$0xff]
  %v42 = vld [vmem:[%s0 + $0xa8] sm:$0xff]
  %v43 = vld [vmem:[%s0 + $0xb0] sm:$0xff]
  %v44 = vld [vmem:[%s0 + $0xb8] sm:$0xff]
  %v45 = vld [vmem:[%s0 + $0xc0] sm:$0xff]
  %v46 = vld [vmem:[%s0 + $0xc8] sm:$0xff]
  %v47 = vld [vmem:[%s0 + $0xd0] sm:$0xff]
  %v48 = vld [vmem:[%s0 + $0xd8] sm:$0xff]
  %v49 = vld [vmem:[%s0 + $0xe0] sm:$0xff]
  %v50 = vld [vmem:[%s0 + $0xe8] sm:$0xff]
  %v51 = vld [vmem:[%s0 + $0xf0] sm:$0xff]
  %v52 = vld [vmem:[%s0 + $0xf8] sm:$0xff]
  %v53 = vld [vmem:[%s0 + $0x100] sm:$0xff]
  %v54 = vld [vmem:[%s0 + $0x108] sm:$0xff]
  %v55 = vld [vmem:[%s0 + $0x110] sm:$0xff]
  %v56 = vld [vmem:[%s0 + $0x118] sm:$0xff]
  %v57 = vld [vmem:[%s0 + $0x120] sm:$0xff]
  %v58 = vld [vmem:[%s0 + $0x128] sm:$0xff]
  %v59 = vld [vmem:[%s0 + $0x130] sm:$0xff]
  %v60 = vld [vmem:[%s0 + $0x138] sm:$0xff]
  %v61 = vld [vmem:[%s0 + $0x140] sm:$0xff]
  %v62 = vld [vmem:[%s0 + $0x148] sm:$0xff]
  %v63 = vld [vmem:[%s0 + $0x150] sm:$0xff]
  %v64 = vld [vmem:[%s0 + $0x158] sm:$0xff]
  %v65 = vld [vmem:[%s0 + $0x160] sm:$0xff]
  %v66 = vld [vmem:[%s0 + $0x168] sm:$0xff]
  %v67 = vld [vmem:[%s0 + $0x170] sm:$0xff]
  %v68 = vld [vmem:[%s0 + $0x178] sm:$0xff]
  %v69 = vld [vmem:[%s0 + $0x180] sm:$0xff]
  %v70 = vld [vmem:[%s0 + $0x188] sm:$0xff]
  %v71 = vld [vmem:[%s0 + $0x190] sm:$0xff]
  %v72 = vld [vmem:[%s0 + $0x198] sm:$0xff]
  %v73 = vld [vmem:[%s0 + $0x1a0] sm:$0xff]
  %v74 = vld [vmem:[%s0 + $0x1a8] sm:$0xff]
  %v75 = vld [vmem:[%s0 + $0x1b0] sm:$0xff]
  %v76 = vld [vmem:[%s0 + $0x1b8] sm:$0xff]
  %v77 = vld [vmem:[%s0 + $0x1c0] sm:$0xff]
  %v78 = vld [vmem:[%s0 + $0x1c8] sm:$0xff]
  %v79 = vld [vmem:[%s0 + $0x1d0] sm:$0xff]
  %v80 = vld [vmem:[%s0 + $0x1d8] sm:$0xff]
  %v81 = vld [vmem:[%s0 + $0x1e0] sm:$0xff]
  %v82 = vld [vmem:[%s0 + $0x1e8] sm:$0xff]
  %v83 = vld [vmem:[%s0 + $0x1f0] sm:$0xff]
  %v84 = vld [vmem:[%s0 + $0x1f8] sm:$0xff]
  %vm85 = vcmask 31744
  %86 = vst.msk [vmem:[#allocation2] sm:$0xff] %vm85, 0.0
  %87 = vst.msk [vmem:[#allocation2 + $0x8] sm:$0xff] %vm85, 0.0
  %88 = vst.msk [vmem:[#allocation2 + $0x10] sm:$0xff] %vm85, 0.0
  %89 = vst.msk [vmem:[#allocation2 + $0x18] sm:$0xff] %vm85, 0.0
  %90 = vst.msk [vmem:[#allocation2 + $0x20] sm:$0xff] %vm85, 0.0
  %91 = vst.msk [vmem:[#allocation2 + $0x28] sm:$0xff] %vm85, 0.0
  %92 = vst.msk [vmem:[#allocation2 + $0x30] sm:$0xff] %vm85, 0.0
  %93 = vst.msk [vmem:[#allocation2 + $0x38] sm:$0xff] %vm85, 0.0
  %94 = vst.msk [vmem:[#allocation2 + $0x40] sm:$0xff] %vm85, 0.0
  %95 = vst.msk [vmem:[#allocation2 + $0x48] sm:$0xff] %vm85, 0.0
  %96 = vst.msk [vmem:[#allocation2 + $0x50] sm:$0xff] %vm85, 0.0
  %97 = vst.msk [vmem:[#allocation2 + $0x58] sm:$0xff] %vm85, 0.0
  %98 = vst.msk [vmem:[#allocation2 + $0x60] sm:$0xff] %vm85, 0.0
  %99 = vst.msk [vmem:[#allocation2 + $0x68] sm:$0xff] %vm85, 0.0
  %100 = vst.msk [vmem:[#allocation2 + $0x70] sm:$0xff] %vm85, 0.0
  %101 = vst.msk [vmem:[#allocation2 + $0x78] sm:$0xff] %vm85, 0.0
  %102 = vst.msk [vmem:[#allocation2 + $0x80] sm:$0xff] %vm85, 0.0
  %103 = vst.msk [vmem:[#allocation2 + $0x88] sm:$0xff] %vm85, 0.0
  %104 = vst.msk [vmem:[#allocation2 + $0x90] sm:$0xff] %vm85, 0.0
  %105 = vst.msk [vmem:[#allocation2 + $0x98] sm:$0xff] %vm85, 0.0
  %106 = vst.msk [vmem:[#allocation2 + $0xa0] sm:$0xff] %vm85, 0.0
  %107 = vst.msk [vmem:[#allocation2 + $0xa8] sm:$0xff] %vm85, 0.0
  %108 = vst.msk [vmem:[#allocation2 + $0xb0] sm:$0xff] %vm85, 0.0
  %109 = vst.msk [vmem:[#allocation2 + $0xb8] sm:$0xff] %vm85, 0.0
  %110 = vst.msk [vmem:[#allocation2 + $0xc0] sm:$0xff] %vm85, 0.0
  %111 = vst.msk [vmem:[#allocation2 + $0xc8] sm:$0xff] %vm85, 0.0
  %112 = vst.msk [vmem:[#allocation2 + $0xd0] sm:$0xff] %vm85, 0.0
  %113 = vst.msk [vmem:[#allocation2 + $0xd8] sm:$0xff] %vm85, 0.0
  %114 = vst.msk [vmem:[#allocation2 + $0xe0] sm:$0xff] %vm85, 0.0
  %115 = vst.msk [vmem:[#allocation2 + $0xe8] sm:$0xff] %vm85, 0.0
  %116 = vst.msk [vmem:[#allocation2 + $0xf0] sm:$0xff] %vm85, 0.0
  %117 = vst.msk [vmem:[#allocation2 + $0xf8] sm:$0xff] %vm85, 0.0
  %118 = vst.msk [vmem:[#allocation2 + $0x100] sm:$0xff] %vm85, 0.0
  %119 = vst.msk [vmem:[#allocation2 + $0x108] sm:$0xff] %vm85, 0.0
  %120 = vst.msk [vmem:[#allocation2 + $0x110] sm:$0xff] %vm85, 0.0
  %121 = vst.msk [vmem:[#allocation2 + $0x118] sm:$0xff] %vm85, 0.0
  %122 = vst.msk [vmem:[#allocation2 + $0x120] sm:$0xff] %vm85, 0.0
  %123 = vst.msk [vmem:[#allocation2 + $0x128] sm:$0xff] %vm85, 0.0
  %124 = vst.msk [vmem:[#allocation2 + $0x130] sm:$0xff] %vm85, 0.0
  %125 = vst.msk [vmem:[#allocation2 + $0x138] sm:$0xff] %vm85, 0.0
  %126 = vst.msk [vmem:[#allocation2 + $0x140] sm:$0xff] %vm85, 0.0
  %127 = vst.msk [vmem:[#allocation2 + $0x148] sm:$0xff] %vm85, 0.0
  %128 = vst.msk [vmem:[#allocation2 + $0x150] sm:$0xff] %vm85, 0.0
  %129 = vst.msk [vmem:[#allocation2 + $0x158] sm:$0xff] %vm85, 0.0
  %130 = vst.msk [vmem:[#allocation2 + $0x160] sm:$0xff] %vm85, 0.0
  %131 = vst.msk [vmem:[#allocation2 + $0x168] sm:$0xff] %vm85, 0.0
  %132 = vst.msk [vmem:[#allocation2 + $0x170] sm:$0xff] %vm85, 0.0
  %133 = vst.msk [vmem:[#allocation2 + $0x178] sm:$0xff] %vm85, 0.0
  %134 = vst.msk [vmem:[#allocation2 + $0x180] sm:$0xff] %vm85, 0.0
  %135 = vst.msk [vmem:[#allocation2 + $0x188] sm:$0xff] %vm85, 0.0
  %136 = vst.msk [vmem:[#allocation2 + $0x190] sm:$0xff] %vm85, 0.0
  %137 = vst.msk [vmem:[#allocation2 + $0x198] sm:$0xff] %vm85, 0.0
  %138 = vst.msk [vmem:[#allocation2 + $0x1a0] sm:$0xff] %vm85, 0.0
  %139 = vst.msk [vmem:[#allocation2 + $0x1a8] sm:$0xff] %vm85, 0.0
  %140 = vst.msk [vmem:[#allocation2 + $0x1b0] sm:$0xff] %vm85, 0.0
  %141 = vst.msk [vmem:[#allocation2 + $0x1b8] sm:$0xff] %vm85, 0.0
  %142 = vst.msk [vmem:[#allocation2 + $0x1c0] sm:$0xff] %vm85, 0.0
  %143 = vst.msk [vmem:[#allocation2 + $0x1c8] sm:$0xff] %vm85, 0.0
  %144 = vst.msk [vmem:[#allocation2 + $0x1d0] sm:$0xff] %vm85, 0.0
  %145 = vst.msk [vmem:[#allocation2 + $0x1d8] sm:$0xff] %vm85, 0.0
  %146 = vst.msk [vmem:[#allocation2 + $0x1e0] sm:$0xff] %vm85, 0.0
  %147 = vst.msk [vmem:[#allocation2 + $0x1e8] sm:$0xff] %vm85, 0.0
  %148 = vst.msk [vmem:[#allocation2 + $0x1f0] sm:$0xff] %vm85, 0.0
  %149 = vst.msk [vmem:[#allocation2 + $0x1f8] sm:$0xff] %vm85, 0.0
  %150 = vst.msk [vmem:[#allocation2 + $0x200] sm:$0xff] %vm85, 0.0
  %151 = vst.msk [vmem:[#allocation2 + $0x208] sm:$0xff] %vm85, 0.0
  %152 = vst.msk [vmem:[#allocation2 + $0x210] sm:$0xff] %vm85, 0.0
  %153 = vst.msk [vmem:[#allocation2 + $0x218] sm:$0xff] %vm85, 0.0
  %154 = vst.msk [vmem:[#allocation2 + $0x220] sm:$0xff] %vm85, 0.0
  %155 = vst.msk [vmem:[#allocation2 + $0x228] sm:$0xff] %vm85, 0.0
  %156 = vst.msk [vmem:[#allocation2 + $0x230] sm:$0xff] %vm85, 0.0
  %157 = vst.msk [vmem:[#allocation2 + $0x238] sm:$0xff] %vm85, 0.0
  %158 = vst.msk [vmem:[#allocation2 + $0x240] sm:$0xff] %vm85, 0.0
  %159 = vst.msk [vmem:[#allocation2 + $0x248] sm:$0xff] %vm85, 0.0
  %160 = vst.msk [vmem:[#allocation2 + $0x250] sm:$0xff] %vm85, 0.0
  %161 = vst.msk [vmem:[#allocation2 + $0x258] sm:$0xff] %vm85, 0.0
  %162 = vst.msk [vmem:[#allocation2 + $0x260] sm:$0xff] %vm85, 0.0
  %163 = vst.msk [vmem:[#allocation2 + $0x268] sm:$0xff] %vm85, 0.0
  %164 = vst.msk [vmem:[#allocation2 + $0x270] sm:$0xff] %vm85, 0.0
  %165 = vst.msk [vmem:[#allocation2 + $0x278] sm:$0xff] %vm85, 0.0
  %166 = vst.msk [vmem:[#allocation2 + $0x280] sm:$0xff] %vm85, 0.0
  %167 = vst.msk [vmem:[#allocation2 + $0x288] sm:$0xff] %vm85, 0.0
  %168 = vst.msk [vmem:[#allocation2 + $0x290] sm:$0xff] %vm85, 0.0
  %169 = vst.msk [vmem:[#allocation2 + $0x298] sm:$0xff] %vm85, 0.0
  %170 = vst.msk [vmem:[#allocation2 + $0x2a0] sm:$0xff] %vm85, 0.0
  %171 = vst.msk [vmem:[#allocation2 + $0x2a8] sm:$0xff] %vm85, 0.0
  %172 = vst.msk [vmem:[#allocation2 + $0x2b0] sm:$0xff] %vm85, 0.0
  %173 = vst.msk [vmem:[#allocation2 + $0x2b8] sm:$0xff] %vm85, 0.0
  %174 = vst.msk [vmem:[#allocation2 + $0x2c0] sm:$0xff] %vm85, 0.0
  %175 = vst.msk [vmem:[#allocation2 + $0x2c8] sm:$0xff] %vm85, 0.0
  %176 = vst.msk [vmem:[#allocation2 + $0x2d0] sm:$0xff] %vm85, 0.0
  %177 = vst.msk [vmem:[#allocation2 + $0x2d8] sm:$0xff] %vm85, 0.0
  %178 = vst.msk [vmem:[#allocation2 + $0x2e0] sm:$0xff] %vm85, 0.0
  %179 = vst.msk [vmem:[#allocation2 + $0x2e8] sm:$0xff] %vm85, 0.0
  %180 = vst.msk [vmem:[#allocation2 + $0x2f0] sm:$0xff] %vm85, 0.0
  %181 = vst.msk [vmem:[#allocation2 + $0x2f8] sm:$0xff] %vm85, 0.0
  %182 = vst.msk [vmem:[#allocation2 + $0x300] sm:$0xff] %vm85, 0.0
  %183 = vst.msk [vmem:[#allocation2 + $0x308] sm:$0xff] %vm85, 0.0
  %184 = vst.msk [vmem:[#allocation2 + $0x310] sm:$0xff] %vm85, 0.0
  %185 = vst.msk [vmem:[#allocation2 + $0x318] sm:$0xff] %vm85, 0.0
  %186 = vst.msk [vmem:[#allocation2 + $0x320] sm:$0xff] %vm85, 0.0
  %187 = vst.msk [vmem:[#allocation2 + $0x328] sm:$0xff] %vm85, 0.0
  %188 = vst.msk [vmem:[#allocation2 + $0x330] sm:$0xff] %vm85, 0.0
  %189 = vst.msk [vmem:[#allocation2 + $0x338] sm:$0xff] %vm85, 0.0
  %190 = vst.msk [vmem:[#allocation2 + $0x340] sm:$0xff] %vm85, 0.0
  %191 = vst.msk [vmem:[#allocation2 + $0x348] sm:$0xff] %vm85, 0.0
  %192 = vst.msk [vmem:[#allocation2 + $0x350] sm:$0xff] %vm85, 0.0
  %193 = vst.msk [vmem:[#allocation2 + $0x358] sm:$0xff] %vm85, 0.0
  %194 = vst.msk [vmem:[#allocation2 + $0x360] sm:$0xff] %vm85, 0.0
  %195 = vst.msk [vmem:[#allocation2 + $0x368] sm:$0xff] %vm85, 0.0
  %196 = vst.msk [vmem:[#allocation2 + $0x370] sm:$0xff] %vm85, 0.0
  %197 = vst.msk [vmem:[#allocation2 + $0x378] sm:$0xff] %vm85, 0.0
  %198 = vst.msk [vmem:[#allocation2 + $0x380] sm:$0xff] %vm85, 0.0
  %199 = vst.msk [vmem:[#allocation2 + $0x388] sm:$0xff] %vm85, 0.0
  %200 = vst.msk [vmem:[#allocation2 + $0x390] sm:$0xff] %vm85, 0.0
  %201 = vst.msk [vmem:[#allocation2 + $0x398] sm:$0xff] %vm85, 0.0
  %202 = vst.msk [vmem:[#allocation2 + $0x3a0] sm:$0xff] %vm85, 0.0
  %203 = vst.msk [vmem:[#allocation2 + $0x3a8] sm:$0xff] %vm85, 0.0
  %204 = vst.msk [vmem:[#allocation2 + $0x3b0] sm:$0xff] %vm85, 0.0
  %205 = vst.msk [vmem:[#allocation2 + $0x3b8] sm:$0xff] %vm85, 0.0
  %206 = vst.msk [vmem:[#allocation2 + $0x3c0] sm:$0xff] %vm85, 0.0
  %207 = vst.msk [vmem:[#allocation2 + $0x3c8] sm:$0xff] %vm85, 0.0
  %208 = vst.msk [vmem:[#allocation2 + $0x3d0] sm:$0xff] %vm85, 0.0
  %209 = vst.msk [vmem:[#allocation2 + $0x3d8] sm:$0xff] %vm85, 0.0
  %210 = vst.msk [vmem:[#allocation2 + $0x3e0] sm:$0xff] %vm85, 0.0
  %211 = vst.msk [vmem:[#allocation2 + $0x3e8] sm:$0xff] %vm85, 0.0
  %212 = vst.msk [vmem:[#allocation2 + $0x3f0] sm:$0xff] %vm85, 0.0
  %213 = vst.msk [vmem:[#allocation2 + $0x3f8] sm:$0xff] %vm85, 0.0
  %214 = vst.msk [vmem:[#allocation2 + $0x400] sm:$0xff] %vm85, 0.0
  %215 = vst.msk [vmem:[#allocation2 + $0x408] sm:$0xff] %vm85, 0.0
  %216 = vst.msk [vmem:[#allocation2 + $0x410] sm:$0xff] %vm85, 0.0
  %217 = vst.msk [vmem:[#allocation2 + $0x418] sm:$0xff] %vm85, 0.0
  %218 = vst.msk [vmem:[#allocation2 + $0x420] sm:$0xff] %vm85, 0.0
  %219 = vst.msk [vmem:[#allocation2 + $0x428] sm:$0xff] %vm85, 0.0
  %220 = vst.msk [vmem:[#allocation2 + $0x430] sm:$0xff] %vm85, 0.0
  %221 = vst.msk [vmem:[#allocation2 + $0x438] sm:$0xff] %vm85, 0.0
  %222 = vst.msk [vmem:[#allocation2 + $0x440] sm:$0xff] %vm85, 0.0
  %223 = vst.msk [vmem:[#allocation2 + $0x448] sm:$0xff] %vm85, 0.0
  %224 = vst.msk [vmem:[#allocation2 + $0x450] sm:$0xff] %vm85, 0.0
  %225 = vst.msk [vmem:[#allocation2 + $0x458] sm:$0xff] %vm85, 0.0
  %226 = vst.msk [vmem:[#allocation2 + $0x460] sm:$0xff] %vm85, 0.0
  %227 = vst.msk [vmem:[#allocation2 + $0x468] sm:$0xff] %vm85, 0.0
  %228 = vst.msk [vmem:[#allocation2 + $0x470] sm:$0xff] %vm85, 0.0
  %229 = vst.msk [vmem:[#allocation2 + $0x478] sm:$0xff] %vm85, 0.0
  %s230 = scalar_lea.vmem [#allocation2], 32
  %231 = vst.msk [vmem:[%s230 + $0x8] sm:$0xff] %vm85, %v21
  %232 = vst.msk [vmem:[%s230 + $0x10] sm:$0xff] %vm85, %v22
  %233 = vst.msk [vmem:[%s230 + $0x28] sm:$0xff] %vm85, %v23
  %234 = vst.msk [vmem:[%s230 + $0x30] sm:$0xff] %vm85, %v24
  %235 = vst.msk [vmem:[%s230 + $0x48] sm:$0xff] %vm85, %v25
  %236 = vst.msk [vmem:[%s230 + $0x50] sm:$0xff] %vm85, %v26
  %237 = vst.msk [vmem:[%s230 + $0x68] sm:$0xff] %vm85, %v27
  %238 = vst.msk [vmem:[%s230 + $0x70] sm:$0xff] %vm85, %v28
  %239 = vst.msk [vmem:[%s230 + $0x88] sm:$0xff] %vm85, %v29
  %240 = vst.msk [vmem:[%s230 + $0x90] sm:$0xff] %vm85, %v30
  %241 = vst.msk [vmem:[%s230 + $0xa8] sm:$0xff] %vm85, %v31
  %242 = vst.msk [vmem:[%s230 + $0xb0] sm:$0xff] %vm85, %v32
  %243 = vst.msk [vmem:[%s230 + $0xc8] sm:$0xff] %vm85, %v33
  %244 = vst.msk [vmem:[%s230 + $0xd0] sm:$0xff] %vm85, %v34
  %245 = vst.msk [vmem:[%s230 + $0xe8] sm:$0xff] %vm85, %v35
  %246 = vst.msk [vmem:[%s230 + $0xf0] sm:$0xff] %vm85, %v36
  %247 = vst.msk [vmem:[%s230 + $0x108] sm:$0xff] %vm85, %v37
  %248 = vst.msk [vmem:[%s230 + $0x110] sm:$0xff] %vm85, %v38
  %249 = vst.msk [vmem:[%s230 + $0x128] sm:$0xff] %vm85, %v39
  %250 = vst.msk [vmem:[%s230 + $0x130] sm:$0xff] %vm85, %v40
  %251 = vst.msk [vmem:[%s230 + $0x148] sm:$0xff] %vm85, %v41
  %252 = vst.msk [vmem:[%s230 + $0x150] sm:$0xff] %vm85, %v42
  %253 = vst.msk [vmem:[%s230 + $0x168] sm:$0xff] %vm85, %v43
  %254 = vst.msk [vmem:[%s230 + $0x170] sm:$0xff] %vm85, %v44
  %255 = vst.msk [vmem:[%s230 + $0x188] sm:$0xff] %vm85, %v45
  %256 = vst.msk [vmem:[%s230 + $0x190] sm:$0xff] %vm85, %v46
  %257 = vst.msk [vmem:[%s230 + $0x1a8] sm:$0xff] %vm85, %v47
  %258 = vst.msk [vmem:[%s230 + $0x1b0] sm:$0xff] %vm85, %v48
  %259 = vst.msk [vmem:[%s230 + $0x1c8] sm:$0xff] %vm85, %v49
  %260 = vst.msk [vmem:[%s230 + $0x1d0] sm:$0xff] %vm85, %v50
  %261 = vst.msk [vmem:[%s230 + $0x1e8] sm:$0xff] %vm85, %v51
  %262 = vst.msk [vmem:[%s230 + $0x1f0] sm:$0xff] %vm85, %v52
  %263 = vst.msk [vmem:[%s230 + $0x248] sm:$0xff] %vm85, %v53
  %264 = vst.msk [vmem:[%s230 + $0x250] sm:$0xff] %vm85, %v54
  %265 = vst.msk [vmem:[%s230 + $0x268] sm:$0xff] %vm85, %v55
  %266 = vst.msk [vmem:[%s230 + $0x270] sm:$0xff] %vm85, %v56
  %267 = vst.msk [vmem:[%s230 + $0x288] sm:$0xff] %vm85, %v57
  %268 = vst.msk [vmem:[%s230 + $0x290] sm:$0xff] %vm85, %v58
  %269 = vst.msk [vmem:[%s230 + $0x2a8] sm:$0xff] %vm85, %v59
  %270 = vst.msk [vmem:[%s230 + $0x2b0] sm:$0xff] %vm85, %v60
  %271 = vst.msk [vmem:[%s230 + $0x2c8] sm:$0xff] %vm85, %v61
  %272 = vst.msk [vmem:[%s230 + $0x2d0] sm:$0xff] %vm85, %v62
  %273 = vst.msk [vmem:[%s230 + $0x2e8] sm:$0xff] %vm85, %v63
  %274 = vst.msk [vmem:[%s230 + $0x2f0] sm:$0xff] %vm85, %v64
  %275 = vst.msk [vmem:[%s230 + $0x308] sm:$0xff] %vm85, %v65
  %276 = vst.msk [vmem:[%s230 + $0x310] sm:$0xff] %vm85, %v66
  %277 = vst.msk [vmem:[%s230 + $0x328] sm:$0xff] %vm85, %v67
  %278 = vst.msk [vmem:[%s230 + $0x330] sm:$0xff] %vm85, %v68
  %279 = vst.msk [vmem:[%s230 + $0x348] sm:$0xff] %vm85, %v69
  %280 = vst.msk [vmem:[%s230 + $0x350] sm:$0xff] %vm85, %v70
  %281 = vst.msk [vmem:[%s230 + $0x368] sm:$0xff] %vm85, %v71
  %282 = vst.msk [vmem:[%s230 + $0x370] sm:$0xff] %vm85, %v72
  %283 = vst.msk [vmem:[%s230 + $0x388] sm:$0xff] %vm85, %v73
  %284 = vst.msk [vmem:[%s230 + $0x390] sm:$0xff] %vm85, %v74
  %285 = vst.msk [vmem:[%s230 + $0x3a8] sm:$0xff] %vm85, %v75
  %286 = vst.msk [vmem:[%s230 + $0x3b0] sm:$0xff] %vm85, %v76
  %287 = vst.msk [vmem:[%s230 + $0x3c8] sm:$0xff] %vm85, %v77
  %288 = vst.msk [vmem:[%s230 + $0x3d0] sm:$0xff] %vm85, %v78
  %289 = vst.msk [vmem:[%s230 + $0x3e8] sm:$0xff] %vm85, %v79
  %290 = vst.msk [vmem:[%s230 + $0x3f0] sm:$0xff] %vm85, %v80
  %291 = vst.msk [vmem:[%s230 + $0x408] sm:$0xff] %vm85, %v81
  %292 = vst.msk [vmem:[%s230 + $0x410] sm:$0xff] %vm85, %v82
  %293 = vst.msk [vmem:[%s230 + $0x428] sm:$0xff] %vm85, %v83
  %294 = vst.msk [vmem:[%s230 + $0x430] sm:$0xff] %vm85, %v84
  %v295 = vld [vmem:[#allocation2 + $0x7] sm:$0xff]
  %v296 = vld [vmem:[#allocation2 + $0xf] sm:$0xff]
  %v297 = vld [vmem:[#allocation2 + $0x27] sm:$0xff]
  %v298 = vld [vmem:[#allocation2 + $0x2f] sm:$0xff]
  %v299 = vld [vmem:[#allocation2 + $0x47] sm:$0xff]
  %v300 = vld [vmem:[#allocation2 + $0x4f] sm:$0xff]
  %v301 = vld [vmem:[#allocation2 + $0x67] sm:$0xff]
  %v302 = vld [vmem:[#allocation2 + $0x6f] sm:$0xff]
  %v303 = vld [vmem:[#allocation2 + $0x87] sm:$0xff]
  %v304 = vld [vmem:[#allocation2 + $0x8f] sm:$0xff]
  %v305 = vld [vmem:[#allocation2 + $0xa7] sm:$0xff]
  %v306 = vld [vmem:[#allocation2 + $0xaf] sm:$0xff]
  %v307 = vld [vmem:[#allocation2 + $0xc7] sm:$0xff]
  %v308 = vld [vmem:[#allocation2 + $0xcf] sm:$0xff]
  %v309 = vld [vmem:[#allocation2 + $0xe7] sm:$0xff]
  %v310 = vld [vmem:[#allocation2 + $0xef] sm:$0xff]
  %v311 = vld [vmem:[#allocation2 + $0x107] sm:$0xff]
  %v312 = vld [vmem:[#allocation2 + $0x10f] sm:$0xff]
  %v313 = vld [vmem:[#allocation2 + $0x127] sm:$0xff]
  %v314 = vld [vmem:[#allocation2 + $0x12f] sm:$0xff]
  %v315 = vld [vmem:[#allocation2 + $0x147] sm:$0xff]
  %v316 = vld [vmem:[#allocation2 + $0x14f] sm:$0xff]
  %v317 = vld [vmem:[#allocation2 + $0x167] sm:$0xff]
  %v318 = vld [vmem:[#allocation2 + $0x16f] sm:$0xff]
  %v319 = vld [vmem:[#allocation2 + $0x187] sm:$0xff]
  %v320 = vld [vmem:[#allocation2 + $0x18f] sm:$0xff]
  %v321 = vld [vmem:[#allocation2 + $0x1a7] sm:$0xff]
  %v322 = vld [vmem:[#allocation2 + $0x1af] sm:$0xff]
  %v323 = vld [vmem:[#allocation2 + $0x1c7] sm:$0xff]
  %v324 = vld [vmem:[#allocation2 + $0x1cf] sm:$0xff]
  %v325 = vld [vmem:[#allocation2 + $0x1e7] sm:$0xff]
  %v326 = vld [vmem:[#allocation2 + $0x1ef] sm:$0xff]
  %v327 = vld [vmem:[#allocation2 + $0x247] sm:$0xff]
  %v328 = vld [vmem:[#allocation2 + $0x24f] sm:$0xff]
  %v329 = vld [vmem:[#allocation2 + $0x267] sm:$0xff]
  %v330 = vld [vmem:[#allocation2 + $0x26f] sm:$0xff]
  %v331 = vld [vmem:[#allocation2 + $0x287] sm:$0xff]
  %v332 = vld [vmem:[#allocation2 + $0x28f] sm:$0xff]
  %v333 = vld [vmem:[#allocation2 + $0x2a7] sm:$0xff]
  %v334 = vld [vmem:[#allocation2 + $0x2af] sm:$0xff]
  %v335 = vld [vmem:[#allocation2 + $0x2c7] sm:$0xff]
  %v336 = vld [vmem:[#allocation2 + $0x2cf] sm:$0xff]
  %v337 = vld [vmem:[#allocation2 + $0x2e7] sm:$0xff]
  %v338 = vld [vmem:[#allocation2 + $0x2ef] sm:$0xff]
  %v339 = vld [vmem:[#allocation2 + $0x307] sm:$0xff]
  %v340 = vld [vmem:[#allocation2 + $0x30f] sm:$0xff]
  %v341 = vld [vmem:[#allocation2 + $0x327] sm:$0xff]
  %v342 = vld [vmem:[#allocation2 + $0x32f] sm:$0xff]
  %v343 = vld [vmem:[#allocation2 + $0x347] sm:$0xff]
  %v344 = vld [vmem:[#allocation2 + $0x34f] sm:$0xff]
  %v345 = vld [vmem:[#allocation2 + $0x367] sm:$0xff]
  %v346 = vld [vmem:[#allocation2 + $0x36f] sm:$0xff]
  %v347 = vld [vmem:[#allocation2 + $0x387] sm:$0xff]
  %v348 = vld [vmem:[#allocation2 + $0x38f] sm:$0xff]
  %v349 = vld [vmem:[#allocation2 + $0x3a7] sm:$0xff]
  %v350 = vld [vmem:[#allocation2 + $0x3af] sm:$0xff]
  %v351 = vld [vmem:[#allocation2 + $0x3c7] sm:$0xff]
  %v352 = vld [vmem:[#allocation2 + $0x3cf] sm:$0xff]
  %v353 = vld [vmem:[#allocation2 + $0x3e7] sm:$0xff]
  %v354 = vld [vmem:[#allocation2 + $0x3ef] sm:$0xff]
  %v355 = vld [vmem:[#allocation2 + $0x407] sm:$0xff]
  %v356 = vld [vmem:[#allocation2 + $0x40f] sm:$0xff]
  %v357 = vld [vmem:[#allocation2 + $0x427] sm:$0xff]
  %v358 = vld [vmem:[#allocation2 + $0x42f] sm:$0xff]
  %v359 = vld [vmem:[#allocation2 + $0x8] sm:$0xff]
  %v360 = vld [vmem:[#allocation2 + $0x10] sm:$0xff]
  %v361 = vld [vmem:[#allocation2 + $0x28] sm:$0xff]
  %v362 = vld [vmem:[#allocation2 + $0x30] sm:$0xff]
  %v363 = vld [vmem:[#allocation2 + $0x48] sm:$0xff]
  %v364 = vld [vmem:[#allocation2 + $0x50] sm:$0xff]
  %v365 = vld [vmem:[#allocation2 + $0x68] sm:$0xff]
  %v366 = vld [vmem:[#allocation2 + $0x70] sm:$0xff]
  %v367 = vld [vmem:[#allocation2 + $0x88] sm:$0xff]
  %v368 = vld [vmem:[#allocation2 + $0x90] sm:$0xff]
  %v369 = vld [vmem:[#allocation2 + $0xa8] sm:$0xff]
  %v370 = vld [vmem:[#allocation2 + $0xb0] sm:$0xff]
  %v371 = vld [vmem:[#allocation2 + $0xc8] sm:$0xff]
  %v372 = vld [vmem:[#allocation2 + $0xd0] sm:$0xff]
  %v373 = vld [vmem:[#allocation2 + $0xe8] sm:$0xff]
  %v374 = vld [vmem:[#allocation2 + $0xf0] sm:$0xff]
  %v375 = vld [vmem:[#allocation2 + $0x108] sm:$0xff]
  %v376 = vld [vmem:[#allocation2 + $0x110] sm:$0xff]
  %v377 = vld [vmem:[#allocation2 + $0x128] sm:$0xff]
  %v378 = vld [vmem:[#allocation2 + $0x130] sm:$0xff]
  %v379 = vld [vmem:[#allocation2 + $0x148] sm:$0xff]
  %v380 = vld [vmem:[#allocation2 + $0x150] sm:$0xff]
  %v381 = vld [vmem:[#allocation2 + $0x168] sm:$0xff]
  %v382 = vld [vmem:[#allocation2 + $0x170] sm:$0xff]
  %v383 = vld [vmem:[#allocation2 + $0x188] sm:$0xff]
  %v384 = vld [vmem:[#allocation2 + $0x190] sm:$0xff]
  %v385 = vld [vmem:[#allocation2 + $0x1a8] sm:$0xff]
  %v386 = vld [vmem:[#allocation2 + $0x1b0] sm:$0xff]
  %v387 = vld [vmem:[#allocation2 + $0x1c8] sm:$0xff]
  %v388 = vld [vmem:[#allocation2 + $0x1d0] sm:$0xff]
  %v389 = vld [vmem:[#allocation2 + $0x1e8] sm:$0xff]
  %v390 = vld [vmem:[#allocation2 + $0x1f0] sm:$0xff]
  %v391 = vld [vmem:[#allocation2 + $0x248] sm:$0xff]
  %v392 = vld [vmem:[#allocation2 + $0x250] sm:$0xff]
  %v393 = vld [vmem:[#allocation2 + $0x268] sm:$0xff]
  %v394 = vld [vmem:[#allocation2 + $0x270] sm:$0xff]
  %v395 = vld [vmem:[#allocation2 + $0x288] sm:$0xff]
  %v396 = vld [vmem:[#allocation2 + $0x290] sm:$0xff]
  %v397 = vld [vmem:[#allocation2 + $0x2a8] sm:$0xff]
  %v398 = vld [vmem:[#allocation2 + $0x2b0] sm:$0xff]
  %v399 = vld [vmem:[#allocation2 + $0x2c8] sm:$0xff]
  %v400 = vld [vmem:[#allocation2 + $0x2d0] sm:$0xff]
  %v401 = vld [vmem:[#allocation2 + $0x2e8] sm:$0xff]
  %v402 = vld [vmem:[#allocation2 + $0x2f0] sm:$0xff]
  %v403 = vld [vmem:[#allocation2 + $0x308] sm:$0xff]
  %v404 = vld [vmem:[#allocation2 + $0x310] sm:$0xff]
  %v405 = vld [vmem:[#allocation2 + $0x328] sm:$0xff]
  %v406 = vld [vmem:[#allocation2 + $0x330] sm:$0xff]
  %v407 = vld [vmem:[#allocation2 + $0x348] sm:$0xff]
  %v408 = vld [vmem:[#allocation2 + $0x350] sm:$0xff]
  %v409 = vld [vmem:[#allocation2 + $0x368] sm:$0xff]
  %v410 = vld [vmem:[#allocation2 + $0x370] sm:$0xff]
  %v411 = vld [vmem:[#allocation2 + $0x388] sm:$0xff]
  %v412 = vld [vmem:[#allocation2 + $0x390] sm:$0xff]
  %v413 = vld [vmem:[#allocation2 + $0x3a8] sm:$0xff]
  %v414 = vld [vmem:[#allocation2 + $0x3b0] sm:$0xff]
  %v415 = vld [vmem:[#allocation2 + $0x3c8] sm:$0xff]
  %v416 = vld [vmem:[#allocation2 + $0x3d0] sm:$0xff]
  %v417 = vld [vmem:[#allocation2 + $0x3e8] sm:$0xff]
  %v418 = vld [vmem:[#allocation2 + $0x3f0] sm:$0xff]
  %v419 = vld [vmem:[#allocation2 + $0x408] sm:$0xff]
  %v420 = vld [vmem:[#allocation2 + $0x410] sm:$0xff]
  %v421 = vld [vmem:[#allocation2 + $0x428] sm:$0xff]
  %v422 = vld [vmem:[#allocation2 + $0x430] sm:$0xff]
  %v423 = vld [vmem:[#allocation2 + $0x9] sm:$0xff]
  %v424 = vld [vmem:[#allocation2 + $0x11] sm:$0xff]
  %v425 = vld [vmem:[#allocation2 + $0x29] sm:$0xff]
  %v426 = vld [vmem:[#allocation2 + $0x31] sm:$0xff]
  %v427 = vld [vmem:[#allocation2 + $0x49] sm:$0xff]
  %v428 = vld [vmem:[#allocation2 + $0x51] sm:$0xff]
  %v429 = vld [vmem:[#allocation2 + $0x69] sm:$0xff]
  %v430 = vld [vmem:[#allocation2 + $0x71] sm:$0xff]
  %v431 = vld [vmem:[#allocation2 + $0x89] sm:$0xff]
  %v432 = vld [vmem:[#allocation2 + $0x91] sm:$0xff]
  %v433 = vld [vmem:[#allocation2 + $0xa9] sm:$0xff]
  %v434 = vld [vmem:[#allocation2 + $0xb1] sm:$0xff]
  %v435 = vld [vmem:[#allocation2 + $0xc9] sm:$0xff]
  %v436 = vld [vmem:[#allocation2 + $0xd1] sm:$0xff]
  %v437 = vld [vmem:[#allocation2 + $0xe9] sm:$0xff]
  %v438 = vld [vmem:[#allocation2 + $0xf1] sm:$0xff]
  %v439 = vld [vmem:[#allocation2 + $0x109] sm:$0xff]
  %v440 = vld [vmem:[#allocation2 + $0x111] sm:$0xff]
  %v441 = vld [vmem:[#allocation2 + $0x129] sm:$0xff]
  %v442 = vld [vmem:[#allocation2 + $0x131] sm:$0xff]
  %v443 = vld [vmem:[#allocation2 + $0x149] sm:$0xff]
  %v444 = vld [vmem:[#allocation2 + $0x151] sm:$0xff]
  %v445 = vld [vmem:[#allocation2 + $0x169] sm:$0xff]
  %v446 = vld [vmem:[#allocation2 + $0x171] sm:$0xff]
  %v447 = vld [vmem:[#allocation2 + $0x189] sm:$0xff]
  %v448 = vld [vmem:[#allocation2 + $0x191] sm:$0xff]
  %v449 = vld [vmem:[#allocation2 + $0x1a9] sm:$0xff]
  %v450 = vld [vmem:[#allocation2 + $0x1b1] sm:$0xff]
  %v451 = vld [vmem:[#allocation2 + $0x1c9] sm:$0xff]
  %v452 = vld [vmem:[#allocation2 + $0x1d1] sm:$0xff]
  %v453 = vld [vmem:[#allocation2 + $0x1e9] sm:$0xff]
  %v454 = vld [vmem:[#allocation2 + $0x1f1] sm:$0xff]
  %v455 = vld [vmem:[#allocation2 + $0x249] sm:$0xff]
  %v456 = vld [vmem:[#allocation2 + $0x251] sm:$0xff]
  %v457 = vld [vmem:[#allocation2 + $0x269] sm:$0xff]
  %v458 = vld [vmem:[#allocation2 + $0x271] sm:$0xff]
  %v459 = vld [vmem:[#allocation2 + $0x289] sm:$0xff]
  %v460 = vld [vmem:[#allocation2 + $0x291] sm:$0xff]
  %v461 = vld [vmem:[#allocation2 + $0x2a9] sm:$0xff]
  %v462 = vld [vmem:[#allocation2 + $0x2b1] sm:$0xff]
  %v463 = vld [vmem:[#allocation2 + $0x2c9] sm:$0xff]
  %v464 = vld [vmem:[#allocation2 + $0x2d1] sm:$0xff]
  %v465 = vld [vmem:[#allocation2 + $0x2e9] sm:$0xff]
  %v466 = vld [vmem:[#allocation2 + $0x2f1] sm:$0xff]
  %v467 = vld [vmem:[#allocation2 + $0x309] sm:$0xff]
  %v468 = vld [vmem:[#allocation2 + $0x311] sm:$0xff]
  %v469 = vld [vmem:[#allocation2 + $0x329] sm:$0xff]
  %v470 = vld [vmem:[#allocation2 + $0x331] sm:$0xff]
  %v471 = vld [vmem:[#allocation2 + $0x349] sm:$0xff]
  %v472 = vld [vmem:[#allocation2 + $0x351] sm:$0xff]
  %v473 = vld [vmem:[#allocation2 + $0x369] sm:$0xff]
  %v474 = vld [vmem:[#allocation2 + $0x371] sm:$0xff]
  %v475 = vld [vmem:[#allocation2 + $0x389] sm:$0xff]
  %v476 = vld [vmem:[#allocation2 + $0x391] sm:$0xff]
  %v477 = vld [vmem:[#allocation2 + $0x3a9] sm:$0xff]
  %v478 = vld [vmem:[#allocation2 + $0x3b1] sm:$0xff]
  %v479 = vld [vmem:[#allocation2 + $0x3c9] sm:$0xff]
  %v480 = vld [vmem:[#allocation2 + $0x3d1] sm:$0xff]
  %v481 = vld [vmem:[#allocation2 + $0x3e9] sm:$0xff]
  %v482 = vld [vmem:[#allocation2 + $0x3f1] sm:$0xff]
  %v483 = vld [vmem:[#allocation2 + $0x409] sm:$0xff]
  %v484 = vld [vmem:[#allocation2 + $0x411] sm:$0xff]
  %v485 = vld [vmem:[#allocation2 + $0x429] sm:$0xff]
  %v486 = vld [vmem:[#allocation2 + $0x431] sm:$0xff]
  %v487 = vld [vmem:[%s230 + $0x7] sm:$0xff]
  %v488 = vld [vmem:[%s230 + $0xf] sm:$0xff]
  %v489 = vld [vmem:[%s230 + $0x27] sm:$0xff]
  %v490 = vld [vmem:[%s230 + $0x2f] sm:$0xff]
  %v491 = vld [vmem:[%s230 + $0x47] sm:$0xff]
  %v492 = vld [vmem:[%s230 + $0x4f] sm:$0xff]
  %v493 = vld [vmem:[%s230 + $0x67] sm:$0xff]
  %v494 = vld [vmem:[%s230 + $0x6f] sm:$0xff]
  %v495 = vld [vmem:[%s230 + $0x87] sm:$0xff]
  %v496 = vld [vmem:[%s230 + $0x8f] sm:$0xff]
  %v497 = vld [vmem:[%s230 + $0xa7] sm:$0xff]
  %v498 = vld [vmem:[%s230 + $0xaf] sm:$0xff]
  %v499 = vld [vmem:[%s230 + $0xc7] sm:$0xff]
  %v500 = vld [vmem:[%s230 + $0xcf] sm:$0xff]
  %v501 = vld [vmem:[%s230 + $0xe7] sm:$0xff]
  %v502 = vld [vmem:[%s230 + $0xef] sm:$0xff]
  %v503 = vld [vmem:[%s230 + $0x107] sm:$0xff]
  %v504 = vld [vmem:[%s230 + $0x10f] sm:$0xff]
  %v505 = vld [vmem:[%s230 + $0x127] sm:$0xff]
  %v506 = vld [vmem:[%s230 + $0x12f] sm:$0xff]
  %v507 = vld [vmem:[%s230 + $0x147] sm:$0xff]
  %v508 = vld [vmem:[%s230 + $0x14f] sm:$0xff]
  %v509 = vld [vmem:[%s230 + $0x167] sm:$0xff]
  %v510 = vld [vmem:[%s230 + $0x16f] sm:$0xff]
  %v511 = vld [vmem:[%s230 + $0x187] sm:$0xff]
  %v512 = vld [vmem:[%s230 + $0x18f] sm:$0xff]
  %v513 = vld [vmem:[%s230 + $0x1a7] sm:$0xff]
  %v514 = vld [vmem:[%s230 + $0x1af] sm:$0xff]
  %v515 = vld [vmem:[%s230 + $0x1c7] sm:$0xff]
  %v516 = vld [vmem:[%s230 + $0x1cf] sm:$0xff]
  %v517 = vld [vmem:[%s230 + $0x1e7] sm:$0xff]
  %v518 = vld [vmem:[%s230 + $0x1ef] sm:$0xff]
  %v519 = vld [vmem:[%s230 + $0x247] sm:$0xff]
  %v520 = vld [vmem:[%s230 + $0x24f] sm:$0xff]
  %v521 = vld [vmem:[%s230 + $0x267] sm:$0xff]
  %v522 = vld [vmem:[%s230 + $0x26f] sm:$0xff]
  %v523 = vld [vmem:[%s230 + $0x287] sm:$0xff]
  %v524 = vld [vmem:[%s230 + $0x28f] sm:$0xff]
  %v525 = vld [vmem:[%s230 + $0x2a7] sm:$0xff]
  %v526 = vld [vmem:[%s230 + $0x2af] sm:$0xff]
  %v527 = vld [vmem:[%s230 + $0x2c7] sm:$0xff]
  %v528 = vld [vmem:[%s230 + $0x2cf] sm:$0xff]
  %v529 = vld [vmem:[%s230 + $0x2e7] sm:$0xff]
  %v530 = vld [vmem:[%s230 + $0x2ef] sm:$0xff]
  %v531 = vld [vmem:[%s230 + $0x307] sm:$0xff]
  %v532 = vld [vmem:[%s230 + $0x30f] sm:$0xff]
  %v533 = vld [vmem:[%s230 + $0x327] sm:$0xff]
  %v534 = vld [vmem:[%s230 + $0x32f] sm:$0xff]
  %v535 = vld [vmem:[%s230 + $0x347] sm:$0xff]
  %v536 = vld [vmem:[%s230 + $0x34f] sm:$0xff]
  %v537 = vld [vmem:[%s230 + $0x367] sm:$0xff]
  %v538 = vld [vmem:[%s230 + $0x36f] sm:$0xff]
  %v539 = vld [vmem:[%s230 + $0x387] sm:$0xff]
  %v540 = vld [vmem:[%s230 + $0x38f] sm:$0xff]
  %v541 = vld [vmem:[%s230 + $0x3a7] sm:$0xff]
  %v542 = vld [vmem:[%s230 + $0x3af] sm:$0xff]
  %v543 = vld [vmem:[%s230 + $0x3c7] sm:$0xff]
  %v544 = vld [vmem:[%s230 + $0x3cf] sm:$0xff]
  %v545 = vld [vmem:[%s230 + $0x3e7] sm:$0xff]
  %v546 = vld [vmem:[%s230 + $0x3ef] sm:$0xff]
  %v547 = vld [vmem:[%s230 + $0x407] sm:$0xff]
  %v548 = vld [vmem:[%s230 + $0x40f] sm:$0xff]
  %v549 = vld [vmem:[%s230 + $0x427] sm:$0xff]
  %v550 = vld [vmem:[%s230 + $0x42f] sm:$0xff]
  %v551 = vld [vmem:[%s230 + $0x8] sm:$0xff]
  %v552 = vld [vmem:[%s230 + $0x10] sm:$0xff]
  %v553 = vld [vmem:[%s230 + $0x28] sm:$0xff]
  %v554 = vld [vmem:[%s230 + $0x30] sm:$0xff]
  %v555 = vld [vmem:[%s230 + $0x48] sm:$0xff]
  %v556 = vld [vmem:[%s230 + $0x50] sm:$0xff]
  %v557 = vld [vmem:[%s230 + $0x68] sm:$0xff]
  %v558 = vld [vmem:[%s230 + $0x70] sm:$0xff]
  %v559 = vld [vmem:[%s230 + $0x88] sm:$0xff]
  %v560 = vld [vmem:[%s230 + $0x90] sm:$0xff]
  %v561 = vld [vmem:[%s230 + $0xa8] sm:$0xff]
  %v562 = vld [vmem:[%s230 + $0xb0] sm:$0xff]
  %v563 = vld [vmem:[%s230 + $0xc8] sm:$0xff]
  %v564 = vld [vmem:[%s230 + $0xd0] sm:$0xff]
  %v565 = vld [vmem:[%s230 + $0xe8] sm:$0xff]
  %v566 = vld [vmem:[%s230 + $0xf0] sm:$0xff]
  %v567 = vld [vmem:[%s230 + $0x108] sm:$0xff]
  %v568 = vld [vmem:[%s230 + $0x110] sm:$0xff]
  %v569 = vld [vmem:[%s230 + $0x128] sm:$0xff]
  %v570 = vld [vmem:[%s230 + $0x130] sm:$0xff]
  %v571 = vld [vmem:[%s230 + $0x148] sm:$0xff]
  %v572 = vld [vmem:[%s230 + $0x150] sm:$0xff]
  %v573 = vld [vmem:[%s230 + $0x168] sm:$0xff]
  %v574 = vld [vmem:[%s230 + $0x170] sm:$0xff]
  %v575 = vld [vmem:[%s230 + $0x188] sm:$0xff]
  %v576 = vld [vmem:[%s230 + $0x190] sm:$0xff]
  %v577 = vld [vmem:[%s230 + $0x1a8] sm:$0xff]
  %v578 = vld [vmem:[%s230 + $0x1b0] sm:$0xff]
  %v579 = vld [vmem:[%s230 + $0x1c8] sm:$0xff]
  %v580 = vld [vmem:[%s230 + $0x1d0] sm:$0xff]
  %v581 = vld [vmem:[%s230 + $0x1e8] sm:$0xff]
  %v582 = vld [vmem:[%s230 + $0x1f0] sm:$0xff]
  %v583 = vld [vmem:[%s230 + $0x248] sm:$0xff]
  %v584 = vld [vmem:[%s230 + $0x250] sm:$0xff]
  %v585 = vld [vmem:[%s230 + $0x268] sm:$0xff]
  %v586 = vld [vmem:[%s230 + $0x270] sm:$0xff]
  %v587 = vld [vmem:[%s230 + $0x288] sm:$0xff]
  %v588 = vld [vmem:[%s230 + $0x290] sm:$0xff]
  %v589 = vld [vmem:[%s230 + $0x2a8] sm:$0xff]
  %v590 = vld [vmem:[%s230 + $0x2b0] sm:$0xff]
  %v591 = vld [vmem:[%s230 + $0x2c8] sm:$0xff]
  %v592 = vld [vmem:[%s230 + $0x2d0] sm:$0xff]
  %v593 = vld [vmem:[%s230 + $0x2e8] sm:$0xff]
  %v594 = vld [vmem:[%s230 + $0x2f0] sm:$0xff]
  %v595 = vld [vmem:[%s230 + $0x308] sm:$0xff]
  %v596 = vld [vmem:[%s230 + $0x310] sm:$0xff]
  %v597 = vld [vmem:[%s230 + $0x328] sm:$0xff]
  %v598 = vld [vmem:[%s230 + $0x330] sm:$0xff]
  %v599 = vld [vmem:[%s230 + $0x348] sm:$0xff]
  %v600 = vld [vmem:[%s230 + $0x350] sm:$0xff]
  %v601 = vld [vmem:[%s230 + $0x368] sm:$0xff]
  %v602 = vld [vmem:[%s230 + $0x370] sm:$0xff]
  %v603 = vld [vmem:[%s230 + $0x388] sm:$0xff]
  %v604 = vld [vmem:[%s230 + $0x390] sm:$0xff]
  %v605 = vld [vmem:[%s230 + $0x3a8] sm:$0xff]
  %v606 = vld [vmem:[%s230 + $0x3b0] sm:$0xff]
  %v607 = vld [vmem:[%s230 + $0x3c8] sm:$0xff]
  %v608 = vld [vmem:[%s230 + $0x3d0] sm:$0xff]
  %v609 = vld [vmem:[%s230 + $0x3e8] sm:$0xff]
  %v610 = vld [vmem:[%s230 + $0x3f0] sm:$0xff]
  %v611 = vld [vmem:[%s230 + $0x408] sm:$0xff]
  %v612 = vld [vmem:[%s230 + $0x410] sm:$0xff]
  %v613 = vld [vmem:[%s230 + $0x428] sm:$0xff]
  %v614 = vld [vmem:[%s230 + $0x430] sm:$0xff]
  %v615 = vld [vmem:[%s230 + $0x9] sm:$0xff]
  %v616 = vld [vmem:[%s230 + $0x11] sm:$0xff]
  %v617 = vld [vmem:[%s230 + $0x29] sm:$0xff]
  %v618 = vld [vmem:[%s230 + $0x31] sm:$0xff]
  %v619 = vld [vmem:[%s230 + $0x49] sm:$0xff]
  %v620 = vld [vmem:[%s230 + $0x51] sm:$0xff]
  %v621 = vld [vmem:[%s230 + $0x69] sm:$0xff]
  %v622 = vld [vmem:[%s230 + $0x71] sm:$0xff]
  %v623 = vld [vmem:[%s230 + $0x89] sm:$0xff]
  %v624 = vld [vmem:[%s230 + $0x91] sm:$0xff]
  %v625 = vld [vmem:[%s230 + $0xa9] sm:$0xff]
  %v626 = vld [vmem:[%s230 + $0xb1] sm:$0xff]
  %v627 = vld [vmem:[%s230 + $0xc9] sm:$0xff]
  %v628 = vld [vmem:[%s230 + $0xd1] sm:$0xff]
  %v629 = vld [vmem:[%s230 + $0xe9] sm:$0xff]
  %v630 = vld [vmem:[%s230 + $0xf1] sm:$0xff]
  %v631 = vld [vmem:[%s230 + $0x109] sm:$0xff]
  %v632 = vld [vmem:[%s230 + $0x111] sm:$0xff]
  %v633 = vld [vmem:[%s230 + $0x129] sm:$0xff]
  %v634 = vld [vmem:[%s230 + $0x131] sm:$0xff]
  %v635 = vld [vmem:[%s230 + $0x149] sm:$0xff]
  %v636 = vld [vmem:[%s230 + $0x151] sm:$0xff]
  %v637 = vld [vmem:[%s230 + $0x169] sm:$0xff]
  %v638 = vld [vmem:[%s230 + $0x171] sm:$0xff]
  %v639 = vld [vmem:[%s230 + $0x189] sm:$0xff]
  %v640 = vld [vmem:[%s230 + $0x191] sm:$0xff]
  %v641 = vld [vmem:[%s230 + $0x1a9] sm:$0xff]
  %v642 = vld [vmem:[%s230 + $0x1b1] sm:$0xff]
  %v643 = vld [vmem:[%s230 + $0x1c9] sm:$0xff]
  %v644 = vld [vmem:[%s230 + $0x1d1] sm:$0xff]
  %v645 = vld [vmem:[%s230 + $0x1e9] sm:$0xff]
  %v646 = vld [vmem:[%s230 + $0x1f1] sm:$0xff]
  %v647 = vld [vmem:[%s230 + $0x249] sm:$0xff]
  %v648 = vld [vmem:[%s230 + $0x251] sm:$0xff]
  %v649 = vld [vmem:[%s230 + $0x269] sm:$0xff]
  %v650 = vld [vmem:[%s230 + $0x271] sm:$0xff]
  %v651 = vld [vmem:[%s230 + $0x289] sm:$0xff]
  %v652 = vld [vmem:[%s230 + $0x291] sm:$0xff]
  %v653 = vld [vmem:[%s230 + $0x2a9] sm:$0xff]
  %v654 = vld [vmem:[%s230 + $0x2b1] sm:$0xff]
  %v655 = vld [vmem:[%s230 + $0x2c9] sm:$0xff]
  %v656 = vld [vmem:[%s230 + $0x2d1] sm:$0xff]
  %v657 = vld [vmem:[%s230 + $0x2e9] sm:$0xff]
  %v658 = vld [vmem:[%s230 + $0x2f1] sm:$0xff]
  %v659 = vld [vmem:[%s230 + $0x309] sm:$0xff]
  %v660 = vld [vmem:[%s230 + $0x311] sm:$0xff]
  %v661 = vld [vmem:[%s230 + $0x329] sm:$0xff]
  %v662 = vld [vmem:[%s230 + $0x331] sm:$0xff]
  %v663 = vld [vmem:[%s230 + $0x349] sm:$0xff]
  %v664 = vld [vmem:[%s230 + $0x351] sm:$0xff]
  %v665 = vld [vmem:[%s230 + $0x369] sm:$0xff]
  %v666 = vld [vmem:[%s230 + $0x371] sm:$0xff]
  %v667 = vld [vmem:[%s230 + $0x389] sm:$0xff]
  %v668 = vld [vmem:[%s230 + $0x391] sm:$0xff]
  %v669 = vld [vmem:[%s230 + $0x3a9] sm:$0xff]
  %v670 = vld [vmem:[%s230 + $0x3b1] sm:$0xff]
  %v671 = vld [vmem:[%s230 + $0x3c9] sm:$0xff]
  %v672 = vld [vmem:[%s230 + $0x3d1] sm:$0xff]
  %v673 = vld [vmem:[%s230 + $0x3e9] sm:$0xff]
  %v674 = vld [vmem:[%s230 + $0x3f1] sm:$0xff]
  %v675 = vld [vmem:[%s230 + $0x409] sm:$0xff]
  %v676 = vld [vmem:[%s230 + $0x411] sm:$0xff]
  %v677 = vld [vmem:[%s230 + $0x429] sm:$0xff]
  %v678 = vld [vmem:[%s230 + $0x431] sm:$0xff]
  %s679 = scalar_lea.vmem [#allocation2], 64
  %v680 = vld [vmem:[%s679 + $0x7] sm:$0xff]
  %v681 = vld [vmem:[%s679 + $0xf] sm:$0xff]
  %v682 = vld [vmem:[%s679 + $0x27] sm:$0xff]
  %v683 = vld [vmem:[%s679 + $0x2f] sm:$0xff]
  %v684 = vld [vmem:[%s679 + $0x47] sm:$0xff]
  %v685 = vld [vmem:[%s679 + $0x4f] sm:$0xff]
  %v686 = vld [vmem:[%s679 + $0x67] sm:$0xff]
  %v687 = vld [vmem:[%s679 + $0x6f] sm:$0xff]
  %v688 = vld [vmem:[%s679 + $0x87] sm:$0xff]
  %v689 = vld [vmem:[%s679 + $0x8f] sm:$0xff]
  %v690 = vld [vmem:[%s679 + $0xa7] sm:$0xff]
  %v691 = vld [vmem:[%s679 + $0xaf] sm:$0xff]
  %v692 = vld [vmem:[%s679 + $0xc7] sm:$0xff]
  %v693 = vld [vmem:[%s679 + $0xcf] sm:$0xff]
  %v694 = vld [vmem:[%s679 + $0xe7] sm:$0xff]
  %v695 = vld [vmem:[%s679 + $0xef] sm:$0xff]
  %v696 = vld [vmem:[%s679 + $0x107] sm:$0xff]
  %v697 = vld [vmem:[%s679 + $0x10f] sm:$0xff]
  %v698 = vld [vmem:[%s679 + $0x127] sm:$0xff]
  %v699 = vld [vmem:[%s679 + $0x12f] sm:$0xff]
  %v700 = vld [vmem:[%s679 + $0x147] sm:$0xff]
  %v701 = vld [vmem:[%s679 + $0x14f] sm:$0xff]
  %v702 = vld [vmem:[%s679 + $0x167] sm:$0xff]
  %v703 = vld [vmem:[%s679 + $0x16f] sm:$0xff]
  %v704 = vld [vmem:[%s679 + $0x187] sm:$0xff]
  %v705 = vld [vmem:[%s679 + $0x18f] sm:$0xff]
  %v706 = vld [vmem:[%s679 + $0x1a7] sm:$0xff]
  %v707 = vld [vmem:[%s679 + $0x1af] sm:$0xff]
  %v708 = vld [vmem:[%s679 + $0x1c7] sm:$0xff]
  %v709 = vld [vmem:[%s679 + $0x1cf] sm:$0xff]
  %v710 = vld [vmem:[%s679 + $0x1e7] sm:$0xff]
  %v711 = vld [vmem:[%s679 + $0x1ef] sm:$0xff]
  %v712 = vld [vmem:[%s679 + $0x247] sm:$0xff]
  %v713 = vld [vmem:[%s679 + $0x24f] sm:$0xff]
  %v714 = vld [vmem:[%s679 + $0x267] sm:$0xff]
  %v715 = vld [vmem:[%s679 + $0x26f] sm:$0xff]
  %v716 = vld [vmem:[%s679 + $0x287] sm:$0xff]
  %v717 = vld [vmem:[%s679 + $0x28f] sm:$0xff]
  %v718 = vld [vmem:[%s679 + $0x2a7] sm:$0xff]
  %v719 = vld [vmem:[%s679 + $0x2af] sm:$0xff]
  %v720 = vld [vmem:[%s679 + $0x2c7] sm:$0xff]
  %v721 = vld [vmem:[%s679 + $0x2cf] sm:$0xff]
  %v722 = vld [vmem:[%s679 + $0x2e7] sm:$0xff]
  %v723 = vld [vmem:[%s679 + $0x2ef] sm:$0xff]
  %v724 = vld [vmem:[%s679 + $0x307] sm:$0xff]
  %v725 = vld [vmem:[%s679 + $0x30f] sm:$0xff]
  %v726 = vld [vmem:[%s679 + $0x327] sm:$0xff]
  %v727 = vld [vmem:[%s679 + $0x32f] sm:$0xff]
  %v728 = vld [vmem:[%s679 + $0x347] sm:$0xff]
  %v729 = vld [vmem:[%s679 + $0x34f] sm:$0xff]
  %v730 = vld [vmem:[%s679 + $0x367] sm:$0xff]
  %v731 = vld [vmem:[%s679 + $0x36f] sm:$0xff]
  %v732 = vld [vmem:[%s679 + $0x387] sm:$0xff]
  %v733 = vld [vmem:[%s679 + $0x38f] sm:$0xff]
  %v734 = vld [vmem:[%s679 + $0x3a7] sm:$0xff]
  %v735 = vld [vmem:[%s679 + $0x3af] sm:$0xff]
  %v736 = vld [vmem:[%s679 + $0x3c7] sm:$0xff]
  %v737 = vld [vmem:[%s679 + $0x3cf] sm:$0xff]
  %v738 = vld [vmem:[%s679 + $0x3e7] sm:$0xff]
  %v739 = vld [vmem:[%s679 + $0x3ef] sm:$0xff]
  %v740 = vld [vmem:[%s679 + $0x407] sm:$0xff]
  %v741 = vld [vmem:[%s679 + $0x40f] sm:$0xff]
  %v742 = vld [vmem:[%s679 + $0x427] sm:$0xff]
  %v743 = vld [vmem:[%s679 + $0x42f] sm:$0xff]
  %v744 = vld [vmem:[%s679 + $0x8] sm:$0xff]
  %v745 = vld [vmem:[%s679 + $0x10] sm:$0xff]
  %v746 = vld [vmem:[%s679 + $0x28] sm:$0xff]
  %v747 = vld [vmem:[%s679 + $0x30] sm:$0xff]
  %v748 = vld [vmem:[%s679 + $0x48] sm:$0xff]
  %v749 = vld [vmem:[%s679 + $0x50] sm:$0xff]
  %v750 = vld [vmem:[%s679 + $0x68] sm:$0xff]
  %v751 = vld [vmem:[%s679 + $0x70] sm:$0xff]
  %v752 = vld [vmem:[%s679 + $0x88] sm:$0xff]
  %v753 = vld [vmem:[%s679 + $0x90] sm:$0xff]
  %v754 = vld [vmem:[%s679 + $0xa8] sm:$0xff]
  %v755 = vld [vmem:[%s679 + $0xb0] sm:$0xff]
  %v756 = vld [vmem:[%s679 + $0xc8] sm:$0xff]
  %v757 = vld [vmem:[%s679 + $0xd0] sm:$0xff]
  %v758 = vld [vmem:[%s679 + $0xe8] sm:$0xff]
  %v759 = vld [vmem:[%s679 + $0xf0] sm:$0xff]
  %v760 = vld [vmem:[%s679 + $0x108] sm:$0xff]
  %v761 = vld [vmem:[%s679 + $0x110] sm:$0xff]
  %v762 = vld [vmem:[%s679 + $0x128] sm:$0xff]
  %v763 = vld [vmem:[%s679 + $0x130] sm:$0xff]
  %v764 = vld [vmem:[%s679 + $0x148] sm:$0xff]
  %v765 = vld [vmem:[%s679 + $0x150] sm:$0xff]
  %v766 = vld [vmem:[%s679 + $0x168] sm:$0xff]
  %v767 = vld [vmem:[%s679 + $0x170] sm:$0xff]
  %v768 = vld [vmem:[%s679 + $0x188] sm:$0xff]
  %v769 = vld [vmem:[%s679 + $0x190] sm:$0xff]
  %v770 = vld [vmem:[%s679 + $0x1a8] sm:$0xff]
  %v771 = vld [vmem:[%s679 + $0x1b0] sm:$0xff]
  %v772 = vld [vmem:[%s679 + $0x1c8] sm:$0xff]
  %v773 = vld [vmem:[%s679 + $0x1d0] sm:$0xff]
  %v774 = vld [vmem:[%s679 + $0x1e8] sm:$0xff]
  %v775 = vld [vmem:[%s679 + $0x1f0] sm:$0xff]
  %v776 = vld [vmem:[%s679 + $0x248] sm:$0xff]
  %v777 = vld [vmem:[%s679 + $0x250] sm:$0xff]
  %v778 = vld [vmem:[%s679 + $0x268] sm:$0xff]
  %v779 = vld [vmem:[%s679 + $0x270] sm:$0xff]
  %v780 = vld [vmem:[%s679 + $0x288] sm:$0xff]
  %v781 = vld [vmem:[%s679 + $0x290] sm:$0xff]
  %v782 = vld [vmem:[%s679 + $0x2a8] sm:$0xff]
  %v783 = vld [vmem:[%s679 + $0x2b0] sm:$0xff]
  %v784 = vld [vmem:[%s679 + $0x2c8] sm:$0xff]
  %v785 = vld [vmem:[%s679 + $0x2d0] sm:$0xff]
  %v786 = vld [vmem:[%s679 + $0x2e8] sm:$0xff]
  %v787 = vld [vmem:[%s679 + $0x2f0] sm:$0xff]
  %v788 = vld [vmem:[%s679 + $0x308] sm:$0xff]
  %v789 = vld [vmem:[%s679 + $0x310] sm:$0xff]
  %v790 = vld [vmem:[%s679 + $0x328] sm:$0xff]
  %v791 = vld [vmem:[%s679 + $0x330] sm:$0xff]
  %v792 = vld [vmem:[%s679 + $0x348] sm:$0xff]
  %v793 = vld [vmem:[%s679 + $0x350] sm:$0xff]
  %v794 = vld [vmem:[%s679 + $0x368] sm:$0xff]
  %v795 = vld [vmem:[%s679 + $0x370] sm:$0xff]
  %v796 = vld [vmem:[%s679 + $0x388] sm:$0xff]
  %v797 = vld [vmem:[%s679 + $0x390] sm:$0xff]
  %v798 = vld [vmem:[%s679 + $0x3a8] sm:$0xff]
  %v799 = vld [vmem:[%s679 + $0x3b0] sm:$0xff]
  %v800 = vld [vmem:[%s679 + $0x3c8] sm:$0xff]
  %v801 = vld [vmem:[%s679 + $0x3d0] sm:$0xff]
  %v802 = vld [vmem:[%s679 + $0x3e8] sm:$0xff]
  %v803 = vld [vmem:[%s679 + $0x3f0] sm:$0xff]
  %v804 = vld [vmem:[%s679 + $0x408] sm:$0xff]
  %v805 = vld [vmem:[%s679 + $0x410] sm:$0xff]
  %v806 = vld [vmem:[%s679 + $0x428] sm:$0xff]
  %v807 = vld [vmem:[%s679 + $0x430] sm:$0xff]
  %v808 = vld [vmem:[%s679 + $0x9] sm:$0xff]
  %v809 = vld [vmem:[%s679 + $0x11] sm:$0xff]
  %v810 = vld [vmem:[%s679 + $0x29] sm:$0xff]
  %v811 = vld [vmem:[%s679 + $0x31] sm:$0xff]
  %v812 = vld [vmem:[%s679 + $0x49] sm:$0xff]
  %v813 = vld [vmem:[%s679 + $0x51] sm:$0xff]
  %v814 = vld [vmem:[%s679 + $0x69] sm:$0xff]
  %v815 = vld [vmem:[%s679 + $0x71] sm:$0xff]
  %v816 = vld [vmem:[%s679 + $0x89] sm:$0xff]
  %v817 = vld [vmem:[%s679 + $0x91] sm:$0xff]
  %v818 = vld [vmem:[%s679 + $0xa9] sm:$0xff]
  %v819 = vld [vmem:[%s679 + $0xb1] sm:$0xff]
  %v820 = vld [vmem:[%s679 + $0xc9] sm:$0xff]
  %v821 = vld [vmem:[%s679 + $0xd1] sm:$0xff]
  %v822 = vld [vmem:[%s679 + $0xe9] sm:$0xff]
  %v823 = vld [vmem:[%s679 + $0xf1] sm:$0xff]
  %v824 = vld [vmem:[%s679 + $0x109] sm:$0xff]
  %v825 = vld [vmem:[%s679 + $0x111] sm:$0xff]
  %v826 = vld [vmem:[%s679 + $0x129] sm:$0xff]
  %v827 = vld [vmem:[%s679 + $0x131] sm:$0xff]
  %v828 = vld [vmem:[%s679 + $0x149] sm:$0xff]
  %v829 = vld [vmem:[%s679 + $0x151] sm:$0xff]
  %v830 = vld [vmem:[%s679 + $0x169] sm:$0xff]
  %v831 = vld [vmem:[%s679 + $0x171] sm:$0xff]
  %v832 = vld [vmem:[%s679 + $0x189] sm:$0xff]
  %v833 = vld [vmem:[%s679 + $0x191] sm:$0xff]
  %v834 = vld [vmem:[%s679 + $0x1a9] sm:$0xff]
  %v835 = vld [vmem:[%s679 + $0x1b1] sm:$0xff]
  %v836 = vld [vmem:[%s679 + $0x1c9] sm:$0xff]
  %v837 = vld [vmem:[%s679 + $0x1d1] sm:$0xff]
  %v838 = vld [vmem:[%s679 + $0x1e9] sm:$0xff]
  %v839 = vld [vmem:[%s679 + $0x1f1] sm:$0xff]
  %v840 = vld [vmem:[%s679 + $0x249] sm:$0xff]
  %v841 = vld [vmem:[%s679 + $0x251] sm:$0xff]
  %v842 = vld [vmem:[%s679 + $0x269] sm:$0xff]
  %v843 = vld [vmem:[%s679 + $0x271] sm:$0xff]
  %v844 = vld [vmem:[%s679 + $0x289] sm:$0xff]
  %v845 = vld [vmem:[%s679 + $0x291] sm:$0xff]
  %v846 = vld [vmem:[%s679 + $0x2a9] sm:$0xff]
  %v847 = vld [vmem:[%s679 + $0x2b1] sm:$0xff]
  %v848 = vld [vmem:[%s679 + $0x2c9] sm:$0xff]
  %v849 = vld [vmem:[%s679 + $0x2d1] sm:$0xff]
  %v850 = vld [vmem:[%s679 + $0x2e9] sm:$0xff]
  %v851 = vld [vmem:[%s679 + $0x2f1] sm:$0xff]
  %v852 = vld [vmem:[%s679 + $0x309] sm:$0xff]
  %v853 = vld [vmem:[%s679 + $0x311] sm:$0xff]
  %v854 = vld [vmem:[%s679 + $0x329] sm:$0xff]
  %v855 = vld [vmem:[%s679 + $0x331] sm:$0xff]
  %v856 = vld [vmem:[%s679 + $0x349] sm:$0xff]
  %v857 = vld [vmem:[%s679 + $0x351] sm:$0xff]
  %v858 = vld [vmem:[%s679 + $0x369] sm:$0xff]
  %v859 = vld [vmem:[%s679 + $0x371] sm:$0xff]
  %v860 = vld [vmem:[%s679 + $0x389] sm:$0xff]
  %v861 = vld [vmem:[%s679 + $0x391] sm:$0xff]
  %v862 = vld [vmem:[%s679 + $0x3a9] sm:$0xff]
  %v863 = vld [vmem:[%s679 + $0x3b1] sm:$0xff]
  %v864 = vld [vmem:[%s679 + $0x3c9] sm:$0xff]
  %v865 = vld [vmem:[%s679 + $0x3d1] sm:$0xff]
  %v866 = vld [vmem:[%s679 + $0x3e9] sm:$0xff]
  %v867 = vld [vmem:[%s679 + $0x3f1] sm:$0xff]
  %v868 = vld [vmem:[%s679 + $0x409] sm:$0xff]
  %v869 = vld [vmem:[%s679 + $0x411] sm:$0xff]
  %v870 = vld [vmem:[%s679 + $0x429] sm:$0xff]
  %v871 = vld [vmem:[%s679 + $0x431] sm:$0xff]
  %936 = vrot.lane.b32.xlu0 %v359, 4
  %v937 = vpop.permute.xlu0 %936
  %938 = vrot.lane.b32.xlu0 %v360, 4
  %v939 = vpop.permute.xlu0 %938
  %940 = vrot.lane.b32.xlu0 %v361, 4
  %v941 = vpop.permute.xlu0 %940
  %942 = vrot.lane.b32.xlu0 %v362, 4
  %v943 = vpop.permute.xlu0 %942
  %944 = vrot.lane.b32.xlu0 %v363, 4
  %v945 = vpop.permute.xlu0 %944
  %946 = vrot.lane.b32.xlu0 %v364, 4
  %v947 = vpop.permute.xlu0 %946
  %948 = vrot.lane.b32.xlu0 %v365, 4
  %v949 = vpop.permute.xlu0 %948
  %950 = vrot.lane.b32.xlu0 %v366, 4
  %v951 = vpop.permute.xlu0 %950
  %952 = vrot.lane.b32.xlu0 %v367, 4
  %v953 = vpop.permute.xlu0 %952
  %954 = vrot.lane.b32.xlu0 %v368, 4
  %v955 = vpop.permute.xlu0 %954
  %956 = vrot.lane.b32.xlu0 %v369, 4
  %v957 = vpop.permute.xlu0 %956
  %958 = vrot.lane.b32.xlu0 %v370, 4
  %v959 = vpop.permute.xlu0 %958
  %960 = vrot.lane.b32.xlu0 %v371, 4
  %v961 = vpop.permute.xlu0 %960
  %962 = vrot.lane.b32.xlu0 %v372, 4
  %v963 = vpop.permute.xlu0 %962
  %964 = vrot.lane.b32.xlu0 %v373, 4
  %v965 = vpop.permute.xlu0 %964
  %966 = vrot.lane.b32.xlu0 %v374, 4
  %v967 = vpop.permute.xlu0 %966
  %968 = vrot.lane.b32.xlu0 %v375, 4
  %v969 = vpop.permute.xlu0 %968
  %970 = vrot.lane.b32.xlu0 %v376, 4
  %v971 = vpop.permute.xlu0 %970
  %972 = vrot.lane.b32.xlu0 %v377, 4
  %v973 = vpop.permute.xlu0 %972
  %974 = vrot.lane.b32.xlu0 %v378, 4
  %v975 = vpop.permute.xlu0 %974
  %976 = vrot.lane.b32.xlu0 %v379, 4
  %v977 = vpop.permute.xlu0 %976
  %978 = vrot.lane.b32.xlu0 %v380, 4
  %v979 = vpop.permute.xlu0 %978
  %980 = vrot.lane.b32.xlu0 %v381, 4
  %v981 = vpop.permute.xlu0 %980
  %982 = vrot.lane.b32.xlu0 %v382, 4
  %v983 = vpop.permute.xlu0 %982
  %984 = vrot.lane.b32.xlu0 %v383, 4
  %v985 = vpop.permute.xlu0 %984
  %986 = vrot.lane.b32.xlu0 %v384, 4
  %v987 = vpop.permute.xlu0 %986
  %988 = vrot.lane.b32.xlu0 %v385, 4
  %v989 = vpop.permute.xlu0 %988
  %990 = vrot.lane.b32.xlu0 %v386, 4
  %v991 = vpop.permute.xlu0 %990
  %992 = vrot.lane.b32.xlu0 %v387, 4
  %v993 = vpop.permute.xlu0 %992
  %994 = vrot.lane.b32.xlu0 %v388, 4
  %v995 = vpop.permute.xlu0 %994
  %996 = vrot.lane.b32.xlu0 %v389, 4
  %v997 = vpop.permute.xlu0 %996
  %998 = vrot.lane.b32.xlu0 %v390, 4
  %v999 = vpop.permute.xlu0 %998
  %1000 = vrot.lane.b32.xlu0 %v391, 4
  %v1001 = vpop.permute.xlu0 %1000
  %1002 = vrot.lane.b32.xlu0 %v392, 4
  %v1003 = vpop.permute.xlu0 %1002
  %1004 = vrot.lane.b32.xlu0 %v393, 4
  %v1005 = vpop.permute.xlu0 %1004
  %1006 = vrot.lane.b32.xlu0 %v394, 4
  %v1007 = vpop.permute.xlu0 %1006
  %1008 = vrot.lane.b32.xlu0 %v395, 4
  %v1009 = vpop.permute.xlu0 %1008
  %1010 = vrot.lane.b32.xlu0 %v396, 4
  %v1011 = vpop.permute.xlu0 %1010
  %1012 = vrot.lane.b32.xlu0 %v397, 4
  %v1013 = vpop.permute.xlu0 %1012
  %1014 = vrot.lane.b32.xlu0 %v398, 4
  %v1015 = vpop.permute.xlu0 %1014
  %1016 = vrot.lane.b32.xlu0 %v399, 4
  %v1017 = vpop.permute.xlu0 %1016
  %1018 = vrot.lane.b32.xlu0 %v400, 4
  %v1019 = vpop.permute.xlu0 %1018
  %1020 = vrot.lane.b32.xlu0 %v401, 4
  %v1021 = vpop.permute.xlu0 %1020
  %1022 = vrot.lane.b32.xlu0 %v402, 4
  %v1023 = vpop.permute.xlu0 %1022
  %1024 = vrot.lane.b32.xlu0 %v403, 4
  %v1025 = vpop.permute.xlu0 %1024
  %1026 = vrot.lane.b32.xlu0 %v404, 4
  %v1027 = vpop.permute.xlu0 %1026
  %1028 = vrot.lane.b32.xlu0 %v405, 4
  %v1029 = vpop.permute.xlu0 %1028
  %1030 = vrot.lane.b32.xlu0 %v406, 4
  %v1031 = vpop.permute.xlu0 %1030
  %1032 = vrot.lane.b32.xlu0 %v407, 4
  %v1033 = vpop.permute.xlu0 %1032
  %1034 = vrot.lane.b32.xlu0 %v408, 4
  %v1035 = vpop.permute.xlu0 %1034
  %1036 = vrot.lane.b32.xlu0 %v409, 4
  %v1037 = vpop.permute.xlu0 %1036
  %1038 = vrot.lane.b32.xlu0 %v410, 4
  %v1039 = vpop.permute.xlu0 %1038
  %1040 = vrot.lane.b32.xlu0 %v411, 4
  %v1041 = vpop.permute.xlu0 %1040
  %1042 = vrot.lane.b32.xlu0 %v412, 4
  %v1043 = vpop.permute.xlu0 %1042
  %1044 = vrot.lane.b32.xlu0 %v413, 4
  %v1045 = vpop.permute.xlu0 %1044
  %1046 = vrot.lane.b32.xlu0 %v414, 4
  %v1047 = vpop.permute.xlu0 %1046
  %1048 = vrot.lane.b32.xlu0 %v415, 4
  %v1049 = vpop.permute.xlu0 %1048
  %1050 = vrot.lane.b32.xlu0 %v416, 4
  %v1051 = vpop.permute.xlu0 %1050
  %1052 = vrot.lane.b32.xlu0 %v417, 4
  %v1053 = vpop.permute.xlu0 %1052
  %1054 = vrot.lane.b32.xlu0 %v418, 4
  %v1055 = vpop.permute.xlu0 %1054
  %1056 = vrot.lane.b32.xlu0 %v419, 4
  %v1057 = vpop.permute.xlu0 %1056
  %1058 = vrot.lane.b32.xlu0 %v420, 4
  %v1059 = vpop.permute.xlu0 %1058
  %1060 = vrot.lane.b32.xlu0 %v421, 4
  %v1061 = vpop.permute.xlu0 %1060
  %1062 = vrot.lane.b32.xlu0 %v422, 4
  %v1063 = vpop.permute.xlu0 %1062
  %1192 = vrot.lane.b32.xlu0 %v423, 8
  %v1193 = vpop.permute.xlu0 %1192
  %1194 = vrot.lane.b32.xlu0 %v424, 8
  %v1195 = vpop.permute.xlu0 %1194
  %1196 = vrot.lane.b32.xlu0 %v425, 8
  %v1197 = vpop.permute.xlu0 %1196
  %1198 = vrot.lane.b32.xlu0 %v426, 8
  %v1199 = vpop.permute.xlu0 %1198
  %1200 = vrot.lane.b32.xlu0 %v427, 8
  %v1201 = vpop.permute.xlu0 %1200
  %1202 = vrot.lane.b32.xlu0 %v428, 8
  %v1203 = vpop.permute.xlu0 %1202
  %1204 = vrot.lane.b32.xlu0 %v429, 8
  %v1205 = vpop.permute.xlu0 %1204
  %1206 = vrot.lane.b32.xlu0 %v430, 8
  %v1207 = vpop.permute.xlu0 %1206
  %1208 = vrot.lane.b32.xlu0 %v431, 8
  %v1209 = vpop.permute.xlu0 %1208
  %1210 = vrot.lane.b32.xlu0 %v432, 8
  %v1211 = vpop.permute.xlu0 %1210
  %1212 = vrot.lane.b32.xlu0 %v433, 8
  %v1213 = vpop.permute.xlu0 %1212
  %1214 = vrot.lane.b32.xlu0 %v434, 8
  %v1215 = vpop.permute.xlu0 %1214
  %1216 = vrot.lane.b32.xlu0 %v435, 8
  %v1217 = vpop.permute.xlu0 %1216
  %1218 = vrot.lane.b32.xlu0 %v436, 8
  %v1219 = vpop.permute.xlu0 %1218
  %1220 = vrot.lane.b32.xlu0 %v437, 8
  %v1221 = vpop.permute.xlu0 %1220
  %1222 = vrot.lane.b32.xlu0 %v438, 8
  %v1223 = vpop.permute.xlu0 %1222
  %1224 = vrot.lane.b32.xlu0 %v439, 8
  %v1225 = vpop.permute.xlu0 %1224
  %1226 = vrot.lane.b32.xlu0 %v440, 8
  %v1227 = vpop.permute.xlu0 %1226
  %1228 = vrot.lane.b32.xlu0 %v441, 8
  %v1229 = vpop.permute.xlu0 %1228
  %1230 = vrot.lane.b32.xlu0 %v442, 8
  %v1231 = vpop.permute.xlu0 %1230
  %1232 = vrot.lane.b32.xlu0 %v443, 8
  %v1233 = vpop.permute.xlu0 %1232
  %1234 = vrot.lane.b32.xlu0 %v444, 8
  %v1235 = vpop.permute.xlu0 %1234
  %1236 = vrot.lane.b32.xlu0 %v445, 8
  %v1237 = vpop.permute.xlu0 %1236
  %1238 = vrot.lane.b32.xlu0 %v446, 8
  %v1239 = vpop.permute.xlu0 %1238
  %1240 = vrot.lane.b32.xlu0 %v447, 8
  %v1241 = vpop.permute.xlu0 %1240
  %1242 = vrot.lane.b32.xlu0 %v448, 8
  %v1243 = vpop.permute.xlu0 %1242
  %1244 = vrot.lane.b32.xlu0 %v449, 8
  %v1245 = vpop.permute.xlu0 %1244
  %1246 = vrot.lane.b32.xlu0 %v450, 8
  %v1247 = vpop.permute.xlu0 %1246
  %1248 = vrot.lane.b32.xlu0 %v451, 8
  %v1249 = vpop.permute.xlu0 %1248
  %1250 = vrot.lane.b32.xlu0 %v452, 8
  %v1251 = vpop.permute.xlu0 %1250
  %1252 = vrot.lane.b32.xlu0 %v453, 8
  %v1253 = vpop.permute.xlu0 %1252
  %1254 = vrot.lane.b32.xlu0 %v454, 8
  %v1255 = vpop.permute.xlu0 %1254
  %1256 = vrot.lane.b32.xlu0 %v455, 8
  %v1257 = vpop.permute.xlu0 %1256
  %1258 = vrot.lane.b32.xlu0 %v456, 8
  %v1259 = vpop.permute.xlu0 %1258
  %1260 = vrot.lane.b32.xlu0 %v457, 8
  %v1261 = vpop.permute.xlu0 %1260
  %1262 = vrot.lane.b32.xlu0 %v458, 8
  %v1263 = vpop.permute.xlu0 %1262
  %1264 = vrot.lane.b32.xlu0 %v459, 8
  %v1265 = vpop.permute.xlu0 %1264
  %1266 = vrot.lane.b32.xlu0 %v460, 8
  %v1267 = vpop.permute.xlu0 %1266
  %1268 = vrot.lane.b32.xlu0 %v461, 8
  %v1269 = vpop.permute.xlu0 %1268
  %1270 = vrot.lane.b32.xlu0 %v462, 8
  %v1271 = vpop.permute.xlu0 %1270
  %1272 = vrot.lane.b32.xlu0 %v463, 8
  %v1273 = vpop.permute.xlu0 %1272
  %1274 = vrot.lane.b32.xlu0 %v464, 8
  %v1275 = vpop.permute.xlu0 %1274
  %1276 = vrot.lane.b32.xlu0 %v465, 8
  %v1277 = vpop.permute.xlu0 %1276
  %1278 = vrot.lane.b32.xlu0 %v466, 8
  %v1279 = vpop.permute.xlu0 %1278
  %1280 = vrot.lane.b32.xlu0 %v467, 8
  %v1281 = vpop.permute.xlu0 %1280
  %1282 = vrot.lane.b32.xlu0 %v468, 8
  %v1283 = vpop.permute.xlu0 %1282
  %1284 = vrot.lane.b32.xlu0 %v469, 8
  %v1285 = vpop.permute.xlu0 %1284
  %1286 = vrot.lane.b32.xlu0 %v470, 8
  %v1287 = vpop.permute.xlu0 %1286
  %1288 = vrot.lane.b32.xlu0 %v471, 8
  %v1289 = vpop.permute.xlu0 %1288
  %1290 = vrot.lane.b32.xlu0 %v472, 8
  %v1291 = vpop.permute.xlu0 %1290
  %1292 = vrot.lane.b32.xlu0 %v473, 8
  %v1293 = vpop.permute.xlu0 %1292
  %1294 = vrot.lane.b32.xlu0 %v474, 8
  %v1295 = vpop.permute.xlu0 %1294
  %1296 = vrot.lane.b32.xlu0 %v475, 8
  %v1297 = vpop.permute.xlu0 %1296
  %1298 = vrot.lane.b32.xlu0 %v476, 8
  %v1299 = vpop.permute.xlu0 %1298
  %1300 = vrot.lane.b32.xlu0 %v477, 8
  %v1301 = vpop.permute.xlu0 %1300
  %1302 = vrot.lane.b32.xlu0 %v478, 8
  %v1303 = vpop.permute.xlu0 %1302
  %1304 = vrot.lane.b32.xlu0 %v479, 8
  %v1305 = vpop.permute.xlu0 %1304
  %1306 = vrot.lane.b32.xlu0 %v480, 8
  %v1307 = vpop.permute.xlu0 %1306
  %1308 = vrot.lane.b32.xlu0 %v481, 8
  %v1309 = vpop.permute.xlu0 %1308
  %1310 = vrot.lane.b32.xlu0 %v482, 8
  %v1311 = vpop.permute.xlu0 %1310
  %1312 = vrot.lane.b32.xlu0 %v483, 8
  %v1313 = vpop.permute.xlu0 %1312
  %1314 = vrot.lane.b32.xlu0 %v484, 8
  %v1315 = vpop.permute.xlu0 %1314
  %1316 = vrot.lane.b32.xlu0 %v485, 8
  %v1317 = vpop.permute.xlu0 %1316
  %1318 = vrot.lane.b32.xlu0 %v486, 8
  %v1319 = vpop.permute.xlu0 %1318
  %1448 = vrot.lane.b32.xlu0 %v487, 12
  %v1449 = vpop.permute.xlu0 %1448
  %1450 = vrot.lane.b32.xlu0 %v488, 12
  %v1451 = vpop.permute.xlu0 %1450
  %1452 = vrot.lane.b32.xlu0 %v489, 12
  %v1453 = vpop.permute.xlu0 %1452
  %1454 = vrot.lane.b32.xlu0 %v490, 12
  %v1455 = vpop.permute.xlu0 %1454
  %1456 = vrot.lane.b32.xlu0 %v491, 12
  %v1457 = vpop.permute.xlu0 %1456
  %1458 = vrot.lane.b32.xlu0 %v492, 12
  %v1459 = vpop.permute.xlu0 %1458
  %1460 = vrot.lane.b32.xlu0 %v493, 12
  %v1461 = vpop.permute.xlu0 %1460
  %1462 = vrot.lane.b32.xlu0 %v494, 12
  %v1463 = vpop.permute.xlu0 %1462
  %1464 = vrot.lane.b32.xlu0 %v495, 12
  %v1465 = vpop.permute.xlu0 %1464
  %1466 = vrot.lane.b32.xlu0 %v496, 12
  %v1467 = vpop.permute.xlu0 %1466
  %1468 = vrot.lane.b32.xlu0 %v497, 12
  %v1469 = vpop.permute.xlu0 %1468
  %1470 = vrot.lane.b32.xlu0 %v498, 12
  %v1471 = vpop.permute.xlu0 %1470
  %1472 = vrot.lane.b32.xlu0 %v499, 12
  %v1473 = vpop.permute.xlu0 %1472
  %1474 = vrot.lane.b32.xlu0 %v500, 12
  %v1475 = vpop.permute.xlu0 %1474
  %1476 = vrot.lane.b32.xlu0 %v501, 12
  %v1477 = vpop.permute.xlu0 %1476
  %1478 = vrot.lane.b32.xlu0 %v502, 12
  %v1479 = vpop.permute.xlu0 %1478
  %1480 = vrot.lane.b32.xlu0 %v503, 12
  %v1481 = vpop.permute.xlu0 %1480
  %1482 = vrot.lane.b32.xlu0 %v504, 12
  %v1483 = vpop.permute.xlu0 %1482
  %1484 = vrot.lane.b32.xlu0 %v505, 12
  %v1485 = vpop.permute.xlu0 %1484
  %1486 = vrot.lane.b32.xlu0 %v506, 12
  %v1487 = vpop.permute.xlu0 %1486
  %1488 = vrot.lane.b32.xlu0 %v507, 12
  %v1489 = vpop.permute.xlu0 %1488
  %1490 = vrot.lane.b32.xlu0 %v508, 12
  %v1491 = vpop.permute.xlu0 %1490
  %1492 = vrot.lane.b32.xlu0 %v509, 12
  %v1493 = vpop.permute.xlu0 %1492
  %1494 = vrot.lane.b32.xlu0 %v510, 12
  %v1495 = vpop.permute.xlu0 %1494
  %1496 = vrot.lane.b32.xlu0 %v511, 12
  %v1497 = vpop.permute.xlu0 %1496
  %1498 = vrot.lane.b32.xlu0 %v512, 12
  %v1499 = vpop.permute.xlu0 %1498
  %1500 = vrot.lane.b32.xlu0 %v513, 12
  %v1501 = vpop.permute.xlu0 %1500
  %1502 = vrot.lane.b32.xlu0 %v514, 12
  %v1503 = vpop.permute.xlu0 %1502
  %1504 = vrot.lane.b32.xlu0 %v515, 12
  %v1505 = vpop.permute.xlu0 %1504
  %1506 = vrot.lane.b32.xlu0 %v516, 12
  %v1507 = vpop.permute.xlu0 %1506
  %1508 = vrot.lane.b32.xlu0 %v517, 12
  %v1509 = vpop.permute.xlu0 %1508
  %1510 = vrot.lane.b32.xlu0 %v518, 12
  %v1511 = vpop.permute.xlu0 %1510
  %1512 = vrot.lane.b32.xlu0 %v519, 12
  %v1513 = vpop.permute.xlu0 %1512
  %1514 = vrot.lane.b32.xlu0 %v520, 12
  %v1515 = vpop.permute.xlu0 %1514
  %1516 = vrot.lane.b32.xlu0 %v521, 12
  %v1517 = vpop.permute.xlu0 %1516
  %1518 = vrot.lane.b32.xlu0 %v522, 12
  %v1519 = vpop.permute.xlu0 %1518
  %1520 = vrot.lane.b32.xlu0 %v523, 12
  %v1521 = vpop.permute.xlu0 %1520
  %1522 = vrot.lane.b32.xlu0 %v524, 12
  %v1523 = vpop.permute.xlu0 %1522
  %1524 = vrot.lane.b32.xlu0 %v525, 12
  %v1525 = vpop.permute.xlu0 %1524
  %1526 = vrot.lane.b32.xlu0 %v526, 12
  %v1527 = vpop.permute.xlu0 %1526
  %1528 = vrot.lane.b32.xlu0 %v527, 12
  %v1529 = vpop.permute.xlu0 %1528
  %1530 = vrot.lane.b32.xlu0 %v528, 12
  %v1531 = vpop.permute.xlu0 %1530
  %1532 = vrot.lane.b32.xlu0 %v529, 12
  %v1533 = vpop.permute.xlu0 %1532
  %1534 = vrot.lane.b32.xlu0 %v530, 12
  %v1535 = vpop.permute.xlu0 %1534
  %1536 = vrot.lane.b32.xlu0 %v531, 12
  %v1537 = vpop.permute.xlu0 %1536
  %1538 = vrot.lane.b32.xlu0 %v532, 12
  %v1539 = vpop.permute.xlu0 %1538
  %1540 = vrot.lane.b32.xlu0 %v533, 12
  %v1541 = vpop.permute.xlu0 %1540
  %1542 = vrot.lane.b32.xlu0 %v534, 12
  %v1543 = vpop.permute.xlu0 %1542
  %1544 = vrot.lane.b32.xlu0 %v535, 12
  %v1545 = vpop.permute.xlu0 %1544
  %1546 = vrot.lane.b32.xlu0 %v536, 12
  %v1547 = vpop.permute.xlu0 %1546
  %1548 = vrot.lane.b32.xlu0 %v537, 12
  %v1549 = vpop.permute.xlu0 %1548
  %1550 = vrot.lane.b32.xlu0 %v538, 12
  %v1551 = vpop.permute.xlu0 %1550
  %1552 = vrot.lane.b32.xlu0 %v539, 12
  %v1553 = vpop.permute.xlu0 %1552
  %1554 = vrot.lane.b32.xlu0 %v540, 12
  %v1555 = vpop.permute.xlu0 %1554
  %1556 = vrot.lane.b32.xlu0 %v541, 12
  %v1557 = vpop.permute.xlu0 %1556
  %1558 = vrot.lane.b32.xlu0 %v542, 12
  %v1559 = vpop.permute.xlu0 %1558
  %1560 = vrot.lane.b32.xlu0 %v543, 12
  %v1561 = vpop.permute.xlu0 %1560
  %1562 = vrot.lane.b32.xlu0 %v544, 12
  %v1563 = vpop.permute.xlu0 %1562
  %1564 = vrot.lane.b32.xlu0 %v545, 12
  %v1565 = vpop.permute.xlu0 %1564
  %1566 = vrot.lane.b32.xlu0 %v546, 12
  %v1567 = vpop.permute.xlu0 %1566
  %1568 = vrot.lane.b32.xlu0 %v547, 12
  %v1569 = vpop.permute.xlu0 %1568
  %1570 = vrot.lane.b32.xlu0 %v548, 12
  %v1571 = vpop.permute.xlu0 %1570
  %1572 = vrot.lane.b32.xlu0 %v549, 12
  %v1573 = vpop.permute.xlu0 %1572
  %1574 = vrot.lane.b32.xlu0 %v550, 12
  %v1575 = vpop.permute.xlu0 %1574
  %1704 = vrot.lane.b32.xlu0 %v551, 16
  %v1705 = vpop.permute.xlu0 %1704
  %1706 = vrot.lane.b32.xlu0 %v552, 16
  %v1707 = vpop.permute.xlu0 %1706
  %1708 = vrot.lane.b32.xlu0 %v553, 16
  %v1709 = vpop.permute.xlu0 %1708
  %1710 = vrot.lane.b32.xlu0 %v554, 16
  %v1711 = vpop.permute.xlu0 %1710
  %1712 = vrot.lane.b32.xlu0 %v555, 16
  %v1713 = vpop.permute.xlu0 %1712
  %1714 = vrot.lane.b32.xlu0 %v556, 16
  %v1715 = vpop.permute.xlu0 %1714
  %1716 = vrot.lane.b32.xlu0 %v557, 16
  %v1717 = vpop.permute.xlu0 %1716
  %1718 = vrot.lane.b32.xlu0 %v558, 16
  %v1719 = vpop.permute.xlu0 %1718
  %1720 = vrot.lane.b32.xlu0 %v559, 16
  %v1721 = vpop.permute.xlu0 %1720
  %1722 = vrot.lane.b32.xlu0 %v560, 16
  %v1723 = vpop.permute.xlu0 %1722
  %1724 = vrot.lane.b32.xlu0 %v561, 16
  %v1725 = vpop.permute.xlu0 %1724
  %1726 = vrot.lane.b32.xlu0 %v562, 16
  %v1727 = vpop.permute.xlu0 %1726
  %1728 = vrot.lane.b32.xlu0 %v563, 16
  %v1729 = vpop.permute.xlu0 %1728
  %1730 = vrot.lane.b32.xlu0 %v564, 16
  %v1731 = vpop.permute.xlu0 %1730
  %1732 = vrot.lane.b32.xlu0 %v565, 16
  %v1733 = vpop.permute.xlu0 %1732
  %1734 = vrot.lane.b32.xlu0 %v566, 16
  %v1735 = vpop.permute.xlu0 %1734
  %1736 = vrot.lane.b32.xlu0 %v567, 16
  %v1737 = vpop.permute.xlu0 %1736
  %1738 = vrot.lane.b32.xlu0 %v568, 16
  %v1739 = vpop.permute.xlu0 %1738
  %1740 = vrot.lane.b32.xlu0 %v569, 16
  %v1741 = vpop.permute.xlu0 %1740
  %1742 = vrot.lane.b32.xlu0 %v570, 16
  %v1743 = vpop.permute.xlu0 %1742
  %1744 = vrot.lane.b32.xlu0 %v571, 16
  %v1745 = vpop.permute.xlu0 %1744
  %1746 = vrot.lane.b32.xlu0 %v572, 16
  %v1747 = vpop.permute.xlu0 %1746
  %1748 = vrot.lane.b32.xlu0 %v573, 16
  %v1749 = vpop.permute.xlu0 %1748
  %1750 = vrot.lane.b32.xlu0 %v574, 16
  %v1751 = vpop.permute.xlu0 %1750
  %1752 = vrot.lane.b32.xlu0 %v575, 16
  %v1753 = vpop.permute.xlu0 %1752
  %1754 = vrot.lane.b32.xlu0 %v576, 16
  %v1755 = vpop.permute.xlu0 %1754
  %1756 = vrot.lane.b32.xlu0 %v577, 16
  %v1757 = vpop.permute.xlu0 %1756
  %1758 = vrot.lane.b32.xlu0 %v578, 16
  %v1759 = vpop.permute.xlu0 %1758
  %1760 = vrot.lane.b32.xlu0 %v579, 16
  %v1761 = vpop.permute.xlu0 %1760
  %1762 = vrot.lane.b32.xlu0 %v580, 16
  %v1763 = vpop.permute.xlu0 %1762
  %1764 = vrot.lane.b32.xlu0 %v581, 16
  %v1765 = vpop.permute.xlu0 %1764
  %1766 = vrot.lane.b32.xlu0 %v582, 16
  %v1767 = vpop.permute.xlu0 %1766
  %1768 = vrot.lane.b32.xlu0 %v583, 16
  %v1769 = vpop.permute.xlu0 %1768
  %1770 = vrot.lane.b32.xlu0 %v584, 16
  %v1771 = vpop.permute.xlu0 %1770
  %1772 = vrot.lane.b32.xlu0 %v585, 16
  %v1773 = vpop.permute.xlu0 %1772
  %1774 = vrot.lane.b32.xlu0 %v586, 16
  %v1775 = vpop.permute.xlu0 %1774
  %1776 = vrot.lane.b32.xlu0 %v587, 16
  %v1777 = vpop.permute.xlu0 %1776
  %1778 = vrot.lane.b32.xlu0 %v588, 16
  %v1779 = vpop.permute.xlu0 %1778
  %1780 = vrot.lane.b32.xlu0 %v589, 16
  %v1781 = vpop.permute.xlu0 %1780
  %1782 = vrot.lane.b32.xlu0 %v590, 16
  %v1783 = vpop.permute.xlu0 %1782
  %1784 = vrot.lane.b32.xlu0 %v591, 16
  %v1785 = vpop.permute.xlu0 %1784
  %1786 = vrot.lane.b32.xlu0 %v592, 16
  %v1787 = vpop.permute.xlu0 %1786
  %1788 = vrot.lane.b32.xlu0 %v593, 16
  %v1789 = vpop.permute.xlu0 %1788
  %1790 = vrot.lane.b32.xlu0 %v594, 16
  %v1791 = vpop.permute.xlu0 %1790
  %1792 = vrot.lane.b32.xlu0 %v595, 16
  %v1793 = vpop.permute.xlu0 %1792
  %1794 = vrot.lane.b32.xlu0 %v596, 16
  %v1795 = vpop.permute.xlu0 %1794
  %1796 = vrot.lane.b32.xlu0 %v597, 16
  %v1797 = vpop.permute.xlu0 %1796
  %1798 = vrot.lane.b32.xlu0 %v598, 16
  %v1799 = vpop.permute.xlu0 %1798
  %1800 = vrot.lane.b32.xlu0 %v599, 16
  %v1801 = vpop.permute.xlu0 %1800
  %1802 = vrot.lane.b32.xlu0 %v600, 16
  %v1803 = vpop.permute.xlu0 %1802
  %1804 = vrot.lane.b32.xlu0 %v601, 16
  %v1805 = vpop.permute.xlu0 %1804
  %1806 = vrot.lane.b32.xlu0 %v602, 16
  %v1807 = vpop.permute.xlu0 %1806
  %1808 = vrot.lane.b32.xlu0 %v603, 16
  %v1809 = vpop.permute.xlu0 %1808
  %1810 = vrot.lane.b32.xlu0 %v604, 16
  %v1811 = vpop.permute.xlu0 %1810
  %1812 = vrot.lane.b32.xlu0 %v605, 16
  %v1813 = vpop.permute.xlu0 %1812
  %1814 = vrot.lane.b32.xlu0 %v606, 16
  %v1815 = vpop.permute.xlu0 %1814
  %1816 = vrot.lane.b32.xlu0 %v607, 16
  %v1817 = vpop.permute.xlu0 %1816
  %1818 = vrot.lane.b32.xlu0 %v608, 16
  %v1819 = vpop.permute.xlu0 %1818
  %1820 = vrot.lane.b32.xlu0 %v609, 16
  %v1821 = vpop.permute.xlu0 %1820
  %1822 = vrot.lane.b32.xlu0 %v610, 16
  %v1823 = vpop.permute.xlu0 %1822
  %1824 = vrot.lane.b32.xlu0 %v611, 16
  %v1825 = vpop.permute.xlu0 %1824
  %1826 = vrot.lane.b32.xlu0 %v612, 16
  %v1827 = vpop.permute.xlu0 %1826
  %1828 = vrot.lane.b32.xlu0 %v613, 16
  %v1829 = vpop.permute.xlu0 %1828
  %1830 = vrot.lane.b32.xlu0 %v614, 16
  %v1831 = vpop.permute.xlu0 %1830
  %1960 = vrot.lane.b32.xlu0 %v615, 20
  %v1961 = vpop.permute.xlu0 %1960
  %1962 = vrot.lane.b32.xlu0 %v616, 20
  %v1963 = vpop.permute.xlu0 %1962
  %1964 = vrot.lane.b32.xlu0 %v617, 20
  %v1965 = vpop.permute.xlu0 %1964
  %1966 = vrot.lane.b32.xlu0 %v618, 20
  %v1967 = vpop.permute.xlu0 %1966
  %1968 = vrot.lane.b32.xlu0 %v619, 20
  %v1969 = vpop.permute.xlu0 %1968
  %1970 = vrot.lane.b32.xlu0 %v620, 20
  %v1971 = vpop.permute.xlu0 %1970
  %1972 = vrot.lane.b32.xlu0 %v621, 20
  %v1973 = vpop.permute.xlu0 %1972
  %1974 = vrot.lane.b32.xlu0 %v622, 20
  %v1975 = vpop.permute.xlu0 %1974
  %1976 = vrot.lane.b32.xlu0 %v623, 20
  %v1977 = vpop.permute.xlu0 %1976
  %1978 = vrot.lane.b32.xlu0 %v624, 20
  %v1979 = vpop.permute.xlu0 %1978
  %1980 = vrot.lane.b32.xlu0 %v625, 20
  %v1981 = vpop.permute.xlu0 %1980
  %1982 = vrot.lane.b32.xlu0 %v626, 20
  %v1983 = vpop.permute.xlu0 %1982
  %1984 = vrot.lane.b32.xlu0 %v627, 20
  %v1985 = vpop.permute.xlu0 %1984
  %1986 = vrot.lane.b32.xlu0 %v628, 20
  %v1987 = vpop.permute.xlu0 %1986
  %1988 = vrot.lane.b32.xlu0 %v629, 20
  %v1989 = vpop.permute.xlu0 %1988
  %1990 = vrot.lane.b32.xlu0 %v630, 20
  %v1991 = vpop.permute.xlu0 %1990
  %1992 = vrot.lane.b32.xlu0 %v631, 20
  %v1993 = vpop.permute.xlu0 %1992
  %1994 = vrot.lane.b32.xlu0 %v632, 20
  %v1995 = vpop.permute.xlu0 %1994
  %1996 = vrot.lane.b32.xlu0 %v633, 20
  %v1997 = vpop.permute.xlu0 %1996
  %1998 = vrot.lane.b32.xlu0 %v634, 20
  %v1999 = vpop.permute.xlu0 %1998
  %2000 = vrot.lane.b32.xlu0 %v635, 20
  %v2001 = vpop.permute.xlu0 %2000
  %2002 = vrot.lane.b32.xlu0 %v636, 20
  %v2003 = vpop.permute.xlu0 %2002
  %2004 = vrot.lane.b32.xlu0 %v637, 20
  %v2005 = vpop.permute.xlu0 %2004
  %2006 = vrot.lane.b32.xlu0 %v638, 20
  %v2007 = vpop.permute.xlu0 %2006
  %2008 = vrot.lane.b32.xlu0 %v639, 20
  %v2009 = vpop.permute.xlu0 %2008
  %2010 = vrot.lane.b32.xlu0 %v640, 20
  %v2011 = vpop.permute.xlu0 %2010
  %2012 = vrot.lane.b32.xlu0 %v641, 20
  %v2013 = vpop.permute.xlu0 %2012
  %2014 = vrot.lane.b32.xlu0 %v642, 20
  %v2015 = vpop.permute.xlu0 %2014
  %2016 = vrot.lane.b32.xlu0 %v643, 20
  %v2017 = vpop.permute.xlu0 %2016
  %2018 = vrot.lane.b32.xlu0 %v644, 20
  %v2019 = vpop.permute.xlu0 %2018
  %2020 = vrot.lane.b32.xlu0 %v645, 20
  %v2021 = vpop.permute.xlu0 %2020
  %2022 = vrot.lane.b32.xlu0 %v646, 20
  %v2023 = vpop.permute.xlu0 %2022
  %2024 = vrot.lane.b32.xlu0 %v647, 20
  %v2025 = vpop.permute.xlu0 %2024
  %2026 = vrot.lane.b32.xlu0 %v648, 20
  %v2027 = vpop.permute.xlu0 %2026
  %2028 = vrot.lane.b32.xlu0 %v649, 20
  %v2029 = vpop.permute.xlu0 %2028
  %2030 = vrot.lane.b32.xlu0 %v650, 20
  %v2031 = vpop.permute.xlu0 %2030
  %2032 = vrot.lane.b32.xlu0 %v651, 20
  %v2033 = vpop.permute.xlu0 %2032
  %2034 = vrot.lane.b32.xlu0 %v652, 20
  %v2035 = vpop.permute.xlu0 %2034
  %2036 = vrot.lane.b32.xlu0 %v653, 20
  %v2037 = vpop.permute.xlu0 %2036
  %2038 = vrot.lane.b32.xlu0 %v654, 20
  %v2039 = vpop.permute.xlu0 %2038
  %2040 = vrot.lane.b32.xlu0 %v655, 20
  %v2041 = vpop.permute.xlu0 %2040
  %2042 = vrot.lane.b32.xlu0 %v656, 20
  %v2043 = vpop.permute.xlu0 %2042
  %2044 = vrot.lane.b32.xlu0 %v657, 20
  %v2045 = vpop.permute.xlu0 %2044
  %2046 = vrot.lane.b32.xlu0 %v658, 20
  %v2047 = vpop.permute.xlu0 %2046
  %2048 = vrot.lane.b32.xlu0 %v659, 20
  %v2049 = vpop.permute.xlu0 %2048
  %2050 = vrot.lane.b32.xlu0 %v660, 20
  %v2051 = vpop.permute.xlu0 %2050
  %2052 = vrot.lane.b32.xlu0 %v661, 20
  %v2053 = vpop.permute.xlu0 %2052
  %2054 = vrot.lane.b32.xlu0 %v662, 20
  %v2055 = vpop.permute.xlu0 %2054
  %2056 = vrot.lane.b32.xlu0 %v663, 20
  %v2057 = vpop.permute.xlu0 %2056
  %2058 = vrot.lane.b32.xlu0 %v664, 20
  %v2059 = vpop.permute.xlu0 %2058
  %2060 = vrot.lane.b32.xlu0 %v665, 20
  %v2061 = vpop.permute.xlu0 %2060
  %2062 = vrot.lane.b32.xlu0 %v666, 20
  %v2063 = vpop.permute.xlu0 %2062
  %2064 = vrot.lane.b32.xlu0 %v667, 20
  %v2065 = vpop.permute.xlu0 %2064
  %2066 = vrot.lane.b32.xlu0 %v668, 20
  %v2067 = vpop.permute.xlu0 %2066
  %2068 = vrot.lane.b32.xlu0 %v669, 20
  %v2069 = vpop.permute.xlu0 %2068
  %2070 = vrot.lane.b32.xlu0 %v670, 20
  %v2071 = vpop.permute.xlu0 %2070
  %2072 = vrot.lane.b32.xlu0 %v671, 20
  %v2073 = vpop.permute.xlu0 %2072
  %2074 = vrot.lane.b32.xlu0 %v672, 20
  %v2075 = vpop.permute.xlu0 %2074
  %2076 = vrot.lane.b32.xlu0 %v673, 20
  %v2077 = vpop.permute.xlu0 %2076
  %2078 = vrot.lane.b32.xlu0 %v674, 20
  %v2079 = vpop.permute.xlu0 %2078
  %2080 = vrot.lane.b32.xlu0 %v675, 20
  %v2081 = vpop.permute.xlu0 %2080
  %2082 = vrot.lane.b32.xlu0 %v676, 20
  %v2083 = vpop.permute.xlu0 %2082
  %2084 = vrot.lane.b32.xlu0 %v677, 20
  %v2085 = vpop.permute.xlu0 %2084
  %2086 = vrot.lane.b32.xlu0 %v678, 20
  %v2087 = vpop.permute.xlu0 %2086
  %2216 = vrot.lane.b32.xlu0 %v680, 24
  %v2217 = vpop.permute.xlu0 %2216
  %2218 = vrot.lane.b32.xlu0 %v681, 24
  %v2219 = vpop.permute.xlu0 %2218
  %2220 = vrot.lane.b32.xlu0 %v682, 24
  %v2221 = vpop.permute.xlu0 %2220
  %2222 = vrot.lane.b32.xlu0 %v683, 24
  %v2223 = vpop.permute.xlu0 %2222
  %2224 = vrot.lane.b32.xlu0 %v684, 24
  %v2225 = vpop.permute.xlu0 %2224
  %2226 = vrot.lane.b32.xlu0 %v685, 24
  %v2227 = vpop.permute.xlu0 %2226
  %2228 = vrot.lane.b32.xlu0 %v686, 24
  %v2229 = vpop.permute.xlu0 %2228
  %2230 = vrot.lane.b32.xlu0 %v687, 24
  %v2231 = vpop.permute.xlu0 %2230
  %2232 = vrot.lane.b32.xlu0 %v688, 24
  %v2233 = vpop.permute.xlu0 %2232
  %2234 = vrot.lane.b32.xlu0 %v689, 24
  %v2235 = vpop.permute.xlu0 %2234
  %2236 = vrot.lane.b32.xlu0 %v690, 24
  %v2237 = vpop.permute.xlu0 %2236
  %2238 = vrot.lane.b32.xlu0 %v691, 24
  %v2239 = vpop.permute.xlu0 %2238
  %2240 = vrot.lane.b32.xlu0 %v692, 24
  %v2241 = vpop.permute.xlu0 %2240
  %2242 = vrot.lane.b32.xlu0 %v693, 24
  %v2243 = vpop.permute.xlu0 %2242
  %2244 = vrot.lane.b32.xlu0 %v694, 24
  %v2245 = vpop.permute.xlu0 %2244
  %2246 = vrot.lane.b32.xlu0 %v695, 24
  %v2247 = vpop.permute.xlu0 %2246
  %2248 = vrot.lane.b32.xlu0 %v696, 24
  %v2249 = vpop.permute.xlu0 %2248
  %2250 = vrot.lane.b32.xlu0 %v697, 24
  %v2251 = vpop.permute.xlu0 %2250
  %2252 = vrot.lane.b32.xlu0 %v698, 24
  %v2253 = vpop.permute.xlu0 %2252
  %2254 = vrot.lane.b32.xlu0 %v699, 24
  %v2255 = vpop.permute.xlu0 %2254
  %2256 = vrot.lane.b32.xlu0 %v700, 24
  %v2257 = vpop.permute.xlu0 %2256
  %2258 = vrot.lane.b32.xlu0 %v701, 24
  %v2259 = vpop.permute.xlu0 %2258
  %2260 = vrot.lane.b32.xlu0 %v702, 24
  %v2261 = vpop.permute.xlu0 %2260
  %2262 = vrot.lane.b32.xlu0 %v703, 24
  %v2263 = vpop.permute.xlu0 %2262
  %2264 = vrot.lane.b32.xlu0 %v704, 24
  %v2265 = vpop.permute.xlu0 %2264
  %2266 = vrot.lane.b32.xlu0 %v705, 24
  %v2267 = vpop.permute.xlu0 %2266
  %2268 = vrot.lane.b32.xlu0 %v706, 24
  %v2269 = vpop.permute.xlu0 %2268
  %2270 = vrot.lane.b32.xlu0 %v707, 24
  %v2271 = vpop.permute.xlu0 %2270
  %2272 = vrot.lane.b32.xlu0 %v708, 24
  %v2273 = vpop.permute.xlu0 %2272
  %2274 = vrot.lane.b32.xlu0 %v709, 24
  %v2275 = vpop.permute.xlu0 %2274
  %2276 = vrot.lane.b32.xlu0 %v710, 24
  %v2277 = vpop.permute.xlu0 %2276
  %2278 = vrot.lane.b32.xlu0 %v711, 24
  %v2279 = vpop.permute.xlu0 %2278
  %2280 = vrot.lane.b32.xlu0 %v712, 24
  %v2281 = vpop.permute.xlu0 %2280
  %2282 = vrot.lane.b32.xlu0 %v713, 24
  %v2283 = vpop.permute.xlu0 %2282
  %2284 = vrot.lane.b32.xlu0 %v714, 24
  %v2285 = vpop.permute.xlu0 %2284
  %2286 = vrot.lane.b32.xlu0 %v715, 24
  %v2287 = vpop.permute.xlu0 %2286
  %2288 = vrot.lane.b32.xlu0 %v716, 24
  %v2289 = vpop.permute.xlu0 %2288
  %2290 = vrot.lane.b32.xlu0 %v717, 24
  %v2291 = vpop.permute.xlu0 %2290
  %2292 = vrot.lane.b32.xlu0 %v718, 24
  %v2293 = vpop.permute.xlu0 %2292
  %2294 = vrot.lane.b32.xlu0 %v719, 24
  %v2295 = vpop.permute.xlu0 %2294
  %2296 = vrot.lane.b32.xlu0 %v720, 24
  %v2297 = vpop.permute.xlu0 %2296
  %2298 = vrot.lane.b32.xlu0 %v721, 24
  %v2299 = vpop.permute.xlu0 %2298
  %2300 = vrot.lane.b32.xlu0 %v722, 24
  %v2301 = vpop.permute.xlu0 %2300
  %2302 = vrot.lane.b32.xlu0 %v723, 24
  %v2303 = vpop.permute.xlu0 %2302
  %2304 = vrot.lane.b32.xlu0 %v724, 24
  %v2305 = vpop.permute.xlu0 %2304
  %2306 = vrot.lane.b32.xlu0 %v725, 24
  %v2307 = vpop.permute.xlu0 %2306
  %2308 = vrot.lane.b32.xlu0 %v726, 24
  %v2309 = vpop.permute.xlu0 %2308
  %2310 = vrot.lane.b32.xlu0 %v727, 24
  %v2311 = vpop.permute.xlu0 %2310
  %2312 = vrot.lane.b32.xlu0 %v728, 24
  %v2313 = vpop.permute.xlu0 %2312
  %2314 = vrot.lane.b32.xlu0 %v729, 24
  %v2315 = vpop.permute.xlu0 %2314
  %2316 = vrot.lane.b32.xlu0 %v730, 24
  %v2317 = vpop.permute.xlu0 %2316
  %2318 = vrot.lane.b32.xlu0 %v731, 24
  %v2319 = vpop.permute.xlu0 %2318
  %2320 = vrot.lane.b32.xlu0 %v732, 24
  %v2321 = vpop.permute.xlu0 %2320
  %2322 = vrot.lane.b32.xlu0 %v733, 24
  %v2323 = vpop.permute.xlu0 %2322
  %2324 = vrot.lane.b32.xlu0 %v734, 24
  %v2325 = vpop.permute.xlu0 %2324
  %2326 = vrot.lane.b32.xlu0 %v735, 24
  %v2327 = vpop.permute.xlu0 %2326
  %2328 = vrot.lane.b32.xlu0 %v736, 24
  %v2329 = vpop.permute.xlu0 %2328
  %2330 = vrot.lane.b32.xlu0 %v737, 24
  %v2331 = vpop.permute.xlu0 %2330
  %2332 = vrot.lane.b32.xlu0 %v738, 24
  %v2333 = vpop.permute.xlu0 %2332
  %2334 = vrot.lane.b32.xlu0 %v739, 24
  %v2335 = vpop.permute.xlu0 %2334
  %2336 = vrot.lane.b32.xlu0 %v740, 24
  %v2337 = vpop.permute.xlu0 %2336
  %2338 = vrot.lane.b32.xlu0 %v741, 24
  %v2339 = vpop.permute.xlu0 %2338
  %2340 = vrot.lane.b32.xlu0 %v742, 24
  %v2341 = vpop.permute.xlu0 %2340
  %2342 = vrot.lane.b32.xlu0 %v743, 24
  %v2343 = vpop.permute.xlu0 %2342
  %2472 = vrot.lane.b32.xlu0 %v744, 28
  %v2473 = vpop.permute.xlu0 %2472
  %2474 = vrot.lane.b32.xlu0 %v745, 28
  %v2475 = vpop.permute.xlu0 %2474
  %2476 = vrot.lane.b32.xlu0 %v746, 28
  %v2477 = vpop.permute.xlu0 %2476
  %2478 = vrot.lane.b32.xlu0 %v747, 28
  %v2479 = vpop.permute.xlu0 %2478
  %2480 = vrot.lane.b32.xlu0 %v748, 28
  %v2481 = vpop.permute.xlu0 %2480
  %2482 = vrot.lane.b32.xlu0 %v749, 28
  %v2483 = vpop.permute.xlu0 %2482
  %2484 = vrot.lane.b32.xlu0 %v750, 28
  %v2485 = vpop.permute.xlu0 %2484
  %2486 = vrot.lane.b32.xlu0 %v751, 28
  %v2487 = vpop.permute.xlu0 %2486
  %2488 = vrot.lane.b32.xlu0 %v752, 28
  %v2489 = vpop.permute.xlu0 %2488
  %2490 = vrot.lane.b32.xlu0 %v753, 28
  %v2491 = vpop.permute.xlu0 %2490
  %2492 = vrot.lane.b32.xlu0 %v754, 28
  %v2493 = vpop.permute.xlu0 %2492
  %2494 = vrot.lane.b32.xlu0 %v755, 28
  %v2495 = vpop.permute.xlu0 %2494
  %2496 = vrot.lane.b32.xlu0 %v756, 28
  %v2497 = vpop.permute.xlu0 %2496
  %2498 = vrot.lane.b32.xlu0 %v757, 28
  %v2499 = vpop.permute.xlu0 %2498
  %2500 = vrot.lane.b32.xlu0 %v758, 28
  %v2501 = vpop.permute.xlu0 %2500
  %2502 = vrot.lane.b32.xlu0 %v759, 28
  %v2503 = vpop.permute.xlu0 %2502
  %2504 = vrot.lane.b32.xlu0 %v760, 28
  %v2505 = vpop.permute.xlu0 %2504
  %2506 = vrot.lane.b32.xlu0 %v761, 28
  %v2507 = vpop.permute.xlu0 %2506
  %2508 = vrot.lane.b32.xlu0 %v762, 28
  %v2509 = vpop.permute.xlu0 %2508
  %2510 = vrot.lane.b32.xlu0 %v763, 28
  %v2511 = vpop.permute.xlu0 %2510
  %2512 = vrot.lane.b32.xlu0 %v764, 28
  %v2513 = vpop.permute.xlu0 %2512
  %2514 = vrot.lane.b32.xlu0 %v765, 28
  %v2515 = vpop.permute.xlu0 %2514
  %2516 = vrot.lane.b32.xlu0 %v766, 28
  %v2517 = vpop.permute.xlu0 %2516
  %2518 = vrot.lane.b32.xlu0 %v767, 28
  %v2519 = vpop.permute.xlu0 %2518
  %2520 = vrot.lane.b32.xlu0 %v768, 28
  %v2521 = vpop.permute.xlu0 %2520
  %2522 = vrot.lane.b32.xlu0 %v769, 28
  %v2523 = vpop.permute.xlu0 %2522
  %2524 = vrot.lane.b32.xlu0 %v770, 28
  %v2525 = vpop.permute.xlu0 %2524
  %2526 = vrot.lane.b32.xlu0 %v771, 28
  %v2527 = vpop.permute.xlu0 %2526
  %2528 = vrot.lane.b32.xlu0 %v772, 28
  %v2529 = vpop.permute.xlu0 %2528
  %2530 = vrot.lane.b32.xlu0 %v773, 28
  %v2531 = vpop.permute.xlu0 %2530
  %2532 = vrot.lane.b32.xlu0 %v774, 28
  %v2533 = vpop.permute.xlu0 %2532
  %2534 = vrot.lane.b32.xlu0 %v775, 28
  %v2535 = vpop.permute.xlu0 %2534
  %2536 = vrot.lane.b32.xlu0 %v776, 28
  %v2537 = vpop.permute.xlu0 %2536
  %2538 = vrot.lane.b32.xlu0 %v777, 28
  %v2539 = vpop.permute.xlu0 %2538
  %2540 = vrot.lane.b32.xlu0 %v778, 28
  %v2541 = vpop.permute.xlu0 %2540
  %2542 = vrot.lane.b32.xlu0 %v779, 28
  %v2543 = vpop.permute.xlu0 %2542
  %2544 = vrot.lane.b32.xlu0 %v780, 28
  %v2545 = vpop.permute.xlu0 %2544
  %2546 = vrot.lane.b32.xlu0 %v781, 28
  %v2547 = vpop.permute.xlu0 %2546
  %2548 = vrot.lane.b32.xlu0 %v782, 28
  %v2549 = vpop.permute.xlu0 %2548
  %2550 = vrot.lane.b32.xlu0 %v783, 28
  %v2551 = vpop.permute.xlu0 %2550
  %2552 = vrot.lane.b32.xlu0 %v784, 28
  %v2553 = vpop.permute.xlu0 %2552
  %2554 = vrot.lane.b32.xlu0 %v785, 28
  %v2555 = vpop.permute.xlu0 %2554
  %2556 = vrot.lane.b32.xlu0 %v786, 28
  %v2557 = vpop.permute.xlu0 %2556
  %2558 = vrot.lane.b32.xlu0 %v787, 28
  %v2559 = vpop.permute.xlu0 %2558
  %2560 = vrot.lane.b32.xlu0 %v788, 28
  %v2561 = vpop.permute.xlu0 %2560
  %2562 = vrot.lane.b32.xlu0 %v789, 28
  %v2563 = vpop.permute.xlu0 %2562
  %2564 = vrot.lane.b32.xlu0 %v790, 28
  %v2565 = vpop.permute.xlu0 %2564
  %2566 = vrot.lane.b32.xlu0 %v791, 28
  %v2567 = vpop.permute.xlu0 %2566
  %2568 = vrot.lane.b32.xlu0 %v792, 28
  %v2569 = vpop.permute.xlu0 %2568
  %2570 = vrot.lane.b32.xlu0 %v793, 28
  %v2571 = vpop.permute.xlu0 %2570
  %2572 = vrot.lane.b32.xlu0 %v794, 28
  %v2573 = vpop.permute.xlu0 %2572
  %2574 = vrot.lane.b32.xlu0 %v795, 28
  %v2575 = vpop.permute.xlu0 %2574
  %2576 = vrot.lane.b32.xlu0 %v796, 28
  %v2577 = vpop.permute.xlu0 %2576
  %2578 = vrot.lane.b32.xlu0 %v797, 28
  %v2579 = vpop.permute.xlu0 %2578
  %2580 = vrot.lane.b32.xlu0 %v798, 28
  %v2581 = vpop.permute.xlu0 %2580
  %2582 = vrot.lane.b32.xlu0 %v799, 28
  %v2583 = vpop.permute.xlu0 %2582
  %2584 = vrot.lane.b32.xlu0 %v800, 28
  %v2585 = vpop.permute.xlu0 %2584
  %2586 = vrot.lane.b32.xlu0 %v801, 28
  %v2587 = vpop.permute.xlu0 %2586
  %2588 = vrot.lane.b32.xlu0 %v802, 28
  %v2589 = vpop.permute.xlu0 %2588
  %2590 = vrot.lane.b32.xlu0 %v803, 28
  %v2591 = vpop.permute.xlu0 %2590
  %2592 = vrot.lane.b32.xlu0 %v804, 28
  %v2593 = vpop.permute.xlu0 %2592
  %2594 = vrot.lane.b32.xlu0 %v805, 28
  %v2595 = vpop.permute.xlu0 %2594
  %2596 = vrot.lane.b32.xlu0 %v806, 28
  %v2597 = vpop.permute.xlu0 %2596
  %2598 = vrot.lane.b32.xlu0 %v807, 28
  %v2599 = vpop.permute.xlu0 %2598
  %2728 = vrot.lane.b32.xlu0 %v808, 32
  %v2729 = vpop.permute.xlu0 %2728
  %2730 = vrot.lane.b32.xlu0 %v809, 32
  %v2731 = vpop.permute.xlu0 %2730
  %2732 = vrot.lane.b32.xlu0 %v810, 32
  %v2733 = vpop.permute.xlu0 %2732
  %2734 = vrot.lane.b32.xlu0 %v811, 32
  %v2735 = vpop.permute.xlu0 %2734
  %2736 = vrot.lane.b32.xlu0 %v812, 32
  %v2737 = vpop.permute.xlu0 %2736
  %2738 = vrot.lane.b32.xlu0 %v813, 32
  %v2739 = vpop.permute.xlu0 %2738
  %2740 = vrot.lane.b32.xlu0 %v814, 32
  %v2741 = vpop.permute.xlu0 %2740
  %2742 = vrot.lane.b32.xlu0 %v815, 32
  %v2743 = vpop.permute.xlu0 %2742
  %2744 = vrot.lane.b32.xlu0 %v816, 32
  %v2745 = vpop.permute.xlu0 %2744
  %2746 = vrot.lane.b32.xlu0 %v817, 32
  %v2747 = vpop.permute.xlu0 %2746
  %2748 = vrot.lane.b32.xlu0 %v818, 32
  %v2749 = vpop.permute.xlu0 %2748
  %2750 = vrot.lane.b32.xlu0 %v819, 32
  %v2751 = vpop.permute.xlu0 %2750
  %2752 = vrot.lane.b32.xlu0 %v820, 32
  %v2753 = vpop.permute.xlu0 %2752
  %2754 = vrot.lane.b32.xlu0 %v821, 32
  %v2755 = vpop.permute.xlu0 %2754
  %2756 = vrot.lane.b32.xlu0 %v822, 32
  %v2757 = vpop.permute.xlu0 %2756
  %2758 = vrot.lane.b32.xlu0 %v823, 32
  %v2759 = vpop.permute.xlu0 %2758
  %2760 = vrot.lane.b32.xlu0 %v824, 32
  %v2761 = vpop.permute.xlu0 %2760
  %2762 = vrot.lane.b32.xlu0 %v825, 32
  %v2763 = vpop.permute.xlu0 %2762
  %2764 = vrot.lane.b32.xlu0 %v826, 32
  %v2765 = vpop.permute.xlu0 %2764
  %2766 = vrot.lane.b32.xlu0 %v827, 32
  %v2767 = vpop.permute.xlu0 %2766
  %2768 = vrot.lane.b32.xlu0 %v828, 32
  %v2769 = vpop.permute.xlu0 %2768
  %2770 = vrot.lane.b32.xlu0 %v829, 32
  %v2771 = vpop.permute.xlu0 %2770
  %2772 = vrot.lane.b32.xlu0 %v830, 32
  %v2773 = vpop.permute.xlu0 %2772
  %2774 = vrot.lane.b32.xlu0 %v831, 32
  %v2775 = vpop.permute.xlu0 %2774
  %2776 = vrot.lane.b32.xlu0 %v832, 32
  %v2777 = vpop.permute.xlu0 %2776
  %2778 = vrot.lane.b32.xlu0 %v833, 32
  %v2779 = vpop.permute.xlu0 %2778
  %2780 = vrot.lane.b32.xlu0 %v834, 32
  %v2781 = vpop.permute.xlu0 %2780
  %2782 = vrot.lane.b32.xlu0 %v835, 32
  %v2783 = vpop.permute.xlu0 %2782
  %2784 = vrot.lane.b32.xlu0 %v836, 32
  %v2785 = vpop.permute.xlu0 %2784
  %2786 = vrot.lane.b32.xlu0 %v837, 32
  %v2787 = vpop.permute.xlu0 %2786
  %2788 = vrot.lane.b32.xlu0 %v838, 32
  %v2789 = vpop.permute.xlu0 %2788
  %2790 = vrot.lane.b32.xlu0 %v839, 32
  %v2791 = vpop.permute.xlu0 %2790
  %2792 = vrot.lane.b32.xlu0 %v840, 32
  %v2793 = vpop.permute.xlu0 %2792
  %2794 = vrot.lane.b32.xlu0 %v841, 32
  %v2795 = vpop.permute.xlu0 %2794
  %2796 = vrot.lane.b32.xlu0 %v842, 32
  %v2797 = vpop.permute.xlu0 %2796
  %2798 = vrot.lane.b32.xlu0 %v843, 32
  %v2799 = vpop.permute.xlu0 %2798
  %2800 = vrot.lane.b32.xlu0 %v844, 32
  %v2801 = vpop.permute.xlu0 %2800
  %2802 = vrot.lane.b32.xlu0 %v845, 32
  %v2803 = vpop.permute.xlu0 %2802
  %2804 = vrot.lane.b32.xlu0 %v846, 32
  %v2805 = vpop.permute.xlu0 %2804
  %2806 = vrot.lane.b32.xlu0 %v847, 32
  %v2807 = vpop.permute.xlu0 %2806
  %2808 = vrot.lane.b32.xlu0 %v848, 32
  %v2809 = vpop.permute.xlu0 %2808
  %2810 = vrot.lane.b32.xlu0 %v849, 32
  %v2811 = vpop.permute.xlu0 %2810
  %2812 = vrot.lane.b32.xlu0 %v850, 32
  %v2813 = vpop.permute.xlu0 %2812
  %2814 = vrot.lane.b32.xlu0 %v851, 32
  %v2815 = vpop.permute.xlu0 %2814
  %2816 = vrot.lane.b32.xlu0 %v852, 32
  %v2817 = vpop.permute.xlu0 %2816
  %2818 = vrot.lane.b32.xlu0 %v853, 32
  %v2819 = vpop.permute.xlu0 %2818
  %2820 = vrot.lane.b32.xlu0 %v854, 32
  %v2821 = vpop.permute.xlu0 %2820
  %2822 = vrot.lane.b32.xlu0 %v855, 32
  %v2823 = vpop.permute.xlu0 %2822
  %2824 = vrot.lane.b32.xlu0 %v856, 32
  %v2825 = vpop.permute.xlu0 %2824
  %2826 = vrot.lane.b32.xlu0 %v857, 32
  %v2827 = vpop.permute.xlu0 %2826
  %2828 = vrot.lane.b32.xlu0 %v858, 32
  %v2829 = vpop.permute.xlu0 %2828
  %2830 = vrot.lane.b32.xlu0 %v859, 32
  %v2831 = vpop.permute.xlu0 %2830
  %2832 = vrot.lane.b32.xlu0 %v860, 32
  %v2833 = vpop.permute.xlu0 %2832
  %2834 = vrot.lane.b32.xlu0 %v861, 32
  %v2835 = vpop.permute.xlu0 %2834
  %2836 = vrot.lane.b32.xlu0 %v862, 32
  %v2837 = vpop.permute.xlu0 %2836
  %2838 = vrot.lane.b32.xlu0 %v863, 32
  %v2839 = vpop.permute.xlu0 %2838
  %2840 = vrot.lane.b32.xlu0 %v864, 32
  %v2841 = vpop.permute.xlu0 %2840
  %2842 = vrot.lane.b32.xlu0 %v865, 32
  %v2843 = vpop.permute.xlu0 %2842
  %2844 = vrot.lane.b32.xlu0 %v866, 32
  %v2845 = vpop.permute.xlu0 %2844
  %2846 = vrot.lane.b32.xlu0 %v867, 32
  %v2847 = vpop.permute.xlu0 %2846
  %2848 = vrot.lane.b32.xlu0 %v868, 32
  %v2849 = vpop.permute.xlu0 %2848
  %2850 = vrot.lane.b32.xlu0 %v869, 32
  %v2851 = vpop.permute.xlu0 %2850
  %2852 = vrot.lane.b32.xlu0 %v870, 32
  %v2853 = vpop.permute.xlu0 %2852
  %2854 = vrot.lane.b32.xlu0 %v871, 32
  %v2855 = vpop.permute.xlu0 %2854
  %v2920 = vsel %vm85, %v295, %v937
  %v2921 = vsel %vm85, %v296, %v939
  %v2922 = vsel %vm85, %v297, %v941
  %v2923 = vsel %vm85, %v298, %v943
  %v2924 = vsel %vm85, %v299, %v945
  %v2925 = vsel %vm85, %v300, %v947
  %v2926 = vsel %vm85, %v301, %v949
  %v2927 = vsel %vm85, %v302, %v951
  %v2928 = vsel %vm85, %v303, %v953
  %v2929 = vsel %vm85, %v304, %v955
  %v2930 = vsel %vm85, %v305, %v957
  %v2931 = vsel %vm85, %v306, %v959
  %v2932 = vsel %vm85, %v307, %v961
  %v2933 = vsel %vm85, %v308, %v963
  %v2934 = vsel %vm85, %v309, %v965
  %v2935 = vsel %vm85, %v310, %v967
  %v2936 = vsel %vm85, %v311, %v969
  %v2937 = vsel %vm85, %v312, %v971
  %v2938 = vsel %vm85, %v313, %v973
  %v2939 = vsel %vm85, %v314, %v975
  %v2940 = vsel %vm85, %v315, %v977
  %v2941 = vsel %vm85, %v316, %v979
  %v2942 = vsel %vm85, %v317, %v981
  %v2943 = vsel %vm85, %v318, %v983
  %v2944 = vsel %vm85, %v319, %v985
  %v2945 = vsel %vm85, %v320, %v987
  %v2946 = vsel %vm85, %v321, %v989
  %v2947 = vsel %vm85, %v322, %v991
  %v2948 = vsel %vm85, %v323, %v993
  %v2949 = vsel %vm85, %v324, %v995
  %v2950 = vsel %vm85, %v325, %v997
  %v2951 = vsel %vm85, %v326, %v999
  %v2952 = vsel %vm85, %v327, %v1001
  %v2953 = vsel %vm85, %v328, %v1003
  %v2954 = vsel %vm85, %v329, %v1005
  %v2955 = vsel %vm85, %v330, %v1007
  %v2956 = vsel %vm85, %v331, %v1009
  %v2957 = vsel %vm85, %v332, %v1011
  %v2958 = vsel %vm85, %v333, %v1013
  %v2959 = vsel %vm85, %v334, %v1015
  %v2960 = vsel %vm85, %v335, %v1017
  %v2961 = vsel %vm85, %v336, %v1019
  %v2962 = vsel %vm85, %v337, %v1021
  %v2963 = vsel %vm85, %v338, %v1023
  %v2964 = vsel %vm85, %v339, %v1025
  %v2965 = vsel %vm85, %v340, %v1027
  %v2966 = vsel %vm85, %v341, %v1029
  %v2967 = vsel %vm85, %v342, %v1031
  %v2968 = vsel %vm85, %v343, %v1033
  %v2969 = vsel %vm85, %v344, %v1035
  %v2970 = vsel %vm85, %v345, %v1037
  %v2971 = vsel %vm85, %v346, %v1039
  %v2972 = vsel %vm85, %v347, %v1041
  %v2973 = vsel %vm85, %v348, %v1043
  %v2974 = vsel %vm85, %v349, %v1045
  %v2975 = vsel %vm85, %v350, %v1047
  %v2976 = vsel %vm85, %v351, %v1049
  %v2977 = vsel %vm85, %v352, %v1051
  %v2978 = vsel %vm85, %v353, %v1053
  %v2979 = vsel %vm85, %v354, %v1055
  %v2980 = vsel %vm85, %v355, %v1057
  %v2981 = vsel %vm85, %v356, %v1059
  %v2982 = vsel %vm85, %v357, %v1061
  %v2983 = vsel %vm85, %v358, %v1063
  %vm2984 = vcmask 64512
  %v2985 = vsel %vm2984, %v2920, %v1193
  %v2986 = vsel %vm2984, %v2921, %v1195
  %v2987 = vsel %vm2984, %v2922, %v1197
  %v2988 = vsel %vm2984, %v2923, %v1199
  %v2989 = vsel %vm2984, %v2924, %v1201
  %v2990 = vsel %vm2984, %v2925, %v1203
  %v2991 = vsel %vm2984, %v2926, %v1205
  %v2992 = vsel %vm2984, %v2927, %v1207
  %v2993 = vsel %vm2984, %v2928, %v1209
  %v2994 = vsel %vm2984, %v2929, %v1211
  %v2995 = vsel %vm2984, %v2930, %v1213
  %v2996 = vsel %vm2984, %v2931, %v1215
  %v2997 = vsel %vm2984, %v2932, %v1217
  %v2998 = vsel %vm2984, %v2933, %v1219
  %v2999 = vsel %vm2984, %v2934, %v1221
  %v3000 = vsel %vm2984, %v2935, %v1223
  %v3001 = vsel %vm2984, %v2936, %v1225
  %v3002 = vsel %vm2984, %v2937, %v1227
  %v3003 = vsel %vm2984, %v2938, %v1229
  %v3004 = vsel %vm2984, %v2939, %v1231
  %v3005 = vsel %vm2984, %v2940, %v1233
  %v3006 = vsel %vm2984, %v2941, %v1235
  %v3007 = vsel %vm2984, %v2942, %v1237
  %v3008 = vsel %vm2984, %v2943, %v1239
  %v3009 = vsel %vm2984, %v2944, %v1241
  %v3010 = vsel %vm2984, %v2945, %v1243
  %v3011 = vsel %vm2984, %v2946, %v1245
  %v3012 = vsel %vm2984, %v2947, %v1247
  %v3013 = vsel %vm2984, %v2948, %v1249
  %v3014 = vsel %vm2984, %v2949, %v1251
  %v3015 = vsel %vm2984, %v2950, %v1253
  %v3016 = vsel %vm2984, %v2951, %v1255
  %v3017 = vsel %vm2984, %v2952, %v1257
  %v3018 = vsel %vm2984, %v2953, %v1259
  %v3019 = vsel %vm2984, %v2954, %v1261
  %v3020 = vsel %vm2984, %v2955, %v1263
  %v3021 = vsel %vm2984, %v2956, %v1265
  %v3022 = vsel %vm2984, %v2957, %v1267
  %v3023 = vsel %vm2984, %v2958, %v1269
  %v3024 = vsel %vm2984, %v2959, %v1271
  %v3025 = vsel %vm2984, %v2960, %v1273
  %v3026 = vsel %vm2984, %v2961, %v1275
  %v3027 = vsel %vm2984, %v2962, %v1277
  %v3028 = vsel %vm2984, %v2963, %v1279
  %v3029 = vsel %vm2984, %v2964, %v1281
  %v3030 = vsel %vm2984, %v2965, %v1283
  %v3031 = vsel %vm2984, %v2966, %v1285
  %v3032 = vsel %vm2984, %v2967, %v1287
  %v3033 = vsel %vm2984, %v2968, %v1289
  %v3034 = vsel %vm2984, %v2969, %v1291
  %v3035 = vsel %vm2984, %v2970, %v1293
  %v3036 = vsel %vm2984, %v2971, %v1295
  %v3037 = vsel %vm2984, %v2972, %v1297
  %v3038 = vsel %vm2984, %v2973, %v1299
  %v3039 = vsel %vm2984, %v2974, %v1301
  %v3040 = vsel %vm2984, %v2975, %v1303
  %v3041 = vsel %vm2984, %v2976, %v1305
  %v3042 = vsel %vm2984, %v2977, %v1307
  %v3043 = vsel %vm2984, %v2978, %v1309
  %v3044 = vsel %vm2984, %v2979, %v1311
  %v3045 = vsel %vm2984, %v2980, %v1313
  %v3046 = vsel %vm2984, %v2981, %v1315
  %v3047 = vsel %vm2984, %v2982, %v1317
  %v3048 = vsel %vm2984, %v2983, %v1319
  %vm3049 = vcmask 97280
  %v3050 = vsel %vm3049, %v2985, %v1449
  %v3051 = vsel %vm3049, %v2986, %v1451
  %v3052 = vsel %vm3049, %v2987, %v1453
  %v3053 = vsel %vm3049, %v2988, %v1455
  %v3054 = vsel %vm3049, %v2989, %v1457
  %v3055 = vsel %vm3049, %v2990, %v1459
  %v3056 = vsel %vm3049, %v2991, %v1461
  %v3057 = vsel %vm3049, %v2992, %v1463
  %v3058 = vsel %vm3049, %v2993, %v1465
  %v3059 = vsel %vm3049, %v2994, %v1467
  %v3060 = vsel %vm3049, %v2995, %v1469
  %v3061 = vsel %vm3049, %v2996, %v1471
  %v3062 = vsel %vm3049, %v2997, %v1473
  %v3063 = vsel %vm3049, %v2998, %v1475
  %v3064 = vsel %vm3049, %v2999, %v1477
  %v3065 = vsel %vm3049, %v3000, %v1479
  %v3066 = vsel %vm3049, %v3001, %v1481
  %v3067 = vsel %vm3049, %v3002, %v1483
  %v3068 = vsel %vm3049, %v3003, %v1485
  %v3069 = vsel %vm3049, %v3004, %v1487
  %v3070 = vsel %vm3049, %v3005, %v1489
  %v3071 = vsel %vm3049, %v3006, %v1491
  %v3072 = vsel %vm3049, %v3007, %v1493
  %v3073 = vsel %vm3049, %v3008, %v1495
  %v3074 = vsel %vm3049, %v3009, %v1497
  %v3075 = vsel %vm3049, %v3010, %v1499
  %v3076 = vsel %vm3049, %v3011, %v1501
  %v3077 = vsel %vm3049, %v3012, %v1503
  %v3078 = vsel %vm3049, %v3013, %v1505
  %v3079 = vsel %vm3049, %v3014, %v1507
  %v3080 = vsel %vm3049, %v3015, %v1509
  %v3081 = vsel %vm3049, %v3016, %v1511
  %v3082 = vsel %vm3049, %v3017, %v1513
  %v3083 = vsel %vm3049, %v3018, %v1515
  %v3084 = vsel %vm3049, %v3019, %v1517
  %v3085 = vsel %vm3049, %v3020, %v1519
  %v3086 = vsel %vm3049, %v3021, %v1521
  %v3087 = vsel %vm3049, %v3022, %v1523
  %v3088 = vsel %vm3049, %v3023, %v1525
  %v3089 = vsel %vm3049, %v3024, %v1527
  %v3090 = vsel %vm3049, %v3025, %v1529
  %v3091 = vsel %vm3049, %v3026, %v1531
  %v3092 = vsel %vm3049, %v3027, %v1533
  %v3093 = vsel %vm3049, %v3028, %v1535
  %v3094 = vsel %vm3049, %v3029, %v1537
  %v3095 = vsel %vm3049, %v3030, %v1539
  %v3096 = vsel %vm3049, %v3031, %v1541
  %v3097 = vsel %vm3049, %v3032, %v1543
  %v3098 = vsel %vm3049, %v3033, %v1545
  %v3099 = vsel %vm3049, %v3034, %v1547
  %v3100 = vsel %vm3049, %v3035, %v1549
  %v3101 = vsel %vm3049, %v3036, %v1551
  %v3102 = vsel %vm3049, %v3037, %v1553
  %v3103 = vsel %vm3049, %v3038, %v1555
  %v3104 = vsel %vm3049, %v3039, %v1557
  %v3105 = vsel %vm3049, %v3040, %v1559
  %v3106 = vsel %vm3049, %v3041, %v1561
  %v3107 = vsel %vm3049, %v3042, %v1563
  %v3108 = vsel %vm3049, %v3043, %v1565
  %v3109 = vsel %vm3049, %v3044, %v1567
  %v3110 = vsel %vm3049, %v3045, %v1569
  %v3111 = vsel %vm3049, %v3046, %v1571
  %v3112 = vsel %vm3049, %v3047, %v1573
  %v3113 = vsel %vm3049, %v3048, %v1575
  %vm3114 = vcmask 130048
  %v3115 = vsel %vm3114, %v3050, %v1705
  %v3116 = vsel %vm3114, %v3051, %v1707
  %v3117 = vsel %vm3114, %v3052, %v1709
  %v3118 = vsel %vm3114, %v3053, %v1711
  %v3119 = vsel %vm3114, %v3054, %v1713
  %v3120 = vsel %vm3114, %v3055, %v1715
  %v3121 = vsel %vm3114, %v3056, %v1717
  %v3122 = vsel %vm3114, %v3057, %v1719
  %v3123 = vsel %vm3114, %v3058, %v1721
  %v3124 = vsel %vm3114, %v3059, %v1723
  %v3125 = vsel %vm3114, %v3060, %v1725
  %v3126 = vsel %vm3114, %v3061, %v1727
  %v3127 = vsel %vm3114, %v3062, %v1729
  %v3128 = vsel %vm3114, %v3063, %v1731
  %v3129 = vsel %vm3114, %v3064, %v1733
  %v3130 = vsel %vm3114, %v3065, %v1735
  %v3131 = vsel %vm3114, %v3066, %v1737
  %v3132 = vsel %vm3114, %v3067, %v1739
  %v3133 = vsel %vm3114, %v3068, %v1741
  %v3134 = vsel %vm3114, %v3069, %v1743
  %v3135 = vsel %vm3114, %v3070, %v1745
  %v3136 = vsel %vm3114, %v3071, %v1747
  %v3137 = vsel %vm3114, %v3072, %v1749
  %v3138 = vsel %vm3114, %v3073, %v1751
  %v3139 = vsel %vm3114, %v3074, %v1753
  %v3140 = vsel %vm3114, %v3075, %v1755
  %v3141 = vsel %vm3114, %v3076, %v1757
  %v3142 = vsel %vm3114, %v3077, %v1759
  %v3143 = vsel %vm3114, %v3078, %v1761
  %v3144 = vsel %vm3114, %v3079, %v1763
  %v3145 = vsel %vm3114, %v3080, %v1765
  %v3146 = vsel %vm3114, %v3081, %v1767
  %v3147 = vsel %vm3114, %v3082, %v1769
  %v3148 = vsel %vm3114, %v3083, %v1771
  %v3149 = vsel %vm3114, %v3084, %v1773
  %v3150 = vsel %vm3114, %v3085, %v1775
  %v3151 = vsel %vm3114, %v3086, %v1777
  %v3152 = vsel %vm3114, %v3087, %v1779
  %v3153 = vsel %vm3114, %v3088, %v1781
  %v3154 = vsel %vm3114, %v3089, %v1783
  %v3155 = vsel %vm3114, %v3090, %v1785
  %v3156 = vsel %vm3114, %v3091, %v1787
  %v3157 = vsel %vm3114, %v3092, %v1789
  %v3158 = vsel %vm3114, %v3093, %v1791
  %v3159 = vsel %vm3114, %v3094, %v1793
  %v3160 = vsel %vm3114, %v3095, %v1795
  %v3161 = vsel %vm3114, %v3096, %v1797
  %v3162 = vsel %vm3114, %v3097, %v1799
  %v3163 = vsel %vm3114, %v3098, %v1801
  %v3164 = vsel %vm3114, %v3099, %v1803
  %v3165 = vsel %vm3114, %v3100, %v1805
  %v3166 = vsel %vm3114, %v3101, %v1807
  %v3167 = vsel %vm3114, %v3102, %v1809
  %v3168 = vsel %vm3114, %v3103, %v1811
  %v3169 = vsel %vm3114, %v3104, %v1813
  %v3170 = vsel %vm3114, %v3105, %v1815
  %v3171 = vsel %vm3114, %v3106, %v1817
  %v3172 = vsel %vm3114, %v3107, %v1819
  %v3173 = vsel %vm3114, %v3108, %v1821
  %v3174 = vsel %vm3114, %v3109, %v1823
  %v3175 = vsel %vm3114, %v3110, %v1825
  %v3176 = vsel %vm3114, %v3111, %v1827
  %v3177 = vsel %vm3114, %v3112, %v1829
  %v3178 = vsel %vm3114, %v3113, %v1831
  %vm3179 = vcmask 162816
  %v3180 = vsel %vm3179, %v3115, %v1961
  %v3181 = vsel %vm3179, %v3116, %v1963
  %v3182 = vsel %vm3179, %v3117, %v1965
  %v3183 = vsel %vm3179, %v3118, %v1967
  %v3184 = vsel %vm3179, %v3119, %v1969
  %v3185 = vsel %vm3179, %v3120, %v1971
  %v3186 = vsel %vm3179, %v3121, %v1973
  %v3187 = vsel %vm3179, %v3122, %v1975
  %v3188 = vsel %vm3179, %v3123, %v1977
  %v3189 = vsel %vm3179, %v3124, %v1979
  %v3190 = vsel %vm3179, %v3125, %v1981
  %v3191 = vsel %vm3179, %v3126, %v1983
  %v3192 = vsel %vm3179, %v3127, %v1985
  %v3193 = vsel %vm3179, %v3128, %v1987
  %v3194 = vsel %vm3179, %v3129, %v1989
  %v3195 = vsel %vm3179, %v3130, %v1991
  %v3196 = vsel %vm3179, %v3131, %v1993
  %v3197 = vsel %vm3179, %v3132, %v1995
  %v3198 = vsel %vm3179, %v3133, %v1997
  %v3199 = vsel %vm3179, %v3134, %v1999
  %v3200 = vsel %vm3179, %v3135, %v2001
  %v3201 = vsel %vm3179, %v3136, %v2003
  %v3202 = vsel %vm3179, %v3137, %v2005
  %v3203 = vsel %vm3179, %v3138, %v2007
  %v3204 = vsel %vm3179, %v3139, %v2009
  %v3205 = vsel %vm3179, %v3140, %v2011
  %v3206 = vsel %vm3179, %v3141, %v2013
  %v3207 = vsel %vm3179, %v3142, %v2015
  %v3208 = vsel %vm3179, %v3143, %v2017
  %v3209 = vsel %vm3179, %v3144, %v2019
  %v3210 = vsel %vm3179, %v3145, %v2021
  %v3211 = vsel %vm3179, %v3146, %v2023
  %v3212 = vsel %vm3179, %v3147, %v2025
  %v3213 = vsel %vm3179, %v3148, %v2027
  %v3214 = vsel %vm3179, %v3149, %v2029
  %v3215 = vsel %vm3179, %v3150, %v2031
  %v3216 = vsel %vm3179, %v3151, %v2033
  %v3217 = vsel %vm3179, %v3152, %v2035
  %v3218 = vsel %vm3179, %v3153, %v2037
  %v3219 = vsel %vm3179, %v3154, %v2039
  %v3220 = vsel %vm3179, %v3155, %v2041
  %v3221 = vsel %vm3179, %v3156, %v2043
  %v3222 = vsel %vm3179, %v3157, %v2045
  %v3223 = vsel %vm3179, %v3158, %v2047
  %v3224 = vsel %vm3179, %v3159, %v2049
  %v3225 = vsel %vm3179, %v3160, %v2051
  %v3226 = vsel %vm3179, %v3161, %v2053
  %v3227 = vsel %vm3179, %v3162, %v2055
  %v3228 = vsel %vm3179, %v3163, %v2057
  %v3229 = vsel %vm3179, %v3164, %v2059
  %v3230 = vsel %vm3179, %v3165, %v2061
  %v3231 = vsel %vm3179, %v3166, %v2063
  %v3232 = vsel %vm3179, %v3167, %v2065
  %v3233 = vsel %vm3179, %v3168, %v2067
  %v3234 = vsel %vm3179, %v3169, %v2069
  %v3235 = vsel %vm3179, %v3170, %v2071
  %v3236 = vsel %vm3179, %v3171, %v2073
  %v3237 = vsel %vm3179, %v3172, %v2075
  %v3238 = vsel %vm3179, %v3173, %v2077
  %v3239 = vsel %vm3179, %v3174, %v2079
  %v3240 = vsel %vm3179, %v3175, %v2081
  %v3241 = vsel %vm3179, %v3176, %v2083
  %v3242 = vsel %vm3179, %v3177, %v2085
  %v3243 = vsel %vm3179, %v3178, %v2087
  %vm3244 = vcmask 195584
  %v3245 = vsel %vm3244, %v3180, %v2217
  %v3246 = vsel %vm3244, %v3181, %v2219
  %v3247 = vsel %vm3244, %v3182, %v2221
  %v3248 = vsel %vm3244, %v3183, %v2223
  %v3249 = vsel %vm3244, %v3184, %v2225
  %v3250 = vsel %vm3244, %v3185, %v2227
  %v3251 = vsel %vm3244, %v3186, %v2229
  %v3252 = vsel %vm3244, %v3187, %v2231
  %v3253 = vsel %vm3244, %v3188, %v2233
  %v3254 = vsel %vm3244, %v3189, %v2235
  %v3255 = vsel %vm3244, %v3190, %v2237
  %v3256 = vsel %vm3244, %v3191, %v2239
  %v3257 = vsel %vm3244, %v3192, %v2241
  %v3258 = vsel %vm3244, %v3193, %v2243
  %v3259 = vsel %vm3244, %v3194, %v2245
  %v3260 = vsel %vm3244, %v3195, %v2247
  %v3261 = vsel %vm3244, %v3196, %v2249
  %v3262 = vsel %vm3244, %v3197, %v2251
  %v3263 = vsel %vm3244, %v3198, %v2253
  %v3264 = vsel %vm3244, %v3199, %v2255
  %v3265 = vsel %vm3244, %v3200, %v2257
  %v3266 = vsel %vm3244, %v3201, %v2259
  %v3267 = vsel %vm3244, %v3202, %v2261
  %v3268 = vsel %vm3244, %v3203, %v2263
  %v3269 = vsel %vm3244, %v3204, %v2265
  %v3270 = vsel %vm3244, %v3205, %v2267
  %v3271 = vsel %vm3244, %v3206, %v2269
  %v3272 = vsel %vm3244, %v3207, %v2271
  %v3273 = vsel %vm3244, %v3208, %v2273
  %v3274 = vsel %vm3244, %v3209, %v2275
  %v3275 = vsel %vm3244, %v3210, %v2277
  %v3276 = vsel %vm3244, %v3211, %v2279
  %v3277 = vsel %vm3244, %v3212, %v2281
  %v3278 = vsel %vm3244, %v3213, %v2283
  %v3279 = vsel %vm3244, %v3214, %v2285
  %v3280 = vsel %vm3244, %v3215, %v2287
  %v3281 = vsel %vm3244, %v3216, %v2289
  %v3282 = vsel %vm3244, %v3217, %v2291
  %v3283 = vsel %vm3244, %v3218, %v2293
  %v3284 = vsel %vm3244, %v3219, %v2295
  %v3285 = vsel %vm3244, %v3220, %v2297
  %v3286 = vsel %vm3244, %v3221, %v2299
  %v3287 = vsel %vm3244, %v3222, %v2301
  %v3288 = vsel %vm3244, %v3223, %v2303
  %v3289 = vsel %vm3244, %v3224, %v2305
  %v3290 = vsel %vm3244, %v3225, %v2307
  %v3291 = vsel %vm3244, %v3226, %v2309
  %v3292 = vsel %vm3244, %v3227, %v2311
  %v3293 = vsel %vm3244, %v3228, %v2313
  %v3294 = vsel %vm3244, %v3229, %v2315
  %v3295 = vsel %vm3244, %v3230, %v2317
  %v3296 = vsel %vm3244, %v3231, %v2319
  %v3297 = vsel %vm3244, %v3232, %v2321
  %v3298 = vsel %vm3244, %v3233, %v2323
  %v3299 = vsel %vm3244, %v3234, %v2325
  %v3300 = vsel %vm3244, %v3235, %v2327
  %v3301 = vsel %vm3244, %v3236, %v2329
  %v3302 = vsel %vm3244, %v3237, %v2331
  %v3303 = vsel %vm3244, %v3238, %v2333
  %v3304 = vsel %vm3244, %v3239, %v2335
  %v3305 = vsel %vm3244, %v3240, %v2337
  %v3306 = vsel %vm3244, %v3241, %v2339
  %v3307 = vsel %vm3244, %v3242, %v2341
  %v3308 = vsel %vm3244, %v3243, %v2343
  %vm3309 = vcmask 228352
  %v3310 = vsel %vm3309, %v3245, %v2473
  %v3311 = vsel %vm3309, %v3246, %v2475
  %v3312 = vsel %vm3309, %v3247, %v2477
  %v3313 = vsel %vm3309, %v3248, %v2479
  %v3314 = vsel %vm3309, %v3249, %v2481
  %v3315 = vsel %vm3309, %v3250, %v2483
  %v3316 = vsel %vm3309, %v3251, %v2485
  %v3317 = vsel %vm3309, %v3252, %v2487
  %v3318 = vsel %vm3309, %v3253, %v2489
  %v3319 = vsel %vm3309, %v3254, %v2491
  %v3320 = vsel %vm3309, %v3255, %v2493
  %v3321 = vsel %vm3309, %v3256, %v2495
  %v3322 = vsel %vm3309, %v3257, %v2497
  %v3323 = vsel %vm3309, %v3258, %v2499
  %v3324 = vsel %vm3309, %v3259, %v2501
  %v3325 = vsel %vm3309, %v3260, %v2503
  %v3326 = vsel %vm3309, %v3261, %v2505
  %v3327 = vsel %vm3309, %v3262, %v2507
  %v3328 = vsel %vm3309, %v3263, %v2509
  %v3329 = vsel %vm3309, %v3264, %v2511
  %v3330 = vsel %vm3309, %v3265, %v2513
  %v3331 = vsel %vm3309, %v3266, %v2515
  %v3332 = vsel %vm3309, %v3267, %v2517
  %v3333 = vsel %vm3309, %v3268, %v2519
  %v3334 = vsel %vm3309, %v3269, %v2521
  %v3335 = vsel %vm3309, %v3270, %v2523
  %v3336 = vsel %vm3309, %v3271, %v2525
  %v3337 = vsel %vm3309, %v3272, %v2527
  %v3338 = vsel %vm3309, %v3273, %v2529
  %v3339 = vsel %vm3309, %v3274, %v2531
  %v3340 = vsel %vm3309, %v3275, %v2533
  %v3341 = vsel %vm3309, %v3276, %v2535
  %v3342 = vsel %vm3309, %v3277, %v2537
  %v3343 = vsel %vm3309, %v3278, %v2539
  %v3344 = vsel %vm3309, %v3279, %v2541
  %v3345 = vsel %vm3309, %v3280, %v2543
  %v3346 = vsel %vm3309, %v3281, %v2545
  %v3347 = vsel %vm3309, %v3282, %v2547
  %v3348 = vsel %vm3309, %v3283, %v2549
  %v3349 = vsel %vm3309, %v3284, %v2551
  %v3350 = vsel %vm3309, %v3285, %v2553
  %v3351 = vsel %vm3309, %v3286, %v2555
  %v3352 = vsel %vm3309, %v3287, %v2557
  %v3353 = vsel %vm3309, %v3288, %v2559
  %v3354 = vsel %vm3309, %v3289, %v2561
  %v3355 = vsel %vm3309, %v3290, %v2563
  %v3356 = vsel %vm3309, %v3291, %v2565
  %v3357 = vsel %vm3309, %v3292, %v2567
  %v3358 = vsel %vm3309, %v3293, %v2569
  %v3359 = vsel %vm3309, %v3294, %v2571
  %v3360 = vsel %vm3309, %v3295, %v2573
  %v3361 = vsel %vm3309, %v3296, %v2575
  %v3362 = vsel %vm3309, %v3297, %v2577
  %v3363 = vsel %vm3309, %v3298, %v2579
  %v3364 = vsel %vm3309, %v3299, %v2581
  %v3365 = vsel %vm3309, %v3300, %v2583
  %v3366 = vsel %vm3309, %v3301, %v2585
  %v3367 = vsel %vm3309, %v3302, %v2587
  %v3368 = vsel %vm3309, %v3303, %v2589
  %v3369 = vsel %vm3309, %v3304, %v2591
  %v3370 = vsel %vm3309, %v3305, %v2593
  %v3371 = vsel %vm3309, %v3306, %v2595
  %v3372 = vsel %vm3309, %v3307, %v2597
  %v3373 = vsel %vm3309, %v3308, %v2599
  %vm3374 = vcmask 261120
  %v3375 = vsel %vm3374, %v3310, %v2729
  %v3376 = vsel %vm3374, %v3311, %v2731
  %v3377 = vsel %vm3374, %v3312, %v2733
  %v3378 = vsel %vm3374, %v3313, %v2735
  %v3379 = vsel %vm3374, %v3314, %v2737
  %v3380 = vsel %vm3374, %v3315, %v2739
  %v3381 = vsel %vm3374, %v3316, %v2741
  %v3382 = vsel %vm3374, %v3317, %v2743
  %v3383 = vsel %vm3374, %v3318, %v2745
  %v3384 = vsel %vm3374, %v3319, %v2747
  %v3385 = vsel %vm3374, %v3320, %v2749
  %v3386 = vsel %vm3374, %v3321, %v2751
  %v3387 = vsel %vm3374, %v3322, %v2753
  %v3388 = vsel %vm3374, %v3323, %v2755
  %v3389 = vsel %vm3374, %v3324, %v2757
  %v3390 = vsel %vm3374, %v3325, %v2759
  %v3391 = vsel %vm3374, %v3326, %v2761
  %v3392 = vsel %vm3374, %v3327, %v2763
  %v3393 = vsel %vm3374, %v3328, %v2765
  %v3394 = vsel %vm3374, %v3329, %v2767
  %v3395 = vsel %vm3374, %v3330, %v2769
  %v3396 = vsel %vm3374, %v3331, %v2771
  %v3397 = vsel %vm3374, %v3332, %v2773
  %v3398 = vsel %vm3374, %v3333, %v2775
  %v3399 = vsel %vm3374, %v3334, %v2777
  %v3400 = vsel %vm3374, %v3335, %v2779
  %v3401 = vsel %vm3374, %v3336, %v2781
  %v3402 = vsel %vm3374, %v3337, %v2783
  %v3403 = vsel %vm3374, %v3338, %v2785
  %v3404 = vsel %vm3374, %v3339, %v2787
  %v3405 = vsel %vm3374, %v3340, %v2789
  %v3406 = vsel %vm3374, %v3341, %v2791
  %v3407 = vsel %vm3374, %v3342, %v2793
  %v3408 = vsel %vm3374, %v3343, %v2795
  %v3409 = vsel %vm3374, %v3344, %v2797
  %v3410 = vsel %vm3374, %v3345, %v2799
  %v3411 = vsel %vm3374, %v3346, %v2801
  %v3412 = vsel %vm3374, %v3347, %v2803
  %v3413 = vsel %vm3374, %v3348, %v2805
  %v3414 = vsel %vm3374, %v3349, %v2807
  %v3415 = vsel %vm3374, %v3350, %v2809
  %v3416 = vsel %vm3374, %v3351, %v2811
  %v3417 = vsel %vm3374, %v3352, %v2813
  %v3418 = vsel %vm3374, %v3353, %v2815
  %v3419 = vsel %vm3374, %v3354, %v2817
  %v3420 = vsel %vm3374, %v3355, %v2819
  %v3421 = vsel %vm3374, %v3356, %v2821
  %v3422 = vsel %vm3374, %v3357, %v2823
  %v3423 = vsel %vm3374, %v3358, %v2825
  %v3424 = vsel %vm3374, %v3359, %v2827
  %v3425 = vsel %vm3374, %v3360, %v2829
  %v3426 = vsel %vm3374, %v3361, %v2831
  %v3427 = vsel %vm3374, %v3362, %v2833
  %v3428 = vsel %vm3374, %v3363, %v2835
  %v3429 = vsel %vm3374, %v3364, %v2837
  %v3430 = vsel %vm3374, %v3365, %v2839
  %v3431 = vsel %vm3374, %v3366, %v2841
  %v3432 = vsel %vm3374, %v3367, %v2843
  %v3433 = vsel %vm3374, %v3368, %v2845
  %v3434 = vsel %vm3374, %v3369, %v2847
  %v3435 = vsel %vm3374, %v3370, %v2849
  %v3436 = vsel %vm3374, %v3371, %v2851
  %v3437 = vsel %vm3374, %v3372, %v2853
  %v3438 = vsel %vm3374, %v3373, %v2855
  %v3439 = vpack.c.bf16 %v3376, %v3375
  %v3440 = vpack.c.bf16 %v3378, %v3377
  %v3441 = vpack.c.bf16 %v3380, %v3379
  %v3442 = vpack.c.bf16 %v3382, %v3381
  %v3443 = vpack.c.bf16 %v3384, %v3383
  %v3444 = vpack.c.bf16 %v3386, %v3385
  %v3445 = vpack.c.bf16 %v3388, %v3387
  %v3446 = vpack.c.bf16 %v3390, %v3389
  %v3447 = vpack.c.bf16 %v3392, %v3391
  %v3448 = vpack.c.bf16 %v3394, %v3393
  %v3449 = vpack.c.bf16 %v3396, %v3395
  %v3450 = vpack.c.bf16 %v3398, %v3397
  %v3451 = vpack.c.bf16 %v3400, %v3399
  %v3452 = vpack.c.bf16 %v3402, %v3401
  %v3453 = vpack.c.bf16 %v3404, %v3403
  %v3454 = vpack.c.bf16 %v3406, %v3405
  %v3455 = vpack.c.bf16 %v3408, %v3407
  %v3456 = vpack.c.bf16 %v3410, %v3409
  %v3457 = vpack.c.bf16 %v3412, %v3411
  %v3458 = vpack.c.bf16 %v3414, %v3413
  %v3459 = vpack.c.bf16 %v3416, %v3415
  %v3460 = vpack.c.bf16 %v3418, %v3417
  %v3461 = vpack.c.bf16 %v3420, %v3419
  %v3462 = vpack.c.bf16 %v3422, %v3421
  %v3463 = vpack.c.bf16 %v3424, %v3423
  %v3464 = vpack.c.bf16 %v3426, %v3425
  %v3465 = vpack.c.bf16 %v3428, %v3427
  %v3466 = vpack.c.bf16 %v3430, %v3429
  %v3467 = vpack.c.bf16 %v3432, %v3431
  %v3468 = vpack.c.bf16 %v3434, %v3433
  %v3469 = vpack.c.bf16 %v3436, %v3435
  %v3470 = vpack.c.bf16 %v3438, %v3437
  %v3471 = vld [vmem:[%s1] sm:$0xf]
  %v3472 = vld [vmem:[%s1 + $0x4] sm:$0xf]
  %v3473 = vld [vmem:[%s1 + $0x8] sm:$0xf]
  %v3474 = vld [vmem:[%s1 + $0xc] sm:$0xf]
  %v3475 = vld [vmem:[%s1 + $0x10] sm:$0x3]
  %v3476 = vld [vmem:[%s2] sm:$0x1]
  %v3478 = vlaneseq
  %v3479 = vshrl.u32 %v3478, 7
  %v3480 = vsub.s32 0, %v3479
  %v3481 = vrot.slane %v3476, %v3480
  %v3488 = vunpack.c.l.b16 %v3471
  %v3489 = vunpack.c.l.b16 %v3472
  %v3490 = vunpack.c.l.b16 %v3473
  %v3491 = vunpack.c.l.b16 %v3474
  %v3492 = vunpack.c.l.b16 %v3475
  %v3493 = vpack.c.b16 %v3489, %v3488
  %v3494 = vpack.c.b16 %v3491, %v3490
  %v3495 = vpack.c.b16 %v3492, %v3492
  %vm3498 = vcmask 293888
  %v3500 = vsel %vm3498, %v3439, 0
  %v3503 = vsel %vm3498, %v3440, 0
  %v3506 = vsel %vm3498, %v3441, 0
  %v3509 = vsel %vm3498, %v3442, 0
  %v3512 = vsel %vm3498, %v3443, 0
  %v3515 = vsel %vm3498, %v3444, 0
  %v3518 = vsel %vm3498, %v3445, 0
  %v3521 = vsel %vm3498, %v3446, 0
  %v3524 = vsel %vm3498, %v3447, 0
  %v3527 = vsel %vm3498, %v3448, 0
  %v3530 = vsel %vm3498, %v3449, 0
  %v3533 = vsel %vm3498, %v3450, 0
  %v3536 = vsel %vm3498, %v3451, 0
  %v3539 = vsel %vm3498, %v3452, 0
  %v3542 = vsel %vm3498, %v3453, 0
  %v3545 = vsel %vm3498, %v3454, 0
  %v3548 = vsel %vm3498, %v3455, 0
  %v3551 = vsel %vm3498, %v3456, 0
  %v3554 = vsel %vm3498, %v3457, 0
  %v3557 = vsel %vm3498, %v3458, 0
  %v3560 = vsel %vm3498, %v3459, 0
  %v3563 = vsel %vm3498, %v3460, 0
  %v3566 = vsel %vm3498, %v3461, 0
  %v3569 = vsel %vm3498, %v3462, 0
  %v3572 = vsel %vm3498, %v3463, 0
  %v3575 = vsel %vm3498, %v3464, 0
  %v3578 = vsel %vm3498, %v3465, 0
  %v3581 = vsel %vm3498, %v3466, 0
  %v3584 = vsel %vm3498, %v3467, 0
  %v3587 = vsel %vm3498, %v3468, 0
  %v3590 = vsel %vm3498, %v3469, 0
  %v3593 = vsel %vm3498, %v3470, 0
  %vm3595 = vcmask 1041408
  %v3597 = vsel %vm3595, %v3495, 0
  %3599 = vmatprep.subr.bf16.mxu0 0
  %3600 = vmatpush1.bf16.msra.mxu0 %v3493
  %3601 = vmatprep.subr.bf16.mxu0 0
  %3602 = vmatpush1.bf16.msra.mxu0 %v3494
  %3603 = vmatprep.subr.bf16.mxu0 0
  %3604 = vmatpush1.bf16.msra.mxu0 %v3597
  %3605 = vmatprep.subr.bf16.mxu0 0
  %3606 = vmatpush1.bf16.msra.mxu0 0
  %3607 = vmatprep.subr.bf16.mxu0 0
  %3608 = vmatpush1.bf16.msra.mxu0 0
  %3609 = vmatprep.subr.bf16.mxu0 0
  %3610 = vmatpush1.bf16.msra.mxu0 0
  %3611 = vmatprep.subr.bf16.mxu0 0
  %3612 = vmatpush1.bf16.msra.mxu0 0
  %3613 = vmatprep.subr.bf16.mxu0 0
  %3614 = vmatpush1.bf16.msra.mxu0 0
  %3615 = vmatprep.subr.bf16.mxu0 0
  %3616 = vmatpush1.bf16.msra.mxu0 0
  %3617 = vmatprep.subr.bf16.mxu0 0
  %3618 = vmatpush1.bf16.msra.mxu0 0
  %3619 = vmatprep.subr.bf16.mxu0 0
  %3620 = vmatpush1.bf16.msra.mxu0 0
  %3621 = vmatprep.subr.bf16.mxu0 0
  %3622 = vmatpush1.bf16.msra.mxu0 0
  %3623 = vmatprep.subr.bf16.mxu0 0
  %3624 = vmatpush1.bf16.msra.mxu0 0
  %3625 = vmatprep.subr.bf16.mxu0 0
  %3626 = vmatpush1.bf16.msra.mxu0 0
  %3627 = vmatprep.subr.bf16.mxu0 0
  %3628 = vmatpush1.bf16.msra.mxu0 0
  %3629 = vmatprep.subr.bf16.mxu0 0
  %3630 = vmatpush1.bf16.msra.mxu0 0
  %3631 = vmatprep.mubr.bf16.mxu0 0
  %3632 = vmatmul.mubr.bf16.gmra.mrb[0].mxu0 %v3500
  %v3633 = vpop.f32.mrb[0].mxu0
  %v3634 = vadd.f32 %v3481, %v3633
  %v3635 = vpop.f32.mrb[0].mxu0
  %v3636 = vpop.f32.mrb[0].mxu0
  %v3637 = vadd.f32 %v3481, %v3636
  %v3638 = vpop.f32.mrb[0].mxu0
  %3639 = vmatprep.mubr.bf16.mxu0 0
  %3640 = vmatmul.mubr.bf16.gmra.mrb[0].mxu0 %v3503
  %v3641 = vpop.f32.mrb[0].mxu0
  %v3642 = vadd.f32 %v3481, %v3641
  %v3643 = vpop.f32.mrb[0].mxu0
  %v3644 = vpop.f32.mrb[0].mxu0
  %v3645 = vadd.f32 %v3481, %v3644
  %v3646 = vpop.f32.mrb[0].mxu0
  %3647 = vmatprep.mubr.bf16.mxu0 0
  %3648 = vmatmul.mubr.bf16.gmra.mrb[0].mxu0 %v3506
  %v3649 = vpop.f32.mrb[0].mxu0
  %v3650 = vadd.f32 %v3481, %v3649
  %v3651 = vpop.f32.mrb[0].mxu0
  %v3652 = vpop.f32.mrb[0].mxu0
  %v3653 = vadd.f32 %v3481, %v3652
  %v3654 = vpop.f32.mrb[0].mxu0
  %3655 = vmatprep.mubr.bf16.mxu0 0
  %3656 = vmatmul.mubr.bf16.gmra.mrb[0].mxu0 %v3509
  %v3657 = vpop.f32.mrb[0].mxu0
  %v3658 = vadd.f32 %v3481, %v3657
  %v3659 = vpop.f32.mrb[0].mxu0
  %v3660 = vpop.f32.mrb[0].mxu0
  %v3661 = vadd.f32 %v3481, %v3660
  %v3662 = vpop.f32.mrb[0].mxu0
  %3663 = vmatprep.mubr.bf16.mxu0 0
  %3664 = vmatmul.mubr.bf16.gmra.mrb[0].mxu0 %v3512
  %v3665 = vpop.f32.mrb[0].mxu0
  %v3666 = vadd.f32 %v3481, %v3665
  %v3667 = vpop.f32.mrb[0].mxu0
  %v3668 = vpop.f32.mrb[0].mxu0
  %v3669 = vadd.f32 %v3481, %v3668
  %v3670 = vpop.f32.mrb[0].mxu0
  %3671 = vmatprep.mubr.bf16.mxu0 0
  %3672 = vmatmul.mubr.bf16.gmra.mrb[0].mxu0 %v3515
  %v3673 = vpop.f32.mrb[0].mxu0
  %v3674 = vadd.f32 %v3481, %v3673
  %v3675 = vpop.f32.mrb[0].mxu0
  %v3676 = vpop.f32.mrb[0].mxu0
  %v3677 = vadd.f32 %v3481, %v3676
  %v3678 = vpop.f32.mrb[0].mxu0
  %3679 = vmatprep.mubr.bf16.mxu0 0
  %3680 = vmatmul.mubr.bf16.gmra.mrb[0].mxu0 %v3518
  %v3681 = vpop.f32.mrb[0].mxu0
  %v3682 = vadd.f32 %v3481, %v3681
  %v3683 = vpop.f32.mrb[0].mxu0
  %v3684 = vpop.f32.mrb[0].mxu0
  %v3685 = vadd.f32 %v3481, %v3684
  %v3686 = vpop.f32.mrb[0].mxu0
  %3687 = vmatprep.mubr.bf16.mxu0 0
  %3688 = vmatmul.mubr.bf16.gmra.mrb[0].mxu0 %v3521
  %v3689 = vpop.f32.mrb[0].mxu0
  %v3690 = vadd.f32 %v3481, %v3689
  %v3691 = vpop.f32.mrb[0].mxu0
  %v3692 = vpop.f32.mrb[0].mxu0
  %v3693 = vadd.f32 %v3481, %v3692
  %v3694 = vpop.f32.mrb[0].mxu0
  %3695 = vmatprep.mubr.bf16.mxu0 0
  %3696 = vmatmul.mubr.bf16.gmra.mrb[0].mxu0 %v3524
  %v3697 = vpop.f32.mrb[0].mxu0
  %v3698 = vadd.f32 %v3481, %v3697
  %v3699 = vpop.f32.mrb[0].mxu0
  %v3700 = vpop.f32.mrb[0].mxu0
  %v3701 = vadd.f32 %v3481, %v3700
  %v3702 = vpop.f32.mrb[0].mxu0
  %3703 = vmatprep.mubr.bf16.mxu0 0
  %3704 = vmatmul.mubr.bf16.gmra.mrb[0].mxu0 %v3527
  %v3705 = vpop.f32.mrb[0].mxu0
  %v3706 = vadd.f32 %v3481, %v3705
  %v3707 = vpop.f32.mrb[0].mxu0
  %v3708 = vpop.f32.mrb[0].mxu0
  %v3709 = vadd.f32 %v3481, %v3708
  %v3710 = vpop.f32.mrb[0].mxu0
  %3711 = vmatprep.mubr.bf16.mxu0 0
  %3712 = vmatmul.mubr.bf16.gmra.mrb[0].mxu0 %v3530
  %v3713 = vpop.f32.mrb[0].mxu0
  %v3714 = vadd.f32 %v3481, %v3713
  %v3715 = vpop.f32.mrb[0].mxu0
  %v3716 = vpop.f32.mrb[0].mxu0
  %v3717 = vadd.f32 %v3481, %v3716
  %v3718 = vpop.f32.mrb[0].mxu0
  %3719 = vmatprep.mubr.bf16.mxu0 0
  %3720 = vmatmul.mubr.bf16.gmra.mrb[0].mxu0 %v3533
  %v3721 = vpop.f32.mrb[0].mxu0
  %v3722 = vadd.f32 %v3481, %v3721
  %v3723 = vpop.f32.mrb[0].mxu0
  %v3724 = vpop.f32.mrb[0].mxu0
  %v3725 = vadd.f32 %v3481, %v3724
  %v3726 = vpop.f32.mrb[0].mxu0
  %3727 = vmatprep.mubr.bf16.mxu0 0
  %3728 = vmatmul.mubr.bf16.gmra.mrb[0].mxu0 %v3536
  %v3729 = vpop.f32.mrb[0].mxu0
  %v3730 = vadd.f32 %v3481, %v3729
  %v3731 = vpop.f32.mrb[0].mxu0
  %v3732 = vpop.f32.mrb[0].mxu0
  %v3733 = vadd.f32 %v3481, %v3732
  %v3734 = vpop.f32.mrb[0].mxu0
  %3735 = vmatprep.mubr.bf16.mxu0 0
  %3736 = vmatmul.mubr.bf16.gmra.mrb[0].mxu0 %v3539
  %v3737 = vpop.f32.mrb[0].mxu0
  %v3738 = vadd.f32 %v3481, %v3737
  %v3739 = vpop.f32.mrb[0].mxu0
  %v3740 = vpop.f32.mrb[0].mxu0
  %v3741 = vadd.f32 %v3481, %v3740
  %v3742 = vpop.f32.mrb[0].mxu0
  %3743 = vmatprep.mubr.bf16.mxu0 0
  %3744 = vmatmul.mubr.bf16.gmra.mrb[0].mxu0 %v3542
  %v3745 = vpop.f32.mrb[0].mxu0
  %v3746 = vadd.f32 %v3481, %v3745
  %v3747 = vpop.f32.mrb[0].mxu0
  %v3748 = vpop.f32.mrb[0].mxu0
  %v3749 = vadd.f32 %v3481, %v3748
  %v3750 = vpop.f32.mrb[0].mxu0
  %3751 = vmatprep.mubr.bf16.mxu0 0
  %3752 = vmatmul.mubr.bf16.gmra.mrb[0].mxu0 %v3545
  %v3753 = vpop.f32.mrb[0].mxu0
  %v3754 = vadd.f32 %v3481, %v3753
  %v3755 = vpop.f32.mrb[0].mxu0
  %v3756 = vpop.f32.mrb[0].mxu0
  %v3757 = vadd.f32 %v3481, %v3756
  %v3758 = vpop.f32.mrb[0].mxu0
  %3759 = vmatprep.mubr.bf16.mxu0 0
  %3760 = vmatmul.mubr.bf16.gmra.mrb[0].mxu0 %v3548
  %v3761 = vpop.f32.mrb[0].mxu0
  %v3762 = vadd.f32 %v3481, %v3761
  %v3763 = vpop.f32.mrb[0].mxu0
  %v3764 = vpop.f32.mrb[0].mxu0
  %v3765 = vadd.f32 %v3481, %v3764
  %v3766 = vpop.f32.mrb[0].mxu0
  %3767 = vmatprep.mubr.bf16.mxu0 0
  %3768 = vmatmul.mubr.bf16.gmra.mrb[0].mxu0 %v3551
  %v3769 = vpop.f32.mrb[0].mxu0
  %v3770 = vadd.f32 %v3481, %v3769
  %v3771 = vpop.f32.mrb[0].mxu0
  %v3772 = vpop.f32.mrb[0].mxu0
  %v3773 = vadd.f32 %v3481, %v3772
  %v3774 = vpop.f32.mrb[0].mxu0
  %3775 = vmatprep.mubr.bf16.mxu0 0
  %3776 = vmatmul.mubr.bf16.gmra.mrb[0].mxu0 %v3554
  %v3777 = vpop.f32.mrb[0].mxu0
  %v3778 = vadd.f32 %v3481, %v3777
  %v3779 = vpop.f32.mrb[0].mxu0
  %v3780 = vpop.f32.mrb[0].mxu0
  %v3781 = vadd.f32 %v3481, %v3780
  %v3782 = vpop.f32.mrb[0].mxu0
  %3783 = vmatprep.mubr.bf16.mxu0 0
  %3784 = vmatmul.mubr.bf16.gmra.mrb[0].mxu0 %v3557
  %v3785 = vpop.f32.mrb[0].mxu0
  %v3786 = vadd.f32 %v3481, %v3785
  %v3787 = vpop.f32.mrb[0].mxu0
  %v3788 = vpop.f32.mrb[0].mxu0
  %v3789 = vadd.f32 %v3481, %v3788
  %v3790 = vpop.f32.mrb[0].mxu0
  %3791 = vmatprep.mubr.bf16.mxu0 0
  %3792 = vmatmul.mubr.bf16.gmra.mrb[0].mxu0 %v3560
  %v3793 = vpop.f32.mrb[0].mxu0
  %v3794 = vadd.f32 %v3481, %v3793
  %v3795 = vpop.f32.mrb[0].mxu0
  %v3796 = vpop.f32.mrb[0].mxu0
  %v3797 = vadd.f32 %v3481, %v3796
  %v3798 = vpop.f32.mrb[0].mxu0
  %3799 = vmatprep.mubr.bf16.mxu0 0
  %3800 = vmatmul.mubr.bf16.gmra.mrb[0].mxu0 %v3563
  %v3801 = vpop.f32.mrb[0].mxu0
  %v3802 = vadd.f32 %v3481, %v3801
  %v3803 = vpop.f32.mrb[0].mxu0
  %v3804 = vpop.f32.mrb[0].mxu0
  %v3805 = vadd.f32 %v3481, %v3804
  %v3806 = vpop.f32.mrb[0].mxu0
  %3807 = vmatprep.mubr.bf16.mxu0 0
  %3808 = vmatmul.mubr.bf16.gmra.mrb[0].mxu0 %v3566
  %v3809 = vpop.f32.mrb[0].mxu0
  %v3810 = vadd.f32 %v3481, %v3809
  %v3811 = vpop.f32.mrb[0].mxu0
  %v3812 = vpop.f32.mrb[0].mxu0
  %v3813 = vadd.f32 %v3481, %v3812
  %v3814 = vpop.f32.mrb[0].mxu0
  %3815 = vmatprep.mubr.bf16.mxu0 0
  %3816 = vmatmul.mubr.bf16.gmra.mrb[0].mxu0 %v3569
  %v3817 = vpop.f32.mrb[0].mxu0
  %v3818 = vadd.f32 %v3481, %v3817
  %v3819 = vpop.f32.mrb[0].mxu0
  %v3820 = vpop.f32.mrb[0].mxu0
  %v3821 = vadd.f32 %v3481, %v3820
  %v3822 = vpop.f32.mrb[0].mxu0
  %3823 = vmatprep.mubr.bf16.mxu0 0
  %3824 = vmatmul.mubr.bf16.gmra.mrb[0].mxu0 %v3572
  %v3825 = vpop.f32.mrb[0].mxu0
  %v3826 = vadd.f32 %v3481, %v3825
  %v3827 = vpop.f32.mrb[0].mxu0
  %v3828 = vpop.f32.mrb[0].mxu0
  %v3829 = vadd.f32 %v3481, %v3828
  %v3830 = vpop.f32.mrb[0].mxu0
  %3831 = vmatprep.mubr.bf16.mxu0 0
  %3832 = vmatmul.mubr.bf16.gmra.mrb[0].mxu0 %v3575
  %v3833 = vpop.f32.mrb[0].mxu0
  %v3834 = vadd.f32 %v3481, %v3833
  %v3835 = vpop.f32.mrb[0].mxu0
  %v3836 = vpop.f32.mrb[0].mxu0
  %v3837 = vadd.f32 %v3481, %v3836
  %v3838 = vpop.f32.mrb[0].mxu0
  %3839 = vmatprep.mubr.bf16.mxu0 0
  %3840 = vmatmul.mubr.bf16.gmra.mrb[0].mxu0 %v3578
  %v3841 = vpop.f32.mrb[0].mxu0
  %v3842 = vadd.f32 %v3481, %v3841
  %v3843 = vpop.f32.mrb[0].mxu0
  %v3844 = vpop.f32.mrb[0].mxu0
  %v3845 = vadd.f32 %v3481, %v3844
  %v3846 = vpop.f32.mrb[0].mxu0
  %3847 = vmatprep.mubr.bf16.mxu0 0
  %3848 = vmatmul.mubr.bf16.gmra.mrb[0].mxu0 %v3581
  %v3849 = vpop.f32.mrb[0].mxu0
  %v3850 = vadd.f32 %v3481, %v3849
  %v3851 = vpop.f32.mrb[0].mxu0
  %v3852 = vpop.f32.mrb[0].mxu0
  %v3853 = vadd.f32 %v3481, %v3852
  %v3854 = vpop.f32.mrb[0].mxu0
  %3855 = vmatprep.mubr.bf16.mxu0 0
  %3856 = vmatmul.mubr.bf16.gmra.mrb[0].mxu0 %v3584
  %v3857 = vpop.f32.mrb[0].mxu0
  %v3858 = vadd.f32 %v3481, %v3857
  %v3859 = vpop.f32.mrb[0].mxu0
  %v3860 = vpop.f32.mrb[0].mxu0
  %v3861 = vadd.f32 %v3481, %v3860
  %v3862 = vpop.f32.mrb[0].mxu0
  %3863 = vmatprep.mubr.bf16.mxu0 0
  %3864 = vmatmul.mubr.bf16.gmra.mrb[0].mxu0 %v3587
  %v3865 = vpop.f32.mrb[0].mxu0
  %v3866 = vadd.f32 %v3481, %v3865
  %v3867 = vpop.f32.mrb[0].mxu0
  %v3868 = vpop.f32.mrb[0].mxu0
  %v3869 = vadd.f32 %v3481, %v3868
  %v3870 = vpop.f32.mrb[0].mxu0
  %3871 = vmatprep.mubr.bf16.mxu0 0
  %3872 = vmatmul.mubr.bf16.gmra.mrb[0].mxu0 %v3590
  %v3873 = vpop.f32.mrb[0].mxu0
  %v3874 = vadd.f32 %v3481, %v3873
  %v3875 = vpop.f32.mrb[0].mxu0
  %v3876 = vpop.f32.mrb[0].mxu0
  %v3877 = vadd.f32 %v3481, %v3876
  %v3878 = vpop.f32.mrb[0].mxu0
  %3879 = vmatprep.mubr.bf16.mxu0 0
  %3880 = vmatmul.mubr.bf16.gmra.mrb[0].mxu0 %v3593
  %v3881 = vpop.f32.mrb[0].mxu0
  %v3882 = vadd.f32 %v3481, %v3881
  %v3883 = vpop.f32.mrb[0].mxu0
  %v3884 = vpop.f32.mrb[0].mxu0
  %v3885 = vadd.f32 %v3481, %v3884
  %v3886 = vpop.f32.mrb[0].mxu0
  %3887 = vdwg.mxu0
  %v3888 = vxor.u32 %v3634, 2147483648
  %v3889 = vxor.u32 %v3637, 2147483648
  %v3890 = vxor.u32 %v3642, 2147483648
  %v3891 = vxor.u32 %v3645, 2147483648
  %v3892 = vxor.u32 %v3650, 2147483648
  %v3893 = vxor.u32 %v3653, 2147483648
  %v3894 = vxor.u32 %v3658, 2147483648
  %v3895 = vxor.u32 %v3661, 2147483648
  %v3896 = vxor.u32 %v3666, 2147483648
  %v3897 = vxor.u32 %v3669, 2147483648
  %v3898 = vxor.u32 %v3674, 2147483648
  %v3899 = vxor.u32 %v3677, 2147483648
  %v3900 = vxor.u32 %v3682, 2147483648
  %v3901 = vxor.u32 %v3685, 2147483648
  %v3902 = vxor.u32 %v3690, 2147483648
  %v3903 = vxor.u32 %v3693, 2147483648
  %v3904 = vxor.u32 %v3698, 2147483648
  %v3905 = vxor.u32 %v3701, 2147483648
  %v3906 = vxor.u32 %v3706, 2147483648
  %v3907 = vxor.u32 %v3709, 2147483648
  %v3908 = vxor.u32 %v3714, 2147483648
  %v3909 = vxor.u32 %v3717, 2147483648
  %v3910 = vxor.u32 %v3722, 2147483648
  %v3911 = vxor.u32 %v3725, 2147483648
  %v3912 = vxor.u32 %v3730, 2147483648
  %v3913 = vxor.u32 %v3733, 2147483648
  %v3914 = vxor.u32 %v3738, 2147483648
  %v3915 = vxor.u32 %v3741, 2147483648
  %v3916 = vxor.u32 %v3746, 2147483648
  %v3917 = vxor.u32 %v3749, 2147483648
  %v3918 = vxor.u32 %v3754, 2147483648
  %v3919 = vxor.u32 %v3757, 2147483648
  %v3920 = vxor.u32 %v3762, 2147483648
  %v3921 = vxor.u32 %v3765, 2147483648
  %v3922 = vxor.u32 %v3770, 2147483648
  %v3923 = vxor.u32 %v3773, 2147483648
  %v3924 = vxor.u32 %v3778, 2147483648
  %v3925 = vxor.u32 %v3781, 2147483648
  %v3926 = vxor.u32 %v3786, 2147483648
  %v3927 = vxor.u32 %v3789, 2147483648
  %v3928 = vxor.u32 %v3794, 2147483648
  %v3929 = vxor.u32 %v3797, 2147483648
  %v3930 = vxor.u32 %v3802, 2147483648
  %v3931 = vxor.u32 %v3805, 2147483648
  %v3932 = vxor.u32 %v3810, 2147483648
  %v3933 = vxor.u32 %v3813, 2147483648
  %v3934 = vxor.u32 %v3818, 2147483648
  %v3935 = vxor.u32 %v3821, 2147483648
  %v3936 = vxor.u32 %v3826, 2147483648
  %v3937 = vxor.u32 %v3829, 2147483648
  %v3938 = vxor.u32 %v3834, 2147483648
  %v3939 = vxor.u32 %v3837, 2147483648
  %v3940 = vxor.u32 %v3842, 2147483648
  %v3941 = vxor.u32 %v3845, 2147483648
  %v3942 = vxor.u32 %v3850, 2147483648
  %v3943 = vxor.u32 %v3853, 2147483648
  %v3944 = vxor.u32 %v3858, 2147483648
  %v3945 = vxor.u32 %v3861, 2147483648
  %v3946 = vxor.u32 %v3866, 2147483648
  %v3947 = vxor.u32 %v3869, 2147483648
  %v3948 = vxor.u32 %v3874, 2147483648
  %v3949 = vxor.u32 %v3877, 2147483648
  %v3950 = vxor.u32 %v3882, 2147483648
  %v3951 = vxor.u32 %v3885, 2147483648
  %v3952 = vmul.f32 %v3888, 1.442695
  %v3953 = vpow.pop %v3952
  %v3954 = vmul.f32 %v3889, 1.442695
  %v3955 = vpow.pop %v3954
  %v3956 = vmul.f32 %v3890, 1.442695
  %v3957 = vpow.pop %v3956
  %v3958 = vmul.f32 %v3891, 1.442695
  %v3959 = vpow.pop %v3958
  %v3960 = vmul.f32 %v3892, 1.442695
  %v3961 = vpow.pop %v3960
  %v3962 = vmul.f32 %v3893, 1.442695
  %v3963 = vpow.pop %v3962
  %v3964 = vmul.f32 %v3894, 1.442695
  %v3965 = vpow.pop %v3964
  %v3966 = vmul.f32 %v3895, 1.442695
  %v3967 = vpow.pop %v3966
  %v3968 = vmul.f32 %v3896, 1.442695
  %v3969 = vpow.pop %v3968
  %v3970 = vmul.f32 %v3897, 1.442695
  %v3971 = vpow.pop %v3970
  %v3972 = vmul.f32 %v3898, 1.442695
  %v3973 = vpow.pop %v3972
  %v3974 = vmul.f32 %v3899, 1.442695
  %v3975 = vpow.pop %v3974
  %v3976 = vmul.f32 %v3900, 1.442695
  %v3977 = vpow.pop %v3976
  %v3978 = vmul.f32 %v3901, 1.442695
  %v3979 = vpow.pop %v3978
  %v3980 = vmul.f32 %v3902, 1.442695
  %v3981 = vpow.pop %v3980
  %v3982 = vmul.f32 %v3903, 1.442695
  %v3983 = vpow.pop %v3982
  %v3984 = vmul.f32 %v3904, 1.442695
  %v3985 = vpow.pop %v3984
  %v3986 = vmul.f32 %v3905, 1.442695
  %v3987 = vpow.pop %v3986
  %v3988 = vmul.f32 %v3906, 1.442695
  %v3989 = vpow.pop %v3988
  %v3990 = vmul.f32 %v3907, 1.442695
  %v3991 = vpow.pop %v3990
  %v3992 = vmul.f32 %v3908, 1.442695
  %v3993 = vpow.pop %v3992
  %v3994 = vmul.f32 %v3909, 1.442695
  %v3995 = vpow.pop %v3994
  %v3996 = vmul.f32 %v3910, 1.442695
  %v3997 = vpow.pop %v3996
  %v3998 = vmul.f32 %v3911, 1.442695
  %v3999 = vpow.pop %v3998
  %v4000 = vmul.f32 %v3912, 1.442695
  %v4001 = vpow.pop %v4000
  %v4002 = vmul.f32 %v3913, 1.442695
  %v4003 = vpow.pop %v4002
  %v4004 = vmul.f32 %v3914, 1.442695
  %v4005 = vpow.pop %v4004
  %v4006 = vmul.f32 %v3915, 1.442695
  %v4007 = vpow.pop %v4006
  %v4008 = vmul.f32 %v3916, 1.442695
  %v4009 = vpow.pop %v4008
  %v4010 = vmul.f32 %v3917, 1.442695
  %v4011 = vpow.pop %v4010
  %v4012 = vmul.f32 %v3918, 1.442695
  %v4013 = vpow.pop %v4012
  %v4014 = vmul.f32 %v3919, 1.442695
  %v4015 = vpow.pop %v4014
  %v4016 = vmul.f32 %v3920, 1.442695
  %v4017 = vpow.pop %v4016
  %v4018 = vmul.f32 %v3921, 1.442695
  %v4019 = vpow.pop %v4018
  %v4020 = vmul.f32 %v3922, 1.442695
  %v4021 = vpow.pop %v4020
  %v4022 = vmul.f32 %v3923, 1.442695
  %v4023 = vpow.pop %v4022
  %v4024 = vmul.f32 %v3924, 1.442695
  %v4025 = vpow.pop %v4024
  %v4026 = vmul.f32 %v3925, 1.442695
  %v4027 = vpow.pop %v4026
  %v4028 = vmul.f32 %v3926, 1.442695
  %v4029 = vpow.pop %v4028
  %v4030 = vmul.f32 %v3927, 1.442695
  %v4031 = vpow.pop %v4030
  %v4032 = vmul.f32 %v3928, 1.442695
  %v4033 = vpow.pop %v4032
  %v4034 = vmul.f32 %v3929, 1.442695
  %v4035 = vpow.pop %v4034
  %v4036 = vmul.f32 %v3930, 1.442695
  %v4037 = vpow.pop %v4036
  %v4038 = vmul.f32 %v3931, 1.442695
  %v4039 = vpow.pop %v4038
  %v4040 = vmul.f32 %v3932, 1.442695
  %v4041 = vpow.pop %v4040
  %v4042 = vmul.f32 %v3933, 1.442695
  %v4043 = vpow.pop %v4042
  %v4044 = vmul.f32 %v3934, 1.442695
  %v4045 = vpow.pop %v4044
  %v4046 = vmul.f32 %v3935, 1.442695
  %v4047 = vpow.pop %v4046
  %v4048 = vmul.f32 %v3936, 1.442695
  %v4049 = vpow.pop %v4048
  %v4050 = vmul.f32 %v3937, 1.442695
  %v4051 = vpow.pop %v4050
  %v4052 = vmul.f32 %v3938, 1.442695
  %v4053 = vpow.pop %v4052
  %v4054 = vmul.f32 %v3939, 1.442695
  %v4055 = vpow.pop %v4054
  %v4056 = vmul.f32 %v3940, 1.442695
  %v4057 = vpow.pop %v4056
  %v4058 = vmul.f32 %v3941, 1.442695
  %v4059 = vpow.pop %v4058
  %v4060 = vmul.f32 %v3942, 1.442695
  %v4061 = vpow.pop %v4060
  %v4062 = vmul.f32 %v3943, 1.442695
  %v4063 = vpow.pop %v4062
  %v4064 = vmul.f32 %v3944, 1.442695
  %v4065 = vpow.pop %v4064
  %v4066 = vmul.f32 %v3945, 1.442695
  %v4067 = vpow.pop %v4066
  %v4068 = vmul.f32 %v3946, 1.442695
  %v4069 = vpow.pop %v4068
  %v4070 = vmul.f32 %v3947, 1.442695
  %v4071 = vpow.pop %v4070
  %v4072 = vmul.f32 %v3948, 1.442695
  %v4073 = vpow.pop %v4072
  %v4074 = vmul.f32 %v3949, 1.442695
  %v4075 = vpow.pop %v4074
  %v4076 = vmul.f32 %v3950, 1.442695
  %v4077 = vpow.pop %v4076
  %v4078 = vmul.f32 %v3951, 1.442695
  %v4079 = vpow.pop %v4078
  %v4080 = vadd.f32 %v3953, 1.0
  %v4081 = vadd.f32 %v3955, 1.0
  %v4082 = vadd.f32 %v3957, 1.0
  %v4083 = vadd.f32 %v3959, 1.0
  %v4084 = vadd.f32 %v3961, 1.0
  %v4085 = vadd.f32 %v3963, 1.0
  %v4086 = vadd.f32 %v3965, 1.0
  %v4087 = vadd.f32 %v3967, 1.0
  %v4088 = vadd.f32 %v3969, 1.0
  %v4089 = vadd.f32 %v3971, 1.0
  %v4090 = vadd.f32 %v3973, 1.0
  %v4091 = vadd.f32 %v3975, 1.0
  %v4092 = vadd.f32 %v3977, 1.0
  %v4093 = vadd.f32 %v3979, 1.0
  %v4094 = vadd.f32 %v3981, 1.0
  %v4095 = vadd.f32 %v3983, 1.0
  %v4096 = vadd.f32 %v3985, 1.0
  %v4097 = vadd.f32 %v3987, 1.0
  %v4098 = vadd.f32 %v3989, 1.0
  %v4099 = vadd.f32 %v3991, 1.0
  %v4100 = vadd.f32 %v3993, 1.0
  %v4101 = vadd.f32 %v3995, 1.0
  %v4102 = vadd.f32 %v3997, 1.0
  %v4103 = vadd.f32 %v3999, 1.0
  %v4104 = vadd.f32 %v4001, 1.0
  %v4105 = vadd.f32 %v4003, 1.0
  %v4106 = vadd.f32 %v4005, 1.0
  %v4107 = vadd.f32 %v4007, 1.0
  %v4108 = vadd.f32 %v4009, 1.0
  %v4109 = vadd.f32 %v4011, 1.0
  %v4110 = vadd.f32 %v4013, 1.0
  %v4111 = vadd.f32 %v4015, 1.0
  %v4112 = vadd.f32 %v4017, 1.0
  %v4113 = vadd.f32 %v4019, 1.0
  %v4114 = vadd.f32 %v4021, 1.0
  %v4115 = vadd.f32 %v4023, 1.0
  %v4116 = vadd.f32 %v4025, 1.0
  %v4117 = vadd.f32 %v4027, 1.0
  %v4118 = vadd.f32 %v4029, 1.0
  %v4119 = vadd.f32 %v4031, 1.0
  %v4120 = vadd.f32 %v4033, 1.0
  %v4121 = vadd.f32 %v4035, 1.0
  %v4122 = vadd.f32 %v4037, 1.0
  %v4123 = vadd.f32 %v4039, 1.0
  %v4124 = vadd.f32 %v4041, 1.0
  %v4125 = vadd.f32 %v4043, 1.0
  %v4126 = vadd.f32 %v4045, 1.0
  %v4127 = vadd.f32 %v4047, 1.0
  %v4128 = vadd.f32 %v4049, 1.0
  %v4129 = vadd.f32 %v4051, 1.0
  %v4130 = vadd.f32 %v4053, 1.0
  %v4131 = vadd.f32 %v4055, 1.0
  %v4132 = vadd.f32 %v4057, 1.0
  %v4133 = vadd.f32 %v4059, 1.0
  %v4134 = vadd.f32 %v4061, 1.0
  %v4135 = vadd.f32 %v4063, 1.0
  %v4136 = vadd.f32 %v4065, 1.0
  %v4137 = vadd.f32 %v4067, 1.0
  %v4138 = vadd.f32 %v4069, 1.0
  %v4139 = vadd.f32 %v4071, 1.0
  %v4140 = vadd.f32 %v4073, 1.0
  %v4141 = vadd.f32 %v4075, 1.0
  %v4142 = vadd.f32 %v4077, 1.0
  %v4143 = vadd.f32 %v4079, 1.0
  %v4144 = vrcp.pop %v4080
  %v4145 = vmul.f32 1.0, %v4144
  %v4146 = vrcp.pop %v4081
  %v4147 = vmul.f32 1.0, %v4146
  %v4148 = vrcp.pop %v4082
  %v4149 = vmul.f32 1.0, %v4148
  %v4150 = vrcp.pop %v4083
  %v4151 = vmul.f32 1.0, %v4150
  %v4152 = vrcp.pop %v4084
  %v4153 = vmul.f32 1.0, %v4152
  %v4154 = vrcp.pop %v4085
  %v4155 = vmul.f32 1.0, %v4154
  %v4156 = vrcp.pop %v4086
  %v4157 = vmul.f32 1.0, %v4156
  %v4158 = vrcp.pop %v4087
  %v4159 = vmul.f32 1.0, %v4158
  %v4160 = vrcp.pop %v4088
  %v4161 = vmul.f32 1.0, %v4160
  %v4162 = vrcp.pop %v4089
  %v4163 = vmul.f32 1.0, %v4162
  %v4164 = vrcp.pop %v4090
  %v4165 = vmul.f32 1.0, %v4164
  %v4166 = vrcp.pop %v4091
  %v4167 = vmul.f32 1.0, %v4166
  %v4168 = vrcp.pop %v4092
  %v4169 = vmul.f32 1.0, %v4168
  %v4170 = vrcp.pop %v4093
  %v4171 = vmul.f32 1.0, %v4170
  %v4172 = vrcp.pop %v4094
  %v4173 = vmul.f32 1.0, %v4172
  %v4174 = vrcp.pop %v4095
  %v4175 = vmul.f32 1.0, %v4174
  %v4176 = vrcp.pop %v4096
  %v4177 = vmul.f32 1.0, %v4176
  %v4178 = vrcp.pop %v4097
  %v4179 = vmul.f32 1.0, %v4178
  %v4180 = vrcp.pop %v4098
  %v4181 = vmul.f32 1.0, %v4180
  %v4182 = vrcp.pop %v4099
  %v4183 = vmul.f32 1.0, %v4182
  %v4184 = vrcp.pop %v4100
  %v4185 = vmul.f32 1.0, %v4184
  %v4186 = vrcp.pop %v4101
  %v4187 = vmul.f32 1.0, %v4186
  %v4188 = vrcp.pop %v4102
  %v4189 = vmul.f32 1.0, %v4188
  %v4190 = vrcp.pop %v4103
  %v4191 = vmul.f32 1.0, %v4190
  %v4192 = vrcp.pop %v4104
  %v4193 = vmul.f32 1.0, %v4192
  %v4194 = vrcp.pop %v4105
  %v4195 = vmul.f32 1.0, %v4194
  %v4196 = vrcp.pop %v4106
  %v4197 = vmul.f32 1.0, %v4196
  %v4198 = vrcp.pop %v4107
  %v4199 = vmul.f32 1.0, %v4198
  %v4200 = vrcp.pop %v4108
  %v4201 = vmul.f32 1.0, %v4200
  %v4202 = vrcp.pop %v4109
  %v4203 = vmul.f32 1.0, %v4202
  %v4204 = vrcp.pop %v4110
  %v4205 = vmul.f32 1.0, %v4204
  %v4206 = vrcp.pop %v4111
  %v4207 = vmul.f32 1.0, %v4206
  %v4208 = vrcp.pop %v4112
  %v4209 = vmul.f32 1.0, %v4208
  %v4210 = vrcp.pop %v4113
  %v4211 = vmul.f32 1.0, %v4210
  %v4212 = vrcp.pop %v4114
  %v4213 = vmul.f32 1.0, %v4212
  %v4214 = vrcp.pop %v4115
  %v4215 = vmul.f32 1.0, %v4214
  %v4216 = vrcp.pop %v4116
  %v4217 = vmul.f32 1.0, %v4216
  %v4218 = vrcp.pop %v4117
  %v4219 = vmul.f32 1.0, %v4218
  %v4220 = vrcp.pop %v4118
  %v4221 = vmul.f32 1.0, %v4220
  %v4222 = vrcp.pop %v4119
  %v4223 = vmul.f32 1.0, %v4222
  %v4224 = vrcp.pop %v4120
  %v4225 = vmul.f32 1.0, %v4224
  %v4226 = vrcp.pop %v4121
  %v4227 = vmul.f32 1.0, %v4226
  %v4228 = vrcp.pop %v4122
  %v4229 = vmul.f32 1.0, %v4228
  %v4230 = vrcp.pop %v4123
  %v4231 = vmul.f32 1.0, %v4230
  %v4232 = vrcp.pop %v4124
  %v4233 = vmul.f32 1.0, %v4232
  %v4234 = vrcp.pop %v4125
  %v4235 = vmul.f32 1.0, %v4234
  %v4236 = vrcp.pop %v4126
  %v4237 = vmul.f32 1.0, %v4236
  %v4238 = vrcp.pop %v4127
  %v4239 = vmul.f32 1.0, %v4238
  %v4240 = vrcp.pop %v4128
  %v4241 = vmul.f32 1.0, %v4240
  %v4242 = vrcp.pop %v4129
  %v4243 = vmul.f32 1.0, %v4242
  %v4244 = vrcp.pop %v4130
  %v4245 = vmul.f32 1.0, %v4244
  %v4246 = vrcp.pop %v4131
  %v4247 = vmul.f32 1.0, %v4246
  %v4248 = vrcp.pop %v4132
  %v4249 = vmul.f32 1.0, %v4248
  %v4250 = vrcp.pop %v4133
  %v4251 = vmul.f32 1.0, %v4250
  %v4252 = vrcp.pop %v4134
  %v4253 = vmul.f32 1.0, %v4252
  %v4254 = vrcp.pop %v4135
  %v4255 = vmul.f32 1.0, %v4254
  %v4256 = vrcp.pop %v4136
  %v4257 = vmul.f32 1.0, %v4256
  %v4258 = vrcp.pop %v4137
  %v4259 = vmul.f32 1.0, %v4258
  %v4260 = vrcp.pop %v4138
  %v4261 = vmul.f32 1.0, %v4260
  %v4262 = vrcp.pop %v4139
  %v4263 = vmul.f32 1.0, %v4262
  %v4264 = vrcp.pop %v4140
  %v4265 = vmul.f32 1.0, %v4264
  %v4266 = vrcp.pop %v4141
  %v4267 = vmul.f32 1.0, %v4266
  %v4268 = vrcp.pop %v4142
  %v4269 = vmul.f32 1.0, %v4268
  %v4270 = vrcp.pop %v4143
  %v4271 = vmul.f32 1.0, %v4270
  %v4272 = vmul.f32 %v3634, %v4145
  %v4273 = vmul.f32 %v3637, %v4147
  %v4274 = vmul.f32 %v3642, %v4149
  %v4275 = vmul.f32 %v3645, %v4151
  %v4276 = vmul.f32 %v3650, %v4153
  %v4277 = vmul.f32 %v3653, %v4155
  %v4278 = vmul.f32 %v3658, %v4157
  %v4279 = vmul.f32 %v3661, %v4159
  %v4280 = vmul.f32 %v3666, %v4161
  %v4281 = vmul.f32 %v3669, %v4163
  %v4282 = vmul.f32 %v3674, %v4165
  %v4283 = vmul.f32 %v3677, %v4167
  %v4284 = vmul.f32 %v3682, %v4169
  %v4285 = vmul.f32 %v3685, %v4171
  %v4286 = vmul.f32 %v3690, %v4173
  %v4287 = vmul.f32 %v3693, %v4175
  %v4288 = vmul.f32 %v3698, %v4177
  %v4289 = vmul.f32 %v3701, %v4179
  %v4290 = vmul.f32 %v3706, %v4181
  %v4291 = vmul.f32 %v3709, %v4183
  %v4292 = vmul.f32 %v3714, %v4185
  %v4293 = vmul.f32 %v3717, %v4187
  %v4294 = vmul.f32 %v3722, %v4189
  %v4295 = vmul.f32 %v3725, %v4191
  %v4296 = vmul.f32 %v3730, %v4193
  %v4297 = vmul.f32 %v3733, %v4195
  %v4298 = vmul.f32 %v3738, %v4197
  %v4299 = vmul.f32 %v3741, %v4199
  %v4300 = vmul.f32 %v3746, %v4201
  %v4301 = vmul.f32 %v3749, %v4203
  %v4302 = vmul.f32 %v3754, %v4205
  %v4303 = vmul.f32 %v3757, %v4207
  %v4304 = vmul.f32 %v3762, %v4209
  %v4305 = vmul.f32 %v3765, %v4211
  %v4306 = vmul.f32 %v3770, %v4213
  %v4307 = vmul.f32 %v3773, %v4215
  %v4308 = vmul.f32 %v3778, %v4217
  %v4309 = vmul.f32 %v3781, %v4219
  %v4310 = vmul.f32 %v3786, %v4221
  %v4311 = vmul.f32 %v3789, %v4223
  %v4312 = vmul.f32 %v3794, %v4225
  %v4313 = vmul.f32 %v3797, %v4227
  %v4314 = vmul.f32 %v3802, %v4229
  %v4315 = vmul.f32 %v3805, %v4231
  %v4316 = vmul.f32 %v3810, %v4233
  %v4317 = vmul.f32 %v3813, %v4235
  %v4318 = vmul.f32 %v3818, %v4237
  %v4319 = vmul.f32 %v3821, %v4239
  %v4320 = vmul.f32 %v3826, %v4241
  %v4321 = vmul.f32 %v3829, %v4243
  %v4322 = vmul.f32 %v3834, %v4245
  %v4323 = vmul.f32 %v3837, %v4247
  %v4324 = vmul.f32 %v3842, %v4249
  %v4325 = vmul.f32 %v3845, %v4251
  %v4326 = vmul.f32 %v3850, %v4253
  %v4327 = vmul.f32 %v3853, %v4255
  %v4328 = vmul.f32 %v3858, %v4257
  %v4329 = vmul.f32 %v3861, %v4259
  %v4330 = vmul.f32 %v3866, %v4261
  %v4331 = vmul.f32 %v3869, %v4263
  %v4332 = vmul.f32 %v3874, %v4265
  %v4333 = vmul.f32 %v3877, %v4267
  %v4334 = vmul.f32 %v3882, %v4269
  %v4335 = vmul.f32 %v3885, %v4271
  %4336 = vst.msk [vmem:[#allocation3] sm:$0xff] %vm3114, 0.0
  %4337 = vst.msk [vmem:[#allocation3 + $0x8] sm:$0xff] %vm3114, 0.0
  %4338 = vst.msk [vmem:[#allocation3 + $0x10] sm:$0xff] %vm3114, 0.0
  %4339 = vst.msk [vmem:[#allocation3 + $0x18] sm:$0xff] %vm3114, 0.0
  %4340 = vst.msk [vmem:[#allocation3 + $0x20] sm:$0xff] %vm3114, 0.0
  %4341 = vst.msk [vmem:[#allocation3 + $0x28] sm:$0xff] %vm3114, 0.0
  %4342 = vst.msk [vmem:[#allocation3 + $0x30] sm:$0xff] %vm3114, 0.0
  %4343 = vst.msk [vmem:[#allocation3 + $0x38] sm:$0xff] %vm3114, 0.0
  %4344 = vst.msk [vmem:[#allocation3 + $0x40] sm:$0xff] %vm3114, 0.0
  %4345 = vst.msk [vmem:[#allocation3 + $0x48] sm:$0xff] %vm3114, 0.0
  %4346 = vst.msk [vmem:[#allocation3 + $0x50] sm:$0xff] %vm3114, 0.0
  %4347 = vst.msk [vmem:[#allocation3 + $0x58] sm:$0xff] %vm3114, 0.0
  %4348 = vst.msk [vmem:[#allocation3 + $0x60] sm:$0xff] %vm3114, 0.0
  %4349 = vst.msk [vmem:[#allocation3 + $0x68] sm:$0xff] %vm3114, 0.0
  %4350 = vst.msk [vmem:[#allocation3 + $0x70] sm:$0xff] %vm3114, 0.0
  %4351 = vst.msk [vmem:[#allocation3 + $0x78] sm:$0xff] %vm3114, 0.0
  %4352 = vst.msk [vmem:[#allocation3 + $0x80] sm:$0xff] %vm3114, 0.0
  %4353 = vst.msk [vmem:[#allocation3 + $0x88] sm:$0xff] %vm3114, 0.0
  %4354 = vst.msk [vmem:[#allocation3 + $0x90] sm:$0xff] %vm3114, 0.0
  %4355 = vst.msk [vmem:[#allocation3 + $0x98] sm:$0xff] %vm3114, 0.0
  %4356 = vst.msk [vmem:[#allocation3 + $0xa0] sm:$0xff] %vm3114, 0.0
  %4357 = vst.msk [vmem:[#allocation3 + $0xa8] sm:$0xff] %vm3114, 0.0
  %4358 = vst.msk [vmem:[#allocation3 + $0xb0] sm:$0xff] %vm3114, 0.0
  %4359 = vst.msk [vmem:[#allocation3 + $0xb8] sm:$0xff] %vm3114, 0.0
  %4360 = vst.msk [vmem:[#allocation3 + $0xc0] sm:$0xff] %vm3114, 0.0
  %4361 = vst.msk [vmem:[#allocation3 + $0xc8] sm:$0xff] %vm3114, 0.0
  %4362 = vst.msk [vmem:[#allocation3 + $0xd0] sm:$0xff] %vm3114, 0.0
  %4363 = vst.msk [vmem:[#allocation3 + $0xd8] sm:$0xff] %vm3114, 0.0
  %4364 = vst.msk [vmem:[#allocation3 + $0xe0] sm:$0xff] %vm3114, 0.0
  %4365 = vst.msk [vmem:[#allocation3 + $0xe8] sm:$0xff] %vm3114, 0.0
  %4366 = vst.msk [vmem:[#allocation3 + $0xf0] sm:$0xff] %vm3114, 0.0
  %4367 = vst.msk [vmem:[#allocation3 + $0xf8] sm:$0xff] %vm3114, 0.0
  %4368 = vst.msk [vmem:[#allocation3 + $0x100] sm:$0xff] %vm3114, 0.0
  %4369 = vst.msk [vmem:[#allocation3 + $0x108] sm:$0xff] %vm3114, 0.0
  %4370 = vst.msk [vmem:[#allocation3 + $0x110] sm:$0xff] %vm3114, 0.0
  %4371 = vst.msk [vmem:[#allocation3 + $0x118] sm:$0xff] %vm3114, 0.0
  %4372 = vst.msk [vmem:[#allocation3 + $0x120] sm:$0xff] %vm3114, 0.0
  %4373 = vst.msk [vmem:[#allocation3 + $0x128] sm:$0xff] %vm3114, 0.0
  %4374 = vst.msk [vmem:[#allocation3 + $0x130] sm:$0xff] %vm3114, 0.0
  %4375 = vst.msk [vmem:[#allocation3 + $0x138] sm:$0xff] %vm3114, 0.0
  %4376 = vst.msk [vmem:[#allocation3 + $0x140] sm:$0xff] %vm3114, 0.0
  %4377 = vst.msk [vmem:[#allocation3 + $0x148] sm:$0xff] %vm3114, 0.0
  %4378 = vst.msk [vmem:[#allocation3 + $0x150] sm:$0xff] %vm3114, 0.0
  %4379 = vst.msk [vmem:[#allocation3 + $0x158] sm:$0xff] %vm3114, 0.0
  %4380 = vst.msk [vmem:[#allocation3 + $0x160] sm:$0xff] %vm3114, 0.0
  %4381 = vst.msk [vmem:[#allocation3 + $0x168] sm:$0xff] %vm3114, 0.0
  %4382 = vst.msk [vmem:[#allocation3 + $0x170] sm:$0xff] %vm3114, 0.0
  %4383 = vst.msk [vmem:[#allocation3 + $0x178] sm:$0xff] %vm3114, 0.0
  %4384 = vst.msk [vmem:[#allocation3 + $0x180] sm:$0xff] %vm3114, 0.0
  %4385 = vst.msk [vmem:[#allocation3 + $0x188] sm:$0xff] %vm3114, 0.0
  %4386 = vst.msk [vmem:[#allocation3 + $0x190] sm:$0xff] %vm3114, 0.0
  %4387 = vst.msk [vmem:[#allocation3 + $0x198] sm:$0xff] %vm3114, 0.0
  %4388 = vst.msk [vmem:[#allocation3 + $0x1a0] sm:$0xff] %vm3114, 0.0
  %4389 = vst.msk [vmem:[#allocation3 + $0x1a8] sm:$0xff] %vm3114, 0.0
  %4390 = vst.msk [vmem:[#allocation3 + $0x1b0] sm:$0xff] %vm3114, 0.0
  %4391 = vst.msk [vmem:[#allocation3 + $0x1b8] sm:$0xff] %vm3114, 0.0
  %4392 = vst.msk [vmem:[#allocation3 + $0x1c0] sm:$0xff] %vm3114, 0.0
  %4393 = vst.msk [vmem:[#allocation3 + $0x1c8] sm:$0xff] %vm3114, 0.0
  %4394 = vst.msk [vmem:[#allocation3 + $0x1d0] sm:$0xff] %vm3114, 0.0
  %4395 = vst.msk [vmem:[#allocation3 + $0x1d8] sm:$0xff] %vm3114, 0.0
  %4396 = vst.msk [vmem:[#allocation3 + $0x1e0] sm:$0xff] %vm3114, 0.0
  %4397 = vst.msk [vmem:[#allocation3 + $0x1e8] sm:$0xff] %vm3114, 0.0
  %4398 = vst.msk [vmem:[#allocation3 + $0x1f0] sm:$0xff] %vm3114, 0.0
  %4399 = vst.msk [vmem:[#allocation3 + $0x1f8] sm:$0xff] %vm3114, 0.0
  %4400 = vst.msk [vmem:[#allocation3 + $0x200] sm:$0xff] %vm3114, 0.0
  %4401 = vst.msk [vmem:[#allocation3 + $0x208] sm:$0xff] %vm3114, 0.0
  %4402 = vst.msk [vmem:[#allocation3 + $0x210] sm:$0xff] %vm3114, 0.0
  %4403 = vst.msk [vmem:[#allocation3 + $0x218] sm:$0xff] %vm3114, 0.0
  %4404 = vst.msk [vmem:[#allocation3 + $0x220] sm:$0xff] %vm3114, 0.0
  %4405 = vst.msk [vmem:[#allocation3 + $0x228] sm:$0xff] %vm3114, 0.0
  %4406 = vst.msk [vmem:[#allocation3 + $0x230] sm:$0xff] %vm3114, 0.0
  %4407 = vst.msk [vmem:[#allocation3 + $0x238] sm:$0xff] %vm3114, 0.0
  %4408 = vst.msk [vmem:[#allocation3 + $0x240] sm:$0xff] %vm3114, 0.0
  %4409 = vst.msk [vmem:[#allocation3 + $0x248] sm:$0xff] %vm3114, 0.0
  %4410 = vst.msk [vmem:[#allocation3 + $0x250] sm:$0xff] %vm3114, 0.0
  %4411 = vst.msk [vmem:[#allocation3 + $0x258] sm:$0xff] %vm3114, 0.0
  %4412 = vst.msk [vmem:[#allocation3 + $0x260] sm:$0xff] %vm3114, 0.0
  %4413 = vst.msk [vmem:[#allocation3 + $0x268] sm:$0xff] %vm3114, 0.0
  %4414 = vst.msk [vmem:[#allocation3 + $0x270] sm:$0xff] %vm3114, 0.0
  %4415 = vst.msk [vmem:[#allocation3 + $0x278] sm:$0xff] %vm3114, 0.0
  %4416 = vst.msk [vmem:[#allocation3 + $0x280] sm:$0xff] %vm3114, 0.0
  %4417 = vst.msk [vmem:[#allocation3 + $0x288] sm:$0xff] %vm3114, 0.0
  %4418 = vst.msk [vmem:[#allocation3 + $0x290] sm:$0xff] %vm3114, 0.0
  %4419 = vst.msk [vmem:[#allocation3 + $0x298] sm:$0xff] %vm3114, 0.0
  %4420 = vst.msk [vmem:[#allocation3 + $0x2a0] sm:$0xff] %vm3114, 0.0
  %4421 = vst.msk [vmem:[#allocation3 + $0x2a8] sm:$0xff] %vm3114, 0.0
  %4422 = vst.msk [vmem:[#allocation3 + $0x2b0] sm:$0xff] %vm3114, 0.0
  %4423 = vst.msk [vmem:[#allocation3 + $0x2b8] sm:$0xff] %vm3114, 0.0
  %4424 = vst.msk [vmem:[#allocation3 + $0x2c0] sm:$0xff] %vm3114, 0.0
  %4425 = vst.msk [vmem:[#allocation3 + $0x2c8] sm:$0xff] %vm3114, 0.0
  %4426 = vst.msk [vmem:[#allocation3 + $0x2d0] sm:$0xff] %vm3114, 0.0
  %4427 = vst.msk [vmem:[#allocation3 + $0x2d8] sm:$0xff] %vm3114, 0.0
  %4428 = vst.msk [vmem:[#allocation3 + $0x2e0] sm:$0xff] %vm3114, 0.0
  %4429 = vst.msk [vmem:[#allocation3 + $0x2e8] sm:$0xff] %vm3114, 0.0
  %4430 = vst.msk [vmem:[#allocation3 + $0x2f0] sm:$0xff] %vm3114, 0.0
  %4431 = vst.msk [vmem:[#allocation3 + $0x2f8] sm:$0xff] %vm3114, 0.0
  %4432 = vst.msk [vmem:[#allocation3 + $0x300] sm:$0xff] %vm3114, 0.0
  %4433 = vst.msk [vmem:[#allocation3 + $0x308] sm:$0xff] %vm3114, 0.0
  %4434 = vst.msk [vmem:[#allocation3 + $0x310] sm:$0xff] %vm3114, 0.0
  %4435 = vst.msk [vmem:[#allocation3 + $0x318] sm:$0xff] %vm3114, 0.0
  %4436 = vst.msk [vmem:[#allocation3 + $0x320] sm:$0xff] %vm3114, 0.0
  %4437 = vst.msk [vmem:[#allocation3 + $0x328] sm:$0xff] %vm3114, 0.0
  %4438 = vst.msk [vmem:[#allocation3 + $0x330] sm:$0xff] %vm3114, 0.0
  %4439 = vst.msk [vmem:[#allocation3 + $0x338] sm:$0xff] %vm3114, 0.0
  %4440 = vst.msk [vmem:[#allocation3 + $0x340] sm:$0xff] %vm3114, 0.0
  %4441 = vst.msk [vmem:[#allocation3 + $0x348] sm:$0xff] %vm3114, 0.0
  %4442 = vst.msk [vmem:[#allocation3 + $0x350] sm:$0xff] %vm3114, 0.0
  %4443 = vst.msk [vmem:[#allocation3 + $0x358] sm:$0xff] %vm3114, 0.0
  %4444 = vst.msk [vmem:[#allocation3 + $0x360] sm:$0xff] %vm3114, 0.0
  %4445 = vst.msk [vmem:[#allocation3 + $0x368] sm:$0xff] %vm3114, 0.0
  %4446 = vst.msk [vmem:[#allocation3 + $0x370] sm:$0xff] %vm3114, 0.0
  %4447 = vst.msk [vmem:[#allocation3 + $0x378] sm:$0xff] %vm3114, 0.0
  %4448 = vst.msk [vmem:[#allocation3 + $0x380] sm:$0xff] %vm3114, 0.0
  %4449 = vst.msk [vmem:[#allocation3 + $0x388] sm:$0xff] %vm3114, 0.0
  %4450 = vst.msk [vmem:[#allocation3 + $0x390] sm:$0xff] %vm3114, 0.0
  %4451 = vst.msk [vmem:[#allocation3 + $0x398] sm:$0xff] %vm3114, 0.0
  %4452 = vst.msk [vmem:[#allocation3 + $0x3a0] sm:$0xff] %vm3114, 0.0
  %4453 = vst.msk [vmem:[#allocation3 + $0x3a8] sm:$0xff] %vm3114, 0.0
  %4454 = vst.msk [vmem:[#allocation3 + $0x3b0] sm:$0xff] %vm3114, 0.0
  %4455 = vst.msk [vmem:[#allocation3 + $0x3b8] sm:$0xff] %vm3114, 0.0
  %4456 = vst.msk [vmem:[#allocation3 + $0x3c0] sm:$0xff] %vm3114, 0.0
  %4457 = vst.msk [vmem:[#allocation3 + $0x3c8] sm:$0xff] %vm3114, 0.0
  %4458 = vst.msk [vmem:[#allocation3 + $0x3d0] sm:$0xff] %vm3114, 0.0
  %4459 = vst.msk [vmem:[#allocation3 + $0x3d8] sm:$0xff] %vm3114, 0.0
  %4460 = vst.msk [vmem:[#allocation3 + $0x3e0] sm:$0xff] %vm3114, 0.0
  %4461 = vst.msk [vmem:[#allocation3 + $0x3e8] sm:$0xff] %vm3114, 0.0
  %4462 = vst.msk [vmem:[#allocation3 + $0x3f0] sm:$0xff] %vm3114, 0.0
  %4463 = vst.msk [vmem:[#allocation3 + $0x3f8] sm:$0xff] %vm3114, 0.0
  %4464 = vst.msk [vmem:[#allocation3 + $0x400] sm:$0xff] %vm3114, 0.0
  %4465 = vst.msk [vmem:[#allocation3 + $0x408] sm:$0xff] %vm3114, 0.0
  %4466 = vst.msk [vmem:[#allocation3 + $0x410] sm:$0xff] %vm3114, 0.0
  %4467 = vst.msk [vmem:[#allocation3 + $0x418] sm:$0xff] %vm3114, 0.0
  %4468 = vst.msk [vmem:[#allocation3 + $0x420] sm:$0xff] %vm3114, 0.0
  %4469 = vst.msk [vmem:[#allocation3 + $0x428] sm:$0xff] %vm3114, 0.0
  %4470 = vst.msk [vmem:[#allocation3 + $0x430] sm:$0xff] %vm3114, 0.0
  %4471 = vst.msk [vmem:[#allocation3 + $0x438] sm:$0xff] %vm3114, 0.0
  %4472 = vst.msk [vmem:[#allocation3 + $0x440] sm:$0xff] %vm3114, 0.0
  %4473 = vst.msk [vmem:[#allocation3 + $0x448] sm:$0xff] %vm3114, 0.0
  %4474 = vst.msk [vmem:[#allocation3 + $0x450] sm:$0xff] %vm3114, 0.0
  %4475 = vst.msk [vmem:[#allocation3 + $0x458] sm:$0xff] %vm3114, 0.0
  %4476 = vst.msk [vmem:[#allocation3 + $0x460] sm:$0xff] %vm3114, 0.0
  %4477 = vst.msk [vmem:[#allocation3 + $0x468] sm:$0xff] %vm3114, 0.0
  %4478 = vst.msk [vmem:[#allocation3 + $0x470] sm:$0xff] %vm3114, 0.0
  %4479 = vst.msk [vmem:[#allocation3 + $0x478] sm:$0xff] %vm3114, 0.0
  %s4480 = scalar_lea.vmem [#allocation3], 32
  %4481 = vst.msk [vmem:[%s4480 + $0x8] sm:$0xff] %vm3114, %v4272
  %4482 = vst.msk [vmem:[%s4480 + $0x10] sm:$0xff] %vm3114, %v4273
  %4483 = vst.msk [vmem:[%s4480 + $0x28] sm:$0xff] %vm3114, %v4274
  %4484 = vst.msk [vmem:[%s4480 + $0x30] sm:$0xff] %vm3114, %v4275
  %4485 = vst.msk [vmem:[%s4480 + $0x48] sm:$0xff] %vm3114, %v4276
  %4486 = vst.msk [vmem:[%s4480 + $0x50] sm:$0xff] %vm3114, %v4277
  %4487 = vst.msk [vmem:[%s4480 + $0x68] sm:$0xff] %vm3114, %v4278
  %4488 = vst.msk [vmem:[%s4480 + $0x70] sm:$0xff] %vm3114, %v4279
  %4489 = vst.msk [vmem:[%s4480 + $0x88] sm:$0xff] %vm3114, %v4280
  %4490 = vst.msk [vmem:[%s4480 + $0x90] sm:$0xff] %vm3114, %v4281
  %4491 = vst.msk [vmem:[%s4480 + $0xa8] sm:$0xff] %vm3114, %v4282
  %4492 = vst.msk [vmem:[%s4480 + $0xb0] sm:$0xff] %vm3114, %v4283
  %4493 = vst.msk [vmem:[%s4480 + $0xc8] sm:$0xff] %vm3114, %v4284
  %4494 = vst.msk [vmem:[%s4480 + $0xd0] sm:$0xff] %vm3114, %v4285
  %4495 = vst.msk [vmem:[%s4480 + $0xe8] sm:$0xff] %vm3114, %v4286
  %4496 = vst.msk [vmem:[%s4480 + $0xf0] sm:$0xff] %vm3114, %v4287
  %4497 = vst.msk [vmem:[%s4480 + $0x108] sm:$0xff] %vm3114, %v4288
  %4498 = vst.msk [vmem:[%s4480 + $0x110] sm:$0xff] %vm3114, %v4289
  %4499 = vst.msk [vmem:[%s4480 + $0x128] sm:$0xff] %vm3114, %v4290
  %4500 = vst.msk [vmem:[%s4480 + $0x130] sm:$0xff] %vm3114, %v4291
  %4501 = vst.msk [vmem:[%s4480 + $0x148] sm:$0xff] %vm3114, %v4292
  %4502 = vst.msk [vmem:[%s4480 + $0x150] sm:$0xff] %vm3114, %v4293
  %4503 = vst.msk [vmem:[%s4480 + $0x168] sm:$0xff] %vm3114, %v4294
  %4504 = vst.msk [vmem:[%s4480 + $0x170] sm:$0xff] %vm3114, %v4295
  %4505 = vst.msk [vmem:[%s4480 + $0x188] sm:$0xff] %vm3114, %v4296
  %4506 = vst.msk [vmem:[%s4480 + $0x190] sm:$0xff] %vm3114, %v4297
  %4507 = vst.msk [vmem:[%s4480 + $0x1a8] sm:$0xff] %vm3114, %v4298
  %4508 = vst.msk [vmem:[%s4480 + $0x1b0] sm:$0xff] %vm3114, %v4299
  %4509 = vst.msk [vmem:[%s4480 + $0x1c8] sm:$0xff] %vm3114, %v4300
  %4510 = vst.msk [vmem:[%s4480 + $0x1d0] sm:$0xff] %vm3114, %v4301
  %4511 = vst.msk [vmem:[%s4480 + $0x1e8] sm:$0xff] %vm3114, %v4302
  %4512 = vst.msk [vmem:[%s4480 + $0x1f0] sm:$0xff] %vm3114, %v4303
  %4513 = vst.msk [vmem:[%s4480 + $0x248] sm:$0xff] %vm3114, %v4304
  %4514 = vst.msk [vmem:[%s4480 + $0x250] sm:$0xff] %vm3114, %v4305
  %4515 = vst.msk [vmem:[%s4480 + $0x268] sm:$0xff] %vm3114, %v4306
  %4516 = vst.msk [vmem:[%s4480 + $0x270] sm:$0xff] %vm3114, %v4307
  %4517 = vst.msk [vmem:[%s4480 + $0x288] sm:$0xff] %vm3114, %v4308
  %4518 = vst.msk [vmem:[%s4480 + $0x290] sm:$0xff] %vm3114, %v4309
  %4519 = vst.msk [vmem:[%s4480 + $0x2a8] sm:$0xff] %vm3114, %v4310
  %4520 = vst.msk [vmem:[%s4480 + $0x2b0] sm:$0xff] %vm3114, %v4311
  %4521 = vst.msk [vmem:[%s4480 + $0x2c8] sm:$0xff] %vm3114, %v4312
  %4522 = vst.msk [vmem:[%s4480 + $0x2d0] sm:$0xff] %vm3114, %v4313
  %4523 = vst.msk [vmem:[%s4480 + $0x2e8] sm:$0xff] %vm3114, %v4314
  %4524 = vst.msk [vmem:[%s4480 + $0x2f0] sm:$0xff] %vm3114, %v4315
  %4525 = vst.msk [vmem:[%s4480 + $0x308] sm:$0xff] %vm3114, %v4316
  %4526 = vst.msk [vmem:[%s4480 + $0x310] sm:$0xff] %vm3114, %v4317
  %4527 = vst.msk [vmem:[%s4480 + $0x328] sm:$0xff] %vm3114, %v4318
  %4528 = vst.msk [vmem:[%s4480 + $0x330] sm:$0xff] %vm3114, %v4319
  %4529 = vst.msk [vmem:[%s4480 + $0x348] sm:$0xff] %vm3114, %v4320
  %4530 = vst.msk [vmem:[%s4480 + $0x350] sm:$0xff] %vm3114, %v4321
  %4531 = vst.msk [vmem:[%s4480 + $0x368] sm:$0xff] %vm3114, %v4322
  %4532 = vst.msk [vmem:[%s4480 + $0x370] sm:$0xff] %vm3114, %v4323
  %4533 = vst.msk [vmem:[%s4480 + $0x388] sm:$0xff] %vm3114, %v4324
  %4534 = vst.msk [vmem:[%s4480 + $0x390] sm:$0xff] %vm3114, %v4325
  %4535 = vst.msk [vmem:[%s4480 + $0x3a8] sm:$0xff] %vm3114, %v4326
  %4536 = vst.msk [vmem:[%s4480 + $0x3b0] sm:$0xff] %vm3114, %v4327
  %4537 = vst.msk [vmem:[%s4480 + $0x3c8] sm:$0xff] %vm3114, %v4328
  %4538 = vst.msk [vmem:[%s4480 + $0x3d0] sm:$0xff] %vm3114, %v4329
  %4539 = vst.msk [vmem:[%s4480 + $0x3e8] sm:$0xff] %vm3114, %v4330
  %4540 = vst.msk [vmem:[%s4480 + $0x3f0] sm:$0xff] %vm3114, %v4331
  %4541 = vst.msk [vmem:[%s4480 + $0x408] sm:$0xff] %vm3114, %v4332
  %4542 = vst.msk [vmem:[%s4480 + $0x410] sm:$0xff] %vm3114, %v4333
  %4543 = vst.msk [vmem:[%s4480 + $0x428] sm:$0xff] %vm3114, %v4334
  %4544 = vst.msk [vmem:[%s4480 + $0x430] sm:$0xff] %vm3114, %v4335
  %v4545 = vld [vmem:[#allocation3 + $0x7] sm:$0xff]
  %v4546 = vld [vmem:[#allocation3 + $0xf] sm:$0xff]
  %v4547 = vld [vmem:[#allocation3 + $0x27] sm:$0xff]
  %v4548 = vld [vmem:[#allocation3 + $0x2f] sm:$0xff]
  %v4549 = vld [vmem:[#allocation3 + $0x47] sm:$0xff]
  %v4550 = vld [vmem:[#allocation3 + $0x4f] sm:$0xff]
  %v4551 = vld [vmem:[#allocation3 + $0x67] sm:$0xff]
  %v4552 = vld [vmem:[#allocation3 + $0x6f] sm:$0xff]
  %v4553 = vld [vmem:[#allocation3 + $0x87] sm:$0xff]
  %v4554 = vld [vmem:[#allocation3 + $0x8f] sm:$0xff]
  %v4555 = vld [vmem:[#allocation3 + $0xa7] sm:$0xff]
  %v4556 = vld [vmem:[#allocation3 + $0xaf] sm:$0xff]
  %v4557 = vld [vmem:[#allocation3 + $0xc7] sm:$0xff]
  %v4558 = vld [vmem:[#allocation3 + $0xcf] sm:$0xff]
  %v4559 = vld [vmem:[#allocation3 + $0xe7] sm:$0xff]
  %v4560 = vld [vmem:[#allocation3 + $0xef] sm:$0xff]
  %v4561 = vld [vmem:[#allocation3 + $0x107] sm:$0xff]
  %v4562 = vld [vmem:[#allocation3 + $0x10f] sm:$0xff]
  %v4563 = vld [vmem:[#allocation3 + $0x127] sm:$0xff]
  %v4564 = vld [vmem:[#allocation3 + $0x12f] sm:$0xff]
  %v4565 = vld [vmem:[#allocation3 + $0x147] sm:$0xff]
  %v4566 = vld [vmem:[#allocation3 + $0x14f] sm:$0xff]
  %v4567 = vld [vmem:[#allocation3 + $0x167] sm:$0xff]
  %v4568 = vld [vmem:[#allocation3 + $0x16f] sm:$0xff]
  %v4569 = vld [vmem:[#allocation3 + $0x187] sm:$0xff]
  %v4570 = vld [vmem:[#allocation3 + $0x18f] sm:$0xff]
  %v4571 = vld [vmem:[#allocation3 + $0x1a7] sm:$0xff]
  %v4572 = vld [vmem:[#allocation3 + $0x1af] sm:$0xff]
  %v4573 = vld [vmem:[#allocation3 + $0x1c7] sm:$0xff]
  %v4574 = vld [vmem:[#allocation3 + $0x1cf] sm:$0xff]
  %v4575 = vld [vmem:[#allocation3 + $0x1e7] sm:$0xff]
  %v4576 = vld [vmem:[#allocation3 + $0x1ef] sm:$0xff]
  %v4577 = vld [vmem:[#allocation3 + $0x247] sm:$0xff]
  %v4578 = vld [vmem:[#allocation3 + $0x24f] sm:$0xff]
  %v4579 = vld [vmem:[#allocation3 + $0x267] sm:$0xff]
  %v4580 = vld [vmem:[#allocation3 + $0x26f] sm:$0xff]
  %v4581 = vld [vmem:[#allocation3 + $0x287] sm:$0xff]
  %v4582 = vld [vmem:[#allocation3 + $0x28f] sm:$0xff]
  %v4583 = vld [vmem:[#allocation3 + $0x2a7] sm:$0xff]
  %v4584 = vld [vmem:[#allocation3 + $0x2af] sm:$0xff]
  %v4585 = vld [vmem:[#allocation3 + $0x2c7] sm:$0xff]
  %v4586 = vld [vmem:[#allocation3 + $0x2cf] sm:$0xff]
  %v4587 = vld [vmem:[#allocation3 + $0x2e7] sm:$0xff]
  %v4588 = vld [vmem:[#allocation3 + $0x2ef] sm:$0xff]
  %v4589 = vld [vmem:[#allocation3 + $0x307] sm:$0xff]
  %v4590 = vld [vmem:[#allocation3 + $0x30f] sm:$0xff]
  %v4591 = vld [vmem:[#allocation3 + $0x327] sm:$0xff]
  %v4592 = vld [vmem:[#allocation3 + $0x32f] sm:$0xff]
  %v4593 = vld [vmem:[#allocation3 + $0x347] sm:$0xff]
  %v4594 = vld [vmem:[#allocation3 + $0x34f] sm:$0xff]
  %v4595 = vld [vmem:[#allocation3 + $0x367] sm:$0xff]
  %v4596 = vld [vmem:[#allocation3 + $0x36f] sm:$0xff]
  %v4597 = vld [vmem:[#allocation3 + $0x387] sm:$0xff]
  %v4598 = vld [vmem:[#allocation3 + $0x38f] sm:$0xff]
  %v4599 = vld [vmem:[#allocation3 + $0x3a7] sm:$0xff]
  %v4600 = vld [vmem:[#allocation3 + $0x3af] sm:$0xff]
  %v4601 = vld [vmem:[#allocation3 + $0x3c7] sm:$0xff]
  %v4602 = vld [vmem:[#allocation3 + $0x3cf] sm:$0xff]
  %v4603 = vld [vmem:[#allocation3 + $0x3e7] sm:$0xff]
  %v4604 = vld [vmem:[#allocation3 + $0x3ef] sm:$0xff]
  %v4605 = vld [vmem:[#allocation3 + $0x407] sm:$0xff]
  %v4606 = vld [vmem:[#allocation3 + $0x40f] sm:$0xff]
  %v4607 = vld [vmem:[#allocation3 + $0x427] sm:$0xff]
  %v4608 = vld [vmem:[#allocation3 + $0x42f] sm:$0xff]
  %v4609 = vld [vmem:[#allocation3 + $0x8] sm:$0xff]
  %v4610 = vld [vmem:[#allocation3 + $0x10] sm:$0xff]
  %v4611 = vld [vmem:[#allocation3 + $0x28] sm:$0xff]
  %v4612 = vld [vmem:[#allocation3 + $0x30] sm:$0xff]
  %v4613 = vld [vmem:[#allocation3 + $0x48] sm:$0xff]
  %v4614 = vld [vmem:[#allocation3 + $0x50] sm:$0xff]
  %v4615 = vld [vmem:[#allocation3 + $0x68] sm:$0xff]
  %v4616 = vld [vmem:[#allocation3 + $0x70] sm:$0xff]
  %v4617 = vld [vmem:[#allocation3 + $0x88] sm:$0xff]
  %v4618 = vld [vmem:[#allocation3 + $0x90] sm:$0xff]
  %v4619 = vld [vmem:[#allocation3 + $0xa8] sm:$0xff]
  %v4620 = vld [vmem:[#allocation3 + $0xb0] sm:$0xff]
  %v4621 = vld [vmem:[#allocation3 + $0xc8] sm:$0xff]
  %v4622 = vld [vmem:[#allocation3 + $0xd0] sm:$0xff]
  %v4623 = vld [vmem:[#allocation3 + $0xe8] sm:$0xff]
  %v4624 = vld [vmem:[#allocation3 + $0xf0] sm:$0xff]
  %v4625 = vld [vmem:[#allocation3 + $0x108] sm:$0xff]
  %v4626 = vld [vmem:[#allocation3 + $0x110] sm:$0xff]
  %v4627 = vld [vmem:[#allocation3 + $0x128] sm:$0xff]
  %v4628 = vld [vmem:[#allocation3 + $0x130] sm:$0xff]
  %v4629 = vld [vmem:[#allocation3 + $0x148] sm:$0xff]
  %v4630 = vld [vmem:[#allocation3 + $0x150] sm:$0xff]
  %v4631 = vld [vmem:[#allocation3 + $0x168] sm:$0xff]
  %v4632 = vld [vmem:[#allocation3 + $0x170] sm:$0xff]
  %v4633 = vld [vmem:[#allocation3 + $0x188] sm:$0xff]
  %v4634 = vld [vmem:[#allocation3 + $0x190] sm:$0xff]
  %v4635 = vld [vmem:[#allocation3 + $0x1a8] sm:$0xff]
  %v4636 = vld [vmem:[#allocation3 + $0x1b0] sm:$0xff]
  %v4637 = vld [vmem:[#allocation3 + $0x1c8] sm:$0xff]
  %v4638 = vld [vmem:[#allocation3 + $0x1d0] sm:$0xff]
  %v4639 = vld [vmem:[#allocation3 + $0x1e8] sm:$0xff]
  %v4640 = vld [vmem:[#allocation3 + $0x1f0] sm:$0xff]
  %v4641 = vld [vmem:[#allocation3 + $0x248] sm:$0xff]
  %v4642 = vld [vmem:[#allocation3 + $0x250] sm:$0xff]
  %v4643 = vld [vmem:[#allocation3 + $0x268] sm:$0xff]
  %v4644 = vld [vmem:[#allocation3 + $0x270] sm:$0xff]
  %v4645 = vld [vmem:[#allocation3 + $0x288] sm:$0xff]
  %v4646 = vld [vmem:[#allocation3 + $0x290] sm:$0xff]
  %v4647 = vld [vmem:[#allocation3 + $0x2a8] sm:$0xff]
  %v4648 = vld [vmem:[#allocation3 + $0x2b0] sm:$0xff]
  %v4649 = vld [vmem:[#allocation3 + $0x2c8] sm:$0xff]
  %v4650 = vld [vmem:[#allocation3 + $0x2d0] sm:$0xff]
  %v4651 = vld [vmem:[#allocation3 + $0x2e8] sm:$0xff]
  %v4652 = vld [vmem:[#allocation3 + $0x2f0] sm:$0xff]
  %v4653 = vld [vmem:[#allocation3 + $0x308] sm:$0xff]
  %v4654 = vld [vmem:[#allocation3 + $0x310] sm:$0xff]
  %v4655 = vld [vmem:[#allocation3 + $0x328] sm:$0xff]
  %v4656 = vld [vmem:[#allocation3 + $0x330] sm:$0xff]
  %v4657 = vld [vmem:[#allocation3 + $0x348] sm:$0xff]
  %v4658 = vld [vmem:[#allocation3 + $0x350] sm:$0xff]
  %v4659 = vld [vmem:[#allocation3 + $0x368] sm:$0xff]
  %v4660 = vld [vmem:[#allocation3 + $0x370] sm:$0xff]
  %v4661 = vld [vmem:[#allocation3 + $0x388] sm:$0xff]
  %v4662 = vld [vmem:[#allocation3 + $0x390] sm:$0xff]
  %v4663 = vld [vmem:[#allocation3 + $0x3a8] sm:$0xff]
  %v4664 = vld [vmem:[#allocation3 + $0x3b0] sm:$0xff]
  %v4665 = vld [vmem:[#allocation3 + $0x3c8] sm:$0xff]
  %v4666 = vld [vmem:[#allocation3 + $0x3d0] sm:$0xff]
  %v4667 = vld [vmem:[#allocation3 + $0x3e8] sm:$0xff]
  %v4668 = vld [vmem:[#allocation3 + $0x3f0] sm:$0xff]
  %v4669 = vld [vmem:[#allocation3 + $0x408] sm:$0xff]
  %v4670 = vld [vmem:[#allocation3 + $0x410] sm:$0xff]
  %v4671 = vld [vmem:[#allocation3 + $0x428] sm:$0xff]
  %v4672 = vld [vmem:[#allocation3 + $0x430] sm:$0xff]
  %v4673 = vld [vmem:[#allocation3 + $0x9] sm:$0xff]
  %v4674 = vld [vmem:[#allocation3 + $0x11] sm:$0xff]
  %v4675 = vld [vmem:[#allocation3 + $0x29] sm:$0xff]
  %v4676 = vld [vmem:[#allocation3 + $0x31] sm:$0xff]
  %v4677 = vld [vmem:[#allocation3 + $0x49] sm:$0xff]
  %v4678 = vld [vmem:[#allocation3 + $0x51] sm:$0xff]
  %v4679 = vld [vmem:[#allocation3 + $0x69] sm:$0xff]
  %v4680 = vld [vmem:[#allocation3 + $0x71] sm:$0xff]
  %v4681 = vld [vmem:[#allocation3 + $0x89] sm:$0xff]
  %v4682 = vld [vmem:[#allocation3 + $0x91] sm:$0xff]
  %v4683 = vld [vmem:[#allocation3 + $0xa9] sm:$0xff]
  %v4684 = vld [vmem:[#allocation3 + $0xb1] sm:$0xff]
  %v4685 = vld [vmem:[#allocation3 + $0xc9] sm:$0xff]
  %v4686 = vld [vmem:[#allocation3 + $0xd1] sm:$0xff]
  %v4687 = vld [vmem:[#allocation3 + $0xe9] sm:$0xff]
  %v4688 = vld [vmem:[#allocation3 + $0xf1] sm:$0xff]
  %v4689 = vld [vmem:[#allocation3 + $0x109] sm:$0xff]
  %v4690 = vld [vmem:[#allocation3 + $0x111] sm:$0xff]
  %v4691 = vld [vmem:[#allocation3 + $0x129] sm:$0xff]
  %v4692 = vld [vmem:[#allocation3 + $0x131] sm:$0xff]
  %v4693 = vld [vmem:[#allocation3 + $0x149] sm:$0xff]
  %v4694 = vld [vmem:[#allocation3 + $0x151] sm:$0xff]
  %v4695 = vld [vmem:[#allocation3 + $0x169] sm:$0xff]
  %v4696 = vld [vmem:[#allocation3 + $0x171] sm:$0xff]
  %v4697 = vld [vmem:[#allocation3 + $0x189] sm:$0xff]
  %v4698 = vld [vmem:[#allocation3 + $0x191] sm:$0xff]
  %v4699 = vld [vmem:[#allocation3 + $0x1a9] sm:$0xff]
  %v4700 = vld [vmem:[#allocation3 + $0x1b1] sm:$0xff]
  %v4701 = vld [vmem:[#allocation3 + $0x1c9] sm:$0xff]
  %v4702 = vld [vmem:[#allocation3 + $0x1d1] sm:$0xff]
  %v4703 = vld [vmem:[#allocation3 + $0x1e9] sm:$0xff]
  %v4704 = vld [vmem:[#allocation3 + $0x1f1] sm:$0xff]
  %v4705 = vld [vmem:[#allocation3 + $0x249] sm:$0xff]
  %v4706 = vld [vmem:[#allocation3 + $0x251] sm:$0xff]
  %v4707 = vld [vmem:[#allocation3 + $0x269] sm:$0xff]
  %v4708 = vld [vmem:[#allocation3 + $0x271] sm:$0xff]
  %v4709 = vld [vmem:[#allocation3 + $0x289] sm:$0xff]
  %v4710 = vld [vmem:[#allocation3 + $0x291] sm:$0xff]
  %v4711 = vld [vmem:[#allocation3 + $0x2a9] sm:$0xff]
  %v4712 = vld [vmem:[#allocation3 + $0x2b1] sm:$0xff]
  %v4713 = vld [vmem:[#allocation3 + $0x2c9] sm:$0xff]
  %v4714 = vld [vmem:[#allocation3 + $0x2d1] sm:$0xff]
  %v4715 = vld [vmem:[#allocation3 + $0x2e9] sm:$0xff]
  %v4716 = vld [vmem:[#allocation3 + $0x2f1] sm:$0xff]
  %v4717 = vld [vmem:[#allocation3 + $0x309] sm:$0xff]
  %v4718 = vld [vmem:[#allocation3 + $0x311] sm:$0xff]
  %v4719 = vld [vmem:[#allocation3 + $0x329] sm:$0xff]
  %v4720 = vld [vmem:[#allocation3 + $0x331] sm:$0xff]
  %v4721 = vld [vmem:[#allocation3 + $0x349] sm:$0xff]
  %v4722 = vld [vmem:[#allocation3 + $0x351] sm:$0xff]
  %v4723 = vld [vmem:[#allocation3 + $0x369] sm:$0xff]
  %v4724 = vld [vmem:[#allocation3 + $0x371] sm:$0xff]
  %v4725 = vld [vmem:[#allocation3 + $0x389] sm:$0xff]
  %v4726 = vld [vmem:[#allocation3 + $0x391] sm:$0xff]
  %v4727 = vld [vmem:[#allocation3 + $0x3a9] sm:$0xff]
  %v4728 = vld [vmem:[#allocation3 + $0x3b1] sm:$0xff]
  %v4729 = vld [vmem:[#allocation3 + $0x3c9] sm:$0xff]
  %v4730 = vld [vmem:[#allocation3 + $0x3d1] sm:$0xff]
  %v4731 = vld [vmem:[#allocation3 + $0x3e9] sm:$0xff]
  %v4732 = vld [vmem:[#allocation3 + $0x3f1] sm:$0xff]
  %v4733 = vld [vmem:[#allocation3 + $0x409] sm:$0xff]
  %v4734 = vld [vmem:[#allocation3 + $0x411] sm:$0xff]
  %v4735 = vld [vmem:[#allocation3 + $0x429] sm:$0xff]
  %v4736 = vld [vmem:[#allocation3 + $0x431] sm:$0xff]
  %v4737 = vld [vmem:[%s4480 + $0x7] sm:$0xff]
  %v4738 = vld [vmem:[%s4480 + $0xf] sm:$0xff]
  %v4739 = vld [vmem:[%s4480 + $0x27] sm:$0xff]
  %v4740 = vld [vmem:[%s4480 + $0x2f] sm:$0xff]
  %v4741 = vld [vmem:[%s4480 + $0x47] sm:$0xff]
  %v4742 = vld [vmem:[%s4480 + $0x4f] sm:$0xff]
  %v4743 = vld [vmem:[%s4480 + $0x67] sm:$0xff]
  %v4744 = vld [vmem:[%s4480 + $0x6f] sm:$0xff]
  %v4745 = vld [vmem:[%s4480 + $0x87] sm:$0xff]
  %v4746 = vld [vmem:[%s4480 + $0x8f] sm:$0xff]
  %v4747 = vld [vmem:[%s4480 + $0xa7] sm:$0xff]
  %v4748 = vld [vmem:[%s4480 + $0xaf] sm:$0xff]
  %v4749 = vld [vmem:[%s4480 + $0xc7] sm:$0xff]
  %v4750 = vld [vmem:[%s4480 + $0xcf] sm:$0xff]
  %v4751 = vld [vmem:[%s4480 + $0xe7] sm:$0xff]
  %v4752 = vld [vmem:[%s4480 + $0xef] sm:$0xff]
  %v4753 = vld [vmem:[%s4480 + $0x107] sm:$0xff]
  %v4754 = vld [vmem:[%s4480 + $0x10f] sm:$0xff]
  %v4755 = vld [vmem:[%s4480 + $0x127] sm:$0xff]
  %v4756 = vld [vmem:[%s4480 + $0x12f] sm:$0xff]
  %v4757 = vld [vmem:[%s4480 + $0x147] sm:$0xff]
  %v4758 = vld [vmem:[%s4480 + $0x14f] sm:$0xff]
  %v4759 = vld [vmem:[%s4480 + $0x167] sm:$0xff]
  %v4760 = vld [vmem:[%s4480 + $0x16f] sm:$0xff]
  %v4761 = vld [vmem:[%s4480 + $0x187] sm:$0xff]
  %v4762 = vld [vmem:[%s4480 + $0x18f] sm:$0xff]
  %v4763 = vld [vmem:[%s4480 + $0x1a7] sm:$0xff]
  %v4764 = vld [vmem:[%s4480 + $0x1af] sm:$0xff]
  %v4765 = vld [vmem:[%s4480 + $0x1c7] sm:$0xff]
  %v4766 = vld [vmem:[%s4480 + $0x1cf] sm:$0xff]
  %v4767 = vld [vmem:[%s4480 + $0x1e7] sm:$0xff]
  %v4768 = vld [vmem:[%s4480 + $0x1ef] sm:$0xff]
  %v4769 = vld [vmem:[%s4480 + $0x247] sm:$0xff]
  %v4770 = vld [vmem:[%s4480 + $0x24f] sm:$0xff]
  %v4771 = vld [vmem:[%s4480 + $0x267] sm:$0xff]
  %v4772 = vld [vmem:[%s4480 + $0x26f] sm:$0xff]
  %v4773 = vld [vmem:[%s4480 + $0x287] sm:$0xff]
  %v4774 = vld [vmem:[%s4480 + $0x28f] sm:$0xff]
  %v4775 = vld [vmem:[%s4480 + $0x2a7] sm:$0xff]
  %v4776 = vld [vmem:[%s4480 + $0x2af] sm:$0xff]
  %v4777 = vld [vmem:[%s4480 + $0x2c7] sm:$0xff]
  %v4778 = vld [vmem:[%s4480 + $0x2cf] sm:$0xff]
  %v4779 = vld [vmem:[%s4480 + $0x2e7] sm:$0xff]
  %v4780 = vld [vmem:[%s4480 + $0x2ef] sm:$0xff]
  %v4781 = vld [vmem:[%s4480 + $0x307] sm:$0xff]
  %v4782 = vld [vmem:[%s4480 + $0x30f] sm:$0xff]
  %v4783 = vld [vmem:[%s4480 + $0x327] sm:$0xff]
  %v4784 = vld [vmem:[%s4480 + $0x32f] sm:$0xff]
  %v4785 = vld [vmem:[%s4480 + $0x347] sm:$0xff]
  %v4786 = vld [vmem:[%s4480 + $0x34f] sm:$0xff]
  %v4787 = vld [vmem:[%s4480 + $0x367] sm:$0xff]
  %v4788 = vld [vmem:[%s4480 + $0x36f] sm:$0xff]
  %v4789 = vld [vmem:[%s4480 + $0x387] sm:$0xff]
  %v4790 = vld [vmem:[%s4480 + $0x38f] sm:$0xff]
  %v4791 = vld [vmem:[%s4480 + $0x3a7] sm:$0xff]
  %v4792 = vld [vmem:[%s4480 + $0x3af] sm:$0xff]
  %v4793 = vld [vmem:[%s4480 + $0x3c7] sm:$0xff]
  %v4794 = vld [vmem:[%s4480 + $0x3cf] sm:$0xff]
  %v4795 = vld [vmem:[%s4480 + $0x3e7] sm:$0xff]
  %v4796 = vld [vmem:[%s4480 + $0x3ef] sm:$0xff]
  %v4797 = vld [vmem:[%s4480 + $0x407] sm:$0xff]
  %v4798 = vld [vmem:[%s4480 + $0x40f] sm:$0xff]
  %v4799 = vld [vmem:[%s4480 + $0x427] sm:$0xff]
  %v4800 = vld [vmem:[%s4480 + $0x42f] sm:$0xff]
  %v4801 = vld [vmem:[%s4480 + $0x8] sm:$0xff]
  %v4802 = vld [vmem:[%s4480 + $0x10] sm:$0xff]
  %v4803 = vld [vmem:[%s4480 + $0x28] sm:$0xff]
  %v4804 = vld [vmem:[%s4480 + $0x30] sm:$0xff]
  %v4805 = vld [vmem:[%s4480 + $0x48] sm:$0xff]
  %v4806 = vld [vmem:[%s4480 + $0x50] sm:$0xff]
  %v4807 = vld [vmem:[%s4480 + $0x68] sm:$0xff]
  %v4808 = vld [vmem:[%s4480 + $0x70] sm:$0xff]
  %v4809 = vld [vmem:[%s4480 + $0x88] sm:$0xff]
  %v4810 = vld [vmem:[%s4480 + $0x90] sm:$0xff]
  %v4811 = vld [vmem:[%s4480 + $0xa8] sm:$0xff]
  %v4812 = vld [vmem:[%s4480 + $0xb0] sm:$0xff]
  %v4813 = vld [vmem:[%s4480 + $0xc8] sm:$0xff]
  %v4814 = vld [vmem:[%s4480 + $0xd0] sm:$0xff]
  %v4815 = vld [vmem:[%s4480 + $0xe8] sm:$0xff]
  %v4816 = vld [vmem:[%s4480 + $0xf0] sm:$0xff]
  %v4817 = vld [vmem:[%s4480 + $0x108] sm:$0xff]
  %v4818 = vld [vmem:[%s4480 + $0x110] sm:$0xff]
  %v4819 = vld [vmem:[%s4480 + $0x128] sm:$0xff]
  %v4820 = vld [vmem:[%s4480 + $0x130] sm:$0xff]
  %v4821 = vld [vmem:[%s4480 + $0x148] sm:$0xff]
  %v4822 = vld [vmem:[%s4480 + $0x150] sm:$0xff]
  %v4823 = vld [vmem:[%s4480 + $0x168] sm:$0xff]
  %v4824 = vld [vmem:[%s4480 + $0x170] sm:$0xff]
  %v4825 = vld [vmem:[%s4480 + $0x188] sm:$0xff]
  %v4826 = vld [vmem:[%s4480 + $0x190] sm:$0xff]
  %v4827 = vld [vmem:[%s4480 + $0x1a8] sm:$0xff]
  %v4828 = vld [vmem:[%s4480 + $0x1b0] sm:$0xff]
  %v4829 = vld [vmem:[%s4480 + $0x1c8] sm:$0xff]
  %v4830 = vld [vmem:[%s4480 + $0x1d0] sm:$0xff]
  %v4831 = vld [vmem:[%s4480 + $0x1e8] sm:$0xff]
  %v4832 = vld [vmem:[%s4480 + $0x1f0] sm:$0xff]
  %v4833 = vld [vmem:[%s4480 + $0x248] sm:$0xff]
  %v4834 = vld [vmem:[%s4480 + $0x250] sm:$0xff]
  %v4835 = vld [vmem:[%s4480 + $0x268] sm:$0xff]
  %v4836 = vld [vmem:[%s4480 + $0x270] sm:$0xff]
  %v4837 = vld [vmem:[%s4480 + $0x288] sm:$0xff]
  %v4838 = vld [vmem:[%s4480 + $0x290] sm:$0xff]
  %v4839 = vld [vmem:[%s4480 + $0x2a8] sm:$0xff]
  %v4840 = vld [vmem:[%s4480 + $0x2b0] sm:$0xff]
  %v4841 = vld [vmem:[%s4480 + $0x2c8] sm:$0xff]
  %v4842 = vld [vmem:[%s4480 + $0x2d0] sm:$0xff]
  %v4843 = vld [vmem:[%s4480 + $0x2e8] sm:$0xff]
  %v4844 = vld [vmem:[%s4480 + $0x2f0] sm:$0xff]
  %v4845 = vld [vmem:[%s4480 + $0x308] sm:$0xff]
  %v4846 = vld [vmem:[%s4480 + $0x310] sm:$0xff]
  %v4847 = vld [vmem:[%s4480 + $0x328] sm:$0xff]
  %v4848 = vld [vmem:[%s4480 + $0x330] sm:$0xff]
  %v4849 = vld [vmem:[%s4480 + $0x348] sm:$0xff]
  %v4850 = vld [vmem:[%s4480 + $0x350] sm:$0xff]
  %v4851 = vld [vmem:[%s4480 + $0x368] sm:$0xff]
  %v4852 = vld [vmem:[%s4480 + $0x370] sm:$0xff]
  %v4853 = vld [vmem:[%s4480 + $0x388] sm:$0xff]
  %v4854 = vld [vmem:[%s4480 + $0x390] sm:$0xff]
  %v4855 = vld [vmem:[%s4480 + $0x3a8] sm:$0xff]
  %v4856 = vld [vmem:[%s4480 + $0x3b0] sm:$0xff]
  %v4857 = vld [vmem:[%s4480 + $0x3c8] sm:$0xff]
  %v4858 = vld [vmem:[%s4480 + $0x3d0] sm:$0xff]
  %v4859 = vld [vmem:[%s4480 + $0x3e8] sm:$0xff]
  %v4860 = vld [vmem:[%s4480 + $0x3f0] sm:$0xff]
  %v4861 = vld [vmem:[%s4480 + $0x408] sm:$0xff]
  %v4862 = vld [vmem:[%s4480 + $0x410] sm:$0xff]
  %v4863 = vld [vmem:[%s4480 + $0x428] sm:$0xff]
  %v4864 = vld [vmem:[%s4480 + $0x430] sm:$0xff]
  %v4865 = vld [vmem:[%s4480 + $0x9] sm:$0xff]
  %v4866 = vld [vmem:[%s4480 + $0x11] sm:$0xff]
  %v4867 = vld [vmem:[%s4480 + $0x29] sm:$0xff]
  %v4868 = vld [vmem:[%s4480 + $0x31] sm:$0xff]
  %v4869 = vld [vmem:[%s4480 + $0x49] sm:$0xff]
  %v4870 = vld [vmem:[%s4480 + $0x51] sm:$0xff]
  %v4871 = vld [vmem:[%s4480 + $0x69] sm:$0xff]
  %v4872 = vld [vmem:[%s4480 + $0x71] sm:$0xff]
  %v4873 = vld [vmem:[%s4480 + $0x89] sm:$0xff]
  %v4874 = vld [vmem:[%s4480 + $0x91] sm:$0xff]
  %v4875 = vld [vmem:[%s4480 + $0xa9] sm:$0xff]
  %v4876 = vld [vmem:[%s4480 + $0xb1] sm:$0xff]
  %v4877 = vld [vmem:[%s4480 + $0xc9] sm:$0xff]
  %v4878 = vld [vmem:[%s4480 + $0xd1] sm:$0xff]
  %v4879 = vld [vmem:[%s4480 + $0xe9] sm:$0xff]
  %v4880 = vld [vmem:[%s4480 + $0xf1] sm:$0xff]
  %v4881 = vld [vmem:[%s4480 + $0x109] sm:$0xff]
  %v4882 = vld [vmem:[%s4480 + $0x111] sm:$0xff]
  %v4883 = vld [vmem:[%s4480 + $0x129] sm:$0xff]
  %v4884 = vld [vmem:[%s4480 + $0x131] sm:$0xff]
  %v4885 = vld [vmem:[%s4480 + $0x149] sm:$0xff]
  %v4886 = vld [vmem:[%s4480 + $0x151] sm:$0xff]
  %v4887 = vld [vmem:[%s4480 + $0x169] sm:$0xff]
  %v4888 = vld [vmem:[%s4480 + $0x171] sm:$0xff]
  %v4889 = vld [vmem:[%s4480 + $0x189] sm:$0xff]
  %v4890 = vld [vmem:[%s4480 + $0x191] sm:$0xff]
  %v4891 = vld [vmem:[%s4480 + $0x1a9] sm:$0xff]
  %v4892 = vld [vmem:[%s4480 + $0x1b1] sm:$0xff]
  %v4893 = vld [vmem:[%s4480 + $0x1c9] sm:$0xff]
  %v4894 = vld [vmem:[%s4480 + $0x1d1] sm:$0xff]
  %v4895 = vld [vmem:[%s4480 + $0x1e9] sm:$0xff]
  %v4896 = vld [vmem:[%s4480 + $0x1f1] sm:$0xff]
  %v4897 = vld [vmem:[%s4480 + $0x249] sm:$0xff]
  %v4898 = vld [vmem:[%s4480 + $0x251] sm:$0xff]
  %v4899 = vld [vmem:[%s4480 + $0x269] sm:$0xff]
  %v4900 = vld [vmem:[%s4480 + $0x271] sm:$0xff]
  %v4901 = vld [vmem:[%s4480 + $0x289] sm:$0xff]
  %v4902 = vld [vmem:[%s4480 + $0x291] sm:$0xff]
  %v4903 = vld [vmem:[%s4480 + $0x2a9] sm:$0xff]
  %v4904 = vld [vmem:[%s4480 + $0x2b1] sm:$0xff]
  %v4905 = vld [vmem:[%s4480 + $0x2c9] sm:$0xff]
  %v4906 = vld [vmem:[%s4480 + $0x2d1] sm:$0xff]
  %v4907 = vld [vmem:[%s4480 + $0x2e9] sm:$0xff]
  %v4908 = vld [vmem:[%s4480 + $0x2f1] sm:$0xff]
  %v4909 = vld [vmem:[%s4480 + $0x309] sm:$0xff]
  %v4910 = vld [vmem:[%s4480 + $0x311] sm:$0xff]
  %v4911 = vld [vmem:[%s4480 + $0x329] sm:$0xff]
  %v4912 = vld [vmem:[%s4480 + $0x331] sm:$0xff]
  %v4913 = vld [vmem:[%s4480 + $0x349] sm:$0xff]
  %v4914 = vld [vmem:[%s4480 + $0x351] sm:$0xff]
  %v4915 = vld [vmem:[%s4480 + $0x369] sm:$0xff]
  %v4916 = vld [vmem:[%s4480 + $0x371] sm:$0xff]
  %v4917 = vld [vmem:[%s4480 + $0x389] sm:$0xff]
  %v4918 = vld [vmem:[%s4480 + $0x391] sm:$0xff]
  %v4919 = vld [vmem:[%s4480 + $0x3a9] sm:$0xff]
  %v4920 = vld [vmem:[%s4480 + $0x3b1] sm:$0xff]
  %v4921 = vld [vmem:[%s4480 + $0x3c9] sm:$0xff]
  %v4922 = vld [vmem:[%s4480 + $0x3d1] sm:$0xff]
  %v4923 = vld [vmem:[%s4480 + $0x3e9] sm:$0xff]
  %v4924 = vld [vmem:[%s4480 + $0x3f1] sm:$0xff]
  %v4925 = vld [vmem:[%s4480 + $0x409] sm:$0xff]
  %v4926 = vld [vmem:[%s4480 + $0x411] sm:$0xff]
  %v4927 = vld [vmem:[%s4480 + $0x429] sm:$0xff]
  %v4928 = vld [vmem:[%s4480 + $0x431] sm:$0xff]
  %s4929 = scalar_lea.vmem [#allocation3], 64
  %v4930 = vld [vmem:[%s4929 + $0x7] sm:$0xff]
  %v4931 = vld [vmem:[%s4929 + $0xf] sm:$0xff]
  %v4932 = vld [vmem:[%s4929 + $0x27] sm:$0xff]
  %v4933 = vld [vmem:[%s4929 + $0x2f] sm:$0xff]
  %v4934 = vld [vmem:[%s4929 + $0x47] sm:$0xff]
  %v4935 = vld [vmem:[%s4929 + $0x4f] sm:$0xff]
  %v4936 = vld [vmem:[%s4929 + $0x67] sm:$0xff]
  %v4937 = vld [vmem:[%s4929 + $0x6f] sm:$0xff]
  %v4938 = vld [vmem:[%s4929 + $0x87] sm:$0xff]
  %v4939 = vld [vmem:[%s4929 + $0x8f] sm:$0xff]
  %v4940 = vld [vmem:[%s4929 + $0xa7] sm:$0xff]
  %v4941 = vld [vmem:[%s4929 + $0xaf] sm:$0xff]
  %v4942 = vld [vmem:[%s4929 + $0xc7] sm:$0xff]
  %v4943 = vld [vmem:[%s4929 + $0xcf] sm:$0xff]
  %v4944 = vld [vmem:[%s4929 + $0xe7] sm:$0xff]
  %v4945 = vld [vmem:[%s4929 + $0xef] sm:$0xff]
  %v4946 = vld [vmem:[%s4929 + $0x107] sm:$0xff]
  %v4947 = vld [vmem:[%s4929 + $0x10f] sm:$0xff]
  %v4948 = vld [vmem:[%s4929 + $0x127] sm:$0xff]
  %v4949 = vld [vmem:[%s4929 + $0x12f] sm:$0xff]
  %v4950 = vld [vmem:[%s4929 + $0x147] sm:$0xff]
  %v4951 = vld [vmem:[%s4929 + $0x14f] sm:$0xff]
  %v4952 = vld [vmem:[%s4929 + $0x167] sm:$0xff]
  %v4953 = vld [vmem:[%s4929 + $0x16f] sm:$0xff]
  %v4954 = vld [vmem:[%s4929 + $0x187] sm:$0xff]
  %v4955 = vld [vmem:[%s4929 + $0x18f] sm:$0xff]
  %v4956 = vld [vmem:[%s4929 + $0x1a7] sm:$0xff]
  %v4957 = vld [vmem:[%s4929 + $0x1af] sm:$0xff]
  %v4958 = vld [vmem:[%s4929 + $0x1c7] sm:$0xff]
  %v4959 = vld [vmem:[%s4929 + $0x1cf] sm:$0xff]
  %v4960 = vld [vmem:[%s4929 + $0x1e7] sm:$0xff]
  %v4961 = vld [vmem:[%s4929 + $0x1ef] sm:$0xff]
  %v4962 = vld [vmem:[%s4929 + $0x247] sm:$0xff]
  %v4963 = vld [vmem:[%s4929 + $0x24f] sm:$0xff]
  %v4964 = vld [vmem:[%s4929 + $0x267] sm:$0xff]
  %v4965 = vld [vmem:[%s4929 + $0x26f] sm:$0xff]
  %v4966 = vld [vmem:[%s4929 + $0x287] sm:$0xff]
  %v4967 = vld [vmem:[%s4929 + $0x28f] sm:$0xff]
  %v4968 = vld [vmem:[%s4929 + $0x2a7] sm:$0xff]
  %v4969 = vld [vmem:[%s4929 + $0x2af] sm:$0xff]
  %v4970 = vld [vmem:[%s4929 + $0x2c7] sm:$0xff]
  %v4971 = vld [vmem:[%s4929 + $0x2cf] sm:$0xff]
  %v4972 = vld [vmem:[%s4929 + $0x2e7] sm:$0xff]
  %v4973 = vld [vmem:[%s4929 + $0x2ef] sm:$0xff]
  %v4974 = vld [vmem:[%s4929 + $0x307] sm:$0xff]
  %v4975 = vld [vmem:[%s4929 + $0x30f] sm:$0xff]
  %v4976 = vld [vmem:[%s4929 + $0x327] sm:$0xff]
  %v4977 = vld [vmem:[%s4929 + $0x32f] sm:$0xff]
  %v4978 = vld [vmem:[%s4929 + $0x347] sm:$0xff]
  %v4979 = vld [vmem:[%s4929 + $0x34f] sm:$0xff]
  %v4980 = vld [vmem:[%s4929 + $0x367] sm:$0xff]
  %v4981 = vld [vmem:[%s4929 + $0x36f] sm:$0xff]
  %v4982 = vld [vmem:[%s4929 + $0x387] sm:$0xff]
  %v4983 = vld [vmem:[%s4929 + $0x38f] sm:$0xff]
  %v4984 = vld [vmem:[%s4929 + $0x3a7] sm:$0xff]
  %v4985 = vld [vmem:[%s4929 + $0x3af] sm:$0xff]
  %v4986 = vld [vmem:[%s4929 + $0x3c7] sm:$0xff]
  %v4987 = vld [vmem:[%s4929 + $0x3cf] sm:$0xff]
  %v4988 = vld [vmem:[%s4929 + $0x3e7] sm:$0xff]
  %v4989 = vld [vmem:[%s4929 + $0x3ef] sm:$0xff]
  %v4990 = vld [vmem:[%s4929 + $0x407] sm:$0xff]
  %v4991 = vld [vmem:[%s4929 + $0x40f] sm:$0xff]
  %v4992 = vld [vmem:[%s4929 + $0x427] sm:$0xff]
  %v4993 = vld [vmem:[%s4929 + $0x42f] sm:$0xff]
  %v4994 = vld [vmem:[%s4929 + $0x8] sm:$0xff]
  %v4995 = vld [vmem:[%s4929 + $0x10] sm:$0xff]
  %v4996 = vld [vmem:[%s4929 + $0x28] sm:$0xff]
  %v4997 = vld [vmem:[%s4929 + $0x30] sm:$0xff]
  %v4998 = vld [vmem:[%s4929 + $0x48] sm:$0xff]
  %v4999 = vld [vmem:[%s4929 + $0x50] sm:$0xff]
  %v5000 = vld [vmem:[%s4929 + $0x68] sm:$0xff]
  %v5001 = vld [vmem:[%s4929 + $0x70] sm:$0xff]
  %v5002 = vld [vmem:[%s4929 + $0x88] sm:$0xff]
  %v5003 = vld [vmem:[%s4929 + $0x90] sm:$0xff]
  %v5004 = vld [vmem:[%s4929 + $0xa8] sm:$0xff]
  %v5005 = vld [vmem:[%s4929 + $0xb0] sm:$0xff]
  %v5006 = vld [vmem:[%s4929 + $0xc8] sm:$0xff]
  %v5007 = vld [vmem:[%s4929 + $0xd0] sm:$0xff]
  %v5008 = vld [vmem:[%s4929 + $0xe8] sm:$0xff]
  %v5009 = vld [vmem:[%s4929 + $0xf0] sm:$0xff]
  %v5010 = vld [vmem:[%s4929 + $0x108] sm:$0xff]
  %v5011 = vld [vmem:[%s4929 + $0x110] sm:$0xff]
  %v5012 = vld [vmem:[%s4929 + $0x128] sm:$0xff]
  %v5013 = vld [vmem:[%s4929 + $0x130] sm:$0xff]
  %v5014 = vld [vmem:[%s4929 + $0x148] sm:$0xff]
  %v5015 = vld [vmem:[%s4929 + $0x150] sm:$0xff]
  %v5016 = vld [vmem:[%s4929 + $0x168] sm:$0xff]
  %v5017 = vld [vmem:[%s4929 + $0x170] sm:$0xff]
  %v5018 = vld [vmem:[%s4929 + $0x188] sm:$0xff]
  %v5019 = vld [vmem:[%s4929 + $0x190] sm:$0xff]
  %v5020 = vld [vmem:[%s4929 + $0x1a8] sm:$0xff]
  %v5021 = vld [vmem:[%s4929 + $0x1b0] sm:$0xff]
  %v5022 = vld [vmem:[%s4929 + $0x1c8] sm:$0xff]
  %v5023 = vld [vmem:[%s4929 + $0x1d0] sm:$0xff]
  %v5024 = vld [vmem:[%s4929 + $0x1e8] sm:$0xff]
  %v5025 = vld [vmem:[%s4929 + $0x1f0] sm:$0xff]
  %v5026 = vld [vmem:[%s4929 + $0x248] sm:$0xff]
  %v5027 = vld [vmem:[%s4929 + $0x250] sm:$0xff]
  %v5028 = vld [vmem:[%s4929 + $0x268] sm:$0xff]
  %v5029 = vld [vmem:[%s4929 + $0x270] sm:$0xff]
  %v5030 = vld [vmem:[%s4929 + $0x288] sm:$0xff]
  %v5031 = vld [vmem:[%s4929 + $0x290] sm:$0xff]
  %v5032 = vld [vmem:[%s4929 + $0x2a8] sm:$0xff]
  %v5033 = vld [vmem:[%s4929 + $0x2b0] sm:$0xff]
  %v5034 = vld [vmem:[%s4929 + $0x2c8] sm:$0xff]
  %v5035 = vld [vmem:[%s4929 + $0x2d0] sm:$0xff]
  %v5036 = vld [vmem:[%s4929 + $0x2e8] sm:$0xff]
  %v5037 = vld [vmem:[%s4929 + $0x2f0] sm:$0xff]
  %v5038 = vld [vmem:[%s4929 + $0x308] sm:$0xff]
  %v5039 = vld [vmem:[%s4929 + $0x310] sm:$0xff]
  %v5040 = vld [vmem:[%s4929 + $0x328] sm:$0xff]
  %v5041 = vld [vmem:[%s4929 + $0x330] sm:$0xff]
  %v5042 = vld [vmem:[%s4929 + $0x348] sm:$0xff]
  %v5043 = vld [vmem:[%s4929 + $0x350] sm:$0xff]
  %v5044 = vld [vmem:[%s4929 + $0x368] sm:$0xff]
  %v5045 = vld [vmem:[%s4929 + $0x370] sm:$0xff]
  %v5046 = vld [vmem:[%s4929 + $0x388] sm:$0xff]
  %v5047 = vld [vmem:[%s4929 + $0x390] sm:$0xff]
  %v5048 = vld [vmem:[%s4929 + $0x3a8] sm:$0xff]
  %v5049 = vld [vmem:[%s4929 + $0x3b0] sm:$0xff]
  %v5050 = vld [vmem:[%s4929 + $0x3c8] sm:$0xff]
  %v5051 = vld [vmem:[%s4929 + $0x3d0] sm:$0xff]
  %v5052 = vld [vmem:[%s4929 + $0x3e8] sm:$0xff]
  %v5053 = vld [vmem:[%s4929 + $0x3f0] sm:$0xff]
  %v5054 = vld [vmem:[%s4929 + $0x408] sm:$0xff]
  %v5055 = vld [vmem:[%s4929 + $0x410] sm:$0xff]
  %v5056 = vld [vmem:[%s4929 + $0x428] sm:$0xff]
  %v5057 = vld [vmem:[%s4929 + $0x430] sm:$0xff]
  %v5058 = vld [vmem:[%s4929 + $0x9] sm:$0xff]
  %v5059 = vld [vmem:[%s4929 + $0x11] sm:$0xff]
  %v5060 = vld [vmem:[%s4929 + $0x29] sm:$0xff]
  %v5061 = vld [vmem:[%s4929 + $0x31] sm:$0xff]
  %v5062 = vld [vmem:[%s4929 + $0x49] sm:$0xff]
  %v5063 = vld [vmem:[%s4929 + $0x51] sm:$0xff]
  %v5064 = vld [vmem:[%s4929 + $0x69] sm:$0xff]
  %v5065 = vld [vmem:[%s4929 + $0x71] sm:$0xff]
  %v5066 = vld [vmem:[%s4929 + $0x89] sm:$0xff]
  %v5067 = vld [vmem:[%s4929 + $0x91] sm:$0xff]
  %v5068 = vld [vmem:[%s4929 + $0xa9] sm:$0xff]
  %v5069 = vld [vmem:[%s4929 + $0xb1] sm:$0xff]
  %v5070 = vld [vmem:[%s4929 + $0xc9] sm:$0xff]
  %v5071 = vld [vmem:[%s4929 + $0xd1] sm:$0xff]
  %v5072 = vld [vmem:[%s4929 + $0xe9] sm:$0xff]
  %v5073 = vld [vmem:[%s4929 + $0xf1] sm:$0xff]
  %v5074 = vld [vmem:[%s4929 + $0x109] sm:$0xff]
  %v5075 = vld [vmem:[%s4929 + $0x111] sm:$0xff]
  %v5076 = vld [vmem:[%s4929 + $0x129] sm:$0xff]
  %v5077 = vld [vmem:[%s4929 + $0x131] sm:$0xff]
  %v5078 = vld [vmem:[%s4929 + $0x149] sm:$0xff]
  %v5079 = vld [vmem:[%s4929 + $0x151] sm:$0xff]
  %v5080 = vld [vmem:[%s4929 + $0x169] sm:$0xff]
  %v5081 = vld [vmem:[%s4929 + $0x171] sm:$0xff]
  %v5082 = vld [vmem:[%s4929 + $0x189] sm:$0xff]
  %v5083 = vld [vmem:[%s4929 + $0x191] sm:$0xff]
  %v5084 = vld [vmem:[%s4929 + $0x1a9] sm:$0xff]
  %v5085 = vld [vmem:[%s4929 + $0x1b1] sm:$0xff]
  %v5086 = vld [vmem:[%s4929 + $0x1c9] sm:$0xff]
  %v5087 = vld [vmem:[%s4929 + $0x1d1] sm:$0xff]
  %v5088 = vld [vmem:[%s4929 + $0x1e9] sm:$0xff]
  %v5089 = vld [vmem:[%s4929 + $0x1f1] sm:$0xff]
  %v5090 = vld [vmem:[%s4929 + $0x249] sm:$0xff]
  %v5091 = vld [vmem:[%s4929 + $0x251] sm:$0xff]
  %v5092 = vld [vmem:[%s4929 + $0x269] sm:$0xff]
  %v5093 = vld [vmem:[%s4929 + $0x271] sm:$0xff]
  %v5094 = vld [vmem:[%s4929 + $0x289] sm:$0xff]
  %v5095 = vld [vmem:[%s4929 + $0x291] sm:$0xff]
  %v5096 = vld [vmem:[%s4929 + $0x2a9] sm:$0xff]
  %v5097 = vld [vmem:[%s4929 + $0x2b1] sm:$0xff]
  %v5098 = vld [vmem:[%s4929 + $0x2c9] sm:$0xff]
  %v5099 = vld [vmem:[%s4929 + $0x2d1] sm:$0xff]
  %v5100 = vld [vmem:[%s4929 + $0x2e9] sm:$0xff]
  %v5101 = vld [vmem:[%s4929 + $0x2f1] sm:$0xff]
  %v5102 = vld [vmem:[%s4929 + $0x309] sm:$0xff]
  %v5103 = vld [vmem:[%s4929 + $0x311] sm:$0xff]
  %v5104 = vld [vmem:[%s4929 + $0x329] sm:$0xff]
  %v5105 = vld [vmem:[%s4929 + $0x331] sm:$0xff]
  %v5106 = vld [vmem:[%s4929 + $0x349] sm:$0xff]
  %v5107 = vld [vmem:[%s4929 + $0x351] sm:$0xff]
  %v5108 = vld [vmem:[%s4929 + $0x369] sm:$0xff]
  %v5109 = vld [vmem:[%s4929 + $0x371] sm:$0xff]
  %v5110 = vld [vmem:[%s4929 + $0x389] sm:$0xff]
  %v5111 = vld [vmem:[%s4929 + $0x391] sm:$0xff]
  %v5112 = vld [vmem:[%s4929 + $0x3a9] sm:$0xff]
  %v5113 = vld [vmem:[%s4929 + $0x3b1] sm:$0xff]
  %v5114 = vld [vmem:[%s4929 + $0x3c9] sm:$0xff]
  %v5115 = vld [vmem:[%s4929 + $0x3d1] sm:$0xff]
  %v5116 = vld [vmem:[%s4929 + $0x3e9] sm:$0xff]
  %v5117 = vld [vmem:[%s4929 + $0x3f1] sm:$0xff]
  %v5118 = vld [vmem:[%s4929 + $0x409] sm:$0xff]
  %v5119 = vld [vmem:[%s4929 + $0x411] sm:$0xff]
  %v5120 = vld [vmem:[%s4929 + $0x429] sm:$0xff]
  %v5121 = vld [vmem:[%s4929 + $0x431] sm:$0xff]
  %5186 = vrot.lane.b32.xlu0 %v4609, 16
  %v5187 = vpop.permute.xlu0 %5186
  %5188 = vrot.lane.b32.xlu0 %v4610, 16
  %v5189 = vpop.permute.xlu0 %5188
  %5190 = vrot.lane.b32.xlu0 %v4611, 16
  %v5191 = vpop.permute.xlu0 %5190
  %5192 = vrot.lane.b32.xlu0 %v4612, 16
  %v5193 = vpop.permute.xlu0 %5192
  %5194 = vrot.lane.b32.xlu0 %v4613, 16
  %v5195 = vpop.permute.xlu0 %5194
  %5196 = vrot.lane.b32.xlu0 %v4614, 16
  %v5197 = vpop.permute.xlu0 %5196
  %5198 = vrot.lane.b32.xlu0 %v4615, 16
  %v5199 = vpop.permute.xlu0 %5198
  %5200 = vrot.lane.b32.xlu0 %v4616, 16
  %v5201 = vpop.permute.xlu0 %5200
  %5202 = vrot.lane.b32.xlu0 %v4617, 16
  %v5203 = vpop.permute.xlu0 %5202
  %5204 = vrot.lane.b32.xlu0 %v4618, 16
  %v5205 = vpop.permute.xlu0 %5204
  %5206 = vrot.lane.b32.xlu0 %v4619, 16
  %v5207 = vpop.permute.xlu0 %5206
  %5208 = vrot.lane.b32.xlu0 %v4620, 16
  %v5209 = vpop.permute.xlu0 %5208
  %5210 = vrot.lane.b32.xlu0 %v4621, 16
  %v5211 = vpop.permute.xlu0 %5210
  %5212 = vrot.lane.b32.xlu0 %v4622, 16
  %v5213 = vpop.permute.xlu0 %5212
  %5214 = vrot.lane.b32.xlu0 %v4623, 16
  %v5215 = vpop.permute.xlu0 %5214
  %5216 = vrot.lane.b32.xlu0 %v4624, 16
  %v5217 = vpop.permute.xlu0 %5216
  %5218 = vrot.lane.b32.xlu0 %v4625, 16
  %v5219 = vpop.permute.xlu0 %5218
  %5220 = vrot.lane.b32.xlu0 %v4626, 16
  %v5221 = vpop.permute.xlu0 %5220
  %5222 = vrot.lane.b32.xlu0 %v4627, 16
  %v5223 = vpop.permute.xlu0 %5222
  %5224 = vrot.lane.b32.xlu0 %v4628, 16
  %v5225 = vpop.permute.xlu0 %5224
  %5226 = vrot.lane.b32.xlu0 %v4629, 16
  %v5227 = vpop.permute.xlu0 %5226
  %5228 = vrot.lane.b32.xlu0 %v4630, 16
  %v5229 = vpop.permute.xlu0 %5228
  %5230 = vrot.lane.b32.xlu0 %v4631, 16
  %v5231 = vpop.permute.xlu0 %5230
  %5232 = vrot.lane.b32.xlu0 %v4632, 16
  %v5233 = vpop.permute.xlu0 %5232
  %5234 = vrot.lane.b32.xlu0 %v4633, 16
  %v5235 = vpop.permute.xlu0 %5234
  %5236 = vrot.lane.b32.xlu0 %v4634, 16
  %v5237 = vpop.permute.xlu0 %5236
  %5238 = vrot.lane.b32.xlu0 %v4635, 16
  %v5239 = vpop.permute.xlu0 %5238
  %5240 = vrot.lane.b32.xlu0 %v4636, 16
  %v5241 = vpop.permute.xlu0 %5240
  %5242 = vrot.lane.b32.xlu0 %v4637, 16
  %v5243 = vpop.permute.xlu0 %5242
  %5244 = vrot.lane.b32.xlu0 %v4638, 16
  %v5245 = vpop.permute.xlu0 %5244
  %5246 = vrot.lane.b32.xlu0 %v4639, 16
  %v5247 = vpop.permute.xlu0 %5246
  %5248 = vrot.lane.b32.xlu0 %v4640, 16
  %v5249 = vpop.permute.xlu0 %5248
  %5250 = vrot.lane.b32.xlu0 %v4641, 16
  %v5251 = vpop.permute.xlu0 %5250
  %5252 = vrot.lane.b32.xlu0 %v4642, 16
  %v5253 = vpop.permute.xlu0 %5252
  %5254 = vrot.lane.b32.xlu0 %v4643, 16
  %v5255 = vpop.permute.xlu0 %5254
  %5256 = vrot.lane.b32.xlu0 %v4644, 16
  %v5257 = vpop.permute.xlu0 %5256
  %5258 = vrot.lane.b32.xlu0 %v4645, 16
  %v5259 = vpop.permute.xlu0 %5258
  %5260 = vrot.lane.b32.xlu0 %v4646, 16
  %v5261 = vpop.permute.xlu0 %5260
  %5262 = vrot.lane.b32.xlu0 %v4647, 16
  %v5263 = vpop.permute.xlu0 %5262
  %5264 = vrot.lane.b32.xlu0 %v4648, 16
  %v5265 = vpop.permute.xlu0 %5264
  %5266 = vrot.lane.b32.xlu0 %v4649, 16
  %v5267 = vpop.permute.xlu0 %5266
  %5268 = vrot.lane.b32.xlu0 %v4650, 16
  %v5269 = vpop.permute.xlu0 %5268
  %5270 = vrot.lane.b32.xlu0 %v4651, 16
  %v5271 = vpop.permute.xlu0 %5270
  %5272 = vrot.lane.b32.xlu0 %v4652, 16
  %v5273 = vpop.permute.xlu0 %5272
  %5274 = vrot.lane.b32.xlu0 %v4653, 16
  %v5275 = vpop.permute.xlu0 %5274
  %5276 = vrot.lane.b32.xlu0 %v4654, 16
  %v5277 = vpop.permute.xlu0 %5276
  %5278 = vrot.lane.b32.xlu0 %v4655, 16
  %v5279 = vpop.permute.xlu0 %5278
  %5280 = vrot.lane.b32.xlu0 %v4656, 16
  %v5281 = vpop.permute.xlu0 %5280
  %5282 = vrot.lane.b32.xlu0 %v4657, 16
  %v5283 = vpop.permute.xlu0 %5282
  %5284 = vrot.lane.b32.xlu0 %v4658, 16
  %v5285 = vpop.permute.xlu0 %5284
  %5286 = vrot.lane.b32.xlu0 %v4659, 16
  %v5287 = vpop.permute.xlu0 %5286
  %5288 = vrot.lane.b32.xlu0 %v4660, 16
  %v5289 = vpop.permute.xlu0 %5288
  %5290 = vrot.lane.b32.xlu0 %v4661, 16
  %v5291 = vpop.permute.xlu0 %5290
  %5292 = vrot.lane.b32.xlu0 %v4662, 16
  %v5293 = vpop.permute.xlu0 %5292
  %5294 = vrot.lane.b32.xlu0 %v4663, 16
  %v5295 = vpop.permute.xlu0 %5294
  %5296 = vrot.lane.b32.xlu0 %v4664, 16
  %v5297 = vpop.permute.xlu0 %5296
  %5298 = vrot.lane.b32.xlu0 %v4665, 16
  %v5299 = vpop.permute.xlu0 %5298
  %5300 = vrot.lane.b32.xlu0 %v4666, 16
  %v5301 = vpop.permute.xlu0 %5300
  %5302 = vrot.lane.b32.xlu0 %v4667, 16
  %v5303 = vpop.permute.xlu0 %5302
  %5304 = vrot.lane.b32.xlu0 %v4668, 16
  %v5305 = vpop.permute.xlu0 %5304
  %5306 = vrot.lane.b32.xlu0 %v4669, 16
  %v5307 = vpop.permute.xlu0 %5306
  %5308 = vrot.lane.b32.xlu0 %v4670, 16
  %v5309 = vpop.permute.xlu0 %5308
  %5310 = vrot.lane.b32.xlu0 %v4671, 16
  %v5311 = vpop.permute.xlu0 %5310
  %5312 = vrot.lane.b32.xlu0 %v4672, 16
  %v5313 = vpop.permute.xlu0 %5312
  %5442 = vrot.lane.b32.xlu0 %v4673, 32
  %v5443 = vpop.permute.xlu0 %5442
  %5444 = vrot.lane.b32.xlu0 %v4674, 32
  %v5445 = vpop.permute.xlu0 %5444
  %5446 = vrot.lane.b32.xlu0 %v4675, 32
  %v5447 = vpop.permute.xlu0 %5446
  %5448 = vrot.lane.b32.xlu0 %v4676, 32
  %v5449 = vpop.permute.xlu0 %5448
  %5450 = vrot.lane.b32.xlu0 %v4677, 32
  %v5451 = vpop.permute.xlu0 %5450
  %5452 = vrot.lane.b32.xlu0 %v4678, 32
  %v5453 = vpop.permute.xlu0 %5452
  %5454 = vrot.lane.b32.xlu0 %v4679, 32
  %v5455 = vpop.permute.xlu0 %5454
  %5456 = vrot.lane.b32.xlu0 %v4680, 32
  %v5457 = vpop.permute.xlu0 %5456
  %5458 = vrot.lane.b32.xlu0 %v4681, 32
  %v5459 = vpop.permute.xlu0 %5458
  %5460 = vrot.lane.b32.xlu0 %v4682, 32
  %v5461 = vpop.permute.xlu0 %5460
  %5462 = vrot.lane.b32.xlu0 %v4683, 32
  %v5463 = vpop.permute.xlu0 %5462
  %5464 = vrot.lane.b32.xlu0 %v4684, 32
  %v5465 = vpop.permute.xlu0 %5464
  %5466 = vrot.lane.b32.xlu0 %v4685, 32
  %v5467 = vpop.permute.xlu0 %5466
  %5468 = vrot.lane.b32.xlu0 %v4686, 32
  %v5469 = vpop.permute.xlu0 %5468
  %5470 = vrot.lane.b32.xlu0 %v4687, 32
  %v5471 = vpop.permute.xlu0 %5470
  %5472 = vrot.lane.b32.xlu0 %v4688, 32
  %v5473 = vpop.permute.xlu0 %5472
  %5474 = vrot.lane.b32.xlu0 %v4689, 32
  %v5475 = vpop.permute.xlu0 %5474
  %5476 = vrot.lane.b32.xlu0 %v4690, 32
  %v5477 = vpop.permute.xlu0 %5476
  %5478 = vrot.lane.b32.xlu0 %v4691, 32
  %v5479 = vpop.permute.xlu0 %5478
  %5480 = vrot.lane.b32.xlu0 %v4692, 32
  %v5481 = vpop.permute.xlu0 %5480
  %5482 = vrot.lane.b32.xlu0 %v4693, 32
  %v5483 = vpop.permute.xlu0 %5482
  %5484 = vrot.lane.b32.xlu0 %v4694, 32
  %v5485 = vpop.permute.xlu0 %5484
  %5486 = vrot.lane.b32.xlu0 %v4695, 32
  %v5487 = vpop.permute.xlu0 %5486
  %5488 = vrot.lane.b32.xlu0 %v4696, 32
  %v5489 = vpop.permute.xlu0 %5488
  %5490 = vrot.lane.b32.xlu0 %v4697, 32
  %v5491 = vpop.permute.xlu0 %5490
  %5492 = vrot.lane.b32.xlu0 %v4698, 32
  %v5493 = vpop.permute.xlu0 %5492
  %5494 = vrot.lane.b32.xlu0 %v4699, 32
  %v5495 = vpop.permute.xlu0 %5494
  %5496 = vrot.lane.b32.xlu0 %v4700, 32
  %v5497 = vpop.permute.xlu0 %5496
  %5498 = vrot.lane.b32.xlu0 %v4701, 32
  %v5499 = vpop.permute.xlu0 %5498
  %5500 = vrot.lane.b32.xlu0 %v4702, 32
  %v5501 = vpop.permute.xlu0 %5500
  %5502 = vrot.lane.b32.xlu0 %v4703, 32
  %v5503 = vpop.permute.xlu0 %5502
  %5504 = vrot.lane.b32.xlu0 %v4704, 32
  %v5505 = vpop.permute.xlu0 %5504
  %5506 = vrot.lane.b32.xlu0 %v4705, 32
  %v5507 = vpop.permute.xlu0 %5506
  %5508 = vrot.lane.b32.xlu0 %v4706, 32
  %v5509 = vpop.permute.xlu0 %5508
  %5510 = vrot.lane.b32.xlu0 %v4707, 32
  %v5511 = vpop.permute.xlu0 %5510
  %5512 = vrot.lane.b32.xlu0 %v4708, 32
  %v5513 = vpop.permute.xlu0 %5512
  %5514 = vrot.lane.b32.xlu0 %v4709, 32
  %v5515 = vpop.permute.xlu0 %5514
  %5516 = vrot.lane.b32.xlu0 %v4710, 32
  %v5517 = vpop.permute.xlu0 %5516
  %5518 = vrot.lane.b32.xlu0 %v4711, 32
  %v5519 = vpop.permute.xlu0 %5518
  %5520 = vrot.lane.b32.xlu0 %v4712, 32
  %v5521 = vpop.permute.xlu0 %5520
  %5522 = vrot.lane.b32.xlu0 %v4713, 32
  %v5523 = vpop.permute.xlu0 %5522
  %5524 = vrot.lane.b32.xlu0 %v4714, 32
  %v5525 = vpop.permute.xlu0 %5524
  %5526 = vrot.lane.b32.xlu0 %v4715, 32
  %v5527 = vpop.permute.xlu0 %5526
  %5528 = vrot.lane.b32.xlu0 %v4716, 32
  %v5529 = vpop.permute.xlu0 %5528
  %5530 = vrot.lane.b32.xlu0 %v4717, 32
  %v5531 = vpop.permute.xlu0 %5530
  %5532 = vrot.lane.b32.xlu0 %v4718, 32
  %v5533 = vpop.permute.xlu0 %5532
  %5534 = vrot.lane.b32.xlu0 %v4719, 32
  %v5535 = vpop.permute.xlu0 %5534
  %5536 = vrot.lane.b32.xlu0 %v4720, 32
  %v5537 = vpop.permute.xlu0 %5536
  %5538 = vrot.lane.b32.xlu0 %v4721, 32
  %v5539 = vpop.permute.xlu0 %5538
  %5540 = vrot.lane.b32.xlu0 %v4722, 32
  %v5541 = vpop.permute.xlu0 %5540
  %5542 = vrot.lane.b32.xlu0 %v4723, 32
  %v5543 = vpop.permute.xlu0 %5542
  %5544 = vrot.lane.b32.xlu0 %v4724, 32
  %v5545 = vpop.permute.xlu0 %5544
  %5546 = vrot.lane.b32.xlu0 %v4725, 32
  %v5547 = vpop.permute.xlu0 %5546
  %5548 = vrot.lane.b32.xlu0 %v4726, 32
  %v5549 = vpop.permute.xlu0 %5548
  %5550 = vrot.lane.b32.xlu0 %v4727, 32
  %v5551 = vpop.permute.xlu0 %5550
  %5552 = vrot.lane.b32.xlu0 %v4728, 32
  %v5553 = vpop.permute.xlu0 %5552
  %5554 = vrot.lane.b32.xlu0 %v4729, 32
  %v5555 = vpop.permute.xlu0 %5554
  %5556 = vrot.lane.b32.xlu0 %v4730, 32
  %v5557 = vpop.permute.xlu0 %5556
  %5558 = vrot.lane.b32.xlu0 %v4731, 32
  %v5559 = vpop.permute.xlu0 %5558
  %5560 = vrot.lane.b32.xlu0 %v4732, 32
  %v5561 = vpop.permute.xlu0 %5560
  %5562 = vrot.lane.b32.xlu0 %v4733, 32
  %v5563 = vpop.permute.xlu0 %5562
  %5564 = vrot.lane.b32.xlu0 %v4734, 32
  %v5565 = vpop.permute.xlu0 %5564
  %5566 = vrot.lane.b32.xlu0 %v4735, 32
  %v5567 = vpop.permute.xlu0 %5566
  %5568 = vrot.lane.b32.xlu0 %v4736, 32
  %v5569 = vpop.permute.xlu0 %5568
  %5698 = vrot.lane.b32.xlu0 %v4737, 48
  %v5699 = vpop.permute.xlu0 %5698
  %5700 = vrot.lane.b32.xlu0 %v4738, 48
  %v5701 = vpop.permute.xlu0 %5700
  %5702 = vrot.lane.b32.xlu0 %v4739, 48
  %v5703 = vpop.permute.xlu0 %5702
  %5704 = vrot.lane.b32.xlu0 %v4740, 48
  %v5705 = vpop.permute.xlu0 %5704
  %5706 = vrot.lane.b32.xlu0 %v4741, 48
  %v5707 = vpop.permute.xlu0 %5706
  %5708 = vrot.lane.b32.xlu0 %v4742, 48
  %v5709 = vpop.permute.xlu0 %5708
  %5710 = vrot.lane.b32.xlu0 %v4743, 48
  %v5711 = vpop.permute.xlu0 %5710
  %5712 = vrot.lane.b32.xlu0 %v4744, 48
  %v5713 = vpop.permute.xlu0 %5712
  %5714 = vrot.lane.b32.xlu0 %v4745, 48
  %v5715 = vpop.permute.xlu0 %5714
  %5716 = vrot.lane.b32.xlu0 %v4746, 48
  %v5717 = vpop.permute.xlu0 %5716
  %5718 = vrot.lane.b32.xlu0 %v4747, 48
  %v5719 = vpop.permute.xlu0 %5718
  %5720 = vrot.lane.b32.xlu0 %v4748, 48
  %v5721 = vpop.permute.xlu0 %5720
  %5722 = vrot.lane.b32.xlu0 %v4749, 48
  %v5723 = vpop.permute.xlu0 %5722
  %5724 = vrot.lane.b32.xlu0 %v4750, 48
  %v5725 = vpop.permute.xlu0 %5724
  %5726 = vrot.lane.b32.xlu0 %v4751, 48
  %v5727 = vpop.permute.xlu0 %5726
  %5728 = vrot.lane.b32.xlu0 %v4752, 48
  %v5729 = vpop.permute.xlu0 %5728
  %5730 = vrot.lane.b32.xlu0 %v4753, 48
  %v5731 = vpop.permute.xlu0 %5730
  %5732 = vrot.lane.b32.xlu0 %v4754, 48
  %v5733 = vpop.permute.xlu0 %5732
  %5734 = vrot.lane.b32.xlu0 %v4755, 48
  %v5735 = vpop.permute.xlu0 %5734
  %5736 = vrot.lane.b32.xlu0 %v4756, 48
  %v5737 = vpop.permute.xlu0 %5736
  %5738 = vrot.lane.b32.xlu0 %v4757, 48
  %v5739 = vpop.permute.xlu0 %5738
  %5740 = vrot.lane.b32.xlu0 %v4758, 48
  %v5741 = vpop.permute.xlu0 %5740
  %5742 = vrot.lane.b32.xlu0 %v4759, 48
  %v5743 = vpop.permute.xlu0 %5742
  %5744 = vrot.lane.b32.xlu0 %v4760, 48
  %v5745 = vpop.permute.xlu0 %5744
  %5746 = vrot.lane.b32.xlu0 %v4761, 48
  %v5747 = vpop.permute.xlu0 %5746
  %5748 = vrot.lane.b32.xlu0 %v4762, 48
  %v5749 = vpop.permute.xlu0 %5748
  %5750 = vrot.lane.b32.xlu0 %v4763, 48
  %v5751 = vpop.permute.xlu0 %5750
  %5752 = vrot.lane.b32.xlu0 %v4764, 48
  %v5753 = vpop.permute.xlu0 %5752
  %5754 = vrot.lane.b32.xlu0 %v4765, 48
  %v5755 = vpop.permute.xlu0 %5754
  %5756 = vrot.lane.b32.xlu0 %v4766, 48
  %v5757 = vpop.permute.xlu0 %5756
  %5758 = vrot.lane.b32.xlu0 %v4767, 48
  %v5759 = vpop.permute.xlu0 %5758
  %5760 = vrot.lane.b32.xlu0 %v4768, 48
  %v5761 = vpop.permute.xlu0 %5760
  %5762 = vrot.lane.b32.xlu0 %v4769, 48
  %v5763 = vpop.permute.xlu0 %5762
  %5764 = vrot.lane.b32.xlu0 %v4770, 48
  %v5765 = vpop.permute.xlu0 %5764
  %5766 = vrot.lane.b32.xlu0 %v4771, 48
  %v5767 = vpop.permute.xlu0 %5766
  %5768 = vrot.lane.b32.xlu0 %v4772, 48
  %v5769 = vpop.permute.xlu0 %5768
  %5770 = vrot.lane.b32.xlu0 %v4773, 48
  %v5771 = vpop.permute.xlu0 %5770
  %5772 = vrot.lane.b32.xlu0 %v4774, 48
  %v5773 = vpop.permute.xlu0 %5772
  %5774 = vrot.lane.b32.xlu0 %v4775, 48
  %v5775 = vpop.permute.xlu0 %5774
  %5776 = vrot.lane.b32.xlu0 %v4776, 48
  %v5777 = vpop.permute.xlu0 %5776
  %5778 = vrot.lane.b32.xlu0 %v4777, 48
  %v5779 = vpop.permute.xlu0 %5778
  %5780 = vrot.lane.b32.xlu0 %v4778, 48
  %v5781 = vpop.permute.xlu0 %5780
  %5782 = vrot.lane.b32.xlu0 %v4779, 48
  %v5783 = vpop.permute.xlu0 %5782
  %5784 = vrot.lane.b32.xlu0 %v4780, 48
  %v5785 = vpop.permute.xlu0 %5784
  %5786 = vrot.lane.b32.xlu0 %v4781, 48
  %v5787 = vpop.permute.xlu0 %5786
  %5788 = vrot.lane.b32.xlu0 %v4782, 48
  %v5789 = vpop.permute.xlu0 %5788
  %5790 = vrot.lane.b32.xlu0 %v4783, 48
  %v5791 = vpop.permute.xlu0 %5790
  %5792 = vrot.lane.b32.xlu0 %v4784, 48
  %v5793 = vpop.permute.xlu0 %5792
  %5794 = vrot.lane.b32.xlu0 %v4785, 48
  %v5795 = vpop.permute.xlu0 %5794
  %5796 = vrot.lane.b32.xlu0 %v4786, 48
  %v5797 = vpop.permute.xlu0 %5796
  %5798 = vrot.lane.b32.xlu0 %v4787, 48
  %v5799 = vpop.permute.xlu0 %5798
  %5800 = vrot.lane.b32.xlu0 %v4788, 48
  %v5801 = vpop.permute.xlu0 %5800
  %5802 = vrot.lane.b32.xlu0 %v4789, 48
  %v5803 = vpop.permute.xlu0 %5802
  %5804 = vrot.lane.b32.xlu0 %v4790, 48
  %v5805 = vpop.permute.xlu0 %5804
  %5806 = vrot.lane.b32.xlu0 %v4791, 48
  %v5807 = vpop.permute.xlu0 %5806
  %5808 = vrot.lane.b32.xlu0 %v4792, 48
  %v5809 = vpop.permute.xlu0 %5808
  %5810 = vrot.lane.b32.xlu0 %v4793, 48
  %v5811 = vpop.permute.xlu0 %5810
  %5812 = vrot.lane.b32.xlu0 %v4794, 48
  %v5813 = vpop.permute.xlu0 %5812
  %5814 = vrot.lane.b32.xlu0 %v4795, 48
  %v5815 = vpop.permute.xlu0 %5814
  %5816 = vrot.lane.b32.xlu0 %v4796, 48
  %v5817 = vpop.permute.xlu0 %5816
  %5818 = vrot.lane.b32.xlu0 %v4797, 48
  %v5819 = vpop.permute.xlu0 %5818
  %5820 = vrot.lane.b32.xlu0 %v4798, 48
  %v5821 = vpop.permute.xlu0 %5820
  %5822 = vrot.lane.b32.xlu0 %v4799, 48
  %v5823 = vpop.permute.xlu0 %5822
  %5824 = vrot.lane.b32.xlu0 %v4800, 48
  %v5825 = vpop.permute.xlu0 %5824
  %5954 = vrot.lane.b32.xlu0 %v4801, 64
  %v5955 = vpop.permute.xlu0 %5954
  %5956 = vrot.lane.b32.xlu0 %v4802, 64
  %v5957 = vpop.permute.xlu0 %5956
  %5958 = vrot.lane.b32.xlu0 %v4803, 64
  %v5959 = vpop.permute.xlu0 %5958
  %5960 = vrot.lane.b32.xlu0 %v4804, 64
  %v5961 = vpop.permute.xlu0 %5960
  %5962 = vrot.lane.b32.xlu0 %v4805, 64
  %v5963 = vpop.permute.xlu0 %5962
  %5964 = vrot.lane.b32.xlu0 %v4806, 64
  %v5965 = vpop.permute.xlu0 %5964
  %5966 = vrot.lane.b32.xlu0 %v4807, 64
  %v5967 = vpop.permute.xlu0 %5966
  %5968 = vrot.lane.b32.xlu0 %v4808, 64
  %v5969 = vpop.permute.xlu0 %5968
  %5970 = vrot.lane.b32.xlu0 %v4809, 64
  %v5971 = vpop.permute.xlu0 %5970
  %5972 = vrot.lane.b32.xlu0 %v4810, 64
  %v5973 = vpop.permute.xlu0 %5972
  %5974 = vrot.lane.b32.xlu0 %v4811, 64
  %v5975 = vpop.permute.xlu0 %5974
  %5976 = vrot.lane.b32.xlu0 %v4812, 64
  %v5977 = vpop.permute.xlu0 %5976
  %5978 = vrot.lane.b32.xlu0 %v4813, 64
  %v5979 = vpop.permute.xlu0 %5978
  %5980 = vrot.lane.b32.xlu0 %v4814, 64
  %v5981 = vpop.permute.xlu0 %5980
  %5982 = vrot.lane.b32.xlu0 %v4815, 64
  %v5983 = vpop.permute.xlu0 %5982
  %5984 = vrot.lane.b32.xlu0 %v4816, 64
  %v5985 = vpop.permute.xlu0 %5984
  %5986 = vrot.lane.b32.xlu0 %v4817, 64
  %v5987 = vpop.permute.xlu0 %5986
  %5988 = vrot.lane.b32.xlu0 %v4818, 64
  %v5989 = vpop.permute.xlu0 %5988
  %5990 = vrot.lane.b32.xlu0 %v4819, 64
  %v5991 = vpop.permute.xlu0 %5990
  %5992 = vrot.lane.b32.xlu0 %v4820, 64
  %v5993 = vpop.permute.xlu0 %5992
  %5994 = vrot.lane.b32.xlu0 %v4821, 64
  %v5995 = vpop.permute.xlu0 %5994
  %5996 = vrot.lane.b32.xlu0 %v4822, 64
  %v5997 = vpop.permute.xlu0 %5996
  %5998 = vrot.lane.b32.xlu0 %v4823, 64
  %v5999 = vpop.permute.xlu0 %5998
  %6000 = vrot.lane.b32.xlu0 %v4824, 64
  %v6001 = vpop.permute.xlu0 %6000
  %6002 = vrot.lane.b32.xlu0 %v4825, 64
  %v6003 = vpop.permute.xlu0 %6002
  %6004 = vrot.lane.b32.xlu0 %v4826, 64
  %v6005 = vpop.permute.xlu0 %6004
  %6006 = vrot.lane.b32.xlu0 %v4827, 64
  %v6007 = vpop.permute.xlu0 %6006
  %6008 = vrot.lane.b32.xlu0 %v4828, 64
  %v6009 = vpop.permute.xlu0 %6008
  %6010 = vrot.lane.b32.xlu0 %v4829, 64
  %v6011 = vpop.permute.xlu0 %6010
  %6012 = vrot.lane.b32.xlu0 %v4830, 64
  %v6013 = vpop.permute.xlu0 %6012
  %6014 = vrot.lane.b32.xlu0 %v4831, 64
  %v6015 = vpop.permute.xlu0 %6014
  %6016 = vrot.lane.b32.xlu0 %v4832, 64
  %v6017 = vpop.permute.xlu0 %6016
  %6018 = vrot.lane.b32.xlu0 %v4833, 64
  %v6019 = vpop.permute.xlu0 %6018
  %6020 = vrot.lane.b32.xlu0 %v4834, 64
  %v6021 = vpop.permute.xlu0 %6020
  %6022 = vrot.lane.b32.xlu0 %v4835, 64
  %v6023 = vpop.permute.xlu0 %6022
  %6024 = vrot.lane.b32.xlu0 %v4836, 64
  %v6025 = vpop.permute.xlu0 %6024
  %6026 = vrot.lane.b32.xlu0 %v4837, 64
  %v6027 = vpop.permute.xlu0 %6026
  %6028 = vrot.lane.b32.xlu0 %v4838, 64
  %v6029 = vpop.permute.xlu0 %6028
  %6030 = vrot.lane.b32.xlu0 %v4839, 64
  %v6031 = vpop.permute.xlu0 %6030
  %6032 = vrot.lane.b32.xlu0 %v4840, 64
  %v6033 = vpop.permute.xlu0 %6032
  %6034 = vrot.lane.b32.xlu0 %v4841, 64
  %v6035 = vpop.permute.xlu0 %6034
  %6036 = vrot.lane.b32.xlu0 %v4842, 64
  %v6037 = vpop.permute.xlu0 %6036
  %6038 = vrot.lane.b32.xlu0 %v4843, 64
  %v6039 = vpop.permute.xlu0 %6038
  %6040 = vrot.lane.b32.xlu0 %v4844, 64
  %v6041 = vpop.permute.xlu0 %6040
  %6042 = vrot.lane.b32.xlu0 %v4845, 64
  %v6043 = vpop.permute.xlu0 %6042
  %6044 = vrot.lane.b32.xlu0 %v4846, 64
  %v6045 = vpop.permute.xlu0 %6044
  %6046 = vrot.lane.b32.xlu0 %v4847, 64
  %v6047 = vpop.permute.xlu0 %6046
  %6048 = vrot.lane.b32.xlu0 %v4848, 64
  %v6049 = vpop.permute.xlu0 %6048
  %6050 = vrot.lane.b32.xlu0 %v4849, 64
  %v6051 = vpop.permute.xlu0 %6050
  %6052 = vrot.lane.b32.xlu0 %v4850, 64
  %v6053 = vpop.permute.xlu0 %6052
  %6054 = vrot.lane.b32.xlu0 %v4851, 64
  %v6055 = vpop.permute.xlu0 %6054
  %6056 = vrot.lane.b32.xlu0 %v4852, 64
  %v6057 = vpop.permute.xlu0 %6056
  %6058 = vrot.lane.b32.xlu0 %v4853, 64
  %v6059 = vpop.permute.xlu0 %6058
  %6060 = vrot.lane.b32.xlu0 %v4854, 64
  %v6061 = vpop.permute.xlu0 %6060
  %6062 = vrot.lane.b32.xlu0 %v4855, 64
  %v6063 = vpop.permute.xlu0 %6062
  %6064 = vrot.lane.b32.xlu0 %v4856, 64
  %v6065 = vpop.permute.xlu0 %6064
  %6066 = vrot.lane.b32.xlu0 %v4857, 64
  %v6067 = vpop.permute.xlu0 %6066
  %6068 = vrot.lane.b32.xlu0 %v4858, 64
  %v6069 = vpop.permute.xlu0 %6068
  %6070 = vrot.lane.b32.xlu0 %v4859, 64
  %v6071 = vpop.permute.xlu0 %6070
  %6072 = vrot.lane.b32.xlu0 %v4860, 64
  %v6073 = vpop.permute.xlu0 %6072
  %6074 = vrot.lane.b32.xlu0 %v4861, 64
  %v6075 = vpop.permute.xlu0 %6074
  %6076 = vrot.lane.b32.xlu0 %v4862, 64
  %v6077 = vpop.permute.xlu0 %6076
  %6078 = vrot.lane.b32.xlu0 %v4863, 64
  %v6079 = vpop.permute.xlu0 %6078
  %6080 = vrot.lane.b32.xlu0 %v4864, 64
  %v6081 = vpop.permute.xlu0 %6080
  %6210 = vrot.lane.b32.xlu0 %v4865, 80
  %v6211 = vpop.permute.xlu0 %6210
  %6212 = vrot.lane.b32.xlu0 %v4866, 80
  %v6213 = vpop.permute.xlu0 %6212
  %6214 = vrot.lane.b32.xlu0 %v4867, 80
  %v6215 = vpop.permute.xlu0 %6214
  %6216 = vrot.lane.b32.xlu0 %v4868, 80
  %v6217 = vpop.permute.xlu0 %6216
  %6218 = vrot.lane.b32.xlu0 %v4869, 80
  %v6219 = vpop.permute.xlu0 %6218
  %6220 = vrot.lane.b32.xlu0 %v4870, 80
  %v6221 = vpop.permute.xlu0 %6220
  %6222 = vrot.lane.b32.xlu0 %v4871, 80
  %v6223 = vpop.permute.xlu0 %6222
  %6224 = vrot.lane.b32.xlu0 %v4872, 80
  %v6225 = vpop.permute.xlu0 %6224
  %6226 = vrot.lane.b32.xlu0 %v4873, 80
  %v6227 = vpop.permute.xlu0 %6226
  %6228 = vrot.lane.b32.xlu0 %v4874, 80
  %v6229 = vpop.permute.xlu0 %6228
  %6230 = vrot.lane.b32.xlu0 %v4875, 80
  %v6231 = vpop.permute.xlu0 %6230
  %6232 = vrot.lane.b32.xlu0 %v4876, 80
  %v6233 = vpop.permute.xlu0 %6232
  %6234 = vrot.lane.b32.xlu0 %v4877, 80
  %v6235 = vpop.permute.xlu0 %6234
  %6236 = vrot.lane.b32.xlu0 %v4878, 80
  %v6237 = vpop.permute.xlu0 %6236
  %6238 = vrot.lane.b32.xlu0 %v4879, 80
  %v6239 = vpop.permute.xlu0 %6238
  %6240 = vrot.lane.b32.xlu0 %v4880, 80
  %v6241 = vpop.permute.xlu0 %6240
  %6242 = vrot.lane.b32.xlu0 %v4881, 80
  %v6243 = vpop.permute.xlu0 %6242
  %6244 = vrot.lane.b32.xlu0 %v4882, 80
  %v6245 = vpop.permute.xlu0 %6244
  %6246 = vrot.lane.b32.xlu0 %v4883, 80
  %v6247 = vpop.permute.xlu0 %6246
  %6248 = vrot.lane.b32.xlu0 %v4884, 80
  %v6249 = vpop.permute.xlu0 %6248
  %6250 = vrot.lane.b32.xlu0 %v4885, 80
  %v6251 = vpop.permute.xlu0 %6250
  %6252 = vrot.lane.b32.xlu0 %v4886, 80
  %v6253 = vpop.permute.xlu0 %6252
  %6254 = vrot.lane.b32.xlu0 %v4887, 80
  %v6255 = vpop.permute.xlu0 %6254
  %6256 = vrot.lane.b32.xlu0 %v4888, 80
  %v6257 = vpop.permute.xlu0 %6256
  %6258 = vrot.lane.b32.xlu0 %v4889, 80
  %v6259 = vpop.permute.xlu0 %6258
  %6260 = vrot.lane.b32.xlu0 %v4890, 80
  %v6261 = vpop.permute.xlu0 %6260
  %6262 = vrot.lane.b32.xlu0 %v4891, 80
  %v6263 = vpop.permute.xlu0 %6262
  %6264 = vrot.lane.b32.xlu0 %v4892, 80
  %v6265 = vpop.permute.xlu0 %6264
  %6266 = vrot.lane.b32.xlu0 %v4893, 80
  %v6267 = vpop.permute.xlu0 %6266
  %6268 = vrot.lane.b32.xlu0 %v4894, 80
  %v6269 = vpop.permute.xlu0 %6268
  %6270 = vrot.lane.b32.xlu0 %v4895, 80
  %v6271 = vpop.permute.xlu0 %6270
  %6272 = vrot.lane.b32.xlu0 %v4896, 80
  %v6273 = vpop.permute.xlu0 %6272
  %6274 = vrot.lane.b32.xlu0 %v4897, 80
  %v6275 = vpop.permute.xlu0 %6274
  %6276 = vrot.lane.b32.xlu0 %v4898, 80
  %v6277 = vpop.permute.xlu0 %6276
  %6278 = vrot.lane.b32.xlu0 %v4899, 80
  %v6279 = vpop.permute.xlu0 %6278
  %6280 = vrot.lane.b32.xlu0 %v4900, 80
  %v6281 = vpop.permute.xlu0 %6280
  %6282 = vrot.lane.b32.xlu0 %v4901, 80
  %v6283 = vpop.permute.xlu0 %6282
  %6284 = vrot.lane.b32.xlu0 %v4902, 80
  %v6285 = vpop.permute.xlu0 %6284
  %6286 = vrot.lane.b32.xlu0 %v4903, 80
  %v6287 = vpop.permute.xlu0 %6286
  %6288 = vrot.lane.b32.xlu0 %v4904, 80
  %v6289 = vpop.permute.xlu0 %6288
  %6290 = vrot.lane.b32.xlu0 %v4905, 80
  %v6291 = vpop.permute.xlu0 %6290
  %6292 = vrot.lane.b32.xlu0 %v4906, 80
  %v6293 = vpop.permute.xlu0 %6292
  %6294 = vrot.lane.b32.xlu0 %v4907, 80
  %v6295 = vpop.permute.xlu0 %6294
  %6296 = vrot.lane.b32.xlu0 %v4908, 80
  %v6297 = vpop.permute.xlu0 %6296
  %6298 = vrot.lane.b32.xlu0 %v4909, 80
  %v6299 = vpop.permute.xlu0 %6298
  %6300 = vrot.lane.b32.xlu0 %v4910, 80
  %v6301 = vpop.permute.xlu0 %6300
  %6302 = vrot.lane.b32.xlu0 %v4911, 80
  %v6303 = vpop.permute.xlu0 %6302
  %6304 = vrot.lane.b32.xlu0 %v4912, 80
  %v6305 = vpop.permute.xlu0 %6304
  %6306 = vrot.lane.b32.xlu0 %v4913, 80
  %v6307 = vpop.permute.xlu0 %6306
  %6308 = vrot.lane.b32.xlu0 %v4914, 80
  %v6309 = vpop.permute.xlu0 %6308
  %6310 = vrot.lane.b32.xlu0 %v4915, 80
  %v6311 = vpop.permute.xlu0 %6310
  %6312 = vrot.lane.b32.xlu0 %v4916, 80
  %v6313 = vpop.permute.xlu0 %6312
  %6314 = vrot.lane.b32.xlu0 %v4917, 80
  %v6315 = vpop.permute.xlu0 %6314
  %6316 = vrot.lane.b32.xlu0 %v4918, 80
  %v6317 = vpop.permute.xlu0 %6316
  %6318 = vrot.lane.b32.xlu0 %v4919, 80
  %v6319 = vpop.permute.xlu0 %6318
  %6320 = vrot.lane.b32.xlu0 %v4920, 80
  %v6321 = vpop.permute.xlu0 %6320
  %6322 = vrot.lane.b32.xlu0 %v4921, 80
  %v6323 = vpop.permute.xlu0 %6322
  %6324 = vrot.lane.b32.xlu0 %v4922, 80
  %v6325 = vpop.permute.xlu0 %6324
  %6326 = vrot.lane.b32.xlu0 %v4923, 80
  %v6327 = vpop.permute.xlu0 %6326
  %6328 = vrot.lane.b32.xlu0 %v4924, 80
  %v6329 = vpop.permute.xlu0 %6328
  %6330 = vrot.lane.b32.xlu0 %v4925, 80
  %v6331 = vpop.permute.xlu0 %6330
  %6332 = vrot.lane.b32.xlu0 %v4926, 80
  %v6333 = vpop.permute.xlu0 %6332
  %6334 = vrot.lane.b32.xlu0 %v4927, 80
  %v6335 = vpop.permute.xlu0 %6334
  %6336 = vrot.lane.b32.xlu0 %v4928, 80
  %v6337 = vpop.permute.xlu0 %6336
  %6466 = vrot.lane.b32.xlu0 %v4930, 96
  %v6467 = vpop.permute.xlu0 %6466
  %6468 = vrot.lane.b32.xlu0 %v4931, 96
  %v6469 = vpop.permute.xlu0 %6468
  %6470 = vrot.lane.b32.xlu0 %v4932, 96
  %v6471 = vpop.permute.xlu0 %6470
  %6472 = vrot.lane.b32.xlu0 %v4933, 96
  %v6473 = vpop.permute.xlu0 %6472
  %6474 = vrot.lane.b32.xlu0 %v4934, 96
  %v6475 = vpop.permute.xlu0 %6474
  %6476 = vrot.lane.b32.xlu0 %v4935, 96
  %v6477 = vpop.permute.xlu0 %6476
  %6478 = vrot.lane.b32.xlu0 %v4936, 96
  %v6479 = vpop.permute.xlu0 %6478
  %6480 = vrot.lane.b32.xlu0 %v4937, 96
  %v6481 = vpop.permute.xlu0 %6480
  %6482 = vrot.lane.b32.xlu0 %v4938, 96
  %v6483 = vpop.permute.xlu0 %6482
  %6484 = vrot.lane.b32.xlu0 %v4939, 96
  %v6485 = vpop.permute.xlu0 %6484
  %6486 = vrot.lane.b32.xlu0 %v4940, 96
  %v6487 = vpop.permute.xlu0 %6486
  %6488 = vrot.lane.b32.xlu0 %v4941, 96
  %v6489 = vpop.permute.xlu0 %6488
  %6490 = vrot.lane.b32.xlu0 %v4942, 96
  %v6491 = vpop.permute.xlu0 %6490
  %6492 = vrot.lane.b32.xlu0 %v4943, 96
  %v6493 = vpop.permute.xlu0 %6492
  %6494 = vrot.lane.b32.xlu0 %v4944, 96
  %v6495 = vpop.permute.xlu0 %6494
  %6496 = vrot.lane.b32.xlu0 %v4945, 96
  %v6497 = vpop.permute.xlu0 %6496
  %6498 = vrot.lane.b32.xlu0 %v4946, 96
  %v6499 = vpop.permute.xlu0 %6498
  %6500 = vrot.lane.b32.xlu0 %v4947, 96
  %v6501 = vpop.permute.xlu0 %6500
  %6502 = vrot.lane.b32.xlu0 %v4948, 96
  %v6503 = vpop.permute.xlu0 %6502
  %6504 = vrot.lane.b32.xlu0 %v4949, 96
  %v6505 = vpop.permute.xlu0 %6504
  %6506 = vrot.lane.b32.xlu0 %v4950, 96
  %v6507 = vpop.permute.xlu0 %6506
  %6508 = vrot.lane.b32.xlu0 %v4951, 96
  %v6509 = vpop.permute.xlu0 %6508
  %6510 = vrot.lane.b32.xlu0 %v4952, 96
  %v6511 = vpop.permute.xlu0 %6510
  %6512 = vrot.lane.b32.xlu0 %v4953, 96
  %v6513 = vpop.permute.xlu0 %6512
  %6514 = vrot.lane.b32.xlu0 %v4954, 96
  %v6515 = vpop.permute.xlu0 %6514
  %6516 = vrot.lane.b32.xlu0 %v4955, 96
  %v6517 = vpop.permute.xlu0 %6516
  %6518 = vrot.lane.b32.xlu0 %v4956, 96
  %v6519 = vpop.permute.xlu0 %6518
  %6520 = vrot.lane.b32.xlu0 %v4957, 96
  %v6521 = vpop.permute.xlu0 %6520
  %6522 = vrot.lane.b32.xlu0 %v4958, 96
  %v6523 = vpop.permute.xlu0 %6522
  %6524 = vrot.lane.b32.xlu0 %v4959, 96
  %v6525 = vpop.permute.xlu0 %6524
  %6526 = vrot.lane.b32.xlu0 %v4960, 96
  %v6527 = vpop.permute.xlu0 %6526
  %6528 = vrot.lane.b32.xlu0 %v4961, 96
  %v6529 = vpop.permute.xlu0 %6528
  %6530 = vrot.lane.b32.xlu0 %v4962, 96
  %v6531 = vpop.permute.xlu0 %6530
  %6532 = vrot.lane.b32.xlu0 %v4963, 96
  %v6533 = vpop.permute.xlu0 %6532
  %6534 = vrot.lane.b32.xlu0 %v4964, 96
  %v6535 = vpop.permute.xlu0 %6534
  %6536 = vrot.lane.b32.xlu0 %v4965, 96
  %v6537 = vpop.permute.xlu0 %6536
  %6538 = vrot.lane.b32.xlu0 %v4966, 96
  %v6539 = vpop.permute.xlu0 %6538
  %6540 = vrot.lane.b32.xlu0 %v4967, 96
  %v6541 = vpop.permute.xlu0 %6540
  %6542 = vrot.lane.b32.xlu0 %v4968, 96
  %v6543 = vpop.permute.xlu0 %6542
  %6544 = vrot.lane.b32.xlu0 %v4969, 96
  %v6545 = vpop.permute.xlu0 %6544
  %6546 = vrot.lane.b32.xlu0 %v4970, 96
  %v6547 = vpop.permute.xlu0 %6546
  %6548 = vrot.lane.b32.xlu0 %v4971, 96
  %v6549 = vpop.permute.xlu0 %6548
  %6550 = vrot.lane.b32.xlu0 %v4972, 96
  %v6551 = vpop.permute.xlu0 %6550
  %6552 = vrot.lane.b32.xlu0 %v4973, 96
  %v6553 = vpop.permute.xlu0 %6552
  %6554 = vrot.lane.b32.xlu0 %v4974, 96
  %v6555 = vpop.permute.xlu0 %6554
  %6556 = vrot.lane.b32.xlu0 %v4975, 96
  %v6557 = vpop.permute.xlu0 %6556
  %6558 = vrot.lane.b32.xlu0 %v4976, 96
  %v6559 = vpop.permute.xlu0 %6558
  %6560 = vrot.lane.b32.xlu0 %v4977, 96
  %v6561 = vpop.permute.xlu0 %6560
  %6562 = vrot.lane.b32.xlu0 %v4978, 96
  %v6563 = vpop.permute.xlu0 %6562
  %6564 = vrot.lane.b32.xlu0 %v4979, 96
  %v6565 = vpop.permute.xlu0 %6564
  %6566 = vrot.lane.b32.xlu0 %v4980, 96
  %v6567 = vpop.permute.xlu0 %6566
  %6568 = vrot.lane.b32.xlu0 %v4981, 96
  %v6569 = vpop.permute.xlu0 %6568
  %6570 = vrot.lane.b32.xlu0 %v4982, 96
  %v6571 = vpop.permute.xlu0 %6570
  %6572 = vrot.lane.b32.xlu0 %v4983, 96
  %v6573 = vpop.permute.xlu0 %6572
  %6574 = vrot.lane.b32.xlu0 %v4984, 96
  %v6575 = vpop.permute.xlu0 %6574
  %6576 = vrot.lane.b32.xlu0 %v4985, 96
  %v6577 = vpop.permute.xlu0 %6576
  %6578 = vrot.lane.b32.xlu0 %v4986, 96
  %v6579 = vpop.permute.xlu0 %6578
  %6580 = vrot.lane.b32.xlu0 %v4987, 96
  %v6581 = vpop.permute.xlu0 %6580
  %6582 = vrot.lane.b32.xlu0 %v4988, 96
  %v6583 = vpop.permute.xlu0 %6582
  %6584 = vrot.lane.b32.xlu0 %v4989, 96
  %v6585 = vpop.permute.xlu0 %6584
  %6586 = vrot.lane.b32.xlu0 %v4990, 96
  %v6587 = vpop.permute.xlu0 %6586
  %6588 = vrot.lane.b32.xlu0 %v4991, 96
  %v6589 = vpop.permute.xlu0 %6588
  %6590 = vrot.lane.b32.xlu0 %v4992, 96
  %v6591 = vpop.permute.xlu0 %6590
  %6592 = vrot.lane.b32.xlu0 %v4993, 96
  %v6593 = vpop.permute.xlu0 %6592
  %6722 = vrot.lane.b32.xlu0 %v4994, 112
  %v6723 = vpop.permute.xlu0 %6722
  %6724 = vrot.lane.b32.xlu0 %v4995, 112
  %v6725 = vpop.permute.xlu0 %6724
  %6726 = vrot.lane.b32.xlu0 %v4996, 112
  %v6727 = vpop.permute.xlu0 %6726
  %6728 = vrot.lane.b32.xlu0 %v4997, 112
  %v6729 = vpop.permute.xlu0 %6728
  %6730 = vrot.lane.b32.xlu0 %v4998, 112
  %v6731 = vpop.permute.xlu0 %6730
  %6732 = vrot.lane.b32.xlu0 %v4999, 112
  %v6733 = vpop.permute.xlu0 %6732
  %6734 = vrot.lane.b32.xlu0 %v5000, 112
  %v6735 = vpop.permute.xlu0 %6734
  %6736 = vrot.lane.b32.xlu0 %v5001, 112
  %v6737 = vpop.permute.xlu0 %6736
  %6738 = vrot.lane.b32.xlu0 %v5002, 112
  %v6739 = vpop.permute.xlu0 %6738
  %6740 = vrot.lane.b32.xlu0 %v5003, 112
  %v6741 = vpop.permute.xlu0 %6740
  %6742 = vrot.lane.b32.xlu0 %v5004, 112
  %v6743 = vpop.permute.xlu0 %6742
  %6744 = vrot.lane.b32.xlu0 %v5005, 112
  %v6745 = vpop.permute.xlu0 %6744
  %6746 = vrot.lane.b32.xlu0 %v5006, 112
  %v6747 = vpop.permute.xlu0 %6746
  %6748 = vrot.lane.b32.xlu0 %v5007, 112
  %v6749 = vpop.permute.xlu0 %6748
  %6750 = vrot.lane.b32.xlu0 %v5008, 112
  %v6751 = vpop.permute.xlu0 %6750
  %6752 = vrot.lane.b32.xlu0 %v5009, 112
  %v6753 = vpop.permute.xlu0 %6752
  %6754 = vrot.lane.b32.xlu0 %v5010, 112
  %v6755 = vpop.permute.xlu0 %6754
  %6756 = vrot.lane.b32.xlu0 %v5011, 112
  %v6757 = vpop.permute.xlu0 %6756
  %6758 = vrot.lane.b32.xlu0 %v5012, 112
  %v6759 = vpop.permute.xlu0 %6758
  %6760 = vrot.lane.b32.xlu0 %v5013, 112
  %v6761 = vpop.permute.xlu0 %6760
  %6762 = vrot.lane.b32.xlu0 %v5014, 112
  %v6763 = vpop.permute.xlu0 %6762
  %6764 = vrot.lane.b32.xlu0 %v5015, 112
  %v6765 = vpop.permute.xlu0 %6764
  %6766 = vrot.lane.b32.xlu0 %v5016, 112
  %v6767 = vpop.permute.xlu0 %6766
  %6768 = vrot.lane.b32.xlu0 %v5017, 112
  %v6769 = vpop.permute.xlu0 %6768
  %6770 = vrot.lane.b32.xlu0 %v5018, 112
  %v6771 = vpop.permute.xlu0 %6770
  %6772 = vrot.lane.b32.xlu0 %v5019, 112
  %v6773 = vpop.permute.xlu0 %6772
  %6774 = vrot.lane.b32.xlu0 %v5020, 112
  %v6775 = vpop.permute.xlu0 %6774
  %6776 = vrot.lane.b32.xlu0 %v5021, 112
  %v6777 = vpop.permute.xlu0 %6776
  %6778 = vrot.lane.b32.xlu0 %v5022, 112
  %v6779 = vpop.permute.xlu0 %6778
  %6780 = vrot.lane.b32.xlu0 %v5023, 112
  %v6781 = vpop.permute.xlu0 %6780
  %6782 = vrot.lane.b32.xlu0 %v5024, 112
  %v6783 = vpop.permute.xlu0 %6782
  %6784 = vrot.lane.b32.xlu0 %v5025, 112
  %v6785 = vpop.permute.xlu0 %6784
  %6786 = vrot.lane.b32.xlu0 %v5026, 112
  %v6787 = vpop.permute.xlu0 %6786
  %6788 = vrot.lane.b32.xlu0 %v5027, 112
  %v6789 = vpop.permute.xlu0 %6788
  %6790 = vrot.lane.b32.xlu0 %v5028, 112
  %v6791 = vpop.permute.xlu0 %6790
  %6792 = vrot.lane.b32.xlu0 %v5029, 112
  %v6793 = vpop.permute.xlu0 %6792
  %6794 = vrot.lane.b32.xlu0 %v5030, 112
  %v6795 = vpop.permute.xlu0 %6794
  %6796 = vrot.lane.b32.xlu0 %v5031, 112
  %v6797 = vpop.permute.xlu0 %6796
  %6798 = vrot.lane.b32.xlu0 %v5032, 112
  %v6799 = vpop.permute.xlu0 %6798
  %6800 = vrot.lane.b32.xlu0 %v5033, 112
  %v6801 = vpop.permute.xlu0 %6800
  %6802 = vrot.lane.b32.xlu0 %v5034, 112
  %v6803 = vpop.permute.xlu0 %6802
  %6804 = vrot.lane.b32.xlu0 %v5035, 112
  %v6805 = vpop.permute.xlu0 %6804
  %6806 = vrot.lane.b32.xlu0 %v5036, 112
  %v6807 = vpop.permute.xlu0 %6806
  %6808 = vrot.lane.b32.xlu0 %v5037, 112
  %v6809 = vpop.permute.xlu0 %6808
  %6810 = vrot.lane.b32.xlu0 %v5038, 112
  %v6811 = vpop.permute.xlu0 %6810
  %6812 = vrot.lane.b32.xlu0 %v5039, 112
  %v6813 = vpop.permute.xlu0 %6812
  %6814 = vrot.lane.b32.xlu0 %v5040, 112
  %v6815 = vpop.permute.xlu0 %6814
  %6816 = vrot.lane.b32.xlu0 %v5041, 112
  %v6817 = vpop.permute.xlu0 %6816
  %6818 = vrot.lane.b32.xlu0 %v5042, 112
  %v6819 = vpop.permute.xlu0 %6818
  %6820 = vrot.lane.b32.xlu0 %v5043, 112
  %v6821 = vpop.permute.xlu0 %6820
  %6822 = vrot.lane.b32.xlu0 %v5044, 112
  %v6823 = vpop.permute.xlu0 %6822
  %6824 = vrot.lane.b32.xlu0 %v5045, 112
  %v6825 = vpop.permute.xlu0 %6824
  %6826 = vrot.lane.b32.xlu0 %v5046, 112
  %v6827 = vpop.permute.xlu0 %6826
  %6828 = vrot.lane.b32.xlu0 %v5047, 112
  %v6829 = vpop.permute.xlu0 %6828
  %6830 = vrot.lane.b32.xlu0 %v5048, 112
  %v6831 = vpop.permute.xlu0 %6830
  %6832 = vrot.lane.b32.xlu0 %v5049, 112
  %v6833 = vpop.permute.xlu0 %6832
  %6834 = vrot.lane.b32.xlu0 %v5050, 112
  %v6835 = vpop.permute.xlu0 %6834
  %6836 = vrot.lane.b32.xlu0 %v5051, 112
  %v6837 = vpop.permute.xlu0 %6836
  %6838 = vrot.lane.b32.xlu0 %v5052, 112
  %v6839 = vpop.permute.xlu0 %6838
  %6840 = vrot.lane.b32.xlu0 %v5053, 112
  %v6841 = vpop.permute.xlu0 %6840
  %6842 = vrot.lane.b32.xlu0 %v5054, 112
  %v6843 = vpop.permute.xlu0 %6842
  %6844 = vrot.lane.b32.xlu0 %v5055, 112
  %v6845 = vpop.permute.xlu0 %6844
  %6846 = vrot.lane.b32.xlu0 %v5056, 112
  %v6847 = vpop.permute.xlu0 %6846
  %6848 = vrot.lane.b32.xlu0 %v5057, 112
  %v6849 = vpop.permute.xlu0 %6848
  %v6914 = vsel %vm3114, %v4545, %v5187
  %v6915 = vsel %vm3114, %v4546, %v5189
  %v6916 = vsel %vm3114, %v4547, %v5191
  %v6917 = vsel %vm3114, %v4548, %v5193
  %v6918 = vsel %vm3114, %v4549, %v5195
  %v6919 = vsel %vm3114, %v4550, %v5197
  %v6920 = vsel %vm3114, %v4551, %v5199
  %v6921 = vsel %vm3114, %v4552, %v5201
  %v6922 = vsel %vm3114, %v4553, %v5203
  %v6923 = vsel %vm3114, %v4554, %v5205
  %v6924 = vsel %vm3114, %v4555, %v5207
  %v6925 = vsel %vm3114, %v4556, %v5209
  %v6926 = vsel %vm3114, %v4557, %v5211
  %v6927 = vsel %vm3114, %v4558, %v5213
  %v6928 = vsel %vm3114, %v4559, %v5215
  %v6929 = vsel %vm3114, %v4560, %v5217
  %v6930 = vsel %vm3114, %v4561, %v5219
  %v6931 = vsel %vm3114, %v4562, %v5221
  %v6932 = vsel %vm3114, %v4563, %v5223
  %v6933 = vsel %vm3114, %v4564, %v5225
  %v6934 = vsel %vm3114, %v4565, %v5227
  %v6935 = vsel %vm3114, %v4566, %v5229
  %v6936 = vsel %vm3114, %v4567, %v5231
  %v6937 = vsel %vm3114, %v4568, %v5233
  %v6938 = vsel %vm3114, %v4569, %v5235
  %v6939 = vsel %vm3114, %v4570, %v5237
  %v6940 = vsel %vm3114, %v4571, %v5239
  %v6941 = vsel %vm3114, %v4572, %v5241
  %v6942 = vsel %vm3114, %v4573, %v5243
  %v6943 = vsel %vm3114, %v4574, %v5245
  %v6944 = vsel %vm3114, %v4575, %v5247
  %v6945 = vsel %vm3114, %v4576, %v5249
  %v6946 = vsel %vm3114, %v4577, %v5251
  %v6947 = vsel %vm3114, %v4578, %v5253
  %v6948 = vsel %vm3114, %v4579, %v5255
  %v6949 = vsel %vm3114, %v4580, %v5257
  %v6950 = vsel %vm3114, %v4581, %v5259
  %v6951 = vsel %vm3114, %v4582, %v5261
  %v6952 = vsel %vm3114, %v4583, %v5263
  %v6953 = vsel %vm3114, %v4584, %v5265
  %v6954 = vsel %vm3114, %v4585, %v5267
  %v6955 = vsel %vm3114, %v4586, %v5269
  %v6956 = vsel %vm3114, %v4587, %v5271
  %v6957 = vsel %vm3114, %v4588, %v5273
  %v6958 = vsel %vm3114, %v4589, %v5275
  %v6959 = vsel %vm3114, %v4590, %v5277
  %v6960 = vsel %vm3114, %v4591, %v5279
  %v6961 = vsel %vm3114, %v4592, %v5281
  %v6962 = vsel %vm3114, %v4593, %v5283
  %v6963 = vsel %vm3114, %v4594, %v5285
  %v6964 = vsel %vm3114, %v4595, %v5287
  %v6965 = vsel %vm3114, %v4596, %v5289
  %v6966 = vsel %vm3114, %v4597, %v5291
  %v6967 = vsel %vm3114, %v4598, %v5293
  %v6968 = vsel %vm3114, %v4599, %v5295
  %v6969 = vsel %vm3114, %v4600, %v5297
  %v6970 = vsel %vm3114, %v4601, %v5299
  %v6971 = vsel %vm3114, %v4602, %v5301
  %v6972 = vsel %vm3114, %v4603, %v5303
  %v6973 = vsel %vm3114, %v4604, %v5305
  %v6974 = vsel %vm3114, %v4605, %v5307
  %v6975 = vsel %vm3114, %v4606, %v5309
  %v6976 = vsel %vm3114, %v4607, %v5311
  %v6977 = vsel %vm3114, %v4608, %v5313
  %v6978 = vsel %vm3374, %v6914, %v5443
  %v6979 = vsel %vm3374, %v6915, %v5445
  %v6980 = vsel %vm3374, %v6916, %v5447
  %v6981 = vsel %vm3374, %v6917, %v5449
  %v6982 = vsel %vm3374, %v6918, %v5451
  %v6983 = vsel %vm3374, %v6919, %v5453
  %v6984 = vsel %vm3374, %v6920, %v5455
  %v6985 = vsel %vm3374, %v6921, %v5457
  %v6986 = vsel %vm3374, %v6922, %v5459
  %v6987 = vsel %vm3374, %v6923, %v5461
  %v6988 = vsel %vm3374, %v6924, %v5463
  %v6989 = vsel %vm3374, %v6925, %v5465
  %v6990 = vsel %vm3374, %v6926, %v5467
  %v6991 = vsel %vm3374, %v6927, %v5469
  %v6992 = vsel %vm3374, %v6928, %v5471
  %v6993 = vsel %vm3374, %v6929, %v5473
  %v6994 = vsel %vm3374, %v6930, %v5475
  %v6995 = vsel %vm3374, %v6931, %v5477
  %v6996 = vsel %vm3374, %v6932, %v5479
  %v6997 = vsel %vm3374, %v6933, %v5481
  %v6998 = vsel %vm3374, %v6934, %v5483
  %v6999 = vsel %vm3374, %v6935, %v5485
  %v7000 = vsel %vm3374, %v6936, %v5487
  %v7001 = vsel %vm3374, %v6937, %v5489
  %v7002 = vsel %vm3374, %v6938, %v5491
  %v7003 = vsel %vm3374, %v6939, %v5493
  %v7004 = vsel %vm3374, %v6940, %v5495
  %v7005 = vsel %vm3374, %v6941, %v5497
  %v7006 = vsel %vm3374, %v6942, %v5499
  %v7007 = vsel %vm3374, %v6943, %v5501
  %v7008 = vsel %vm3374, %v6944, %v5503
  %v7009 = vsel %vm3374, %v6945, %v5505
  %v7010 = vsel %vm3374, %v6946, %v5507
  %v7011 = vsel %vm3374, %v6947, %v5509
  %v7012 = vsel %vm3374, %v6948, %v5511
  %v7013 = vsel %vm3374, %v6949, %v5513
  %v7014 = vsel %vm3374, %v6950, %v5515
  %v7015 = vsel %vm3374, %v6951, %v5517
  %v7016 = vsel %vm3374, %v6952, %v5519
  %v7017 = vsel %vm3374, %v6953, %v5521
  %v7018 = vsel %vm3374, %v6954, %v5523
  %v7019 = vsel %vm3374, %v6955, %v5525
  %v7020 = vsel %vm3374, %v6956, %v5527
  %v7021 = vsel %vm3374, %v6957, %v5529
  %v7022 = vsel %vm3374, %v6958, %v5531
  %v7023 = vsel %vm3374, %v6959, %v5533
  %v7024 = vsel %vm3374, %v6960, %v5535
  %v7025 = vsel %vm3374, %v6961, %v5537
  %v7026 = vsel %vm3374, %v6962, %v5539
  %v7027 = vsel %vm3374, %v6963, %v5541
  %v7028 = vsel %vm3374, %v6964, %v5543
  %v7029 = vsel %vm3374, %v6965, %v5545
  %v7030 = vsel %vm3374, %v6966, %v5547
  %v7031 = vsel %vm3374, %v6967, %v5549
  %v7032 = vsel %vm3374, %v6968, %v5551
  %v7033 = vsel %vm3374, %v6969, %v5553
  %v7034 = vsel %vm3374, %v6970, %v5555
  %v7035 = vsel %vm3374, %v6971, %v5557
  %v7036 = vsel %vm3374, %v6972, %v5559
  %v7037 = vsel %vm3374, %v6973, %v5561
  %v7038 = vsel %vm3374, %v6974, %v5563
  %v7039 = vsel %vm3374, %v6975, %v5565
  %v7040 = vsel %vm3374, %v6976, %v5567
  %v7041 = vsel %vm3374, %v6977, %v5569
  %vm7042 = vcmask 392192
  %v7043 = vsel %vm7042, %v6978, %v5699
  %v7044 = vsel %vm7042, %v6979, %v5701
  %v7045 = vsel %vm7042, %v6980, %v5703
  %v7046 = vsel %vm7042, %v6981, %v5705
  %v7047 = vsel %vm7042, %v6982, %v5707
  %v7048 = vsel %vm7042, %v6983, %v5709
  %v7049 = vsel %vm7042, %v6984, %v5711
  %v7050 = vsel %vm7042, %v6985, %v5713
  %v7051 = vsel %vm7042, %v6986, %v5715
  %v7052 = vsel %vm7042, %v6987, %v5717
  %v7053 = vsel %vm7042, %v6988, %v5719
  %v7054 = vsel %vm7042, %v6989, %v5721
  %v7055 = vsel %vm7042, %v6990, %v5723
  %v7056 = vsel %vm7042, %v6991, %v5725
  %v7057 = vsel %vm7042, %v6992, %v5727
  %v7058 = vsel %vm7042, %v6993, %v5729
  %v7059 = vsel %vm7042, %v6994, %v5731
  %v7060 = vsel %vm7042, %v6995, %v5733
  %v7061 = vsel %vm7042, %v6996, %v5735
  %v7062 = vsel %vm7042, %v6997, %v5737
  %v7063 = vsel %vm7042, %v6998, %v5739
  %v7064 = vsel %vm7042, %v6999, %v5741
  %v7065 = vsel %vm7042, %v7000, %v5743
  %v7066 = vsel %vm7042, %v7001, %v5745
  %v7067 = vsel %vm7042, %v7002, %v5747
  %v7068 = vsel %vm7042, %v7003, %v5749
  %v7069 = vsel %vm7042, %v7004, %v5751
  %v7070 = vsel %vm7042, %v7005, %v5753
  %v7071 = vsel %vm7042, %v7006, %v5755
  %v7072 = vsel %vm7042, %v7007, %v5757
  %v7073 = vsel %vm7042, %v7008, %v5759
  %v7074 = vsel %vm7042, %v7009, %v5761
  %v7075 = vsel %vm7042, %v7010, %v5763
  %v7076 = vsel %vm7042, %v7011, %v5765
  %v7077 = vsel %vm7042, %v7012, %v5767
  %v7078 = vsel %vm7042, %v7013, %v5769
  %v7079 = vsel %vm7042, %v7014, %v5771
  %v7080 = vsel %vm7042, %v7015, %v5773
  %v7081 = vsel %vm7042, %v7016, %v5775
  %v7082 = vsel %vm7042, %v7017, %v5777
  %v7083 = vsel %vm7042, %v7018, %v5779
  %v7084 = vsel %vm7042, %v7019, %v5781
  %v7085 = vsel %vm7042, %v7020, %v5783
  %v7086 = vsel %vm7042, %v7021, %v5785
  %v7087 = vsel %vm7042, %v7022, %v5787
  %v7088 = vsel %vm7042, %v7023, %v5789
  %v7089 = vsel %vm7042, %v7024, %v5791
  %v7090 = vsel %vm7042, %v7025, %v5793
  %v7091 = vsel %vm7042, %v7026, %v5795
  %v7092 = vsel %vm7042, %v7027, %v5797
  %v7093 = vsel %vm7042, %v7028, %v5799
  %v7094 = vsel %vm7042, %v7029, %v5801
  %v7095 = vsel %vm7042, %v7030, %v5803
  %v7096 = vsel %vm7042, %v7031, %v5805
  %v7097 = vsel %vm7042, %v7032, %v5807
  %v7098 = vsel %vm7042, %v7033, %v5809
  %v7099 = vsel %vm7042, %v7034, %v5811
  %v7100 = vsel %vm7042, %v7035, %v5813
  %v7101 = vsel %vm7042, %v7036, %v5815
  %v7102 = vsel %vm7042, %v7037, %v5817
  %v7103 = vsel %vm7042, %v7038, %v5819
  %v7104 = vsel %vm7042, %v7039, %v5821
  %v7105 = vsel %vm7042, %v7040, %v5823
  %v7106 = vsel %vm7042, %v7041, %v5825
  %vm7107 = vcmask 523264
  %v7108 = vsel %vm7107, %v7043, %v5955
  %v7109 = vsel %vm7107, %v7044, %v5957
  %v7110 = vsel %vm7107, %v7045, %v5959
  %v7111 = vsel %vm7107, %v7046, %v5961
  %v7112 = vsel %vm7107, %v7047, %v5963
  %v7113 = vsel %vm7107, %v7048, %v5965
  %v7114 = vsel %vm7107, %v7049, %v5967
  %v7115 = vsel %vm7107, %v7050, %v5969
  %v7116 = vsel %vm7107, %v7051, %v5971
  %v7117 = vsel %vm7107, %v7052, %v5973
  %v7118 = vsel %vm7107, %v7053, %v5975
  %v7119 = vsel %vm7107, %v7054, %v5977
  %v7120 = vsel %vm7107, %v7055, %v5979
  %v7121 = vsel %vm7107, %v7056, %v5981
  %v7122 = vsel %vm7107, %v7057, %v5983
  %v7123 = vsel %vm7107, %v7058, %v5985
  %v7124 = vsel %vm7107, %v7059, %v5987
  %v7125 = vsel %vm7107, %v7060, %v5989
  %v7126 = vsel %vm7107, %v7061, %v5991
  %v7127 = vsel %vm7107, %v7062, %v5993
  %v7128 = vsel %vm7107, %v7063, %v5995
  %v7129 = vsel %vm7107, %v7064, %v5997
  %v7130 = vsel %vm7107, %v7065, %v5999
  %v7131 = vsel %vm7107, %v7066, %v6001
  %v7132 = vsel %vm7107, %v7067, %v6003
  %v7133 = vsel %vm7107, %v7068, %v6005
  %v7134 = vsel %vm7107, %v7069, %v6007
  %v7135 = vsel %vm7107, %v7070, %v6009
  %v7136 = vsel %vm7107, %v7071, %v6011
  %v7137 = vsel %vm7107, %v7072, %v6013
  %v7138 = vsel %vm7107, %v7073, %v6015
  %v7139 = vsel %vm7107, %v7074, %v6017
  %v7140 = vsel %vm7107, %v7075, %v6019
  %v7141 = vsel %vm7107, %v7076, %v6021
  %v7142 = vsel %vm7107, %v7077, %v6023
  %v7143 = vsel %vm7107, %v7078, %v6025
  %v7144 = vsel %vm7107, %v7079, %v6027
  %v7145 = vsel %vm7107, %v7080, %v6029
  %v7146 = vsel %vm7107, %v7081, %v6031
  %v7147 = vsel %vm7107, %v7082, %v6033
  %v7148 = vsel %vm7107, %v7083, %v6035
  %v7149 = vsel %vm7107, %v7084, %v6037
  %v7150 = vsel %vm7107, %v7085, %v6039
  %v7151 = vsel %vm7107, %v7086, %v6041
  %v7152 = vsel %vm7107, %v7087, %v6043
  %v7153 = vsel %vm7107, %v7088, %v6045
  %v7154 = vsel %vm7107, %v7089, %v6047
  %v7155 = vsel %vm7107, %v7090, %v6049
  %v7156 = vsel %vm7107, %v7091, %v6051
  %v7157 = vsel %vm7107, %v7092, %v6053
  %v7158 = vsel %vm7107, %v7093, %v6055
  %v7159 = vsel %vm7107, %v7094, %v6057
  %v7160 = vsel %vm7107, %v7095, %v6059
  %v7161 = vsel %vm7107, %v7096, %v6061
  %v7162 = vsel %vm7107, %v7097, %v6063
  %v7163 = vsel %vm7107, %v7098, %v6065
  %v7164 = vsel %vm7107, %v7099, %v6067
  %v7165 = vsel %vm7107, %v7100, %v6069
  %v7166 = vsel %vm7107, %v7101, %v6071
  %v7167 = vsel %vm7107, %v7102, %v6073
  %v7168 = vsel %vm7107, %v7103, %v6075
  %v7169 = vsel %vm7107, %v7104, %v6077
  %v7170 = vsel %vm7107, %v7105, %v6079
  %v7171 = vsel %vm7107, %v7106, %v6081
  %vm7172 = vcmask 654336
  %v7173 = vsel %vm7172, %v7108, %v6211
  %v7174 = vsel %vm7172, %v7109, %v6213
  %v7175 = vsel %vm7172, %v7110, %v6215
  %v7176 = vsel %vm7172, %v7111, %v6217
  %v7177 = vsel %vm7172, %v7112, %v6219
  %v7178 = vsel %vm7172, %v7113, %v6221
  %v7179 = vsel %vm7172, %v7114, %v6223
  %v7180 = vsel %vm7172, %v7115, %v6225
  %v7181 = vsel %vm7172, %v7116, %v6227
  %v7182 = vsel %vm7172, %v7117, %v6229
  %v7183 = vsel %vm7172, %v7118, %v6231
  %v7184 = vsel %vm7172, %v7119, %v6233
  %v7185 = vsel %vm7172, %v7120, %v6235
  %v7186 = vsel %vm7172, %v7121, %v6237
  %v7187 = vsel %vm7172, %v7122, %v6239
  %v7188 = vsel %vm7172, %v7123, %v6241
  %v7189 = vsel %vm7172, %v7124, %v6243
  %v7190 = vsel %vm7172, %v7125, %v6245
  %v7191 = vsel %vm7172, %v7126, %v6247
  %v7192 = vsel %vm7172, %v7127, %v6249
  %v7193 = vsel %vm7172, %v7128, %v6251
  %v7194 = vsel %vm7172, %v7129, %v6253
  %v7195 = vsel %vm7172, %v7130, %v6255
  %v7196 = vsel %vm7172, %v7131, %v6257
  %v7197 = vsel %vm7172, %v7132, %v6259
  %v7198 = vsel %vm7172, %v7133, %v6261
  %v7199 = vsel %vm7172, %v7134, %v6263
  %v7200 = vsel %vm7172, %v7135, %v6265
  %v7201 = vsel %vm7172, %v7136, %v6267
  %v7202 = vsel %vm7172, %v7137, %v6269
  %v7203 = vsel %vm7172, %v7138, %v6271
  %v7204 = vsel %vm7172, %v7139, %v6273
  %v7205 = vsel %vm7172, %v7140, %v6275
  %v7206 = vsel %vm7172, %v7141, %v6277
  %v7207 = vsel %vm7172, %v7142, %v6279
  %v7208 = vsel %vm7172, %v7143, %v6281
  %v7209 = vsel %vm7172, %v7144, %v6283
  %v7210 = vsel %vm7172, %v7145, %v6285
  %v7211 = vsel %vm7172, %v7146, %v6287
  %v7212 = vsel %vm7172, %v7147, %v6289
  %v7213 = vsel %vm7172, %v7148, %v6291
  %v7214 = vsel %vm7172, %v7149, %v6293
  %v7215 = vsel %vm7172, %v7150, %v6295
  %v7216 = vsel %vm7172, %v7151, %v6297
  %v7217 = vsel %vm7172, %v7152, %v6299
  %v7218 = vsel %vm7172, %v7153, %v6301
  %v7219 = vsel %vm7172, %v7154, %v6303
  %v7220 = vsel %vm7172, %v7155, %v6305
  %v7221 = vsel %vm7172, %v7156, %v6307
  %v7222 = vsel %vm7172, %v7157, %v6309
  %v7223 = vsel %vm7172, %v7158, %v6311
  %v7224 = vsel %vm7172, %v7159, %v6313
  %v7225 = vsel %vm7172, %v7160, %v6315
  %v7226 = vsel %vm7172, %v7161, %v6317
  %v7227 = vsel %vm7172, %v7162, %v6319
  %v7228 = vsel %vm7172, %v7163, %v6321
  %v7229 = vsel %vm7172, %v7164, %v6323
  %v7230 = vsel %vm7172, %v7165, %v6325
  %v7231 = vsel %vm7172, %v7166, %v6327
  %v7232 = vsel %vm7172, %v7167, %v6329
  %v7233 = vsel %vm7172, %v7168, %v6331
  %v7234 = vsel %vm7172, %v7169, %v6333
  %v7235 = vsel %vm7172, %v7170, %v6335
  %v7236 = vsel %vm7172, %v7171, %v6337
  %vm7237 = vcmask 785408
  %v7238 = vsel %vm7237, %v7173, %v6467
  %v7239 = vsel %vm7237, %v7174, %v6469
  %v7240 = vsel %vm7237, %v7175, %v6471
  %v7241 = vsel %vm7237, %v7176, %v6473
  %v7242 = vsel %vm7237, %v7177, %v6475
  %v7243 = vsel %vm7237, %v7178, %v6477
  %v7244 = vsel %vm7237, %v7179, %v6479
  %v7245 = vsel %vm7237, %v7180, %v6481
  %v7246 = vsel %vm7237, %v7181, %v6483
  %v7247 = vsel %vm7237, %v7182, %v6485
  %v7248 = vsel %vm7237, %v7183, %v6487
  %v7249 = vsel %vm7237, %v7184, %v6489
  %v7250 = vsel %vm7237, %v7185, %v6491
  %v7251 = vsel %vm7237, %v7186, %v6493
  %v7252 = vsel %vm7237, %v7187, %v6495
  %v7253 = vsel %vm7237, %v7188, %v6497
  %v7254 = vsel %vm7237, %v7189, %v6499
  %v7255 = vsel %vm7237, %v7190, %v6501
  %v7256 = vsel %vm7237, %v7191, %v6503
  %v7257 = vsel %vm7237, %v7192, %v6505
  %v7258 = vsel %vm7237, %v7193, %v6507
  %v7259 = vsel %vm7237, %v7194, %v6509
  %v7260 = vsel %vm7237, %v7195, %v6511
  %v7261 = vsel %vm7237, %v7196, %v6513
  %v7262 = vsel %vm7237, %v7197, %v6515
  %v7263 = vsel %vm7237, %v7198, %v6517
  %v7264 = vsel %vm7237, %v7199, %v6519
  %v7265 = vsel %vm7237, %v7200, %v6521
  %v7266 = vsel %vm7237, %v7201, %v6523
  %v7267 = vsel %vm7237, %v7202, %v6525
  %v7268 = vsel %vm7237, %v7203, %v6527
  %v7269 = vsel %vm7237, %v7204, %v6529
  %v7270 = vsel %vm7237, %v7205, %v6531
  %v7271 = vsel %vm7237, %v7206, %v6533
  %v7272 = vsel %vm7237, %v7207, %v6535
  %v7273 = vsel %vm7237, %v7208, %v6537
  %v7274 = vsel %vm7237, %v7209, %v6539
  %v7275 = vsel %vm7237, %v7210, %v6541
  %v7276 = vsel %vm7237, %v7211, %v6543
  %v7277 = vsel %vm7237, %v7212, %v6545
  %v7278 = vsel %vm7237, %v7213, %v6547
  %v7279 = vsel %vm7237, %v7214, %v6549
  %v7280 = vsel %vm7237, %v7215, %v6551
  %v7281 = vsel %vm7237, %v7216, %v6553
  %v7282 = vsel %vm7237, %v7217, %v6555
  %v7283 = vsel %vm7237, %v7218, %v6557
  %v7284 = vsel %vm7237, %v7219, %v6559
  %v7285 = vsel %vm7237, %v7220, %v6561
  %v7286 = vsel %vm7237, %v7221, %v6563
  %v7287 = vsel %vm7237, %v7222, %v6565
  %v7288 = vsel %vm7237, %v7223, %v6567
  %v7289 = vsel %vm7237, %v7224, %v6569
  %v7290 = vsel %vm7237, %v7225, %v6571
  %v7291 = vsel %vm7237, %v7226, %v6573
  %v7292 = vsel %vm7237, %v7227, %v6575
  %v7293 = vsel %vm7237, %v7228, %v6577
  %v7294 = vsel %vm7237, %v7229, %v6579
  %v7295 = vsel %vm7237, %v7230, %v6581
  %v7296 = vsel %vm7237, %v7231, %v6583
  %v7297 = vsel %vm7237, %v7232, %v6585
  %v7298 = vsel %vm7237, %v7233, %v6587
  %v7299 = vsel %vm7237, %v7234, %v6589
  %v7300 = vsel %vm7237, %v7235, %v6591
  %v7301 = vsel %vm7237, %v7236, %v6593
  %vm7302 = vcmask 916480
  %v7303 = vsel %vm7302, %v7238, %v6723
  %v7304 = vsel %vm7302, %v7239, %v6725
  %v7305 = vsel %vm7302, %v7240, %v6727
  %v7306 = vsel %vm7302, %v7241, %v6729
  %v7307 = vsel %vm7302, %v7242, %v6731
  %v7308 = vsel %vm7302, %v7243, %v6733
  %v7309 = vsel %vm7302, %v7244, %v6735
  %v7310 = vsel %vm7302, %v7245, %v6737
  %v7311 = vsel %vm7302, %v7246, %v6739
  %v7312 = vsel %vm7302, %v7247, %v6741
  %v7313 = vsel %vm7302, %v7248, %v6743
  %v7314 = vsel %vm7302, %v7249, %v6745
  %v7315 = vsel %vm7302, %v7250, %v6747
  %v7316 = vsel %vm7302, %v7251, %v6749
  %v7317 = vsel %vm7302, %v7252, %v6751
  %v7318 = vsel %vm7302, %v7253, %v6753
  %v7319 = vsel %vm7302, %v7254, %v6755
  %v7320 = vsel %vm7302, %v7255, %v6757
  %v7321 = vsel %vm7302, %v7256, %v6759
  %v7322 = vsel %vm7302, %v7257, %v6761
  %v7323 = vsel %vm7302, %v7258, %v6763
  %v7324 = vsel %vm7302, %v7259, %v6765
  %v7325 = vsel %vm7302, %v7260, %v6767
  %v7326 = vsel %vm7302, %v7261, %v6769
  %v7327 = vsel %vm7302, %v7262, %v6771
  %v7328 = vsel %vm7302, %v7263, %v6773
  %v7329 = vsel %vm7302, %v7264, %v6775
  %v7330 = vsel %vm7302, %v7265, %v6777
  %v7331 = vsel %vm7302, %v7266, %v6779
  %v7332 = vsel %vm7302, %v7267, %v6781
  %v7333 = vsel %vm7302, %v7268, %v6783
  %v7334 = vsel %vm7302, %v7269, %v6785
  %v7335 = vsel %vm7302, %v7270, %v6787
  %v7336 = vsel %vm7302, %v7271, %v6789
  %v7337 = vsel %vm7302, %v7272, %v6791
  %v7338 = vsel %vm7302, %v7273, %v6793
  %v7339 = vsel %vm7302, %v7274, %v6795
  %v7340 = vsel %vm7302, %v7275, %v6797
  %v7341 = vsel %vm7302, %v7276, %v6799
  %v7342 = vsel %vm7302, %v7277, %v6801
  %v7343 = vsel %vm7302, %v7278, %v6803
  %v7344 = vsel %vm7302, %v7279, %v6805
  %v7345 = vsel %vm7302, %v7280, %v6807
  %v7346 = vsel %vm7302, %v7281, %v6809
  %v7347 = vsel %vm7302, %v7282, %v6811
  %v7348 = vsel %vm7302, %v7283, %v6813
  %v7349 = vsel %vm7302, %v7284, %v6815
  %v7350 = vsel %vm7302, %v7285, %v6817
  %v7351 = vsel %vm7302, %v7286, %v6819
  %v7352 = vsel %vm7302, %v7287, %v6821
  %v7353 = vsel %vm7302, %v7288, %v6823
  %v7354 = vsel %vm7302, %v7289, %v6825
  %v7355 = vsel %vm7302, %v7290, %v6827
  %v7356 = vsel %vm7302, %v7291, %v6829
  %v7357 = vsel %vm7302, %v7292, %v6831
  %v7358 = vsel %vm7302, %v7293, %v6833
  %v7359 = vsel %vm7302, %v7294, %v6835
  %v7360 = vsel %vm7302, %v7295, %v6837
  %v7361 = vsel %vm7302, %v7296, %v6839
  %v7362 = vsel %vm7302, %v7297, %v6841
  %v7363 = vsel %vm7302, %v7298, %v6843
  %v7364 = vsel %vm7302, %v7299, %v6845
  %v7365 = vsel %vm7302, %v7300, %v6847
  %v7366 = vsel %vm7302, %v7301, %v6849
  %v7367 = vpack.c.bf16 %v7304, %v7303
  %v7368 = vpack.c.bf16 %v5059, %v5058
  %v7369 = vpack.c.bf16 %v7306, %v7305
  %v7370 = vpack.c.bf16 %v5061, %v5060
  %v7371 = vpack.c.bf16 %v7308, %v7307
  %v7372 = vpack.c.bf16 %v5063, %v5062
  %v7373 = vpack.c.bf16 %v7310, %v7309
  %v7374 = vpack.c.bf16 %v5065, %v5064
  %v7375 = vpack.c.bf16 %v7312, %v7311
  %v7376 = vpack.c.bf16 %v5067, %v5066
  %v7377 = vpack.c.bf16 %v7314, %v7313
  %v7378 = vpack.c.bf16 %v5069, %v5068
  %v7379 = vpack.c.bf16 %v7316, %v7315
  %v7380 = vpack.c.bf16 %v5071, %v5070
  %v7381 = vpack.c.bf16 %v7318, %v7317
  %v7382 = vpack.c.bf16 %v5073, %v5072
  %v7383 = vpack.c.bf16 %v7320, %v7319
  %v7384 = vpack.c.bf16 %v5075, %v5074
  %v7385 = vpack.c.bf16 %v7322, %v7321
  %v7386 = vpack.c.bf16 %v5077, %v5076
  %v7387 = vpack.c.bf16 %v7324, %v7323
  %v7388 = vpack.c.bf16 %v5079, %v5078
  %v7389 = vpack.c.bf16 %v7326, %v7325
  %v7390 = vpack.c.bf16 %v5081, %v5080
  %v7391 = vpack.c.bf16 %v7328, %v7327
  %v7392 = vpack.c.bf16 %v5083, %v5082
  %v7393 = vpack.c.bf16 %v7330, %v7329
  %v7394 = vpack.c.bf16 %v5085, %v5084
  %v7395 = vpack.c.bf16 %v7332, %v7331
  %v7396 = vpack.c.bf16 %v5087, %v5086
  %v7397 = vpack.c.bf16 %v7334, %v7333
  %v7398 = vpack.c.bf16 %v5089, %v5088
  %v7399 = vpack.c.bf16 %v7336, %v7335
  %v7400 = vpack.c.bf16 %v5091, %v5090
  %v7401 = vpack.c.bf16 %v7338, %v7337
  %v7402 = vpack.c.bf16 %v5093, %v5092
  %v7403 = vpack.c.bf16 %v7340, %v7339
  %v7404 = vpack.c.bf16 %v5095, %v5094
  %v7405 = vpack.c.bf16 %v7342, %v7341
  %v7406 = vpack.c.bf16 %v5097, %v5096
  %v7407 = vpack.c.bf16 %v7344, %v7343
  %v7408 = vpack.c.bf16 %v5099, %v5098
  %v7409 = vpack.c.bf16 %v7346, %v7345
  %v7410 = vpack.c.bf16 %v5101, %v5100
  %v7411 = vpack.c.bf16 %v7348, %v7347
  %v7412 = vpack.c.bf16 %v5103, %v5102
  %v7413 = vpack.c.bf16 %v7350, %v7349
  %v7414 = vpack.c.bf16 %v5105, %v5104
  %v7415 = vpack.c.bf16 %v7352, %v7351
  %v7416 = vpack.c.bf16 %v5107, %v5106
  %v7417 = vpack.c.bf16 %v7354, %v7353
  %v7418 = vpack.c.bf16 %v5109, %v5108
  %v7419 = vpack.c.bf16 %v7356, %v7355
  %v7420 = vpack.c.bf16 %v5111, %v5110
  %v7421 = vpack.c.bf16 %v7358, %v7357
  %v7422 = vpack.c.bf16 %v5113, %v5112
  %v7423 = vpack.c.bf16 %v7360, %v7359
  %v7424 = vpack.c.bf16 %v5115, %v5114
  %v7425 = vpack.c.bf16 %v7362, %v7361
  %v7426 = vpack.c.bf16 %v5117, %v5116
  %v7427 = vpack.c.bf16 %v7364, %v7363
  %v7428 = vpack.c.bf16 %v5119, %v5118
  %v7429 = vpack.c.bf16 %v7366, %v7365
  %v7430 = vpack.c.bf16 %v5121, %v5120
  %v7431 = vld [vmem:[%s3] sm:$0xf]
  %v7432 = vld [vmem:[%s3 + $0x4] sm:$0xf]
  %v7433 = vld [vmem:[%s3 + $0x8] sm:$0xf]
  %v7434 = vld [vmem:[%s3 + $0xc] sm:$0xf]
  %v7435 = vld [vmem:[%s3 + $0x10] sm:$0xf]
  %v7436 = vld [vmem:[%s3 + $0x14] sm:$0xf]
  %v7437 = vld [vmem:[%s3 + $0x18] sm:$0xf]
  %v7438 = vld [vmem:[%s3 + $0x1c] sm:$0xf]
  %v7439 = vld [vmem:[%s3 + $0x20] sm:$0xf]
  %v7440 = vld [vmem:[%s3 + $0x24] sm:$0xf]
  %v7441 = vld [vmem:[%s3 + $0x28] sm:$0xf]
  %v7442 = vld [vmem:[%s3 + $0x2c] sm:$0xf]
  %v7443 = vld [vmem:[%s3 + $0x30] sm:$0xf]
  %v7444 = vld [vmem:[%s3 + $0x34] sm:$0xf]
  %v7445 = vld [vmem:[%s3 + $0x38] sm:$0xf]
  %v7446 = vld [vmem:[%s3 + $0x3c] sm:$0xf]
  %v7447 = vld [vmem:[%s3 + $0x40] sm:$0xf]
  %v7448 = vld [vmem:[%s3 + $0x44] sm:$0xf]
  %v7449 = vld [vmem:[%s4] sm:$0x1]
  %v7451 = vlaneseq
  %v7452 = vshrl.u32 %v7451, 7
  %v7453 = vsub.s32 0, %v7452
  %v7454 = vrot.slane %v7449, %v7453
  %v7474 = vunpack.c.l.b16 %v7431
  %v7475 = vunpack.c.l.b16 %v7432
  %v7476 = vunpack.c.l.b16 %v7433
  %v7477 = vunpack.c.l.b16 %v7434
  %v7478 = vunpack.c.l.b16 %v7435
  %v7479 = vunpack.c.l.b16 %v7436
  %v7480 = vunpack.c.l.b16 %v7437
  %v7481 = vunpack.c.l.b16 %v7438
  %v7482 = vunpack.c.l.b16 %v7439
  %v7483 = vunpack.c.l.b16 %v7440
  %v7484 = vunpack.c.l.b16 %v7441
  %v7485 = vunpack.c.l.b16 %v7442
  %v7486 = vunpack.c.l.b16 %v7443
  %v7487 = vunpack.c.l.b16 %v7444
  %v7488 = vunpack.c.l.b16 %v7445
  %v7489 = vunpack.c.l.b16 %v7446
  %v7490 = vunpack.c.l.b16 %v7447
  %v7491 = vunpack.c.l.b16 %v7448
  %v7492 = vpack.c.b16 %v7475, %v7474
  %v7493 = vpack.c.b16 %v7477, %v7476
  %v7494 = vpack.c.b16 %v7479, %v7478
  %v7495 = vpack.c.b16 %v7481, %v7480
  %v7496 = vpack.c.b16 %v7483, %v7482
  %v7497 = vpack.c.b16 %v7485, %v7484
  %v7498 = vpack.c.b16 %v7487, %v7486
  %v7499 = vpack.c.b16 %v7489, %v7488
  %v7500 = vpack.c.b16 %v7491, %v7490
  %v7511 = vsel %vm3114, %v7368, 0
  %v7514 = vsel %vm3114, %v7370, 0
  %v7517 = vsel %vm3114, %v7372, 0
  %v7520 = vsel %vm3114, %v7374, 0
  %v7523 = vsel %vm3114, %v7376, 0
  %v7526 = vsel %vm3114, %v7378, 0
  %v7529 = vsel %vm3114, %v7380, 0
  %v7532 = vsel %vm3114, %v7382, 0
  %v7535 = vsel %vm3114, %v7384, 0
  %v7538 = vsel %vm3114, %v7386, 0
  %v7541 = vsel %vm3114, %v7388, 0
  %v7544 = vsel %vm3114, %v7390, 0
  %v7547 = vsel %vm3114, %v7392, 0
  %v7550 = vsel %vm3114, %v7394, 0
  %v7553 = vsel %vm3114, %v7396, 0
  %v7556 = vsel %vm3114, %v7398, 0
  %v7559 = vsel %vm3114, %v7400, 0
  %v7562 = vsel %vm3114, %v7402, 0
  %v7565 = vsel %vm3114, %v7404, 0
  %v7568 = vsel %vm3114, %v7406, 0
  %v7571 = vsel %vm3114, %v7408, 0
  %v7574 = vsel %vm3114, %v7410, 0
  %v7577 = vsel %vm3114, %v7412, 0
  %v7580 = vsel %vm3114, %v7414, 0
  %v7583 = vsel %vm3114, %v7416, 0
  %v7586 = vsel %vm3114, %v7418, 0
  %v7589 = vsel %vm3114, %v7420, 0
  %v7592 = vsel %vm3114, %v7422, 0
  %v7595 = vsel %vm3114, %v7424, 0
  %v7598 = vsel %vm3114, %v7426, 0
  %v7601 = vsel %vm3114, %v7428, 0
  %v7604 = vsel %vm3114, %v7430, 0
  %7606 = vmatprep.subr.bf16.mxu0 0
  %7607 = vmatpush1.bf16.msra.mxu0 %v7492
  %7608 = vmatprep.subr.bf16.mxu0 0
  %7609 = vmatpush1.bf16.msra.mxu0 %v7493
  %7610 = vmatprep.subr.bf16.mxu0 0
  %7611 = vmatpush1.bf16.msra.mxu0 %v7494
  %7612 = vmatprep.subr.bf16.mxu0 0
  %7613 = vmatpush1.bf16.msra.mxu0 %v7495
  %7614 = vmatprep.subr.bf16.mxu0 0
  %7615 = vmatpush1.bf16.msra.mxu0 %v7496
  %7616 = vmatprep.subr.bf16.mxu0 0
  %7617 = vmatpush1.bf16.msra.mxu0 %v7497
  %7618 = vmatprep.subr.bf16.mxu0 0
  %7619 = vmatpush1.bf16.msra.mxu0 %v7498
  %7620 = vmatprep.subr.bf16.mxu0 0
  %7621 = vmatpush1.bf16.msra.mxu0 %v7499
  %7622 = vmatprep.subr.bf16.mxu0 0
  %7623 = vmatpush1.bf16.msra.mxu0 %v7500
  %7624 = vmatprep.subr.bf16.mxu0 0
  %7625 = vmatpush1.bf16.msra.mxu0 0
  %7626 = vmatprep.subr.bf16.mxu0 0
  %7627 = vmatpush1.bf16.msra.mxu0 0
  %7628 = vmatprep.subr.bf16.mxu0 0
  %7629 = vmatpush1.bf16.msra.mxu0 0
  %7630 = vmatprep.subr.bf16.mxu0 0
  %7631 = vmatpush1.bf16.msra.mxu0 0
  %7632 = vmatprep.subr.bf16.mxu0 0
  %7633 = vmatpush1.bf16.msra.mxu0 0
  %7634 = vmatprep.subr.bf16.mxu0 0
  %7635 = vmatpush1.bf16.msra.mxu0 0
  %7636 = vmatprep.subr.bf16.mxu0 0
  %7637 = vmatpush1.bf16.msra.mxu0 0
  %7638 = vmatprep.mubr.bf16.mxu0 %v7511
  %7639 = vmatmul.mubr.bf16.gmra.mrb[0].mxu0 %v7367
  %v7640 = vpop.f32.mrb[0].mxu0
  %v7641 = vadd.f32 %v7454, %v7640
  %v7642 = vpop.f32.mrb[0].mxu0
  %v7643 = vpop.f32.mrb[0].mxu0
  %v7644 = vadd.f32 %v7454, %v7643
  %v7645 = vpop.f32.mrb[0].mxu0
  %7646 = vmatprep.mubr.bf16.mxu0 %v7514
  %7647 = vmatmul.mubr.bf16.gmra.mrb[0].mxu0 %v7369
  %v7648 = vpop.f32.mrb[0].mxu0
  %v7649 = vadd.f32 %v7454, %v7648
  %v7650 = vpop.f32.mrb[0].mxu0
  %v7651 = vpop.f32.mrb[0].mxu0
  %v7652 = vadd.f32 %v7454, %v7651
  %v7653 = vpop.f32.mrb[0].mxu0
  %7654 = vmatprep.mubr.bf16.mxu0 %v7517
  %7655 = vmatmul.mubr.bf16.gmra.mrb[0].mxu0 %v7371
  %v7656 = vpop.f32.mrb[0].mxu0
  %v7657 = vadd.f32 %v7454, %v7656
  %v7658 = vpop.f32.mrb[0].mxu0
  %v7659 = vpop.f32.mrb[0].mxu0
  %v7660 = vadd.f32 %v7454, %v7659
  %v7661 = vpop.f32.mrb[0].mxu0
  %7662 = vmatprep.mubr.bf16.mxu0 %v7520
  %7663 = vmatmul.mubr.bf16.gmra.mrb[0].mxu0 %v7373
  %v7664 = vpop.f32.mrb[0].mxu0
  %v7665 = vadd.f32 %v7454, %v7664
  %v7666 = vpop.f32.mrb[0].mxu0
  %v7667 = vpop.f32.mrb[0].mxu0
  %v7668 = vadd.f32 %v7454, %v7667
  %v7669 = vpop.f32.mrb[0].mxu0
  %7670 = vmatprep.mubr.bf16.mxu0 %v7523
  %7671 = vmatmul.mubr.bf16.gmra.mrb[0].mxu0 %v7375
  %v7672 = vpop.f32.mrb[0].mxu0
  %v7673 = vadd.f32 %v7454, %v7672
  %v7674 = vpop.f32.mrb[0].mxu0
  %v7675 = vpop.f32.mrb[0].mxu0
  %v7676 = vadd.f32 %v7454, %v7675
  %v7677 = vpop.f32.mrb[0].mxu0
  %7678 = vmatprep.mubr.bf16.mxu0 %v7526
  %7679 = vmatmul.mubr.bf16.gmra.mrb[0].mxu0 %v7377
  %v7680 = vpop.f32.mrb[0].mxu0
  %v7681 = vadd.f32 %v7454, %v7680
  %v7682 = vpop.f32.mrb[0].mxu0
  %v7683 = vpop.f32.mrb[0].mxu0
  %v7684 = vadd.f32 %v7454, %v7683
  %v7685 = vpop.f32.mrb[0].mxu0
  %7686 = vmatprep.mubr.bf16.mxu0 %v7529
  %7687 = vmatmul.mubr.bf16.gmra.mrb[0].mxu0 %v7379
  %v7688 = vpop.f32.mrb[0].mxu0
  %v7689 = vadd.f32 %v7454, %v7688
  %v7690 = vpop.f32.mrb[0].mxu0
  %v7691 = vpop.f32.mrb[0].mxu0
  %v7692 = vadd.f32 %v7454, %v7691
  %v7693 = vpop.f32.mrb[0].mxu0
  %7694 = vmatprep.mubr.bf16.mxu0 %v7532
  %7695 = vmatmul.mubr.bf16.gmra.mrb[0].mxu0 %v7381
  %v7696 = vpop.f32.mrb[0].mxu0
  %v7697 = vadd.f32 %v7454, %v7696
  %v7698 = vpop.f32.mrb[0].mxu0
  %v7699 = vpop.f32.mrb[0].mxu0
  %v7700 = vadd.f32 %v7454, %v7699
  %v7701 = vpop.f32.mrb[0].mxu0
  %7702 = vmatprep.mubr.bf16.mxu0 %v7535
  %7703 = vmatmul.mubr.bf16.gmra.mrb[0].mxu0 %v7383
  %v7704 = vpop.f32.mrb[0].mxu0
  %v7705 = vadd.f32 %v7454, %v7704
  %v7706 = vpop.f32.mrb[0].mxu0
  %v7707 = vpop.f32.mrb[0].mxu0
  %v7708 = vadd.f32 %v7454, %v7707
  %v7709 = vpop.f32.mrb[0].mxu0
  %7710 = vmatprep.mubr.bf16.mxu0 %v7538
  %7711 = vmatmul.mubr.bf16.gmra.mrb[0].mxu0 %v7385
  %v7712 = vpop.f32.mrb[0].mxu0
  %v7713 = vadd.f32 %v7454, %v7712
  %v7714 = vpop.f32.mrb[0].mxu0
  %v7715 = vpop.f32.mrb[0].mxu0
  %v7716 = vadd.f32 %v7454, %v7715
  %v7717 = vpop.f32.mrb[0].mxu0
  %7718 = vmatprep.mubr.bf16.mxu0 %v7541
  %7719 = vmatmul.mubr.bf16.gmra.mrb[0].mxu0 %v7387
  %v7720 = vpop.f32.mrb[0].mxu0
  %v7721 = vadd.f32 %v7454, %v7720
  %v7722 = vpop.f32.mrb[0].mxu0
  %v7723 = vpop.f32.mrb[0].mxu0
  %v7724 = vadd.f32 %v7454, %v7723
  %v7725 = vpop.f32.mrb[0].mxu0
  %7726 = vmatprep.mubr.bf16.mxu0 %v7544
  %7727 = vmatmul.mubr.bf16.gmra.mrb[0].mxu0 %v7389
  %v7728 = vpop.f32.mrb[0].mxu0
  %v7729 = vadd.f32 %v7454, %v7728
  %v7730 = vpop.f32.mrb[0].mxu0
  %v7731 = vpop.f32.mrb[0].mxu0
  %v7732 = vadd.f32 %v7454, %v7731
  %v7733 = vpop.f32.mrb[0].mxu0
  %7734 = vmatprep.mubr.bf16.mxu0 %v7547
  %7735 = vmatmul.mubr.bf16.gmra.mrb[0].mxu0 %v7391
  %v7736 = vpop.f32.mrb[0].mxu0
  %v7737 = vadd.f32 %v7454, %v7736
  %v7738 = vpop.f32.mrb[0].mxu0
  %v7739 = vpop.f32.mrb[0].mxu0
  %v7740 = vadd.f32 %v7454, %v7739
  %v7741 = vpop.f32.mrb[0].mxu0
  %7742 = vmatprep.mubr.bf16.mxu0 %v7550
  %7743 = vmatmul.mubr.bf16.gmra.mrb[0].mxu0 %v7393
  %v7744 = vpop.f32.mrb[0].mxu0
  %v7745 = vadd.f32 %v7454, %v7744
  %v7746 = vpop.f32.mrb[0].mxu0
  %v7747 = vpop.f32.mrb[0].mxu0
  %v7748 = vadd.f32 %v7454, %v7747
  %v7749 = vpop.f32.mrb[0].mxu0
  %7750 = vmatprep.mubr.bf16.mxu0 %v7553
  %7751 = vmatmul.mubr.bf16.gmra.mrb[0].mxu0 %v7395
  %v7752 = vpop.f32.mrb[0].mxu0
  %v7753 = vadd.f32 %v7454, %v7752
  %v7754 = vpop.f32.mrb[0].mxu0
  %v7755 = vpop.f32.mrb[0].mxu0
  %v7756 = vadd.f32 %v7454, %v7755
  %v7757 = vpop.f32.mrb[0].mxu0
  %7758 = vmatprep.mubr.bf16.mxu0 %v7556
  %7759 = vmatmul.mubr.bf16.gmra.mrb[0].mxu0 %v7397
  %v7760 = vpop.f32.mrb[0].mxu0
  %v7761 = vadd.f32 %v7454, %v7760
  %v7762 = vpop.f32.mrb[0].mxu0
  %v7763 = vpop.f32.mrb[0].mxu0
  %v7764 = vadd.f32 %v7454, %v7763
  %v7765 = vpop.f32.mrb[0].mxu0
  %7766 = vmatprep.mubr.bf16.mxu0 %v7559
  %7767 = vmatmul.mubr.bf16.gmra.mrb[0].mxu0 %v7399
  %v7768 = vpop.f32.mrb[0].mxu0
  %v7769 = vadd.f32 %v7454, %v7768
  %v7770 = vpop.f32.mrb[0].mxu0
  %v7771 = vpop.f32.mrb[0].mxu0
  %v7772 = vadd.f32 %v7454, %v7771
  %v7773 = vpop.f32.mrb[0].mxu0
  %7774 = vmatprep.mubr.bf16.mxu0 %v7562
  %7775 = vmatmul.mubr.bf16.gmra.mrb[0].mxu0 %v7401
  %v7776 = vpop.f32.mrb[0].mxu0
  %v7777 = vadd.f32 %v7454, %v7776
  %v7778 = vpop.f32.mrb[0].mxu0
  %v7779 = vpop.f32.mrb[0].mxu0
  %v7780 = vadd.f32 %v7454, %v7779
  %v7781 = vpop.f32.mrb[0].mxu0
  %7782 = vmatprep.mubr.bf16.mxu0 %v7565
  %7783 = vmatmul.mubr.bf16.gmra.mrb[0].mxu0 %v7403
  %v7784 = vpop.f32.mrb[0].mxu0
  %v7785 = vadd.f32 %v7454, %v7784
  %v7786 = vpop.f32.mrb[0].mxu0
  %v7787 = vpop.f32.mrb[0].mxu0
  %v7788 = vadd.f32 %v7454, %v7787
  %v7789 = vpop.f32.mrb[0].mxu0
  %7790 = vmatprep.mubr.bf16.mxu0 %v7568
  %7791 = vmatmul.mubr.bf16.gmra.mrb[0].mxu0 %v7405
  %v7792 = vpop.f32.mrb[0].mxu0
  %v7793 = vadd.f32 %v7454, %v7792
  %v7794 = vpop.f32.mrb[0].mxu0
  %v7795 = vpop.f32.mrb[0].mxu0
  %v7796 = vadd.f32 %v7454, %v7795
  %v7797 = vpop.f32.mrb[0].mxu0
  %7798 = vmatprep.mubr.bf16.mxu0 %v7571
  %7799 = vmatmul.mubr.bf16.gmra.mrb[0].mxu0 %v7407
  %v7800 = vpop.f32.mrb[0].mxu0
  %v7801 = vadd.f32 %v7454, %v7800
  %v7802 = vpop.f32.mrb[0].mxu0
  %v7803 = vpop.f32.mrb[0].mxu0
  %v7804 = vadd.f32 %v7454, %v7803
  %v7805 = vpop.f32.mrb[0].mxu0
  %7806 = vmatprep.mubr.bf16.mxu0 %v7574
  %7807 = vmatmul.mubr.bf16.gmra.mrb[0].mxu0 %v7409
  %v7808 = vpop.f32.mrb[0].mxu0
  %v7809 = vadd.f32 %v7454, %v7808
  %v7810 = vpop.f32.mrb[0].mxu0
  %v7811 = vpop.f32.mrb[0].mxu0
  %v7812 = vadd.f32 %v7454, %v7811
  %v7813 = vpop.f32.mrb[0].mxu0
  %7814 = vmatprep.mubr.bf16.mxu0 %v7577
  %7815 = vmatmul.mubr.bf16.gmra.mrb[0].mxu0 %v7411
  %v7816 = vpop.f32.mrb[0].mxu0
  %v7817 = vadd.f32 %v7454, %v7816
  %v7818 = vpop.f32.mrb[0].mxu0
  %v7819 = vpop.f32.mrb[0].mxu0
  %v7820 = vadd.f32 %v7454, %v7819
  %v7821 = vpop.f32.mrb[0].mxu0
  %7822 = vmatprep.mubr.bf16.mxu0 %v7580
  %7823 = vmatmul.mubr.bf16.gmra.mrb[0].mxu0 %v7413
  %v7824 = vpop.f32.mrb[0].mxu0
  %v7825 = vadd.f32 %v7454, %v7824
  %v7826 = vpop.f32.mrb[0].mxu0
  %v7827 = vpop.f32.mrb[0].mxu0
  %v7828 = vadd.f32 %v7454, %v7827
  %v7829 = vpop.f32.mrb[0].mxu0
  %7830 = vmatprep.mubr.bf16.mxu0 %v7583
  %7831 = vmatmul.mubr.bf16.gmra.mrb[0].mxu0 %v7415
  %v7832 = vpop.f32.mrb[0].mxu0
  %v7833 = vadd.f32 %v7454, %v7832
  %v7834 = vpop.f32.mrb[0].mxu0
  %v7835 = vpop.f32.mrb[0].mxu0
  %v7836 = vadd.f32 %v7454, %v7835
  %v7837 = vpop.f32.mrb[0].mxu0
  %7838 = vmatprep.mubr.bf16.mxu0 %v7586
  %7839 = vmatmul.mubr.bf16.gmra.mrb[0].mxu0 %v7417
  %v7840 = vpop.f32.mrb[0].mxu0
  %v7841 = vadd.f32 %v7454, %v7840
  %v7842 = vpop.f32.mrb[0].mxu0
  %v7843 = vpop.f32.mrb[0].mxu0
  %v7844 = vadd.f32 %v7454, %v7843
  %v7845 = vpop.f32.mrb[0].mxu0
  %7846 = vmatprep.mubr.bf16.mxu0 %v7589
  %7847 = vmatmul.mubr.bf16.gmra.mrb[0].mxu0 %v7419
  %v7848 = vpop.f32.mrb[0].mxu0
  %v7849 = vadd.f32 %v7454, %v7848
  %v7850 = vpop.f32.mrb[0].mxu0
  %v7851 = vpop.f32.mrb[0].mxu0
  %v7852 = vadd.f32 %v7454, %v7851
  %v7853 = vpop.f32.mrb[0].mxu0
  %7854 = vmatprep.mubr.bf16.mxu0 %v7592
  %7855 = vmatmul.mubr.bf16.gmra.mrb[0].mxu0 %v7421
  %v7856 = vpop.f32.mrb[0].mxu0
  %v7857 = vadd.f32 %v7454, %v7856
  %v7858 = vpop.f32.mrb[0].mxu0
  %v7859 = vpop.f32.mrb[0].mxu0
  %v7860 = vadd.f32 %v7454, %v7859
  %v7861 = vpop.f32.mrb[0].mxu0
  %7862 = vmatprep.mubr.bf16.mxu0 %v7595
  %7863 = vmatmul.mubr.bf16.gmra.mrb[0].mxu0 %v7423
  %v7864 = vpop.f32.mrb[0].mxu0
  %v7865 = vadd.f32 %v7454, %v7864
  %v7866 = vpop.f32.mrb[0].mxu0
  %v7867 = vpop.f32.mrb[0].mxu0
  %v7868 = vadd.f32 %v7454, %v7867
  %v7869 = vpop.f32.mrb[0].mxu0
  %7870 = vmatprep.mubr.bf16.mxu0 %v7598
  %7871 = vmatmul.mubr.bf16.gmra.mrb[0].mxu0 %v7425
  %v7872 = vpop.f32.mrb[0].mxu0
  %v7873 = vadd.f32 %v7454, %v7872
  %v7874 = vpop.f32.mrb[0].mxu0
  %v7875 = vpop.f32.mrb[0].mxu0
  %v7876 = vadd.f32 %v7454, %v7875
  %v7877 = vpop.f32.mrb[0].mxu0
  %7878 = vmatprep.mubr.bf16.mxu0 %v7601
  %7879 = vmatmul.mubr.bf16.gmra.mrb[0].mxu0 %v7427
  %v7880 = vpop.f32.mrb[0].mxu0
  %v7881 = vadd.f32 %v7454, %v7880
  %v7882 = vpop.f32.mrb[0].mxu0
  %v7883 = vpop.f32.mrb[0].mxu0
  %v7884 = vadd.f32 %v7454, %v7883
  %v7885 = vpop.f32.mrb[0].mxu0
  %7886 = vmatprep.mubr.bf16.mxu0 %v7604
  %7887 = vmatmul.mubr.bf16.gmra.mrb[0].mxu0 %v7429
  %v7888 = vpop.f32.mrb[0].mxu0
  %v7889 = vadd.f32 %v7454, %v7888
  %v7890 = vpop.f32.mrb[0].mxu0
  %v7891 = vpop.f32.mrb[0].mxu0
  %v7892 = vadd.f32 %v7454, %v7891
  %v7893 = vpop.f32.mrb[0].mxu0
  %7894 = vdwg.mxu0
  %v7895 = vxor.u32 %v7641, 2147483648
  %v7896 = vxor.u32 %v7644, 2147483648
  %v7897 = vxor.u32 %v7649, 2147483648
  %v7898 = vxor.u32 %v7652, 2147483648
  %v7899 = vxor.u32 %v7657, 2147483648
  %v7900 = vxor.u32 %v7660, 2147483648
  %v7901 = vxor.u32 %v7665, 2147483648
  %v7902 = vxor.u32 %v7668, 2147483648
  %v7903 = vxor.u32 %v7673, 2147483648
  %v7904 = vxor.u32 %v7676, 2147483648
  %v7905 = vxor.u32 %v7681, 2147483648
  %v7906 = vxor.u32 %v7684, 2147483648
  %v7907 = vxor.u32 %v7689, 2147483648
  %v7908 = vxor.u32 %v7692, 2147483648
  %v7909 = vxor.u32 %v7697, 2147483648
  %v7910 = vxor.u32 %v7700, 2147483648
  %v7911 = vxor.u32 %v7705, 2147483648
  %v7912 = vxor.u32 %v7708, 2147483648
  %v7913 = vxor.u32 %v7713, 2147483648
  %v7914 = vxor.u32 %v7716, 2147483648
  %v7915 = vxor.u32 %v7721, 2147483648
  %v7916 = vxor.u32 %v7724, 2147483648
  %v7917 = vxor.u32 %v7729, 2147483648
  %v7918 = vxor.u32 %v7732, 2147483648
  %v7919 = vxor.u32 %v7737, 2147483648
  %v7920 = vxor.u32 %v7740, 2147483648
  %v7921 = vxor.u32 %v7745, 2147483648
  %v7922 = vxor.u32 %v7748, 2147483648
  %v7923 = vxor.u32 %v7753, 2147483648
  %v7924 = vxor.u32 %v7756, 2147483648
  %v7925 = vxor.u32 %v7761, 2147483648
  %v7926 = vxor.u32 %v7764, 2147483648
  %v7927 = vxor.u32 %v7769, 2147483648
  %v7928 = vxor.u32 %v7772, 2147483648
  %v7929 = vxor.u32 %v7777, 2147483648
  %v7930 = vxor.u32 %v7780, 2147483648
  %v7931 = vxor.u32 %v7785, 2147483648
  %v7932 = vxor.u32 %v7788, 2147483648
  %v7933 = vxor.u32 %v7793, 2147483648
  %v7934 = vxor.u32 %v7796, 2147483648
  %v7935 = vxor.u32 %v7801, 2147483648
  %v7936 = vxor.u32 %v7804, 2147483648
  %v7937 = vxor.u32 %v7809, 2147483648
  %v7938 = vxor.u32 %v7812, 2147483648
  %v7939 = vxor.u32 %v7817, 2147483648
  %v7940 = vxor.u32 %v7820, 2147483648
  %v7941 = vxor.u32 %v7825, 2147483648
  %v7942 = vxor.u32 %v7828, 2147483648
  %v7943 = vxor.u32 %v7833, 2147483648
  %v7944 = vxor.u32 %v7836, 2147483648
  %v7945 = vxor.u32 %v7841, 2147483648
  %v7946 = vxor.u32 %v7844, 2147483648
  %v7947 = vxor.u32 %v7849, 2147483648
  %v7948 = vxor.u32 %v7852, 2147483648
  %v7949 = vxor.u32 %v7857, 2147483648
  %v7950 = vxor.u32 %v7860, 2147483648
  %v7951 = vxor.u32 %v7865, 2147483648
  %v7952 = vxor.u32 %v7868, 2147483648
  %v7953 = vxor.u32 %v7873, 2147483648
  %v7954 = vxor.u32 %v7876, 2147483648
  %v7955 = vxor.u32 %v7881, 2147483648
  %v7956 = vxor.u32 %v7884, 2147483648
  %v7957 = vxor.u32 %v7889, 2147483648
  %v7958 = vxor.u32 %v7892, 2147483648
  %v7959 = vmul.f32 %v7895, 1.442695
  %v7960 = vpow.pop %v7959
  %v7961 = vmul.f32 %v7896, 1.442695
  %v7962 = vpow.pop %v7961
  %v7963 = vmul.f32 %v7897, 1.442695
  %v7964 = vpow.pop %v7963
  %v7965 = vmul.f32 %v7898, 1.442695
  %v7966 = vpow.pop %v7965
  %v7967 = vmul.f32 %v7899, 1.442695
  %v7968 = vpow.pop %v7967
  %v7969 = vmul.f32 %v7900, 1.442695
  %v7970 = vpow.pop %v7969
  %v7971 = vmul.f32 %v7901, 1.442695
  %v7972 = vpow.pop %v7971
  %v7973 = vmul.f32 %v7902, 1.442695
  %v7974 = vpow.pop %v7973
  %v7975 = vmul.f32 %v7903, 1.442695
  %v7976 = vpow.pop %v7975
  %v7977 = vmul.f32 %v7904, 1.442695
  %v7978 = vpow.pop %v7977
  %v7979 = vmul.f32 %v7905, 1.442695
  %v7980 = vpow.pop %v7979
  %v7981 = vmul.f32 %v7906, 1.442695
  %v7982 = vpow.pop %v7981
  %v7983 = vmul.f32 %v7907, 1.442695
  %v7984 = vpow.pop %v7983
  %v7985 = vmul.f32 %v7908, 1.442695
  %v7986 = vpow.pop %v7985
  %v7987 = vmul.f32 %v7909, 1.442695
  %v7988 = vpow.pop %v7987
  %v7989 = vmul.f32 %v7910, 1.442695
  %v7990 = vpow.pop %v7989
  %v7991 = vmul.f32 %v7911, 1.442695
  %v7992 = vpow.pop %v7991
  %v7993 = vmul.f32 %v7912, 1.442695
  %v7994 = vpow.pop %v7993
  %v7995 = vmul.f32 %v7913, 1.442695
  %v7996 = vpow.pop %v7995
  %v7997 = vmul.f32 %v7914, 1.442695
  %v7998 = vpow.pop %v7997
  %v7999 = vmul.f32 %v7915, 1.442695
  %v8000 = vpow.pop %v7999
  %v8001 = vmul.f32 %v7916, 1.442695
  %v8002 = vpow.pop %v8001
  %v8003 = vmul.f32 %v7917, 1.442695
  %v8004 = vpow.pop %v8003
  %v8005 = vmul.f32 %v7918, 1.442695
  %v8006 = vpow.pop %v8005
  %v8007 = vmul.f32 %v7919, 1.442695
  %v8008 = vpow.pop %v8007
  %v8009 = vmul.f32 %v7920, 1.442695
  %v8010 = vpow.pop %v8009
  %v8011 = vmul.f32 %v7921, 1.442695
  %v8012 = vpow.pop %v8011
  %v8013 = vmul.f32 %v7922, 1.442695
  %v8014 = vpow.pop %v8013
  %v8015 = vmul.f32 %v7923, 1.442695
  %v8016 = vpow.pop %v8015
  %v8017 = vmul.f32 %v7924, 1.442695
  %v8018 = vpow.pop %v8017
  %v8019 = vmul.f32 %v7925, 1.442695
  %v8020 = vpow.pop %v8019
  %v8021 = vmul.f32 %v7926, 1.442695
  %v8022 = vpow.pop %v8021
  %v8023 = vmul.f32 %v7927, 1.442695
  %v8024 = vpow.pop %v8023
  %v8025 = vmul.f32 %v7928, 1.442695
  %v8026 = vpow.pop %v8025
  %v8027 = vmul.f32 %v7929, 1.442695
  %v8028 = vpow.pop %v8027
  %v8029 = vmul.f32 %v7930, 1.442695
  %v8030 = vpow.pop %v8029
  %v8031 = vmul.f32 %v7931, 1.442695
  %v8032 = vpow.pop %v8031
  %v8033 = vmul.f32 %v7932, 1.442695
  %v8034 = vpow.pop %v8033
  %v8035 = vmul.f32 %v7933, 1.442695
  %v8036 = vpow.pop %v8035
  %v8037 = vmul.f32 %v7934, 1.442695
  %v8038 = vpow.pop %v8037
  %v8039 = vmul.f32 %v7935, 1.442695
  %v8040 = vpow.pop %v8039
  %v8041 = vmul.f32 %v7936, 1.442695
  %v8042 = vpow.pop %v8041
  %v8043 = vmul.f32 %v7937, 1.442695
  %v8044 = vpow.pop %v8043
  %v8045 = vmul.f32 %v7938, 1.442695
  %v8046 = vpow.pop %v8045
  %v8047 = vmul.f32 %v7939, 1.442695
  %v8048 = vpow.pop %v8047
  %v8049 = vmul.f32 %v7940, 1.442695
  %v8050 = vpow.pop %v8049
  %v8051 = vmul.f32 %v7941, 1.442695
  %v8052 = vpow.pop %v8051
  %v8053 = vmul.f32 %v7942, 1.442695
  %v8054 = vpow.pop %v8053
  %v8055 = vmul.f32 %v7943, 1.442695
  %v8056 = vpow.pop %v8055
  %v8057 = vmul.f32 %v7944, 1.442695
  %v8058 = vpow.pop %v8057
  %v8059 = vmul.f32 %v7945, 1.442695
  %v8060 = vpow.pop %v8059
  %v8061 = vmul.f32 %v7946, 1.442695
  %v8062 = vpow.pop %v8061
  %v8063 = vmul.f32 %v7947, 1.442695
  %v8064 = vpow.pop %v8063
  %v8065 = vmul.f32 %v7948, 1.442695
  %v8066 = vpow.pop %v8065
  %v8067 = vmul.f32 %v7949, 1.442695
  %v8068 = vpow.pop %v8067
  %v8069 = vmul.f32 %v7950, 1.442695
  %v8070 = vpow.pop %v8069
  %v8071 = vmul.f32 %v7951, 1.442695
  %v8072 = vpow.pop %v8071
  %v8073 = vmul.f32 %v7952, 1.442695
  %v8074 = vpow.pop %v8073
  %v8075 = vmul.f32 %v7953, 1.442695
  %v8076 = vpow.pop %v8075
  %v8077 = vmul.f32 %v7954, 1.442695
  %v8078 = vpow.pop %v8077
  %v8079 = vmul.f32 %v7955, 1.442695
  %v8080 = vpow.pop %v8079
  %v8081 = vmul.f32 %v7956, 1.442695
  %v8082 = vpow.pop %v8081
  %v8083 = vmul.f32 %v7957, 1.442695
  %v8084 = vpow.pop %v8083
  %v8085 = vmul.f32 %v7958, 1.442695
  %v8086 = vpow.pop %v8085
  %v8087 = vadd.f32 %v7960, 1.0
  %v8088 = vadd.f32 %v7962, 1.0
  %v8089 = vadd.f32 %v7964, 1.0
  %v8090 = vadd.f32 %v7966, 1.0
  %v8091 = vadd.f32 %v7968, 1.0
  %v8092 = vadd.f32 %v7970, 1.0
  %v8093 = vadd.f32 %v7972, 1.0
  %v8094 = vadd.f32 %v7974, 1.0
  %v8095 = vadd.f32 %v7976, 1.0
  %v8096 = vadd.f32 %v7978, 1.0
  %v8097 = vadd.f32 %v7980, 1.0
  %v8098 = vadd.f32 %v7982, 1.0
  %v8099 = vadd.f32 %v7984, 1.0
  %v8100 = vadd.f32 %v7986, 1.0
  %v8101 = vadd.f32 %v7988, 1.0
  %v8102 = vadd.f32 %v7990, 1.0
  %v8103 = vadd.f32 %v7992, 1.0
  %v8104 = vadd.f32 %v7994, 1.0
  %v8105 = vadd.f32 %v7996, 1.0
  %v8106 = vadd.f32 %v7998, 1.0
  %v8107 = vadd.f32 %v8000, 1.0
  %v8108 = vadd.f32 %v8002, 1.0
  %v8109 = vadd.f32 %v8004, 1.0
  %v8110 = vadd.f32 %v8006, 1.0
  %v8111 = vadd.f32 %v8008, 1.0
  %v8112 = vadd.f32 %v8010, 1.0
  %v8113 = vadd.f32 %v8012, 1.0
  %v8114 = vadd.f32 %v8014, 1.0
  %v8115 = vadd.f32 %v8016, 1.0
  %v8116 = vadd.f32 %v8018, 1.0
  %v8117 = vadd.f32 %v8020, 1.0
  %v8118 = vadd.f32 %v8022, 1.0
  %v8119 = vadd.f32 %v8024, 1.0
  %v8120 = vadd.f32 %v8026, 1.0
  %v8121 = vadd.f32 %v8028, 1.0
  %v8122 = vadd.f32 %v8030, 1.0
  %v8123 = vadd.f32 %v8032, 1.0
  %v8124 = vadd.f32 %v8034, 1.0
  %v8125 = vadd.f32 %v8036, 1.0
  %v8126 = vadd.f32 %v8038, 1.0
  %v8127 = vadd.f32 %v8040, 1.0
  %v8128 = vadd.f32 %v8042, 1.0
  %v8129 = vadd.f32 %v8044, 1.0
  %v8130 = vadd.f32 %v8046, 1.0
  %v8131 = vadd.f32 %v8048, 1.0
  %v8132 = vadd.f32 %v8050, 1.0
  %v8133 = vadd.f32 %v8052, 1.0
  %v8134 = vadd.f32 %v8054, 1.0
  %v8135 = vadd.f32 %v8056, 1.0
  %v8136 = vadd.f32 %v8058, 1.0
  %v8137 = vadd.f32 %v8060, 1.0
  %v8138 = vadd.f32 %v8062, 1.0
  %v8139 = vadd.f32 %v8064, 1.0
  %v8140 = vadd.f32 %v8066, 1.0
  %v8141 = vadd.f32 %v8068, 1.0
  %v8142 = vadd.f32 %v8070, 1.0
  %v8143 = vadd.f32 %v8072, 1.0
  %v8144 = vadd.f32 %v8074, 1.0
  %v8145 = vadd.f32 %v8076, 1.0
  %v8146 = vadd.f32 %v8078, 1.0
  %v8147 = vadd.f32 %v8080, 1.0
  %v8148 = vadd.f32 %v8082, 1.0
  %v8149 = vadd.f32 %v8084, 1.0
  %v8150 = vadd.f32 %v8086, 1.0
  %v8151 = vrcp.pop %v8087
  %v8152 = vmul.f32 1.0, %v8151
  %v8153 = vrcp.pop %v8088
  %v8154 = vmul.f32 1.0, %v8153
  %v8155 = vrcp.pop %v8089
  %v8156 = vmul.f32 1.0, %v8155
  %v8157 = vrcp.pop %v8090
  %v8158 = vmul.f32 1.0, %v8157
  %v8159 = vrcp.pop %v8091
  %v8160 = vmul.f32 1.0, %v8159
  %v8161 = vrcp.pop %v8092
  %v8162 = vmul.f32 1.0, %v8161
  %v8163 = vrcp.pop %v8093
  %v8164 = vmul.f32 1.0, %v8163
  %v8165 = vrcp.pop %v8094
  %v8166 = vmul.f32 1.0, %v8165
  %v8167 = vrcp.pop %v8095
  %v8168 = vmul.f32 1.0, %v8167
  %v8169 = vrcp.pop %v8096
  %v8170 = vmul.f32 1.0, %v8169
  %v8171 = vrcp.pop %v8097
  %v8172 = vmul.f32 1.0, %v8171
  %v8173 = vrcp.pop %v8098
  %v8174 = vmul.f32 1.0, %v8173
  %v8175 = vrcp.pop %v8099
  %v8176 = vmul.f32 1.0, %v8175
  %v8177 = vrcp.pop %v8100
  %v8178 = vmul.f32 1.0, %v8177
  %v8179 = vrcp.pop %v8101
  %v8180 = vmul.f32 1.0, %v8179
  %v8181 = vrcp.pop %v8102
  %v8182 = vmul.f32 1.0, %v8181
  %v8183 = vrcp.pop %v8103
  %v8184 = vmul.f32 1.0, %v8183
  %v8185 = vrcp.pop %v8104
  %v8186 = vmul.f32 1.0, %v8185
  %v8187 = vrcp.pop %v8105
  %v8188 = vmul.f32 1.0, %v8187
  %v8189 = vrcp.pop %v8106
  %v8190 = vmul.f32 1.0, %v8189
  %v8191 = vrcp.pop %v8107
  %v8192 = vmul.f32 1.0, %v8191
  %v8193 = vrcp.pop %v8108
  %v8194 = vmul.f32 1.0, %v8193
  %v8195 = vrcp.pop %v8109
  %v8196 = vmul.f32 1.0, %v8195
  %v8197 = vrcp.pop %v8110
  %v8198 = vmul.f32 1.0, %v8197
  %v8199 = vrcp.pop %v8111
  %v8200 = vmul.f32 1.0, %v8199
  %v8201 = vrcp.pop %v8112
  %v8202 = vmul.f32 1.0, %v8201
  %v8203 = vrcp.pop %v8113
  %v8204 = vmul.f32 1.0, %v8203
  %v8205 = vrcp.pop %v8114
  %v8206 = vmul.f32 1.0, %v8205
  %v8207 = vrcp.pop %v8115
  %v8208 = vmul.f32 1.0, %v8207
  %v8209 = vrcp.pop %v8116
  %v8210 = vmul.f32 1.0, %v8209
  %v8211 = vrcp.pop %v8117
  %v8212 = vmul.f32 1.0, %v8211
  %v8213 = vrcp.pop %v8118
  %v8214 = vmul.f32 1.0, %v8213
  %v8215 = vrcp.pop %v8119
  %v8216 = vmul.f32 1.0, %v8215
  %v8217 = vrcp.pop %v8120
  %v8218 = vmul.f32 1.0, %v8217
  %v8219 = vrcp.pop %v8121
  %v8220 = vmul.f32 1.0, %v8219
  %v8221 = vrcp.pop %v8122
  %v8222 = vmul.f32 1.0, %v8221
  %v8223 = vrcp.pop %v8123
  %v8224 = vmul.f32 1.0, %v8223
  %v8225 = vrcp.pop %v8124
  %v8226 = vmul.f32 1.0, %v8225
  %v8227 = vrcp.pop %v8125
  %v8228 = vmul.f32 1.0, %v8227
  %v8229 = vrcp.pop %v8126
  %v8230 = vmul.f32 1.0, %v8229
  %v8231 = vrcp.pop %v8127
  %v8232 = vmul.f32 1.0, %v8231
  %v8233 = vrcp.pop %v8128
  %v8234 = vmul.f32 1.0, %v8233
  %v8235 = vrcp.pop %v8129
  %v8236 = vmul.f32 1.0, %v8235
  %v8237 = vrcp.pop %v8130
  %v8238 = vmul.f32 1.0, %v8237
  %v8239 = vrcp.pop %v8131
  %v8240 = vmul.f32 1.0, %v8239
  %v8241 = vrcp.pop %v8132
  %v8242 = vmul.f32 1.0, %v8241
  %v8243 = vrcp.pop %v8133
  %v8244 = vmul.f32 1.0, %v8243
  %v8245 = vrcp.pop %v8134
  %v8246 = vmul.f32 1.0, %v8245
  %v8247 = vrcp.pop %v8135
  %v8248 = vmul.f32 1.0, %v8247
  %v8249 = vrcp.pop %v8136
  %v8250 = vmul.f32 1.0, %v8249
  %v8251 = vrcp.pop %v8137
  %v8252 = vmul.f32 1.0, %v8251
  %v8253 = vrcp.pop %v8138
  %v8254 = vmul.f32 1.0, %v8253
  %v8255 = vrcp.pop %v8139
  %v8256 = vmul.f32 1.0, %v8255
  %v8257 = vrcp.pop %v8140
  %v8258 = vmul.f32 1.0, %v8257
  %v8259 = vrcp.pop %v8141
  %v8260 = vmul.f32 1.0, %v8259
  %v8261 = vrcp.pop %v8142
  %v8262 = vmul.f32 1.0, %v8261
  %v8263 = vrcp.pop %v8143
  %v8264 = vmul.f32 1.0, %v8263
  %v8265 = vrcp.pop %v8144
  %v8266 = vmul.f32 1.0, %v8265
  %v8267 = vrcp.pop %v8145
  %v8268 = vmul.f32 1.0, %v8267
  %v8269 = vrcp.pop %v8146
  %v8270 = vmul.f32 1.0, %v8269
  %v8271 = vrcp.pop %v8147
  %v8272 = vmul.f32 1.0, %v8271
  %v8273 = vrcp.pop %v8148
  %v8274 = vmul.f32 1.0, %v8273
  %v8275 = vrcp.pop %v8149
  %v8276 = vmul.f32 1.0, %v8275
  %v8277 = vrcp.pop %v8150
  %v8278 = vmul.f32 1.0, %v8277
  %v8279 = vmul.f32 %v7641, %v8152
  %v8280 = vmul.f32 %v7644, %v8154
  %v8281 = vmul.f32 %v7649, %v8156
  %v8282 = vmul.f32 %v7652, %v8158
  %v8283 = vmul.f32 %v7657, %v8160
  %v8284 = vmul.f32 %v7660, %v8162
  %v8285 = vmul.f32 %v7665, %v8164
  %v8286 = vmul.f32 %v7668, %v8166
  %v8287 = vmul.f32 %v7673, %v8168
  %v8288 = vmul.f32 %v7676, %v8170
  %v8289 = vmul.f32 %v7681, %v8172
  %v8290 = vmul.f32 %v7684, %v8174
  %v8291 = vmul.f32 %v7689, %v8176
  %v8292 = vmul.f32 %v7692, %v8178
  %v8293 = vmul.f32 %v7697, %v8180
  %v8294 = vmul.f32 %v7700, %v8182
  %v8295 = vmul.f32 %v7705, %v8184
  %v8296 = vmul.f32 %v7708, %v8186
  %v8297 = vmul.f32 %v7713, %v8188
  %v8298 = vmul.f32 %v7716, %v8190
  %v8299 = vmul.f32 %v7721, %v8192
  %v8300 = vmul.f32 %v7724, %v8194
  %v8301 = vmul.f32 %v7729, %v8196
  %v8302 = vmul.f32 %v7732, %v8198
  %v8303 = vmul.f32 %v7737, %v8200
  %v8304 = vmul.f32 %v7740, %v8202
  %v8305 = vmul.f32 %v7745, %v8204
  %v8306 = vmul.f32 %v7748, %v8206
  %v8307 = vmul.f32 %v7753, %v8208
  %v8308 = vmul.f32 %v7756, %v8210
  %v8309 = vmul.f32 %v7761, %v8212
  %v8310 = vmul.f32 %v7764, %v8214
  %v8311 = vmul.f32 %v7769, %v8216
  %v8312 = vmul.f32 %v7772, %v8218
  %v8313 = vmul.f32 %v7777, %v8220
  %v8314 = vmul.f32 %v7780, %v8222
  %v8315 = vmul.f32 %v7785, %v8224
  %v8316 = vmul.f32 %v7788, %v8226
  %v8317 = vmul.f32 %v7793, %v8228
  %v8318 = vmul.f32 %v7796, %v8230
  %v8319 = vmul.f32 %v7801, %v8232
  %v8320 = vmul.f32 %v7804, %v8234
  %v8321 = vmul.f32 %v7809, %v8236
  %v8322 = vmul.f32 %v7812, %v8238
  %v8323 = vmul.f32 %v7817, %v8240
  %v8324 = vmul.f32 %v7820, %v8242
  %v8325 = vmul.f32 %v7825, %v8244
  %v8326 = vmul.f32 %v7828, %v8246
  %v8327 = vmul.f32 %v7833, %v8248
  %v8328 = vmul.f32 %v7836, %v8250
  %v8329 = vmul.f32 %v7841, %v8252
  %v8330 = vmul.f32 %v7844, %v8254
  %v8331 = vmul.f32 %v7849, %v8256
  %v8332 = vmul.f32 %v7852, %v8258
  %v8333 = vmul.f32 %v7857, %v8260
  %v8334 = vmul.f32 %v7860, %v8262
  %v8335 = vmul.f32 %v7865, %v8264
  %v8336 = vmul.f32 %v7868, %v8266
  %v8337 = vmul.f32 %v7873, %v8268
  %v8338 = vmul.f32 %v7876, %v8270
  %v8339 = vmul.f32 %v7881, %v8272
  %v8340 = vmul.f32 %v7884, %v8274
  %v8341 = vmul.f32 %v7889, %v8276
  %v8342 = vmul.f32 %v7892, %v8278
  %v8343 = vpack.c.bf16 %v8280, %v8279
  %v8344 = vpack.c.bf16 %v8282, %v8281
  %v8345 = vpack.c.bf16 %v8284, %v8283
  %v8346 = vpack.c.bf16 %v8286, %v8285
  %v8347 = vpack.c.bf16 %v8288, %v8287
  %v8348 = vpack.c.bf16 %v8290, %v8289
  %v8349 = vpack.c.bf16 %v8292, %v8291
  %v8350 = vpack.c.bf16 %v8294, %v8293
  %v8351 = vpack.c.bf16 %v8296, %v8295
  %v8352 = vpack.c.bf16 %v8298, %v8297
  %v8353 = vpack.c.bf16 %v8300, %v8299
  %v8354 = vpack.c.bf16 %v8302, %v8301
  %v8355 = vpack.c.bf16 %v8304, %v8303
  %v8356 = vpack.c.bf16 %v8306, %v8305
  %v8357 = vpack.c.bf16 %v8308, %v8307
  %v8358 = vpack.c.bf16 %v8310, %v8309
  %v8359 = vpack.c.bf16 %v8312, %v8311
  %v8360 = vpack.c.bf16 %v8314, %v8313
  %v8361 = vpack.c.bf16 %v8316, %v8315
  %v8362 = vpack.c.bf16 %v8318, %v8317
  %v8363 = vpack.c.bf16 %v8320, %v8319
  %v8364 = vpack.c.bf16 %v8322, %v8321
  %v8365 = vpack.c.bf16 %v8324, %v8323
  %v8366 = vpack.c.bf16 %v8326, %v8325
  %v8367 = vpack.c.bf16 %v8328, %v8327
  %v8368 = vpack.c.bf16 %v8330, %v8329
  %v8369 = vpack.c.bf16 %v8332, %v8331
  %v8370 = vpack.c.bf16 %v8334, %v8333
  %v8371 = vpack.c.bf16 %v8336, %v8335
  %v8372 = vpack.c.bf16 %v8338, %v8337
  %v8373 = vpack.c.bf16 %v8340, %v8339
  %v8374 = vpack.c.bf16 %v8342, %v8341
  %v8407 = vunpack.c.l.b16 %v8343
  %v8408 = vunpack.c.h.b16 %v8343
  %v8409 = vunpack.c.l.b16 %v8344
  %v8410 = vunpack.c.h.b16 %v8344
  %v8411 = vunpack.c.l.b16 %v8345
  %v8412 = vunpack.c.h.b16 %v8345
  %v8413 = vunpack.c.l.b16 %v8346
  %v8414 = vunpack.c.h.b16 %v8346
  %v8415 = vunpack.c.l.b16 %v8347
  %v8416 = vunpack.c.h.b16 %v8347
  %v8417 = vunpack.c.l.b16 %v8348
  %v8418 = vunpack.c.h.b16 %v8348
  %v8419 = vunpack.c.l.b16 %v8349
  %v8420 = vunpack.c.h.b16 %v8349
  %v8421 = vunpack.c.l.b16 %v8350
  %v8422 = vunpack.c.h.b16 %v8350
  %v8423 = vunpack.c.l.b16 %v8351
  %v8424 = vunpack.c.h.b16 %v8351
  %v8425 = vunpack.c.l.b16 %v8352
  %v8426 = vunpack.c.h.b16 %v8352
  %v8427 = vunpack.c.l.b16 %v8353
  %v8428 = vunpack.c.h.b16 %v8353
  %v8429 = vunpack.c.l.b16 %v8354
  %v8430 = vunpack.c.h.b16 %v8354
  %v8431 = vunpack.c.l.b16 %v8355
  %v8432 = vunpack.c.h.b16 %v8355
  %v8433 = vunpack.c.l.b16 %v8356
  %v8434 = vunpack.c.h.b16 %v8356
  %v8435 = vunpack.c.l.b16 %v8357
  %v8436 = vunpack.c.h.b16 %v8357
  %v8437 = vunpack.c.l.b16 %v8358
  %v8438 = vunpack.c.h.b16 %v8358
  %v8439 = vunpack.c.l.b16 %v8359
  %v8440 = vunpack.c.h.b16 %v8359
  %v8441 = vunpack.c.l.b16 %v8360
  %v8442 = vunpack.c.h.b16 %v8360
  %v8443 = vunpack.c.l.b16 %v8361
  %v8444 = vunpack.c.h.b16 %v8361
  %v8445 = vunpack.c.l.b16 %v8362
  %v8446 = vunpack.c.h.b16 %v8362
  %v8447 = vunpack.c.l.b16 %v8363
  %v8448 = vunpack.c.h.b16 %v8363
  %v8449 = vunpack.c.l.b16 %v8364
  %v8450 = vunpack.c.h.b16 %v8364
  %v8451 = vunpack.c.l.b16 %v8365
  %v8452 = vunpack.c.h.b16 %v8365
  %v8453 = vunpack.c.l.b16 %v8366
  %v8454 = vunpack.c.h.b16 %v8366
  %v8455 = vunpack.c.l.b16 %v8367
  %v8456 = vunpack.c.h.b16 %v8367
  %v8457 = vunpack.c.l.b16 %v8368
  %v8458 = vunpack.c.h.b16 %v8368
  %v8459 = vunpack.c.l.b16 %v8369
  %v8460 = vunpack.c.h.b16 %v8369
  %v8461 = vunpack.c.l.b16 %v8370
  %v8462 = vunpack.c.h.b16 %v8370
  %v8463 = vunpack.c.l.b16 %v8371
  %v8464 = vunpack.c.h.b16 %v8371
  %v8465 = vunpack.c.l.b16 %v8372
  %v8466 = vunpack.c.h.b16 %v8372
  %v8467 = vunpack.c.l.b16 %v8373
  %v8468 = vunpack.c.h.b16 %v8373
  %v8469 = vunpack.c.l.b16 %v8374
  %v8470 = vunpack.c.h.b16 %v8374
  %v8471 = vpack.c.b16 %v8407, %v8407
  %v8472 = vpack.c.b16 %v8408, %v8408
  %v8473 = vpack.c.b16 %v8409, %v8409
  %v8474 = vpack.c.b16 %v8410, %v8410
  %v8475 = vpack.c.b16 %v8411, %v8411
  %v8476 = vpack.c.b16 %v8412, %v8412
  %v8477 = vpack.c.b16 %v8413, %v8413
  %v8478 = vpack.c.b16 %v8414, %v8414
  %v8479 = vpack.c.b16 %v8415, %v8415
  %v8480 = vpack.c.b16 %v8416, %v8416
  %v8481 = vpack.c.b16 %v8417, %v8417
  %v8482 = vpack.c.b16 %v8418, %v8418
  %v8483 = vpack.c.b16 %v8419, %v8419
  %v8484 = vpack.c.b16 %v8420, %v8420
  %v8485 = vpack.c.b16 %v8421, %v8421
  %v8486 = vpack.c.b16 %v8422, %v8422
  %v8487 = vpack.c.b16 %v8423, %v8423
  %v8488 = vpack.c.b16 %v8424, %v8424
  %v8489 = vpack.c.b16 %v8425, %v8425
  %v8490 = vpack.c.b16 %v8426, %v8426
  %v8491 = vpack.c.b16 %v8427, %v8427
  %v8492 = vpack.c.b16 %v8428, %v8428
  %v8493 = vpack.c.b16 %v8429, %v8429
  %v8494 = vpack.c.b16 %v8430, %v8430
  %v8495 = vpack.c.b16 %v8431, %v8431
  %v8496 = vpack.c.b16 %v8432, %v8432
  %v8497 = vpack.c.b16 %v8433, %v8433
  %v8498 = vpack.c.b16 %v8434, %v8434
  %v8499 = vpack.c.b16 %v8435, %v8435
  %v8500 = vpack.c.b16 %v8436, %v8436
  %v8501 = vpack.c.b16 %v8437, %v8437
  %v8502 = vpack.c.b16 %v8438, %v8438
  %v8503 = vpack.c.b16 %v8439, %v8439
  %v8504 = vpack.c.b16 %v8440, %v8440
  %v8505 = vpack.c.b16 %v8441, %v8441
  %v8506 = vpack.c.b16 %v8442, %v8442
  %v8507 = vpack.c.b16 %v8443, %v8443
  %v8508 = vpack.c.b16 %v8444, %v8444
  %v8509 = vpack.c.b16 %v8445, %v8445
  %v8510 = vpack.c.b16 %v8446, %v8446
  %v8511 = vpack.c.b16 %v8447, %v8447
  %v8512 = vpack.c.b16 %v8448, %v8448
  %v8513 = vpack.c.b16 %v8449, %v8449
  %v8514 = vpack.c.b16 %v8450, %v8450
  %v8515 = vpack.c.b16 %v8451, %v8451
  %v8516 = vpack.c.b16 %v8452, %v8452
  %v8517 = vpack.c.b16 %v8453, %v8453
  %v8518 = vpack.c.b16 %v8454, %v8454
  %v8519 = vpack.c.b16 %v8455, %v8455
  %v8520 = vpack.c.b16 %v8456, %v8456
  %v8521 = vpack.c.b16 %v8457, %v8457
  %v8522 = vpack.c.b16 %v8458, %v8458
  %v8523 = vpack.c.b16 %v8459, %v8459
  %v8524 = vpack.c.b16 %v8460, %v8460
  %v8525 = vpack.c.b16 %v8461, %v8461
  %v8526 = vpack.c.b16 %v8462, %v8462
  %v8527 = vpack.c.b16 %v8463, %v8463
  %v8528 = vpack.c.b16 %v8464, %v8464
  %v8529 = vpack.c.b16 %v8465, %v8465
  %v8530 = vpack.c.b16 %v8466, %v8466
  %v8531 = vpack.c.b16 %v8467, %v8467
  %v8532 = vpack.c.b16 %v8468, %v8468
  %v8533 = vpack.c.b16 %v8469, %v8469
  %v8534 = vpack.c.b16 %v8470, %v8470
  %vm8599 = vcmask 125952
  %8600 = vst.msk [vmem:[%s5] sm:$0xf] %vm8599, %v8471
  %8601 = vst.msk [vmem:[%s5 + $0x4] sm:$0xf] %vm8599, %v8472
  %8602 = vst.msk [vmem:[%s5 + $0x8] sm:$0xf] %vm8599, %v8473
  %8603 = vst.msk [vmem:[%s5 + $0xc] sm:$0xf] %vm8599, %v8474
  %8604 = vst.msk [vmem:[%s5 + $0x10] sm:$0xf] %vm8599, %v8475
  %8605 = vst.msk [vmem:[%s5 + $0x14] sm:$0xf] %vm8599, %v8476
  %8606 = vst.msk [vmem:[%s5 + $0x18] sm:$0xf] %vm8599, %v8477
  %8607 = vst.msk [vmem:[%s5 + $0x1c] sm:$0xf] %vm8599, %v8478
  %8608 = vst.msk [vmem:[%s5 + $0x20] sm:$0xf] %vm8599, %v8479
  %8609 = vst.msk [vmem:[%s5 + $0x24] sm:$0xf] %vm8599, %v8480
  %8610 = vst.msk [vmem:[%s5 + $0x28] sm:$0xf] %vm8599, %v8481
  %8611 = vst.msk [vmem:[%s5 + $0x2c] sm:$0xf] %vm8599, %v8482
  %8612 = vst.msk [vmem:[%s5 + $0x30] sm:$0xf] %vm8599, %v8483
  %8613 = vst.msk [vmem:[%s5 + $0x34] sm:$0xf] %vm8599, %v8484
  %8614 = vst.msk [vmem:[%s5 + $0x38] sm:$0xf] %vm8599, %v8485
  %8615 = vst.msk [vmem:[%s5 + $0x3c] sm:$0xf] %vm8599, %v8486
  %8616 = vst.msk [vmem:[%s5 + $0x40] sm:$0xf] %vm8599, %v8487
  %8617 = vst.msk [vmem:[%s5 + $0x44] sm:$0xf] %vm8599, %v8488
  %8618 = vst.msk [vmem:[%s5 + $0x48] sm:$0xf] %vm8599, %v8489
  %8619 = vst.msk [vmem:[%s5 + $0x4c] sm:$0xf] %vm8599, %v8490
  %8620 = vst.msk [vmem:[%s5 + $0x50] sm:$0xf] %vm8599, %v8491
  %8621 = vst.msk [vmem:[%s5 + $0x54] sm:$0xf] %vm8599, %v8492
  %8622 = vst.msk [vmem:[%s5 + $0x58] sm:$0xf] %vm8599, %v8493
  %8623 = vst.msk [vmem:[%s5 + $0x5c] sm:$0xf] %vm8599, %v8494
  %8624 = vst.msk [vmem:[%s5 + $0x60] sm:$0xf] %vm8599, %v8495
  %8625 = vst.msk [vmem:[%s5 + $0x64] sm:$0xf] %vm8599, %v8496
  %8626 = vst.msk [vmem:[%s5 + $0x68] sm:$0xf] %vm8599, %v8497
  %8627 = vst.msk [vmem:[%s5 + $0x6c] sm:$0xf] %vm8599, %v8498
  %8628 = vst.msk [vmem:[%s5 + $0x70] sm:$0xf] %vm8599, %v8499
  %8629 = vst.msk [vmem:[%s5 + $0x74] sm:$0xf] %vm8599, %v8500
  %8630 = vst.msk [vmem:[%s5 + $0x78] sm:$0xf] %vm8599, %v8501
  %8631 = vst.msk [vmem:[%s5 + $0x7c] sm:$0xf] %vm8599, %v8502
  %8632 = vst.msk [vmem:[%s5 + $0x80] sm:$0xf] %vm8599, %v8503
  %8633 = vst.msk [vmem:[%s5 + $0x84] sm:$0xf] %vm8599, %v8504
  %8634 = vst.msk [vmem:[%s5 + $0x88] sm:$0xf] %vm8599, %v8505
  %8635 = vst.msk [vmem:[%s5 + $0x8c] sm:$0xf] %vm8599, %v8506
  %8636 = vst.msk [vmem:[%s5 + $0x90] sm:$0xf] %vm8599, %v8507
  %8637 = vst.msk [vmem:[%s5 + $0x94] sm:$0xf] %vm8599, %v8508
  %8638 = vst.msk [vmem:[%s5 + $0x98] sm:$0xf] %vm8599, %v8509
  %8639 = vst.msk [vmem:[%s5 + $0x9c] sm:$0xf] %vm8599, %v8510
  %8640 = vst.msk [vmem:[%s5 + $0xa0] sm:$0xf] %vm8599, %v8511
  %8641 = vst.msk [vmem:[%s5 + $0xa4] sm:$0xf] %vm8599, %v8512
  %8642 = vst.msk [vmem:[%s5 + $0xa8] sm:$0xf] %vm8599, %v8513
  %8643 = vst.msk [vmem:[%s5 + $0xac] sm:$0xf] %vm8599, %v8514
  %8644 = vst.msk [vmem:[%s5 + $0xb0] sm:$0xf] %vm8599, %v8515
  %8645 = vst.msk [vmem:[%s5 + $0xb4] sm:$0xf] %vm8599, %v8516
  %8646 = vst.msk [vmem:[%s5 + $0xb8] sm:$0xf] %vm8599, %v8517
  %8647 = vst.msk [vmem:[%s5 + $0xbc] sm:$0xf] %vm8599, %v8518
  %8648 = vst.msk [vmem:[%s5 + $0xc0] sm:$0xf] %vm8599, %v8519
  %8649 = vst.msk [vmem:[%s5 + $0xc4] sm:$0xf] %vm8599, %v8520
  %8650 = vst.msk [vmem:[%s5 + $0xc8] sm:$0xf] %vm8599, %v8521
  %8651 = vst.msk [vmem:[%s5 + $0xcc] sm:$0xf] %vm8599, %v8522
  %8652 = vst.msk [vmem:[%s5 + $0xd0] sm:$0xf] %vm8599, %v8523
  %8653 = vst.msk [vmem:[%s5 + $0xd4] sm:$0xf] %vm8599, %v8524
  %8654 = vst.msk [vmem:[%s5 + $0xd8] sm:$0xf] %vm8599, %v8525
  %8655 = vst.msk [vmem:[%s5 + $0xdc] sm:$0xf] %vm8599, %v8526
  %8656 = vst.msk [vmem:[%s5 + $0xe0] sm:$0xf] %vm8599, %v8527
  %8657 = vst.msk [vmem:[%s5 + $0xe4] sm:$0xf] %vm8599, %v8528
  %8658 = vst.msk [vmem:[%s5 + $0xe8] sm:$0xf] %vm8599, %v8529
  %8659 = vst.msk [vmem:[%s5 + $0xec] sm:$0xf] %vm8599, %v8530
  %8660 = vst.msk [vmem:[%s5 + $0xf0] sm:$0xf] %vm8599, %v8531
  %8661 = vst.msk [vmem:[%s5 + $0xf4] sm:$0xf] %vm8599, %v8532
  %8662 = vst.msk [vmem:[%s5 + $0xf8] sm:$0xf] %vm8599, %v8533
  %8663 = vst.msk [vmem:[%s5 + $0xfc] sm:$0xf] %vm8599, %v8534
  // Predicated region
  $region22: #{policy_net_forward.2} parent=0 // pred_check
    _
  $region23: #{policy_net_forward.2} parent=0 // pred_check_branch
    %8665 = sbr.rel (0) target = $region25
  $region24: #{policy_net_forward.2} parent=0 // pred_region
    _
  $region25: #{policy_net_forward.2} parent=0 // pred_fallthru
    _
  // Predicated region
  $region26: #{policy_net_forward.2} parent=0 // pred_check
    _
  $region27: #{policy_net_forward.2} parent=0 // pred_check_branch
    %8667 = sbr.rel (0) target = $region29
  $region28: #{policy_net_forward.2} parent=0 // pred_region
    _
  $region29: #{policy_net_forward.2} parent=0 // pred_fallthru
    _

</llo_original>
